<compile_context>
chip_gen: v5e
topology: v5e:2x2
jax: 0.10.0
libtpu: 0.0.40
codegen_flags: <defaults>
</compile_context>

<pallas_src>
import functools

import jax
import jax.numpy as jnp
from jax.experimental import pallas as pl
from jax.experimental.pallas import tpu as pltpu

D_INPUT = 5
D_MODEL = 64
NHEAD = 2                   # heads collapse: seq_len==1 so softmax==1 per head
NUM_BINS = 32
REG_DIM = 4
DIM_FF = 2048               # nn.TransformerEncoderLayer default dim_feedforward
FF_CHUNK = 512              # chunk DIM_FF to bound the live (TILE_B, *) intermediate
HEAD_PAD = 128              # fused cls+reg output padded to a lane-dense width
LN_EPS = 1e-5
MAX_TILE_B = 1024           # perf review: sweep 512-2048; 1024 is safe on v5e/v6e/v7x
MIN_TILE_B = 256            # multiple of 128 (v5e MXU) and 256 (v6e/v7x MXU)


def _layernorm(z, g, b):
    mu = jnp.mean(z, axis=-1, keepdims=True)
    var = jnp.mean((z - mu) ** 2, axis=-1, keepdims=True)   # biased var (PyTorch LayerNorm)
    return (z - mu) * jax.lax.rsqrt(var + LN_EPS) * g + b


def fast_transformer_kernel(
    x_ref,
    wpre_ref, bpre_ref,              # fused embed + attention(V@Wo) + residual affine (bf16 W)
    ln1g_ref, ln1b_ref,              # encoder norm1
    w1_ref, b1_ref, w2_ref, b2_ref,  # feed-forward (w1/w2 are bf16)
    ln2g_ref, ln2b_ref,              # encoder norm2
    lnfg_ref, lnfb_ref,              # final self.norm
    wh_ref, bh_ref,                  # fused [cls | reg | zero-pad] head (bf16 W)
    out_ref,
):
    f32 = jnp.float32
    bf16 = jnp.bfloat16

    x = x_ref[...].astype(bf16)                                       # (TB, 5)

    # embed + self-attention + residual, pre-fused on host into one affine map (bf16 MXU).
    h_res = jnp.dot(x, wpre_ref[...], preferred_element_type=f32) + bpre_ref[...]
    h1 = _layernorm(h_res, ln1g_ref[...], ln1b_ref[...])              # (TB, 64), f32

    # Feed-forward: ReLU(h1 @ W1 + b1) @ W2 + b2, chunked over DIM_FF (bf16 MXU, f32 acc).
    h1_bf = h1.astype(bf16)
    acc = jnp.zeros((h1.shape[0], D_MODEL), f32)
    for c in range(DIM_FF // FF_CHUNK):                               # 4 static chunks
        lo = c * FF_CHUNK
        hh = jnp.dot(h1_bf, w1_ref[:, lo:lo + FF_CHUNK],
                     preferred_element_type=f32)
        hh = jnp.maximum(hh + b1_ref[:, lo:lo + FF_CHUNK], 0.0)       # ReLU
        acc = acc + jnp.dot(hh.astype(bf16), w2_ref[lo:lo + FF_CHUNK, :],
                            preferred_element_type=f32)
    ff = acc + b2_ref[...]

    h2 = _layernorm(h1 + ff, ln2g_ref[...], ln2b_ref[...])
    h3 = _layernorm(h2, lnfg_ref[...], lnfb_ref[...])                 # final self.norm

    # Fused cls+reg head: single lane-dense (TB, 128) unmasked store; sliced in the wrapper.
    out_ref[...] = (jnp.dot(h3.astype(bf16), wh_ref[...], preferred_element_type=f32)
                    + bh_ref[...])


FUSED_ORDER = [
    "w_pre", "b_pre",
    "ln1_g", "ln1_b",
    "w1", "b1", "w2", "b2",
    "ln2_g", "ln2_b",
    "lnf_g", "lnf_b",
    "w_head", "b_head",
]


def prepare_fused_params(p):
    """Host-side (trace-time) fusion of the seq_len==1 model into kernel operands."""
    f32 = jnp.float32
    bf16 = jnp.bfloat16
    # attention with one key: softmax == 1 -> output == V @ Wo + (bv @ Wo + bo)
    w_attn = p["wv"] @ p["wo"]                                        # (64, 64)
    b_attn = p["bv"] @ p["wo"] + p["bo"]                              # (1, 64)
    m = jnp.eye(D_MODEL, dtype=f32) + w_attn                          # residual + attn
    w_pre = p["embed_w"] @ m                                          # (5, 64)
    b_pre = p["embed_b"] @ m + b_attn                                 # (1, 64)

    w_head = jnp.zeros((D_MODEL, HEAD_PAD), f32)
    w_head = w_head.at[:, :NUM_BINS].set(p["wc"])
    w_head = w_head.at[:, NUM_BINS:NUM_BINS + REG_DIM].set(p["wr"])
    b_head = jnp.zeros((1, HEAD_PAD), f32)
    b_head = b_head.at[:, :NUM_BINS].set(p["bc"])
    b_head = b_head.at[:, NUM_BINS:NUM_BINS + REG_DIM].set(p["br"])

    return {
        "w_pre": w_pre.astype(bf16), "b_pre": b_pre,
        "ln1_g": p["ln1_g"], "ln1_b": p["ln1_b"],
        "w1": p["w1"].astype(bf16), "b1": p["b1"],
        "w2": p["w2"].astype(bf16), "b2": p["b2"],
        "ln2_g": p["ln2_g"], "ln2_b": p["ln2_b"],
        "lnf_g": p["lnf_g"], "lnf_b": p["lnf_b"],
        "w_head": w_head.astype(bf16), "b_head": b_head,
    }


def choose_tile_b(batch, max_tile=MAX_TILE_B, min_tile=MIN_TILE_B):
    """Pick a batch tile: as large as allowed, but with >= 2 grid steps when the batch
    permits so v7x's two TensorCores both get work (dimension_semantics=('parallel',))."""
    half = pl.cdiv(pl.cdiv(batch, 2), min_tile) * min_tile   # ~ceil(B/2) rounded to 256
    return int(max(min_tile, min(max_tile, half)))


@functools.partial(jax.jit, static_argnames=("tile_b",))
def fast_transformer_forward(x, fused, tile_b=MIN_TILE_B):
    B = x.shape[0]
    b_pad = pl.cdiv(B, tile_b) * tile_b
    x = x.astype(jnp.float32)
    if b_pad != B:
        # batch-only zero pad (no 5->8 feature pad: 5 == full last dim is a legal block dim)
        x = jnp.concatenate([x, jnp.zeros((b_pad - B, D_INPUT), jnp.float32)], axis=0)

    weight_args = [fused[name] for name in FUSED_ORDER]
    resident = lambda i: (0, 0)   # same block every grid step -> fetched once, stays in VMEM

    out = pl.pallas_call(
        fast_transformer_kernel,
        out_shape=jax.ShapeDtypeStruct((b_pad, HEAD_PAD), jnp.float32),
        grid_spec=pltpu.PrefetchScalarGridSpec(
            num_scalar_prefetch=0,
            grid=(b_pad // tile_b,),
            in_specs=[pl.BlockSpec((tile_b, D_INPUT), lambda i: (i, 0))]
                     + [pl.BlockSpec(a.shape, resident) for a in weight_args],
            out_specs=pl.BlockSpec((tile_b, HEAD_PAD), lambda i: (i, 0)),
        ),
        compiler_params=pltpu.CompilerParams(
            dimension_semantics=("parallel",),        # shards batch tiles across TCs on v7x
            vmem_limit_bytes=48 * 1024 * 1024,        # > 32 MiB scoped default, < v7x 64 MiB
        ),
    )(x, *weight_args)

    return out[:B, :NUM_BINS], out[:B, NUM_BINS:NUM_BINS + REG_DIM]


def reference_forward(x, p):
    """Pure-JAX reference of the same math (mirrors the bf16 FF matmuls)."""
    f32, bf16 = jnp.float32, jnp.bfloat16
    h = x @ p["embed_w"] + p["embed_b"]
    attn_out = (h @ p["wv"] + p["bv"]) @ p["wo"] + p["bo"]   # seq_len=1 => attention == V
    h1 = _layernorm(h + attn_out, p["ln1_g"], p["ln1_b"])
    hh = jnp.maximum(
        jnp.dot(h1.astype(bf16), p["w1"].astype(bf16), preferred_element_type=f32)
        + p["b1"], 0.0)
    ff = jnp.dot(hh.astype(bf16), p["w2"].astype(bf16), preferred_element_type=f32) + p["b2"]
    h2 = _layernorm(h1 + ff, p["ln2_g"], p["ln2_b"])
    h3 = _layernorm(h2, p["lnf_g"], p["lnf_b"])
    return h3 @ p["wc"] + p["bc"], h3 @ p["wr"] + p["br"]


def init_params(key):
    def dense(k, n_in, n_out, scale=0.1):
        kw, kb = jax.random.split(k)
        w = jax.random.normal(kw, (n_in, n_out), jnp.float32) * scale
        b = jax.random.normal(kb, (1, n_out), jnp.float32) * scale
        return w, b

    keys = jax.random.split(key, 7)
    p = {}
    p["embed_w"], p["embed_b"] = dense(keys[0], D_INPUT, D_MODEL)
    # Q/K projections of the MHA in_proj are omitted: with seq_len==1 they do not affect
    # the output (softmax over a single key is exactly 1).
    p["wv"], p["bv"] = dense(keys[1], D_MODEL, D_MODEL)
    p["wo"], p["bo"] = dense(keys[2], D_MODEL, D_MODEL)
    p["w1"], p["b1"] = dense(keys[3], D_MODEL, DIM_FF)
    p["w2"], p["b2"] = dense(keys[4], DIM_FF, D_MODEL)
    p["wc"], p["bc"] = dense(keys[5], D_MODEL, NUM_BINS)
    p["wr"], p["br"] = dense(keys[6], D_MODEL, REG_DIM)
    # LayerNorm params: PyTorch default init (gamma=1, beta=0).
    for name in ("ln1", "ln2", "lnf"):
        p[f"{name}_g"] = jnp.ones((1, D_MODEL), jnp.float32)
        p[f"{name}_b"] = jnp.zeros((1, D_MODEL), jnp.float32)
    return p


if __name__ == "__main__":
    key = jax.random.PRNGKey(0)
    kx, kp = jax.random.split(key)

    B = 384                 # small; not a multiple of the tile (tests batch pad) and > 1 tile
    x = jax.random.normal(kx, (B, D_INPUT), jnp.float32)
    params = init_params(kp)
    fused = prepare_fused_params(params)

    tile_b = choose_tile_b(B)          # -> 256 here: 2 grid steps (both v7x TCs busy)
    cls_out, reg_out = fast_transformer_forward(x, fused, tile_b=tile_b)
    jax.block_until_ready((cls_out, reg_out))

    cls_ref, reg_ref = reference_forward(x, params)
    assert cls_out.shape == (B, NUM_BINS) and reg_out.shape == (B, REG_DIM)
    assert jnp.allclose(cls_out, cls_ref, rtol=2e-2, atol=2e-2)
    assert jnp.allclose(reg_out, reg_ref, rtol=2e-2, atol=2e-2)

    print("KERNEL_OK")
</pallas_src>

<mosaic_0001>
module attributes {stable_mosaic.version = 11 : i64} {
  func.func @fast_transformer_kernel(%arg0: i32, %arg1: memref<256x5xf32, #tpu.memory_space<vmem>>, %arg2: memref<5x64xbf16, #tpu.memory_space<vmem>>, %arg3: memref<1x64xf32, #tpu.memory_space<vmem>>, %arg4: memref<1x64xf32, #tpu.memory_space<vmem>>, %arg5: memref<1x64xf32, #tpu.memory_space<vmem>>, %arg6: memref<64x2048xbf16, #tpu.memory_space<vmem>>, %arg7: memref<1x2048xf32, #tpu.memory_space<vmem>>, %arg8: memref<2048x64xbf16, #tpu.memory_space<vmem>>, %arg9: memref<1x64xf32, #tpu.memory_space<vmem>>, %arg10: memref<1x64xf32, #tpu.memory_space<vmem>>, %arg11: memref<1x64xf32, #tpu.memory_space<vmem>>, %arg12: memref<1x64xf32, #tpu.memory_space<vmem>>, %arg13: memref<1x64xf32, #tpu.memory_space<vmem>>, %arg14: memref<64x128xbf16, #tpu.memory_space<vmem>>, %arg15: memref<1x128xf32, #tpu.memory_space<vmem>>, %arg16: memref<256x128xf32, #tpu.memory_space<vmem>>) attributes {dimension_semantics = [#tpu.dimension_semantics<parallel>], iteration_bounds = array<i64: 2>, scalar_prefetch = 0 : i64, scratch_operands = 0 : i64, tpu.core_type = #tpu.core_type<tc>, window_params = [{transform_indices = @transform_0, window_bounds = array<i64: 256, 5>}, {pipeline_mode = #tpu.pipeline_mode<synchronous>, transform_indices = @transform_1, window_bounds = array<i64: 5, 64>}, {pipeline_mode = #tpu.pipeline_mode<synchronous>, transform_indices = @transform_2, window_bounds = array<i64: 1, 64>}, {pipeline_mode = #tpu.pipeline_mode<synchronous>, transform_indices = @transform_3, window_bounds = array<i64: 1, 64>}, {pipeline_mode = #tpu.pipeline_mode<synchronous>, transform_indices = @transform_4, window_bounds = array<i64: 1, 64>}, {pipeline_mode = #tpu.pipeline_mode<synchronous>, transform_indices = @transform_5, window_bounds = array<i64: 64, 2048>}, {pipeline_mode = #tpu.pipeline_mode<synchronous>, transform_indices = @transform_6, window_bounds = array<i64: 1, 2048>}, {pipeline_mode = #tpu.pipeline_mode<synchronous>, transform_indices = @transform_7, window_bounds = array<i64: 2048, 64>}, {pipeline_mode = #tpu.pipeline_mode<synchronous>, transform_indices = @transform_8, window_bounds = array<i64: 1, 64>}, {pipeline_mode = #tpu.pipeline_mode<synchronous>, transform_indices = @transform_9, window_bounds = array<i64: 1, 64>}, {pipeline_mode = #tpu.pipeline_mode<synchronous>, transform_indices = @transform_10, window_bounds = array<i64: 1, 64>}, {pipeline_mode = #tpu.pipeline_mode<synchronous>, transform_indices = @transform_11, window_bounds = array<i64: 1, 64>}, {pipeline_mode = #tpu.pipeline_mode<synchronous>, transform_indices = @transform_12, window_bounds = array<i64: 1, 64>}, {pipeline_mode = #tpu.pipeline_mode<synchronous>, transform_indices = @transform_13, window_bounds = array<i64: 64, 128>}, {pipeline_mode = #tpu.pipeline_mode<synchronous>, transform_indices = @transform_14, window_bounds = array<i64: 1, 128>}, {transform_indices = @transform_15, window_bounds = array<i64: 256, 128>}]} {
    %c0 = arith.constant 0 : index
    %c0_0 = arith.constant 0 : index
    %0 = vector.load %arg1[%c0, %c0_0] : memref<256x5xf32, #tpu.memory_space<vmem>>, vector<256x5xf32>
    %1 = arith.truncf %0 : vector<256x5xf32> to vector<256x5xbf16>
    %c0_1 = arith.constant 0 : index
    %c0_2 = arith.constant 0 : index
    %2 = vector.load %arg2[%c0_1, %c0_2] : memref<5x64xbf16, #tpu.memory_space<vmem>>, vector<5x64xbf16>
    %cst = arith.constant dense<0.000000e+00> : vector<256x64xf32>
    %3 = tpu.matmul %1, %2, %cst {dimension_numbers = #tpu.dot_dimension_numbers<[1], [0], [0], [1], [0, 0, 1, 1], [], []>} : vector<256x5xbf16>, vector<5x64xbf16>, vector<256x64xf32> -> vector<256x64xf32>
    %c0_3 = arith.constant 0 : index
    %c0_4 = arith.constant 0 : index
    %4 = vector.load %arg3[%c0_3, %c0_4] : memref<1x64xf32, #tpu.memory_space<vmem>>, vector<1x64xf32>
    %5 = vector.broadcast %4 : vector<1x64xf32> to vector<256x64xf32>
    %6 = arith.addf %3, %5 : vector<256x64xf32>
    %c0_5 = arith.constant 0 : index
    %c0_6 = arith.constant 0 : index
    %7 = vector.load %arg4[%c0_5, %c0_6] : memref<1x64xf32, #tpu.memory_space<vmem>>, vector<1x64xf32>
    %c0_7 = arith.constant 0 : index
    %c0_8 = arith.constant 0 : index
    %8 = vector.load %arg5[%c0_7, %c0_8] : memref<1x64xf32, #tpu.memory_space<vmem>>, vector<1x64xf32>
    %cst_9 = arith.constant dense<0.000000e+00> : vector<256xf32>
    %9 = vector.multi_reduction <add>, %6, %cst_9 [1] : vector<256x64xf32> to vector<256xf32>
    %10 = vector.shape_cast %9 : vector<256xf32> to vector<256x1xf32>
    %cst_10 = arith.constant 6.400000e+01 : f32
    %11 = vector.broadcast %cst_10 : f32 to vector<256x1xf32>
    %12 = arith.divf %10, %11 : vector<256x1xf32>
    %13 = vector.broadcast %12 : vector<256x1xf32> to vector<256x64xf32>
    %14 = arith.subf %6, %13 : vector<256x64xf32>
    %15 = arith.mulf %14, %14 : vector<256x64xf32>
    %cst_11 = arith.constant dense<0.000000e+00> : vector<256xf32>
    %16 = vector.multi_reduction <add>, %15, %cst_11 [1] : vector<256x64xf32> to vector<256xf32>
    %17 = vector.shape_cast %16 : vector<256xf32> to vector<256x1xf32>
    %cst_12 = arith.constant 6.400000e+01 : f32
    %18 = vector.broadcast %cst_12 : f32 to vector<256x1xf32>
    %19 = arith.divf %17, %18 : vector<256x1xf32>
    %20 = vector.broadcast %12 : vector<256x1xf32> to vector<256x64xf32>
    %21 = arith.subf %6, %20 : vector<256x64xf32>
    %cst_13 = arith.constant 9.99999974E-6 : f32
    %22 = vector.broadcast %cst_13 : f32 to vector<256x1xf32>
    %23 = arith.addf %19, %22 : vector<256x1xf32>
    %24 = math.rsqrt %23 : vector<256x1xf32>
    %25 = vector.broadcast %24 : vector<256x1xf32> to vector<256x64xf32>
    %26 = arith.mulf %21, %25 : vector<256x64xf32>
    %27 = vector.broadcast %7 : vector<1x64xf32> to vector<256x64xf32>
    %28 = arith.mulf %26, %27 : vector<256x64xf32>
    %29 = vector.broadcast %8 : vector<1x64xf32> to vector<256x64xf32>
    %30 = arith.addf %28, %29 : vector<256x64xf32>
    %31 = arith.truncf %30 : vector<256x64xf32> to vector<256x64xbf16>
    %cst_14 = arith.constant 0.000000e+00 : f32
    %32 = vector.broadcast %cst_14 : f32 to vector<256x64xf32>
    %c0_15 = arith.constant 0 : index
    %c0_16 = arith.constant 0 : index
    %33 = vector.load %arg6[%c0_15, %c0_16] : memref<64x2048xbf16, #tpu.memory_space<vmem>>, vector<64x512xbf16>
    %cst_17 = arith.constant dense<0.000000e+00> : vector<256x512xf32>
    %34 = tpu.matmul %31, %33, %cst_17 {dimension_numbers = #tpu.dot_dimension_numbers<[1], [0], [0], [1], [0, 0, 1, 1], [], []>} : vector<256x64xbf16>, vector<64x512xbf16>, vector<256x512xf32> -> vector<256x512xf32>
    %c0_18 = arith.constant 0 : index
    %c0_19 = arith.constant 0 : index
    %35 = vector.load %arg7[%c0_18, %c0_19] : memref<1x2048xf32, #tpu.memory_space<vmem>>, vector<1x512xf32>
    %36 = vector.broadcast %35 : vector<1x512xf32> to vector<256x512xf32>
    %37 = arith.addf %34, %36 : vector<256x512xf32>
    %cst_20 = arith.constant 0.000000e+00 : f32
    %38 = vector.broadcast %cst_20 : f32 to vector<256x512xf32>
    %39 = arith.maximumf %37, %38 : vector<256x512xf32>
    %40 = arith.truncf %39 : vector<256x512xf32> to vector<256x512xbf16>
    %c0_21 = arith.constant 0 : index
    %c0_22 = arith.constant 0 : index
    %41 = vector.load %arg8[%c0_21, %c0_22] : memref<2048x64xbf16, #tpu.memory_space<vmem>>, vector<512x64xbf16>
    %cst_23 = arith.constant dense<0.000000e+00> : vector<256x64xf32>
    %42 = tpu.matmul %40, %41, %cst_23 {dimension_numbers = #tpu.dot_dimension_numbers<[1], [0], [0], [1], [0, 0, 1, 1], [], []>} : vector<256x512xbf16>, vector<512x64xbf16>, vector<256x64xf32> -> vector<256x64xf32>
    %43 = arith.addf %32, %42 : vector<256x64xf32>
    %c0_24 = arith.constant 0 : index
    %c512 = arith.constant 512 : index
    %44 = vector.load %arg6[%c0_24, %c512] : memref<64x2048xbf16, #tpu.memory_space<vmem>>, vector<64x512xbf16>
    %cst_25 = arith.constant dense<0.000000e+00> : vector<256x512xf32>
    %45 = tpu.matmul %31, %44, %cst_25 {dimension_numbers = #tpu.dot_dimension_numbers<[1], [0], [0], [1], [0, 0, 1, 1], [], []>} : vector<256x64xbf16>, vector<64x512xbf16>, vector<256x512xf32> -> vector<256x512xf32>
    %c0_26 = arith.constant 0 : index
    %c512_27 = arith.constant 512 : index
    %46 = vector.load %arg7[%c0_26, %c512_27] : memref<1x2048xf32, #tpu.memory_space<vmem>>, vector<1x512xf32>
    %47 = vector.broadcast %46 : vector<1x512xf32> to vector<256x512xf32>
    %48 = arith.addf %45, %47 : vector<256x512xf32>
    %cst_28 = arith.constant 0.000000e+00 : f32
    %49 = vector.broadcast %cst_28 : f32 to vector<256x512xf32>
    %50 = arith.maximumf %48, %49 : vector<256x512xf32>
    %51 = arith.truncf %50 : vector<256x512xf32> to vector<256x512xbf16>
    %c512_29 = arith.constant 512 : index
    %c0_30 = arith.constant 0 : index
    %52 = vector.load %arg8[%c512_29, %c0_30] : memref<2048x64xbf16, #tpu.memory_space<vmem>>, vector<512x64xbf16>
    %cst_31 = arith.constant dense<0.000000e+00> : vector<256x64xf32>
    %53 = tpu.matmul %51, %52, %cst_31 {dimension_numbers = #tpu.dot_dimension_numbers<[1], [0], [0], [1], [0, 0, 1, 1], [], []>} : vector<256x512xbf16>, vector<512x64xbf16>, vector<256x64xf32> -> vector<256x64xf32>
    %54 = arith.addf %43, %53 : vector<256x64xf32>
    %c0_32 = arith.constant 0 : index
    %c1024 = arith.constant 1024 : index
    %55 = vector.load %arg6[%c0_32, %c1024] : memref<64x2048xbf16, #tpu.memory_space<vmem>>, vector<64x512xbf16>
    %cst_33 = arith.constant dense<0.000000e+00> : vector<256x512xf32>
    %56 = tpu.matmul %31, %55, %cst_33 {dimension_numbers = #tpu.dot_dimension_numbers<[1], [0], [0], [1], [0, 0, 1, 1], [], []>} : vector<256x64xbf16>, vector<64x512xbf16>, vector<256x512xf32> -> vector<256x512xf32>
    %c0_34 = arith.constant 0 : index
    %c1024_35 = arith.constant 1024 : index
    %57 = vector.load %arg7[%c0_34, %c1024_35] : memref<1x2048xf32, #tpu.memory_space<vmem>>, vector<1x512xf32>
    %58 = vector.broadcast %57 : vector<1x512xf32> to vector<256x512xf32>
    %59 = arith.addf %56, %58 : vector<256x512xf32>
    %cst_36 = arith.constant 0.000000e+00 : f32
    %60 = vector.broadcast %cst_36 : f32 to vector<256x512xf32>
    %61 = arith.maximumf %59, %60 : vector<256x512xf32>
    %62 = arith.truncf %61 : vector<256x512xf32> to vector<256x512xbf16>
    %c1024_37 = arith.constant 1024 : index
    %c0_38 = arith.constant 0 : index
    %63 = vector.load %arg8[%c1024_37, %c0_38] : memref<2048x64xbf16, #tpu.memory_space<vmem>>, vector<512x64xbf16>
    %cst_39 = arith.constant dense<0.000000e+00> : vector<256x64xf32>
    %64 = tpu.matmul %62, %63, %cst_39 {dimension_numbers = #tpu.dot_dimension_numbers<[1], [0], [0], [1], [0, 0, 1, 1], [], []>} : vector<256x512xbf16>, vector<512x64xbf16>, vector<256x64xf32> -> vector<256x64xf32>
    %65 = arith.addf %54, %64 : vector<256x64xf32>
    %c0_40 = arith.constant 0 : index
    %c1536 = arith.constant 1536 : index
    %66 = vector.load %arg6[%c0_40, %c1536] : memref<64x2048xbf16, #tpu.memory_space<vmem>>, vector<64x512xbf16>
    %cst_41 = arith.constant dense<0.000000e+00> : vector<256x512xf32>
    %67 = tpu.matmul %31, %66, %cst_41 {dimension_numbers = #tpu.dot_dimension_numbers<[1], [0], [0], [1], [0, 0, 1, 1], [], []>} : vector<256x64xbf16>, vector<64x512xbf16>, vector<256x512xf32> -> vector<256x512xf32>
    %c0_42 = arith.constant 0 : index
    %c1536_43 = arith.constant 1536 : index
    %68 = vector.load %arg7[%c0_42, %c1536_43] : memref<1x2048xf32, #tpu.memory_space<vmem>>, vector<1x512xf32>
    %69 = vector.broadcast %68 : vector<1x512xf32> to vector<256x512xf32>
    %70 = arith.addf %67, %69 : vector<256x512xf32>
    %cst_44 = arith.constant 0.000000e+00 : f32
    %71 = vector.broadcast %cst_44 : f32 to vector<256x512xf32>
    %72 = arith.maximumf %70, %71 : vector<256x512xf32>
    %73 = arith.truncf %72 : vector<256x512xf32> to vector<256x512xbf16>
    %c1536_45 = arith.constant 1536 : index
    %c0_46 = arith.constant 0 : index
    %74 = vector.load %arg8[%c1536_45, %c0_46] : memref<2048x64xbf16, #tpu.memory_space<vmem>>, vector<512x64xbf16>
    %cst_47 = arith.constant dense<0.000000e+00> : vector<256x64xf32>
    %75 = tpu.matmul %73, %74, %cst_47 {dimension_numbers = #tpu.dot_dimension_numbers<[1], [0], [0], [1], [0, 0, 1, 1], [], []>} : vector<256x512xbf16>, vector<512x64xbf16>, vector<256x64xf32> -> vector<256x64xf32>
    %76 = arith.addf %65, %75 : vector<256x64xf32>
    %c0_48 = arith.constant 0 : index
    %c0_49 = arith.constant 0 : index
    %77 = vector.load %arg9[%c0_48, %c0_49] : memref<1x64xf32, #tpu.memory_space<vmem>>, vector<1x64xf32>
    %78 = vector.broadcast %77 : vector<1x64xf32> to vector<256x64xf32>
    %79 = arith.addf %76, %78 : vector<256x64xf32>
    %80 = arith.addf %30, %79 : vector<256x64xf32>
    %c0_50 = arith.constant 0 : index
    %c0_51 = arith.constant 0 : index
    %81 = vector.load %arg10[%c0_50, %c0_51] : memref<1x64xf32, #tpu.memory_space<vmem>>, vector<1x64xf32>
    %c0_52 = arith.constant 0 : index
    %c0_53 = arith.constant 0 : index
    %82 = vector.load %arg11[%c0_52, %c0_53] : memref<1x64xf32, #tpu.memory_space<vmem>>, vector<1x64xf32>
    %cst_54 = arith.constant dense<0.000000e+00> : vector<256xf32>
    %83 = vector.multi_reduction <add>, %80, %cst_54 [1] : vector<256x64xf32> to vector<256xf32>
    %84 = vector.shape_cast %83 : vector<256xf32> to vector<256x1xf32>
    %cst_55 = arith.constant 6.400000e+01 : f32
    %85 = vector.broadcast %cst_55 : f32 to vector<256x1xf32>
    %86 = arith.divf %84, %85 : vector<256x1xf32>
    %87 = vector.broadcast %86 : vector<256x1xf32> to vector<256x64xf32>
    %88 = arith.subf %80, %87 : vector<256x64xf32>
    %89 = arith.mulf %88, %88 : vector<256x64xf32>
    %cst_56 = arith.constant dense<0.000000e+00> : vector<256xf32>
    %90 = vector.multi_reduction <add>, %89, %cst_56 [1] : vector<256x64xf32> to vector<256xf32>
    %91 = vector.shape_cast %90 : vector<256xf32> to vector<256x1xf32>
    %cst_57 = arith.constant 6.400000e+01 : f32
    %92 = vector.broadcast %cst_57 : f32 to vector<256x1xf32>
    %93 = arith.divf %91, %92 : vector<256x1xf32>
    %94 = vector.broadcast %86 : vector<256x1xf32> to vector<256x64xf32>
    %95 = arith.subf %80, %94 : vector<256x64xf32>
    %cst_58 = arith.constant 9.99999974E-6 : f32
    %96 = vector.broadcast %cst_58 : f32 to vector<256x1xf32>
    %97 = arith.addf %93, %96 : vector<256x1xf32>
    %98 = math.rsqrt %97 : vector<256x1xf32>
    %99 = vector.broadcast %98 : vector<256x1xf32> to vector<256x64xf32>
    %100 = arith.mulf %95, %99 : vector<256x64xf32>
    %101 = vector.broadcast %81 : vector<1x64xf32> to vector<256x64xf32>
    %102 = arith.mulf %100, %101 : vector<256x64xf32>
    %103 = vector.broadcast %82 : vector<1x64xf32> to vector<256x64xf32>
    %104 = arith.addf %102, %103 : vector<256x64xf32>
    %c0_59 = arith.constant 0 : index
    %c0_60 = arith.constant 0 : index
    %105 = vector.load %arg12[%c0_59, %c0_60] : memref<1x64xf32, #tpu.memory_space<vmem>>, vector<1x64xf32>
    %c0_61 = arith.constant 0 : index
    %c0_62 = arith.constant 0 : index
    %106 = vector.load %arg13[%c0_61, %c0_62] : memref<1x64xf32, #tpu.memory_space<vmem>>, vector<1x64xf32>
    %cst_63 = arith.constant dense<0.000000e+00> : vector<256xf32>
    %107 = vector.multi_reduction <add>, %104, %cst_63 [1] : vector<256x64xf32> to vector<256xf32>
    %108 = vector.shape_cast %107 : vector<256xf32> to vector<256x1xf32>
    %cst_64 = arith.constant 6.400000e+01 : f32
    %109 = vector.broadcast %cst_64 : f32 to vector<256x1xf32>
    %110 = arith.divf %108, %109 : vector<256x1xf32>
    %111 = vector.broadcast %110 : vector<256x1xf32> to vector<256x64xf32>
    %112 = arith.subf %104, %111 : vector<256x64xf32>
    %113 = arith.mulf %112, %112 : vector<256x64xf32>
    %cst_65 = arith.constant dense<0.000000e+00> : vector<256xf32>
    %114 = vector.multi_reduction <add>, %113, %cst_65 [1] : vector<256x64xf32> to vector<256xf32>
    %115 = vector.shape_cast %114 : vector<256xf32> to vector<256x1xf32>
    %cst_66 = arith.constant 6.400000e+01 : f32
    %116 = vector.broadcast %cst_66 : f32 to vector<256x1xf32>
    %117 = arith.divf %115, %116 : vector<256x1xf32>
    %118 = vector.broadcast %110 : vector<256x1xf32> to vector<256x64xf32>
    %119 = arith.subf %104, %118 : vector<256x64xf32>
    %cst_67 = arith.constant 9.99999974E-6 : f32
    %120 = vector.broadcast %cst_67 : f32 to vector<256x1xf32>
    %121 = arith.addf %117, %120 : vector<256x1xf32>
    %122 = math.rsqrt %121 : vector<256x1xf32>
    %123 = vector.broadcast %122 : vector<256x1xf32> to vector<256x64xf32>
    %124 = arith.mulf %119, %123 : vector<256x64xf32>
    %125 = vector.broadcast %105 : vector<1x64xf32> to vector<256x64xf32>
    %126 = arith.mulf %124, %125 : vector<256x64xf32>
    %127 = vector.broadcast %106 : vector<1x64xf32> to vector<256x64xf32>
    %128 = arith.addf %126, %127 : vector<256x64xf32>
    %129 = arith.truncf %128 : vector<256x64xf32> to vector<256x64xbf16>
    %c0_68 = arith.constant 0 : index
    %c0_69 = arith.constant 0 : index
    %130 = vector.load %arg14[%c0_68, %c0_69] : memref<64x128xbf16, #tpu.memory_space<vmem>>, vector<64x128xbf16>
    %cst_70 = arith.constant dense<0.000000e+00> : vector<256x128xf32>
    %131 = tpu.matmul %129, %130, %cst_70 {dimension_numbers = #tpu.dot_dimension_numbers<[1], [0], [0], [1], [0, 0, 1, 1], [], []>} : vector<256x64xbf16>, vector<64x128xbf16>, vector<256x128xf32> -> vector<256x128xf32>
    %c0_71 = arith.constant 0 : index
    %c0_72 = arith.constant 0 : index
    %132 = vector.load %arg15[%c0_71, %c0_72] : memref<1x128xf32, #tpu.memory_space<vmem>>, vector<1x128xf32>
    %133 = vector.broadcast %132 : vector<1x128xf32> to vector<256x128xf32>
    %134 = arith.addf %131, %133 : vector<256x128xf32>
    %c0_73 = arith.constant 0 : index
    %c0_74 = arith.constant 0 : index
    %135 = vector.load %arg16[%c0_73, %c0_74] : memref<256x128xf32, #tpu.memory_space<vmem>>, vector<256x128xf32>
    tpu.vector_store %arg16[%c0_73, %c0_74], %134 {strides = array<i32>} : memref<256x128xf32, #tpu.memory_space<vmem>>, vector<256x128xf32>,
    return
  }
  func.func @transform_0(%arg0: i32) -> (i32, i32) {
    %c0_i32 = arith.constant 0 : i32
    %c0_i32_0 = arith.constant 0 : i32
    return %arg0, %c0_i32 : i32, i32
  }
  func.func @transform_1(%arg0: i32) -> (i32, i32) {
    %c0_i32 = arith.constant 0 : i32
    %c0_i32_0 = arith.constant 0 : i32
    %c0_i32_1 = arith.constant 0 : i32
    return %c0_i32, %c0_i32_0 : i32, i32
  }
  func.func @transform_2(%arg0: i32) -> (i32, i32) {
    %c0_i32 = arith.constant 0 : i32
    %c0_i32_0 = arith.constant 0 : i32
    %c0_i32_1 = arith.constant 0 : i32
    return %c0_i32, %c0_i32_0 : i32, i32
  }
  func.func @transform_3(%arg0: i32) -> (i32, i32) {
    %c0_i32 = arith.constant 0 : i32
    %c0_i32_0 = arith.constant 0 : i32
    %c0_i32_1 = arith.constant 0 : i32
    return %c0_i32, %c0_i32_0 : i32, i32
  }
  func.func @transform_4(%arg0: i32) -> (i32, i32) {
    %c0_i32 = arith.constant 0 : i32
    %c0_i32_0 = arith.constant 0 : i32
    %c0_i32_1 = arith.constant 0 : i32
    return %c0_i32, %c0_i32_0 : i32, i32
  }
  func.func @transform_5(%arg0: i32) -> (i32, i32) {
    %c0_i32 = arith.constant 0 : i32
    %c0_i32_0 = arith.constant 0 : i32
    %c0_i32_1 = arith.constant 0 : i32
    return %c0_i32, %c0_i32_0 : i32, i32
  }
  func.func @transform_6(%arg0: i32) -> (i32, i32) {
    %c0_i32 = arith.constant 0 : i32
    %c0_i32_0 = arith.constant 0 : i32
    %c0_i32_1 = arith.constant 0 : i32
    return %c0_i32, %c0_i32_0 : i32, i32
  }
  func.func @transform_7(%arg0: i32) -> (i32, i32) {
    %c0_i32 = arith.constant 0 : i32
    %c0_i32_0 = arith.constant 0 : i32
    %c0_i32_1 = arith.constant 0 : i32
    return %c0_i32, %c0_i32_0 : i32, i32
  }
  func.func @transform_8(%arg0: i32) -> (i32, i32) {
    %c0_i32 = arith.constant 0 : i32
    %c0_i32_0 = arith.constant 0 : i32
    %c0_i32_1 = arith.constant 0 : i32
    return %c0_i32, %c0_i32_0 : i32, i32
  }
  func.func @transform_9(%arg0: i32) -> (i32, i32) {
    %c0_i32 = arith.constant 0 : i32
    %c0_i32_0 = arith.constant 0 : i32
    %c0_i32_1 = arith.constant 0 : i32
    return %c0_i32, %c0_i32_0 : i32, i32
  }
  func.func @transform_10(%arg0: i32) -> (i32, i32) {
    %c0_i32 = arith.constant 0 : i32
    %c0_i32_0 = arith.constant 0 : i32
    %c0_i32_1 = arith.constant 0 : i32
    return %c0_i32, %c0_i32_0 : i32, i32
  }
  func.func @transform_11(%arg0: i32) -> (i32, i32) {
    %c0_i32 = arith.constant 0 : i32
    %c0_i32_0 = arith.constant 0 : i32
    %c0_i32_1 = arith.constant 0 : i32
    return %c0_i32, %c0_i32_0 : i32, i32
  }
  func.func @transform_12(%arg0: i32) -> (i32, i32) {
    %c0_i32 = arith.constant 0 : i32
    %c0_i32_0 = arith.constant 0 : i32
    %c0_i32_1 = arith.constant 0 : i32
    return %c0_i32, %c0_i32_0 : i32, i32
  }
  func.func @transform_13(%arg0: i32) -> (i32, i32) {
    %c0_i32 = arith.constant 0 : i32
    %c0_i32_0 = arith.constant 0 : i32
    %c0_i32_1 = arith.constant 0 : i32
    return %c0_i32, %c0_i32_0 : i32, i32
  }
  func.func @transform_14(%arg0: i32) -> (i32, i32) {
    %c0_i32 = arith.constant 0 : i32
    %c0_i32_0 = arith.constant 0 : i32
    %c0_i32_1 = arith.constant 0 : i32
    return %c0_i32, %c0_i32_0 : i32, i32
  }
  func.func @transform_15(%arg0: i32) -> (i32, i32) {
    %c0_i32 = arith.constant 0 : i32
    %c0_i32_0 = arith.constant 0 : i32
    return %arg0, %c0_i32 : i32, i32
  }
}

</mosaic_0001>

<llo_original>
// kernel: fast_transformer_forward.1
$region0: #{fast_transformer_forward.1}
  #allocation0 [shape = 'u32[]', space=smem, size = 0x4, offset = 0x4, fixed_abs, tag = 'smem constant byte address 0x4 - core index']
  #allocation1 [shape = 'u32[72,128]{1,0:T(1,128)}', space=vmem, size = 0x9000, scoped, tag = 'internal scratch']
  %s0 = inlined_call_operand.vmem [shape: f32[512,5], index: 0, kind: input, shape index: {}]
  %s1 = inlined_call_operand.vmem [shape: bf16[5,64], index: 1, kind: input, shape index: {}]
  %s2 = inlined_call_operand.vmem [shape: f32[1,64], index: 2, kind: input, shape index: {}]
  %s3 = inlined_call_operand.vmem [shape: f32[1,64], index: 3, kind: input, shape index: {}]
  %s4 = inlined_call_operand.vmem [shape: f32[1,64], index: 4, kind: input, shape index: {}]
  %s5 = inlined_call_operand.vmem [shape: bf16[64,2048], index: 5, kind: input, shape index: {}]
  %s6 = inlined_call_operand.vmem [shape: f32[1,2048], index: 6, kind: input, shape index: {}]
  %s7 = inlined_call_operand.vmem [shape: bf16[2048,64], index: 7, kind: input, shape index: {}]
  %s8 = inlined_call_operand.vmem [shape: f32[1,64], index: 8, kind: input, shape index: {}]
  %s9 = inlined_call_operand.vmem [shape: f32[1,64], index: 9, kind: input, shape index: {}]
  %s10 = inlined_call_operand.vmem [shape: f32[1,64], index: 10, kind: input, shape index: {}]
  %s11 = inlined_call_operand.vmem [shape: f32[1,64], index: 11, kind: input, shape index: {}]
  %s12 = inlined_call_operand.vmem [shape: f32[1,64], index: 12, kind: input, shape index: {}]
  %s13 = inlined_call_operand.vmem [shape: bf16[64,128], index: 13, kind: input, shape index: {}]
  %s14 = inlined_call_operand.vmem [shape: f32[1,128], index: 14, kind: input, shape index: {}]
  %s15 = inlined_call_operand.vmem [shape: f32[512,128], index: 15, kind: output, shape index: {}]
  %s16 = sld [smem:[#allocation0]]
  $region93: #{fast_transformer_forward.1} parent=0
    _
  %s18 = ssub.s32 1, %s16
  %s19 = scalar_select 0, %s18, %s16
  loop: start=0, step=1, limit=4
  $region2: #{fast_transformer_forward.1} parent=0 // loop_pre_header
    _
  $region3: #{fast_transformer_forward.1} parent=0 // loop_header
    %s21 = sphi 0, %s25
    %p22 = scmp.ge.s32.totalorder %s21, 4
    %s31 = sphi 0, %s33
    %s34 = sphi 0, %s31
    %s35 = sphi 0, %s34
    %s51 = sphi 0, %s35
    %s55 = sphi 0, %s55
    %s57 = sphi 0, %s55
    %s58 = sphi 0, %s57
    %s72 = sphi 0, %s58
    %s76 = sphi 0, %s76
    %s78 = sphi 0, %s76
    %s79 = sphi 0, %s78
    %s93 = sphi 0, %s79
    %s97 = sphi 0, %s97
    %s99 = sphi 0, %s97
    %s100 = sphi 0, %s99
    %s114 = sphi 0, %s100
    %s118 = sphi 0, %s118
    %s120 = sphi 0, %s118
    %s121 = sphi 0, %s120
    %s135 = sphi 0, %s121
    %s139 = sphi 0, %s139
    %s141 = sphi 0, %s139
    %s142 = sphi 0, %s141
    %s156 = sphi 0, %s142
    %s160 = sphi 0, %s160
    %s162 = sphi 0, %s160
    %s163 = sphi 0, %s162
    %s177 = sphi 0, %s163
    %s181 = sphi 0, %s181
    %s183 = sphi 0, %s181
    %s184 = sphi 0, %s183
    %s198 = sphi 0, %s184
    %s202 = sphi 0, %s202
    %s204 = sphi 0, %s202
    %s205 = sphi 0, %s204
    %s219 = sphi 0, %s205
    %s223 = sphi 0, %s223
    %s225 = sphi 0, %s223
    %s226 = sphi 0, %s225
    %s240 = sphi 0, %s226
    %s244 = sphi 0, %s244
    %s246 = sphi 0, %s244
    %s247 = sphi 0, %s246
    %s261 = sphi 0, %s247
    %s265 = sphi 0, %s265
    %s267 = sphi 0, %s265
    %s268 = sphi 0, %s267
    %s282 = sphi 0, %s268
    %s286 = sphi 0, %s286
    %s288 = sphi 0, %s286
    %s289 = sphi 0, %s288
    %s303 = sphi 0, %s289
    %s307 = sphi 0, %s307
    %s309 = sphi 0, %s307
    %s310 = sphi 0, %s309
    %s324 = sphi 0, %s310
    %s328 = sphi 0, %s328
    %s330 = sphi 0, %s328
    %s331 = sphi 0, %s330
    %s345 = sphi 0, %s331
    %s351 = sphi 0, %s353
    %s354 = sphi 0, %s351
    %s355 = sphi 0, %s354
    %s371 = sphi 0, %s355
  $region4: #{fast_transformer_forward.1} parent=0 // loop_header_branch
    %24 = sbr.rel (%p22) target = $region8
  $region5: #{fast_transformer_forward.1} parent=0 // loop_body
    %s26 = ssub.s32 %s21, 1
    %s27 = ssub.s32 %s21, 2
    %s28 = sadd.s32 %s21, 1
    %s29 = ssub.s32 %s21, %s28
    %p30 = scmp.eq.s32.totalorder %s29, 0
    %s32 = sadd.s32 %s31, 1
    %s33 = scalar_select %p30, %s31, %s32
    %p36 = pneg %p30
    %p37 = scmp.eq.s32.totalorder %s21, 1
    %p38 = por %p36, %p37
    %p39 = scmp.ne.s32.totalorder %s31, %s34
    %p40 = scmp.eq.s32.totalorder %s21, 0
    %p41 = por %p39, %p40
    %p42 = scmp.ne.s32.totalorder %s31, %s34
    %p43 = scmp.eq.s32.totalorder %s26, 1
    %p44 = por %p42, %p43
    %p45 = scmp.ne.s32.totalorder %s34, %s35
    %p46 = scmp.eq.s32.totalorder %s26, 0
    %p47 = por %p45, %p46
    %p48 = scmp.ne.s32.totalorder %s34, %s35
    %p49 = scmp.eq.s32.totalorder %s27, 1
    %p50 = por %p48, %p49
    %p52 = scmp.ne.s32.totalorder %s35, %s51
    %p53 = scmp.eq.s32.totalorder %s27, 0
    %p54 = por %p52, %p53
    %s56 = sadd.s32 %s55, 1
    %p59 = scmp.eq.s32.totalorder %s21, 1
    %p60 = scmp.ne.s32.totalorder %s55, %s57
    %p61 = scmp.eq.s32.totalorder %s21, 0
    %p62 = por %p60, %p61
    %p63 = scmp.ne.s32.totalorder %s55, %s57
    %p64 = scmp.eq.s32.totalorder %s26, 1
    %p65 = por %p63, %p64
    %p66 = scmp.ne.s32.totalorder %s57, %s58
    %p67 = scmp.eq.s32.totalorder %s26, 0
    %p68 = por %p66, %p67
    %p69 = scmp.ne.s32.totalorder %s57, %s58
    %p70 = scmp.eq.s32.totalorder %s27, 1
    %p71 = por %p69, %p70
    %p73 = scmp.ne.s32.totalorder %s58, %s72
    %p74 = scmp.eq.s32.totalorder %s27, 0
    %p75 = por %p73, %p74
    %s77 = sadd.s32 %s76, 1
    %p80 = scmp.eq.s32.totalorder %s21, 1
    %p81 = scmp.ne.s32.totalorder %s76, %s78
    %p82 = scmp.eq.s32.totalorder %s21, 0
    %p83 = por %p81, %p82
    %p84 = scmp.ne.s32.totalorder %s76, %s78
    %p85 = scmp.eq.s32.totalorder %s26, 1
    %p86 = por %p84, %p85
    %p87 = scmp.ne.s32.totalorder %s78, %s79
    %p88 = scmp.eq.s32.totalorder %s26, 0
    %p89 = por %p87, %p88
    %p90 = scmp.ne.s32.totalorder %s78, %s79
    %p91 = scmp.eq.s32.totalorder %s27, 1
    %p92 = por %p90, %p91
    %p94 = scmp.ne.s32.totalorder %s79, %s93
    %p95 = scmp.eq.s32.totalorder %s27, 0
    %p96 = por %p94, %p95
    %s98 = sadd.s32 %s97, 1
    %p101 = scmp.eq.s32.totalorder %s21, 1
    %p102 = scmp.ne.s32.totalorder %s97, %s99
    %p103 = scmp.eq.s32.totalorder %s21, 0
    %p104 = por %p102, %p103
    %p105 = scmp.ne.s32.totalorder %s97, %s99
    %p106 = scmp.eq.s32.totalorder %s26, 1
    %p107 = por %p105, %p106
    %p108 = scmp.ne.s32.totalorder %s99, %s100
    %p109 = scmp.eq.s32.totalorder %s26, 0
    %p110 = por %p108, %p109
    %p111 = scmp.ne.s32.totalorder %s99, %s100
    %p112 = scmp.eq.s32.totalorder %s27, 1
    %p113 = por %p111, %p112
    %p115 = scmp.ne.s32.totalorder %s100, %s114
    %p116 = scmp.eq.s32.totalorder %s27, 0
    %p117 = por %p115, %p116
    %s119 = sadd.s32 %s118, 1
    %p122 = scmp.eq.s32.totalorder %s21, 1
    %p123 = scmp.ne.s32.totalorder %s118, %s120
    %p124 = scmp.eq.s32.totalorder %s21, 0
    %p125 = por %p123, %p124
    %p126 = scmp.ne.s32.totalorder %s118, %s120
    %p127 = scmp.eq.s32.totalorder %s26, 1
    %p128 = por %p126, %p127
    %p129 = scmp.ne.s32.totalorder %s120, %s121
    %p130 = scmp.eq.s32.totalorder %s26, 0
    %p131 = por %p129, %p130
    %p132 = scmp.ne.s32.totalorder %s120, %s121
    %p133 = scmp.eq.s32.totalorder %s27, 1
    %p134 = por %p132, %p133
    %p136 = scmp.ne.s32.totalorder %s121, %s135
    %p137 = scmp.eq.s32.totalorder %s27, 0
    %p138 = por %p136, %p137
    %s140 = sadd.s32 %s139, 1
    %p143 = scmp.eq.s32.totalorder %s21, 1
    %p144 = scmp.ne.s32.totalorder %s139, %s141
    %p145 = scmp.eq.s32.totalorder %s21, 0
    %p146 = por %p144, %p145
    %p147 = scmp.ne.s32.totalorder %s139, %s141
    %p148 = scmp.eq.s32.totalorder %s26, 1
    %p149 = por %p147, %p148
    %p150 = scmp.ne.s32.totalorder %s141, %s142
    %p151 = scmp.eq.s32.totalorder %s26, 0
    %p152 = por %p150, %p151
    %p153 = scmp.ne.s32.totalorder %s141, %s142
    %p154 = scmp.eq.s32.totalorder %s27, 1
    %p155 = por %p153, %p154
    %p157 = scmp.ne.s32.totalorder %s142, %s156
    %p158 = scmp.eq.s32.totalorder %s27, 0
    %p159 = por %p157, %p158
    %s161 = sadd.s32 %s160, 1
    %p164 = scmp.eq.s32.totalorder %s21, 1
    %p165 = scmp.ne.s32.totalorder %s160, %s162
    %p166 = scmp.eq.s32.totalorder %s21, 0
    %p167 = por %p165, %p166
    %p168 = scmp.ne.s32.totalorder %s160, %s162
    %p169 = scmp.eq.s32.totalorder %s26, 1
    %p170 = por %p168, %p169
    %p171 = scmp.ne.s32.totalorder %s162, %s163
    %p172 = scmp.eq.s32.totalorder %s26, 0
    %p173 = por %p171, %p172
    %p174 = scmp.ne.s32.totalorder %s162, %s163
    %p175 = scmp.eq.s32.totalorder %s27, 1
    %p176 = por %p174, %p175
    %p178 = scmp.ne.s32.totalorder %s163, %s177
    %p179 = scmp.eq.s32.totalorder %s27, 0
    %p180 = por %p178, %p179
    %s182 = sadd.s32 %s181, 1
    %p185 = scmp.eq.s32.totalorder %s21, 1
    %p186 = scmp.ne.s32.totalorder %s181, %s183
    %p187 = scmp.eq.s32.totalorder %s21, 0
    %p188 = por %p186, %p187
    %p189 = scmp.ne.s32.totalorder %s181, %s183
    %p190 = scmp.eq.s32.totalorder %s26, 1
    %p191 = por %p189, %p190
    %p192 = scmp.ne.s32.totalorder %s183, %s184
    %p193 = scmp.eq.s32.totalorder %s26, 0
    %p194 = por %p192, %p193
    %p195 = scmp.ne.s32.totalorder %s183, %s184
    %p196 = scmp.eq.s32.totalorder %s27, 1
    %p197 = por %p195, %p196
    %p199 = scmp.ne.s32.totalorder %s184, %s198
    %p200 = scmp.eq.s32.totalorder %s27, 0
    %p201 = por %p199, %p200
    %s203 = sadd.s32 %s202, 1
    %p206 = scmp.eq.s32.totalorder %s21, 1
    %p207 = scmp.ne.s32.totalorder %s202, %s204
    %p208 = scmp.eq.s32.totalorder %s21, 0
    %p209 = por %p207, %p208
    %p210 = scmp.ne.s32.totalorder %s202, %s204
    %p211 = scmp.eq.s32.totalorder %s26, 1
    %p212 = por %p210, %p211
    %p213 = scmp.ne.s32.totalorder %s204, %s205
    %p214 = scmp.eq.s32.totalorder %s26, 0
    %p215 = por %p213, %p214
    %p216 = scmp.ne.s32.totalorder %s204, %s205
    %p217 = scmp.eq.s32.totalorder %s27, 1
    %p218 = por %p216, %p217
    %p220 = scmp.ne.s32.totalorder %s205, %s219
    %p221 = scmp.eq.s32.totalorder %s27, 0
    %p222 = por %p220, %p221
    %s224 = sadd.s32 %s223, 1
    %p227 = scmp.eq.s32.totalorder %s21, 1
    %p228 = scmp.ne.s32.totalorder %s223, %s225
    %p229 = scmp.eq.s32.totalorder %s21, 0
    %p230 = por %p228, %p229
    %p231 = scmp.ne.s32.totalorder %s223, %s225
    %p232 = scmp.eq.s32.totalorder %s26, 1
    %p233 = por %p231, %p232
    %p234 = scmp.ne.s32.totalorder %s225, %s226
    %p235 = scmp.eq.s32.totalorder %s26, 0
    %p236 = por %p234, %p235
    %p237 = scmp.ne.s32.totalorder %s225, %s226
    %p238 = scmp.eq.s32.totalorder %s27, 1
    %p239 = por %p237, %p238
    %p241 = scmp.ne.s32.totalorder %s226, %s240
    %p242 = scmp.eq.s32.totalorder %s27, 0
    %p243 = por %p241, %p242
    %s245 = sadd.s32 %s244, 1
    %p248 = scmp.eq.s32.totalorder %s21, 1
    %p249 = scmp.ne.s32.totalorder %s244, %s246
    %p250 = scmp.eq.s32.totalorder %s21, 0
    %p251 = por %p249, %p250
    %p252 = scmp.ne.s32.totalorder %s244, %s246
    %p253 = scmp.eq.s32.totalorder %s26, 1
    %p254 = por %p252, %p253
    %p255 = scmp.ne.s32.totalorder %s246, %s247
    %p256 = scmp.eq.s32.totalorder %s26, 0
    %p257 = por %p255, %p256
    %p258 = scmp.ne.s32.totalorder %s246, %s247
    %p259 = scmp.eq.s32.totalorder %s27, 1
    %p260 = por %p258, %p259
    %p262 = scmp.ne.s32.totalorder %s247, %s261
    %p263 = scmp.eq.s32.totalorder %s27, 0
    %p264 = por %p262, %p263
    %s266 = sadd.s32 %s265, 1
    %p269 = scmp.eq.s32.totalorder %s21, 1
    %p270 = scmp.ne.s32.totalorder %s265, %s267
    %p271 = scmp.eq.s32.totalorder %s21, 0
    %p272 = por %p270, %p271
    %p273 = scmp.ne.s32.totalorder %s265, %s267
    %p274 = scmp.eq.s32.totalorder %s26, 1
    %p275 = por %p273, %p274
    %p276 = scmp.ne.s32.totalorder %s267, %s268
    %p277 = scmp.eq.s32.totalorder %s26, 0
    %p278 = por %p276, %p277
    %p279 = scmp.ne.s32.totalorder %s267, %s268
    %p280 = scmp.eq.s32.totalorder %s27, 1
    %p281 = por %p279, %p280
    %p283 = scmp.ne.s32.totalorder %s268, %s282
    %p284 = scmp.eq.s32.totalorder %s27, 0
    %p285 = por %p283, %p284
    %s287 = sadd.s32 %s286, 1
    %p290 = scmp.eq.s32.totalorder %s21, 1
    %p291 = scmp.ne.s32.totalorder %s286, %s288
    %p292 = scmp.eq.s32.totalorder %s21, 0
    %p293 = por %p291, %p292
    %p294 = scmp.ne.s32.totalorder %s286, %s288
    %p295 = scmp.eq.s32.totalorder %s26, 1
    %p296 = por %p294, %p295
    %p297 = scmp.ne.s32.totalorder %s288, %s289
    %p298 = scmp.eq.s32.totalorder %s26, 0
    %p299 = por %p297, %p298
    %p300 = scmp.ne.s32.totalorder %s288, %s289
    %p301 = scmp.eq.s32.totalorder %s27, 1
    %p302 = por %p300, %p301
    %p304 = scmp.ne.s32.totalorder %s289, %s303
    %p305 = scmp.eq.s32.totalorder %s27, 0
    %p306 = por %p304, %p305
    %s308 = sadd.s32 %s307, 1
    %p311 = scmp.eq.s32.totalorder %s21, 1
    %p312 = scmp.ne.s32.totalorder %s307, %s309
    %p313 = scmp.eq.s32.totalorder %s21, 0
    %p314 = por %p312, %p313
    %p315 = scmp.ne.s32.totalorder %s307, %s309
    %p316 = scmp.eq.s32.totalorder %s26, 1
    %p317 = por %p315, %p316
    %p318 = scmp.ne.s32.totalorder %s309, %s310
    %p319 = scmp.eq.s32.totalorder %s26, 0
    %p320 = por %p318, %p319
    %p321 = scmp.ne.s32.totalorder %s309, %s310
    %p322 = scmp.eq.s32.totalorder %s27, 1
    %p323 = por %p321, %p322
    %p325 = scmp.ne.s32.totalorder %s310, %s324
    %p326 = scmp.eq.s32.totalorder %s27, 0
    %p327 = por %p325, %p326
    %s329 = sadd.s32 %s328, 1
    %p332 = scmp.eq.s32.totalorder %s21, 1
    %p333 = scmp.ne.s32.totalorder %s328, %s330
    %p334 = scmp.eq.s32.totalorder %s21, 0
    %p335 = por %p333, %p334
    %p336 = scmp.ne.s32.totalorder %s328, %s330
    %p337 = scmp.eq.s32.totalorder %s26, 1
    %p338 = por %p336, %p337
    %p339 = scmp.ne.s32.totalorder %s330, %s331
    %p340 = scmp.eq.s32.totalorder %s26, 0
    %p341 = por %p339, %p340
    %p342 = scmp.ne.s32.totalorder %s330, %s331
    %p343 = scmp.eq.s32.totalorder %s27, 1
    %p344 = por %p342, %p343
    %p346 = scmp.ne.s32.totalorder %s331, %s345
    %p347 = scmp.eq.s32.totalorder %s27, 0
    %p348 = por %p346, %p347
    %s349 = ssub.s32 %s21, %s28
    %p350 = scmp.eq.s32.totalorder %s349, 0
    %s352 = sadd.s32 %s351, 1
    %s353 = scalar_select %p350, %s351, %s352
    %p356 = pneg %p350
    %p357 = scmp.eq.s32.totalorder %s21, 1
    %p358 = por %p356, %p357
    %p359 = scmp.ne.s32.totalorder %s351, %s354
    %p360 = scmp.eq.s32.totalorder %s21, 0
    %p361 = por %p359, %p360
    %p362 = scmp.ne.s32.totalorder %s351, %s354
    %p363 = scmp.eq.s32.totalorder %s26, 1
    %p364 = por %p362, %p363
    %p365 = scmp.ne.s32.totalorder %s354, %s355
    %p366 = scmp.eq.s32.totalorder %s26, 0
    %p367 = por %p365, %p366
    %p368 = scmp.ne.s32.totalorder %s354, %s355
    %p369 = scmp.eq.s32.totalorder %s27, 1
    %p370 = por %p368, %p369
    %p372 = scmp.ne.s32.totalorder %s355, %s371
    %p373 = scmp.eq.s32.totalorder %s27, 0
    %p374 = por %p372, %p373
    %p375 = scmp.le.s32.totalorder 1, %s21
    %p376 = scmp.lt.s32.totalorder %s21, 3
    %p377 = pnand %p375, %p376
    %p378 = pneg %p377
    // Predicated region
    $region9: #{fast_transformer_forward.1} parent=5 // pred_check
      _
    $region10: #{fast_transformer_forward.1} parent=5 // pred_check_branch
      %380 = sbr.rel (%p377) target = $region12
    $region11: #{fast_transformer_forward.1} parent=5 // pred_region
      %s381 = ssub.s32 %s21, 1
      // Predicated region
      $region13: #{fast_transformer_forward.1} parent=11 // pred_check
        %p382 = pneg %p68
      $region14: #{fast_transformer_forward.1} parent=11 // pred_check_branch
        %384 = sbr.rel (%p382) target = $region16
      $region15: #{fast_transformer_forward.1} parent=11 // pred_region
        _
      $region16: #{fast_transformer_forward.1} parent=11 // pred_fallthru
        _
      // Predicated region
      $region17: #{fast_transformer_forward.1} parent=11 // pred_check
        %p385 = pneg %p89
      $region18: #{fast_transformer_forward.1} parent=11 // pred_check_branch
        %387 = sbr.rel (%p385) target = $region20
      $region19: #{fast_transformer_forward.1} parent=11 // pred_region
        _
      $region20: #{fast_transformer_forward.1} parent=11 // pred_fallthru
        _
      // Predicated region
      $region21: #{fast_transformer_forward.1} parent=11 // pred_check
        %p388 = pneg %p110
      $region22: #{fast_transformer_forward.1} parent=11 // pred_check_branch
        %390 = sbr.rel (%p388) target = $region24
      $region23: #{fast_transformer_forward.1} parent=11 // pred_region
        _
      $region24: #{fast_transformer_forward.1} parent=11 // pred_fallthru
        _
      // Predicated region
      $region25: #{fast_transformer_forward.1} parent=11 // pred_check
        %p391 = pneg %p131
      $region26: #{fast_transformer_forward.1} parent=11 // pred_check_branch
        %393 = sbr.rel (%p391) target = $region28
      $region27: #{fast_transformer_forward.1} parent=11 // pred_region
        _
      $region28: #{fast_transformer_forward.1} parent=11 // pred_fallthru
        _
      // Predicated region
      $region29: #{fast_transformer_forward.1} parent=11 // pred_check
        %p394 = pneg %p152
      $region30: #{fast_transformer_forward.1} parent=11 // pred_check_branch
        %396 = sbr.rel (%p394) target = $region32
      $region31: #{fast_transformer_forward.1} parent=11 // pred_region
        _
      $region32: #{fast_transformer_forward.1} parent=11 // pred_fallthru
        _
      // Predicated region
      $region33: #{fast_transformer_forward.1} parent=11 // pred_check
        %p397 = pneg %p173
      $region34: #{fast_transformer_forward.1} parent=11 // pred_check_branch
        %399 = sbr.rel (%p397) target = $region36
      $region35: #{fast_transformer_forward.1} parent=11 // pred_region
        _
      $region36: #{fast_transformer_forward.1} parent=11 // pred_fallthru
        _
      // Predicated region
      $region37: #{fast_transformer_forward.1} parent=11 // pred_check
        %p400 = pneg %p194
      $region38: #{fast_transformer_forward.1} parent=11 // pred_check_branch
        %402 = sbr.rel (%p400) target = $region40
      $region39: #{fast_transformer_forward.1} parent=11 // pred_region
        _
      $region40: #{fast_transformer_forward.1} parent=11 // pred_fallthru
        _
      // Predicated region
      $region41: #{fast_transformer_forward.1} parent=11 // pred_check
        %p403 = pneg %p215
      $region42: #{fast_transformer_forward.1} parent=11 // pred_check_branch
        %405 = sbr.rel (%p403) target = $region44
      $region43: #{fast_transformer_forward.1} parent=11 // pred_region
        _
      $region44: #{fast_transformer_forward.1} parent=11 // pred_fallthru
        _
      // Predicated region
      $region45: #{fast_transformer_forward.1} parent=11 // pred_check
        %p406 = pneg %p236
      $region46: #{fast_transformer_forward.1} parent=11 // pred_check_branch
        %408 = sbr.rel (%p406) target = $region48
      $region47: #{fast_transformer_forward.1} parent=11 // pred_region
        _
      $region48: #{fast_transformer_forward.1} parent=11 // pred_fallthru
        _
      // Predicated region
      $region49: #{fast_transformer_forward.1} parent=11 // pred_check
        %p409 = pneg %p257
      $region50: #{fast_transformer_forward.1} parent=11 // pred_check_branch
        %411 = sbr.rel (%p409) target = $region52
      $region51: #{fast_transformer_forward.1} parent=11 // pred_region
        _
      $region52: #{fast_transformer_forward.1} parent=11 // pred_fallthru
        _
      // Predicated region
      $region53: #{fast_transformer_forward.1} parent=11 // pred_check
        %p412 = pneg %p278
      $region54: #{fast_transformer_forward.1} parent=11 // pred_check_branch
        %414 = sbr.rel (%p412) target = $region56
      $region55: #{fast_transformer_forward.1} parent=11 // pred_region
        _
      $region56: #{fast_transformer_forward.1} parent=11 // pred_fallthru
        _
      // Predicated region
      $region57: #{fast_transformer_forward.1} parent=11 // pred_check
        %p415 = pneg %p299
      $region58: #{fast_transformer_forward.1} parent=11 // pred_check_branch
        %417 = sbr.rel (%p415) target = $region60
      $region59: #{fast_transformer_forward.1} parent=11 // pred_region
        _
      $region60: #{fast_transformer_forward.1} parent=11 // pred_fallthru
        _
      // Predicated region
      $region61: #{fast_transformer_forward.1} parent=11 // pred_check
        %p418 = pneg %p320
      $region62: #{fast_transformer_forward.1} parent=11 // pred_check_branch
        %420 = sbr.rel (%p418) target = $region64
      $region63: #{fast_transformer_forward.1} parent=11 // pred_region
        _
      $region64: #{fast_transformer_forward.1} parent=11 // pred_fallthru
        _
      // Predicated region
      $region65: #{fast_transformer_forward.1} parent=11 // pred_check
        %p421 = pneg %p341
      $region66: #{fast_transformer_forward.1} parent=11 // pred_check_branch
        %423 = sbr.rel (%p421) target = $region68
      $region67: #{fast_transformer_forward.1} parent=11 // pred_region
        _
      $region68: #{fast_transformer_forward.1} parent=11 // pred_fallthru
        _
    $region12: #{fast_transformer_forward.1} parent=5 // pred_fallthru
      _
    %p424 = scmp.lt.s32.totalorder %s21, 2
    // Predicated region
    $region69: #{fast_transformer_forward.1} parent=5 // pred_check
      %p425 = pneg %p424
    $region70: #{fast_transformer_forward.1} parent=5 // pred_check_branch
      %427 = sbr.rel (%p425) target = $region72
    $region71: #{fast_transformer_forward.1} parent=5 // pred_region
      // Predicated region
      $region73: #{fast_transformer_forward.1} parent=71 // pred_check
        %p428 = pneg %p41
      $region74: #{fast_transformer_forward.1} parent=71 // pred_check_branch
        %430 = sbr.rel (%p428) target = $region76
      $region75: #{fast_transformer_forward.1} parent=71 // pred_region
        %s431 = smul.u32 32, %s21
        %p432 = scmp.lt.s32.totalorder %s431, 63
        %s433 = scalar_select %p432, %s431, 63
        %s434 = smul.addr %s433, 8
        %s435 = scalar_lea.vmem %s0, %s434
        %s436 = smul.u32 32, %s21
      $region76: #{fast_transformer_forward.1} parent=71 // pred_fallthru
        _
    $region72: #{fast_transformer_forward.1} parent=5 // pred_fallthru
      _
    %p437 = scmp.le.s32.totalorder 1, %s21
    %p438 = scmp.lt.s32.totalorder %s21, 3
    %p439 = pnand %p437, %p438
    %p440 = pneg %p439
    // Predicated region
    $region77: #{fast_transformer_forward.1} parent=5 // pred_check
      _
    $region78: #{fast_transformer_forward.1} parent=5 // pred_check_branch
      %442 = sbr.rel (%p439) target = $region80
    $region79: #{fast_transformer_forward.1} parent=5 // pred_region
      %s443 = ssub.s32 %s21, 1
      %s444 = smul.u32 32, %s26
      %p445 = scmp.lt.s32.totalorder %s444, 63
      %s446 = scalar_select %p445, %s444, 63
      %s447 = smul.addr %s446, 8
      %s448 = scalar_lea.vmem %s0, %s447
      %p449 = pneg %p47
      %p450 = pneg %p44
      %p451 = pneg %p68
      %p452 = pneg %p65
      %p453 = pneg %p89
      %p454 = pneg %p86
      %p455 = pneg %p110
      %p456 = pneg %p107
      %p457 = pneg %p131
      %p458 = pneg %p128
      %p459 = pneg %p152
      %p460 = pneg %p149
      %p461 = pneg %p173
      %p462 = pneg %p170
      %p463 = pneg %p194
      %p464 = pneg %p191
      %p465 = pneg %p215
      %p466 = pneg %p212
      %p467 = pneg %p236
      %p468 = pneg %p233
      %p469 = pneg %p257
      %p470 = pneg %p254
      %p471 = pneg %p278
      %p472 = pneg %p275
      %p473 = pneg %p299
      %p474 = pneg %p296
      %p475 = pneg %p320
      %p476 = pneg %p317
      %p477 = pneg %p341
      %p478 = pneg %p338
      %p479 = pneg %p367
      %p480 = pneg %p364
      %s481 = smul.u32 32, %s26
      %p482 = scmp.lt.s32.totalorder %s481, 63
      %s483 = scalar_select %p482, %s481, 63
      %s484 = smul.addr %s483, 8
      %s485 = scalar_lea.vmem %s15, %s484
      %s486 = smul.u32 32, %s26
      %p487 = scmp.lt.s32.totalorder %s486, 63
      %s488 = scalar_select %p487, %s486, 63
      %s489 = smul.addr %s488, 8
      %s490 = scalar_lea.vmem %s0, %s489
      %s491 = smul.u32 32, %s26
      %s492 = smul.u32 32, %s26
      %p493 = scmp.lt.s32.totalorder %s492, 63
      %s494 = scalar_select %p493, %s492, 63
      %s495 = smul.addr %s494, 8
      %s496 = scalar_lea.vmem %s15, %s495
      %s497 = smul.u32 32, %s26
      %v499 = vld [vmem:[%s490] sm:$0xff]
      %v500 = vld [vmem:[%s490 + $0x8] sm:$0xff]
      %v501 = vld [vmem:[%s490 + $0x10] sm:$0xff]
      %v502 = vld [vmem:[%s490 + $0x18] sm:$0xff]
      %v503 = vld [vmem:[%s490 + $0x20] sm:$0xff]
      %v504 = vld [vmem:[%s490 + $0x28] sm:$0xff]
      %v505 = vld [vmem:[%s490 + $0x30] sm:$0xff]
      %v506 = vld [vmem:[%s490 + $0x38] sm:$0xff]
      %v507 = vld [vmem:[%s490 + $0x40] sm:$0xff]
      %v508 = vld [vmem:[%s490 + $0x48] sm:$0xff]
      %v509 = vld [vmem:[%s490 + $0x50] sm:$0xff]
      %v510 = vld [vmem:[%s490 + $0x58] sm:$0xff]
      %v511 = vld [vmem:[%s490 + $0x60] sm:$0xff]
      %v512 = vld [vmem:[%s490 + $0x68] sm:$0xff]
      %v513 = vld [vmem:[%s490 + $0x70] sm:$0xff]
      %v514 = vld [vmem:[%s490 + $0x78] sm:$0xff]
      %v515 = vld [vmem:[%s490 + $0x80] sm:$0xff]
      %v516 = vld [vmem:[%s490 + $0x88] sm:$0xff]
      %v517 = vld [vmem:[%s490 + $0x90] sm:$0xff]
      %v518 = vld [vmem:[%s490 + $0x98] sm:$0xff]
      %v519 = vld [vmem:[%s490 + $0xa0] sm:$0xff]
      %v520 = vld [vmem:[%s490 + $0xa8] sm:$0xff]
      %v521 = vld [vmem:[%s490 + $0xb0] sm:$0xff]
      %v522 = vld [vmem:[%s490 + $0xb8] sm:$0xff]
      %v523 = vld [vmem:[%s490 + $0xc0] sm:$0xff]
      %v524 = vld [vmem:[%s490 + $0xc8] sm:$0xff]
      %v525 = vld [vmem:[%s490 + $0xd0] sm:$0xff]
      %v526 = vld [vmem:[%s490 + $0xd8] sm:$0xff]
      %v527 = vld [vmem:[%s490 + $0xe0] sm:$0xff]
      %v528 = vld [vmem:[%s490 + $0xe8] sm:$0xff]
      %v529 = vld [vmem:[%s490 + $0xf0] sm:$0xff]
      %v530 = vld [vmem:[%s490 + $0xf8] sm:$0xff]
      %v531 = vpack.c.bf16 %v500, %v499
      %v532 = vpack.c.bf16 %v502, %v501
      %v533 = vpack.c.bf16 %v504, %v503
      %v534 = vpack.c.bf16 %v506, %v505
      %v535 = vpack.c.bf16 %v508, %v507
      %v536 = vpack.c.bf16 %v510, %v509
      %v537 = vpack.c.bf16 %v512, %v511
      %v538 = vpack.c.bf16 %v514, %v513
      %v539 = vpack.c.bf16 %v516, %v515
      %v540 = vpack.c.bf16 %v518, %v517
      %v541 = vpack.c.bf16 %v520, %v519
      %v542 = vpack.c.bf16 %v522, %v521
      %v543 = vpack.c.bf16 %v524, %v523
      %v544 = vpack.c.bf16 %v526, %v525
      %v545 = vpack.c.bf16 %v528, %v527
      %v546 = vpack.c.bf16 %v530, %v529
      %v547 = vld [vmem:[%s1] sm:$0x7]
      %v548 = vld [vmem:[%s2] sm:$0x1]
      %v550 = vperm.slane %v548, 0
      %vm552 = vcmask 39936
      %v554 = vsel %vm552, %v531, 0
      %v557 = vsel %vm552, %v532, 0
      %v560 = vsel %vm552, %v533, 0
      %v563 = vsel %vm552, %v534, 0
      %v566 = vsel %vm552, %v535, 0
      %v569 = vsel %vm552, %v536, 0
      %v572 = vsel %vm552, %v537, 0
      %v575 = vsel %vm552, %v538, 0
      %v578 = vsel %vm552, %v539, 0
      %v581 = vsel %vm552, %v540, 0
      %v584 = vsel %vm552, %v541, 0
      %v587 = vsel %vm552, %v542, 0
      %v590 = vsel %vm552, %v543, 0
      %v593 = vsel %vm552, %v544, 0
      %v596 = vsel %vm552, %v545, 0
      %v599 = vsel %vm552, %v546, 0
      %vm601 = vcmask 1041408
      %vm602 = vcmask 1042432
      %v603 = vsel %vm601, 4294967295, 65535
      %v604 = vsel %vm602, %v603, 0
      %v606 = vand.u32 %v547, %v604
      %608 = vmatpush.bf16.msra.mxu0 0
      %609 = vmatpush.bf16.msra.mxu0 0
      %610 = vmatpush.bf16.msra.mxu0 0
      %611 = vmatpush.bf16.msra.mxu0 0
      %612 = vmatpush.bf16.msra.mxu0 0
      %613 = vmatpush.bf16.msra.mxu0 0
      %614 = vmatpush.bf16.msra.mxu0 0
      %615 = vmatpush.bf16.msra.mxu0 %v606
      %616 = vmatmul.bf16.gmra.mxu0 %v554
      %v617 = vpop.f32.mrf.mxu0
      %v618 = vadd.f32 %v550, %v617
      %v619 = vpop.f32.mrf.mxu0
      %v620 = vadd.f32 %v550, %v619
      %621 = vmatmul.bf16.gmra.mxu0 %v557
      %v622 = vpop.f32.mrf.mxu0
      %v623 = vadd.f32 %v550, %v622
      %v624 = vpop.f32.mrf.mxu0
      %v625 = vadd.f32 %v550, %v624
      %626 = vmatmul.bf16.gmra.mxu0 %v560
      %v627 = vpop.f32.mrf.mxu0
      %v628 = vadd.f32 %v550, %v627
      %v629 = vpop.f32.mrf.mxu0
      %v630 = vadd.f32 %v550, %v629
      %631 = vmatmul.bf16.gmra.mxu0 %v563
      %v632 = vpop.f32.mrf.mxu0
      %v633 = vadd.f32 %v550, %v632
      %v634 = vpop.f32.mrf.mxu0
      %v635 = vadd.f32 %v550, %v634
      %636 = vmatmul.bf16.gmra.mxu0 %v566
      %v637 = vpop.f32.mrf.mxu0
      %v638 = vadd.f32 %v550, %v637
      %v639 = vpop.f32.mrf.mxu0
      %v640 = vadd.f32 %v550, %v639
      %641 = vmatmul.bf16.gmra.mxu0 %v569
      %v642 = vpop.f32.mrf.mxu0
      %v643 = vadd.f32 %v550, %v642
      %v644 = vpop.f32.mrf.mxu0
      %v645 = vadd.f32 %v550, %v644
      %646 = vmatmul.bf16.gmra.mxu0 %v572
      %v647 = vpop.f32.mrf.mxu0
      %v648 = vadd.f32 %v550, %v647
      %v649 = vpop.f32.mrf.mxu0
      %v650 = vadd.f32 %v550, %v649
      %651 = vmatmul.bf16.gmra.mxu0 %v575
      %v652 = vpop.f32.mrf.mxu0
      %v653 = vadd.f32 %v550, %v652
      %v654 = vpop.f32.mrf.mxu0
      %v655 = vadd.f32 %v550, %v654
      %656 = vmatmul.bf16.gmra.mxu0 %v578
      %v657 = vpop.f32.mrf.mxu0
      %v658 = vadd.f32 %v550, %v657
      %v659 = vpop.f32.mrf.mxu0
      %v660 = vadd.f32 %v550, %v659
      %661 = vmatmul.bf16.gmra.mxu0 %v581
      %v662 = vpop.f32.mrf.mxu0
      %v663 = vadd.f32 %v550, %v662
      %v664 = vpop.f32.mrf.mxu0
      %v665 = vadd.f32 %v550, %v664
      %666 = vmatmul.bf16.gmra.mxu0 %v584
      %v667 = vpop.f32.mrf.mxu0
      %v668 = vadd.f32 %v550, %v667
      %v669 = vpop.f32.mrf.mxu0
      %v670 = vadd.f32 %v550, %v669
      %671 = vmatmul.bf16.gmra.mxu0 %v587
      %v672 = vpop.f32.mrf.mxu0
      %v673 = vadd.f32 %v550, %v672
      %v674 = vpop.f32.mrf.mxu0
      %v675 = vadd.f32 %v550, %v674
      %676 = vmatmul.bf16.gmra.mxu0 %v590
      %v677 = vpop.f32.mrf.mxu0
      %v678 = vadd.f32 %v550, %v677
      %v679 = vpop.f32.mrf.mxu0
      %v680 = vadd.f32 %v550, %v679
      %681 = vmatmul.bf16.gmra.mxu0 %v593
      %v682 = vpop.f32.mrf.mxu0
      %v683 = vadd.f32 %v550, %v682
      %v684 = vpop.f32.mrf.mxu0
      %v685 = vadd.f32 %v550, %v684
      %686 = vmatmul.bf16.gmra.mxu0 %v596
      %v687 = vpop.f32.mrf.mxu0
      %v688 = vadd.f32 %v550, %v687
      %v689 = vpop.f32.mrf.mxu0
      %v690 = vadd.f32 %v550, %v689
      %691 = vmatmul.bf16.gmra.mxu0 %v599
      %v692 = vpop.f32.mrf.mxu0
      %v693 = vadd.f32 %v550, %v692
      %v694 = vpop.f32.mrf.mxu0
      %v695 = vadd.f32 %v550, %v694
      %696 = vdwg.mxu0
      %v697 = vld [vmem:[%s3] sm:$0x1]
      %v698 = vld [vmem:[%s4] sm:$0x1]
      %vm699 = vcmask 523264
      %v700 = vsel %vm699, %v618, 0.0
      %701 = vadd.xlane.f32.xlu0 %v700
      %v702 = vpop.xlane.xlu0 %701
      %v703 = vsel %vm699, %v620, 0.0
      %704 = vadd.xlane.f32.xlu0 %v703
      %v705 = vpop.xlane.xlu0 %704
      %v706 = vsel %vm699, %v623, 0.0
      %707 = vadd.xlane.f32.xlu0 %v706
      %v708 = vpop.xlane.xlu0 %707
      %v709 = vsel %vm699, %v625, 0.0
      %710 = vadd.xlane.f32.xlu0 %v709
      %v711 = vpop.xlane.xlu0 %710
      %v712 = vsel %vm699, %v628, 0.0
      %713 = vadd.xlane.f32.xlu0 %v712
      %v714 = vpop.xlane.xlu0 %713
      %v715 = vsel %vm699, %v630, 0.0
      %716 = vadd.xlane.f32.xlu0 %v715
      %v717 = vpop.xlane.xlu0 %716
      %v718 = vsel %vm699, %v633, 0.0
      %719 = vadd.xlane.f32.xlu0 %v718
      %v720 = vpop.xlane.xlu0 %719
      %v721 = vsel %vm699, %v635, 0.0
      %722 = vadd.xlane.f32.xlu0 %v721
      %v723 = vpop.xlane.xlu0 %722
      %v724 = vsel %vm699, %v638, 0.0
      %725 = vadd.xlane.f32.xlu0 %v724
      %v726 = vpop.xlane.xlu0 %725
      %v727 = vsel %vm699, %v640, 0.0
      %728 = vadd.xlane.f32.xlu0 %v727
      %v729 = vpop.xlane.xlu0 %728
      %v730 = vsel %vm699, %v643, 0.0
      %731 = vadd.xlane.f32.xlu0 %v730
      %v732 = vpop.xlane.xlu0 %731
      %v733 = vsel %vm699, %v645, 0.0
      %734 = vadd.xlane.f32.xlu0 %v733
      %v735 = vpop.xlane.xlu0 %734
      %v736 = vsel %vm699, %v648, 0.0
      %737 = vadd.xlane.f32.xlu0 %v736
      %v738 = vpop.xlane.xlu0 %737
      %v739 = vsel %vm699, %v650, 0.0
      %740 = vadd.xlane.f32.xlu0 %v739
      %v741 = vpop.xlane.xlu0 %740
      %v742 = vsel %vm699, %v653, 0.0
      %743 = vadd.xlane.f32.xlu0 %v742
      %v744 = vpop.xlane.xlu0 %743
      %v745 = vsel %vm699, %v655, 0.0
      %746 = vadd.xlane.f32.xlu0 %v745
      %v747 = vpop.xlane.xlu0 %746
      %v748 = vsel %vm699, %v658, 0.0
      %749 = vadd.xlane.f32.xlu0 %v748
      %v750 = vpop.xlane.xlu0 %749
      %v751 = vsel %vm699, %v660, 0.0
      %752 = vadd.xlane.f32.xlu0 %v751
      %v753 = vpop.xlane.xlu0 %752
      %v754 = vsel %vm699, %v663, 0.0
      %755 = vadd.xlane.f32.xlu0 %v754
      %v756 = vpop.xlane.xlu0 %755
      %v757 = vsel %vm699, %v665, 0.0
      %758 = vadd.xlane.f32.xlu0 %v757
      %v759 = vpop.xlane.xlu0 %758
      %v760 = vsel %vm699, %v668, 0.0
      %761 = vadd.xlane.f32.xlu0 %v760
      %v762 = vpop.xlane.xlu0 %761
      %v763 = vsel %vm699, %v670, 0.0
      %764 = vadd.xlane.f32.xlu0 %v763
      %v765 = vpop.xlane.xlu0 %764
      %v766 = vsel %vm699, %v673, 0.0
      %767 = vadd.xlane.f32.xlu0 %v766
      %v768 = vpop.xlane.xlu0 %767
      %v769 = vsel %vm699, %v675, 0.0
      %770 = vadd.xlane.f32.xlu0 %v769
      %v771 = vpop.xlane.xlu0 %770
      %v772 = vsel %vm699, %v678, 0.0
      %773 = vadd.xlane.f32.xlu0 %v772
      %v774 = vpop.xlane.xlu0 %773
      %v775 = vsel %vm699, %v680, 0.0
      %776 = vadd.xlane.f32.xlu0 %v775
      %v777 = vpop.xlane.xlu0 %776
      %v778 = vsel %vm699, %v683, 0.0
      %779 = vadd.xlane.f32.xlu0 %v778
      %v780 = vpop.xlane.xlu0 %779
      %v781 = vsel %vm699, %v685, 0.0
      %782 = vadd.xlane.f32.xlu0 %v781
      %v783 = vpop.xlane.xlu0 %782
      %v784 = vsel %vm699, %v688, 0.0
      %785 = vadd.xlane.f32.xlu0 %v784
      %v786 = vpop.xlane.xlu0 %785
      %v787 = vsel %vm699, %v690, 0.0
      %788 = vadd.xlane.f32.xlu0 %v787
      %v789 = vpop.xlane.xlu0 %788
      %v790 = vsel %vm699, %v693, 0.0
      %791 = vadd.xlane.f32.xlu0 %v790
      %v792 = vpop.xlane.xlu0 %791
      %v793 = vsel %vm699, %v695, 0.0
      %794 = vadd.xlane.f32.xlu0 %v793
      %v795 = vpop.xlane.xlu0 %794
      %v796 = vrcp.pop 64.0
      %v797 = vmul.f32 64.0, %v796
      %v798 = vsub.f32 1.0, %v797
      %v799 = vmul.f32 %v796, %v798
      %v800 = vadd.f32 %v796, %v799
      %vm801 = vweird.f32 %v796
      %v802 = vsel %vm801, %v796, %v800
      %v803 = vmul.f32 %v702, %v802
      %v804 = vmul.f32 %v705, %v802
      %v805 = vmul.f32 %v708, %v802
      %v806 = vmul.f32 %v711, %v802
      %v807 = vmul.f32 %v714, %v802
      %v808 = vmul.f32 %v717, %v802
      %v809 = vmul.f32 %v720, %v802
      %v810 = vmul.f32 %v723, %v802
      %v811 = vmul.f32 %v726, %v802
      %v812 = vmul.f32 %v729, %v802
      %v813 = vmul.f32 %v732, %v802
      %v814 = vmul.f32 %v735, %v802
      %v815 = vmul.f32 %v738, %v802
      %v816 = vmul.f32 %v741, %v802
      %v817 = vmul.f32 %v744, %v802
      %v818 = vmul.f32 %v747, %v802
      %v819 = vmul.f32 %v750, %v802
      %v820 = vmul.f32 %v753, %v802
      %v821 = vmul.f32 %v756, %v802
      %v822 = vmul.f32 %v759, %v802
      %v823 = vmul.f32 %v762, %v802
      %v824 = vmul.f32 %v765, %v802
      %v825 = vmul.f32 %v768, %v802
      %v826 = vmul.f32 %v771, %v802
      %v827 = vmul.f32 %v774, %v802
      %v828 = vmul.f32 %v777, %v802
      %v829 = vmul.f32 %v780, %v802
      %v830 = vmul.f32 %v783, %v802
      %v831 = vmul.f32 %v786, %v802
      %v832 = vmul.f32 %v789, %v802
      %v833 = vmul.f32 %v792, %v802
      %v834 = vmul.f32 %v795, %v802
      %v835 = vsub.f32 %v618, %v803
      %v836 = vsub.f32 %v620, %v804
      %v837 = vsub.f32 %v623, %v805
      %v838 = vsub.f32 %v625, %v806
      %v839 = vsub.f32 %v628, %v807
      %v840 = vsub.f32 %v630, %v808
      %v841 = vsub.f32 %v633, %v809
      %v842 = vsub.f32 %v635, %v810
      %v843 = vsub.f32 %v638, %v811
      %v844 = vsub.f32 %v640, %v812
      %v845 = vsub.f32 %v643, %v813
      %v846 = vsub.f32 %v645, %v814
      %v847 = vsub.f32 %v648, %v815
      %v848 = vsub.f32 %v650, %v816
      %v849 = vsub.f32 %v653, %v817
      %v850 = vsub.f32 %v655, %v818
      %v851 = vsub.f32 %v658, %v819
      %v852 = vsub.f32 %v660, %v820
      %v853 = vsub.f32 %v663, %v821
      %v854 = vsub.f32 %v665, %v822
      %v855 = vsub.f32 %v668, %v823
      %v856 = vsub.f32 %v670, %v824
      %v857 = vsub.f32 %v673, %v825
      %v858 = vsub.f32 %v675, %v826
      %v859 = vsub.f32 %v678, %v827
      %v860 = vsub.f32 %v680, %v828
      %v861 = vsub.f32 %v683, %v829
      %v862 = vsub.f32 %v685, %v830
      %v863 = vsub.f32 %v688, %v831
      %v864 = vsub.f32 %v690, %v832
      %v865 = vsub.f32 %v693, %v833
      %v866 = vsub.f32 %v695, %v834
      %v867 = vmul.f32 %v835, %v835
      %v868 = vmul.f32 %v836, %v836
      %v869 = vmul.f32 %v837, %v837
      %v870 = vmul.f32 %v838, %v838
      %v871 = vmul.f32 %v839, %v839
      %v872 = vmul.f32 %v840, %v840
      %v873 = vmul.f32 %v841, %v841
      %v874 = vmul.f32 %v842, %v842
      %v875 = vmul.f32 %v843, %v843
      %v876 = vmul.f32 %v844, %v844
      %v877 = vmul.f32 %v845, %v845
      %v878 = vmul.f32 %v846, %v846
      %v879 = vmul.f32 %v847, %v847
      %v880 = vmul.f32 %v848, %v848
      %v881 = vmul.f32 %v849, %v849
      %v882 = vmul.f32 %v850, %v850
      %v883 = vmul.f32 %v851, %v851
      %v884 = vmul.f32 %v852, %v852
      %v885 = vmul.f32 %v853, %v853
      %v886 = vmul.f32 %v854, %v854
      %v887 = vmul.f32 %v855, %v855
      %v888 = vmul.f32 %v856, %v856
      %v889 = vmul.f32 %v857, %v857
      %v890 = vmul.f32 %v858, %v858
      %v891 = vmul.f32 %v859, %v859
      %v892 = vmul.f32 %v860, %v860
      %v893 = vmul.f32 %v861, %v861
      %v894 = vmul.f32 %v862, %v862
      %v895 = vmul.f32 %v863, %v863
      %v896 = vmul.f32 %v864, %v864
      %v897 = vmul.f32 %v865, %v865
      %v898 = vmul.f32 %v866, %v866
      %v899 = vsel %vm699, %v867, 0.0
      %900 = vadd.xlane.f32.xlu0 %v899
      %v901 = vpop.xlane.xlu0 %900
      %v902 = vsel %vm699, %v868, 0.0
      %903 = vadd.xlane.f32.xlu0 %v902
      %v904 = vpop.xlane.xlu0 %903
      %v905 = vsel %vm699, %v869, 0.0
      %906 = vadd.xlane.f32.xlu0 %v905
      %v907 = vpop.xlane.xlu0 %906
      %v908 = vsel %vm699, %v870, 0.0
      %909 = vadd.xlane.f32.xlu0 %v908
      %v910 = vpop.xlane.xlu0 %909
      %v911 = vsel %vm699, %v871, 0.0
      %912 = vadd.xlane.f32.xlu0 %v911
      %v913 = vpop.xlane.xlu0 %912
      %v914 = vsel %vm699, %v872, 0.0
      %915 = vadd.xlane.f32.xlu0 %v914
      %v916 = vpop.xlane.xlu0 %915
      %v917 = vsel %vm699, %v873, 0.0
      %918 = vadd.xlane.f32.xlu0 %v917
      %v919 = vpop.xlane.xlu0 %918
      %v920 = vsel %vm699, %v874, 0.0
      %921 = vadd.xlane.f32.xlu0 %v920
      %v922 = vpop.xlane.xlu0 %921
      %v923 = vsel %vm699, %v875, 0.0
      %924 = vadd.xlane.f32.xlu0 %v923
      %v925 = vpop.xlane.xlu0 %924
      %v926 = vsel %vm699, %v876, 0.0
      %927 = vadd.xlane.f32.xlu0 %v926
      %v928 = vpop.xlane.xlu0 %927
      %v929 = vsel %vm699, %v877, 0.0
      %930 = vadd.xlane.f32.xlu0 %v929
      %v931 = vpop.xlane.xlu0 %930
      %v932 = vsel %vm699, %v878, 0.0
      %933 = vadd.xlane.f32.xlu0 %v932
      %v934 = vpop.xlane.xlu0 %933
      %v935 = vsel %vm699, %v879, 0.0
      %936 = vadd.xlane.f32.xlu0 %v935
      %v937 = vpop.xlane.xlu0 %936
      %v938 = vsel %vm699, %v880, 0.0
      %939 = vadd.xlane.f32.xlu0 %v938
      %v940 = vpop.xlane.xlu0 %939
      %v941 = vsel %vm699, %v881, 0.0
      %942 = vadd.xlane.f32.xlu0 %v941
      %v943 = vpop.xlane.xlu0 %942
      %v944 = vsel %vm699, %v882, 0.0
      %945 = vadd.xlane.f32.xlu0 %v944
      %v946 = vpop.xlane.xlu0 %945
      %v947 = vsel %vm699, %v883, 0.0
      %948 = vadd.xlane.f32.xlu0 %v947
      %v949 = vpop.xlane.xlu0 %948
      %v950 = vsel %vm699, %v884, 0.0
      %951 = vadd.xlane.f32.xlu0 %v950
      %v952 = vpop.xlane.xlu0 %951
      %v953 = vsel %vm699, %v885, 0.0
      %954 = vadd.xlane.f32.xlu0 %v953
      %v955 = vpop.xlane.xlu0 %954
      %v956 = vsel %vm699, %v886, 0.0
      %957 = vadd.xlane.f32.xlu0 %v956
      %v958 = vpop.xlane.xlu0 %957
      %v959 = vsel %vm699, %v887, 0.0
      %960 = vadd.xlane.f32.xlu0 %v959
      %v961 = vpop.xlane.xlu0 %960
      %v962 = vsel %vm699, %v888, 0.0
      %963 = vadd.xlane.f32.xlu0 %v962
      %v964 = vpop.xlane.xlu0 %963
      %v965 = vsel %vm699, %v889, 0.0
      %966 = vadd.xlane.f32.xlu0 %v965
      %v967 = vpop.xlane.xlu0 %966
      %v968 = vsel %vm699, %v890, 0.0
      %969 = vadd.xlane.f32.xlu0 %v968
      %v970 = vpop.xlane.xlu0 %969
      %v971 = vsel %vm699, %v891, 0.0
      %972 = vadd.xlane.f32.xlu0 %v971
      %v973 = vpop.xlane.xlu0 %972
      %v974 = vsel %vm699, %v892, 0.0
      %975 = vadd.xlane.f32.xlu0 %v974
      %v976 = vpop.xlane.xlu0 %975
      %v977 = vsel %vm699, %v893, 0.0
      %978 = vadd.xlane.f32.xlu0 %v977
      %v979 = vpop.xlane.xlu0 %978
      %v980 = vsel %vm699, %v894, 0.0
      %981 = vadd.xlane.f32.xlu0 %v980
      %v982 = vpop.xlane.xlu0 %981
      %v983 = vsel %vm699, %v895, 0.0
      %984 = vadd.xlane.f32.xlu0 %v983
      %v985 = vpop.xlane.xlu0 %984
      %v986 = vsel %vm699, %v896, 0.0
      %987 = vadd.xlane.f32.xlu0 %v986
      %v988 = vpop.xlane.xlu0 %987
      %v989 = vsel %vm699, %v897, 0.0
      %990 = vadd.xlane.f32.xlu0 %v989
      %v991 = vpop.xlane.xlu0 %990
      %v992 = vsel %vm699, %v898, 0.0
      %993 = vadd.xlane.f32.xlu0 %v992
      %v994 = vpop.xlane.xlu0 %993
      %v995 = vmul.f32 %v901, %v802
      %v996 = vmul.f32 %v904, %v802
      %v997 = vmul.f32 %v907, %v802
      %v998 = vmul.f32 %v910, %v802
      %v999 = vmul.f32 %v913, %v802
      %v1000 = vmul.f32 %v916, %v802
      %v1001 = vmul.f32 %v919, %v802
      %v1002 = vmul.f32 %v922, %v802
      %v1003 = vmul.f32 %v925, %v802
      %v1004 = vmul.f32 %v928, %v802
      %v1005 = vmul.f32 %v931, %v802
      %v1006 = vmul.f32 %v934, %v802
      %v1007 = vmul.f32 %v937, %v802
      %v1008 = vmul.f32 %v940, %v802
      %v1009 = vmul.f32 %v943, %v802
      %v1010 = vmul.f32 %v946, %v802
      %v1011 = vmul.f32 %v949, %v802
      %v1012 = vmul.f32 %v952, %v802
      %v1013 = vmul.f32 %v955, %v802
      %v1014 = vmul.f32 %v958, %v802
      %v1015 = vmul.f32 %v961, %v802
      %v1016 = vmul.f32 %v964, %v802
      %v1017 = vmul.f32 %v967, %v802
      %v1018 = vmul.f32 %v970, %v802
      %v1019 = vmul.f32 %v973, %v802
      %v1020 = vmul.f32 %v976, %v802
      %v1021 = vmul.f32 %v979, %v802
      %v1022 = vmul.f32 %v982, %v802
      %v1023 = vmul.f32 %v985, %v802
      %v1024 = vmul.f32 %v988, %v802
      %v1025 = vmul.f32 %v991, %v802
      %v1026 = vmul.f32 %v994, %v802
      %v1027 = vadd.f32 %v995, 1e-05
      %v1028 = vadd.f32 %v996, 1e-05
      %v1029 = vadd.f32 %v997, 1e-05
      %v1030 = vadd.f32 %v998, 1e-05
      %v1031 = vadd.f32 %v999, 1e-05
      %v1032 = vadd.f32 %v1000, 1e-05
      %v1033 = vadd.f32 %v1001, 1e-05
      %v1034 = vadd.f32 %v1002, 1e-05
      %v1035 = vadd.f32 %v1003, 1e-05
      %v1036 = vadd.f32 %v1004, 1e-05
      %v1037 = vadd.f32 %v1005, 1e-05
      %v1038 = vadd.f32 %v1006, 1e-05
      %v1039 = vadd.f32 %v1007, 1e-05
      %v1040 = vadd.f32 %v1008, 1e-05
      %v1041 = vadd.f32 %v1009, 1e-05
      %v1042 = vadd.f32 %v1010, 1e-05
      %v1043 = vadd.f32 %v1011, 1e-05
      %v1044 = vadd.f32 %v1012, 1e-05
      %v1045 = vadd.f32 %v1013, 1e-05
      %v1046 = vadd.f32 %v1014, 1e-05
      %v1047 = vadd.f32 %v1015, 1e-05
      %v1048 = vadd.f32 %v1016, 1e-05
      %v1049 = vadd.f32 %v1017, 1e-05
      %v1050 = vadd.f32 %v1018, 1e-05
      %v1051 = vadd.f32 %v1019, 1e-05
      %v1052 = vadd.f32 %v1020, 1e-05
      %v1053 = vadd.f32 %v1021, 1e-05
      %v1054 = vadd.f32 %v1022, 1e-05
      %v1055 = vadd.f32 %v1023, 1e-05
      %v1056 = vadd.f32 %v1024, 1e-05
      %v1057 = vadd.f32 %v1025, 1e-05
      %v1058 = vadd.f32 %v1026, 1e-05
      %v1059 = vrsqrt.pop %v1027
      %v1060 = vmul.f32 %v1059, %v1027
      %v1061 = vmul.f32 %v1060, %v1059
      %v1062 = vmul.f32 0.5, %v1061
      %v1063 = vsub.f32 1.5, %v1062
      %v1064 = vmul.f32 %v1059, %v1063
      %vm1065 = vweird.f32 %v1027
      %vm1066 = vweird.f32 %v1059
      %vm1067 = vmor %vm1065, %vm1066
      %v1068 = vsel %vm1067, %v1059, %v1064
      %v1069 = vrsqrt.pop %v1028
      %v1070 = vmul.f32 %v1069, %v1028
      %v1071 = vmul.f32 %v1070, %v1069
      %v1072 = vmul.f32 0.5, %v1071
      %v1073 = vsub.f32 1.5, %v1072
      %v1074 = vmul.f32 %v1069, %v1073
      %vm1075 = vweird.f32 %v1028
      %vm1076 = vweird.f32 %v1069
      %vm1077 = vmor %vm1075, %vm1076
      %v1078 = vsel %vm1077, %v1069, %v1074
      %v1079 = vrsqrt.pop %v1029
      %v1080 = vmul.f32 %v1079, %v1029
      %v1081 = vmul.f32 %v1080, %v1079
      %v1082 = vmul.f32 0.5, %v1081
      %v1083 = vsub.f32 1.5, %v1082
      %v1084 = vmul.f32 %v1079, %v1083
      %vm1085 = vweird.f32 %v1029
      %vm1086 = vweird.f32 %v1079
      %vm1087 = vmor %vm1085, %vm1086
      %v1088 = vsel %vm1087, %v1079, %v1084
      %v1089 = vrsqrt.pop %v1030
      %v1090 = vmul.f32 %v1089, %v1030
      %v1091 = vmul.f32 %v1090, %v1089
      %v1092 = vmul.f32 0.5, %v1091
      %v1093 = vsub.f32 1.5, %v1092
      %v1094 = vmul.f32 %v1089, %v1093
      %vm1095 = vweird.f32 %v1030
      %vm1096 = vweird.f32 %v1089
      %vm1097 = vmor %vm1095, %vm1096
      %v1098 = vsel %vm1097, %v1089, %v1094
      %v1099 = vrsqrt.pop %v1031
      %v1100 = vmul.f32 %v1099, %v1031
      %v1101 = vmul.f32 %v1100, %v1099
      %v1102 = vmul.f32 0.5, %v1101
      %v1103 = vsub.f32 1.5, %v1102
      %v1104 = vmul.f32 %v1099, %v1103
      %vm1105 = vweird.f32 %v1031
      %vm1106 = vweird.f32 %v1099
      %vm1107 = vmor %vm1105, %vm1106
      %v1108 = vsel %vm1107, %v1099, %v1104
      %v1109 = vrsqrt.pop %v1032
      %v1110 = vmul.f32 %v1109, %v1032
      %v1111 = vmul.f32 %v1110, %v1109
      %v1112 = vmul.f32 0.5, %v1111
      %v1113 = vsub.f32 1.5, %v1112
      %v1114 = vmul.f32 %v1109, %v1113
      %vm1115 = vweird.f32 %v1032
      %vm1116 = vweird.f32 %v1109
      %vm1117 = vmor %vm1115, %vm1116
      %v1118 = vsel %vm1117, %v1109, %v1114
      %v1119 = vrsqrt.pop %v1033
      %v1120 = vmul.f32 %v1119, %v1033
      %v1121 = vmul.f32 %v1120, %v1119
      %v1122 = vmul.f32 0.5, %v1121
      %v1123 = vsub.f32 1.5, %v1122
      %v1124 = vmul.f32 %v1119, %v1123
      %vm1125 = vweird.f32 %v1033
      %vm1126 = vweird.f32 %v1119
      %vm1127 = vmor %vm1125, %vm1126
      %v1128 = vsel %vm1127, %v1119, %v1124
      %v1129 = vrsqrt.pop %v1034
      %v1130 = vmul.f32 %v1129, %v1034
      %v1131 = vmul.f32 %v1130, %v1129
      %v1132 = vmul.f32 0.5, %v1131
      %v1133 = vsub.f32 1.5, %v1132
      %v1134 = vmul.f32 %v1129, %v1133
      %vm1135 = vweird.f32 %v1034
      %vm1136 = vweird.f32 %v1129
      %vm1137 = vmor %vm1135, %vm1136
      %v1138 = vsel %vm1137, %v1129, %v1134
      %v1139 = vrsqrt.pop %v1035
      %v1140 = vmul.f32 %v1139, %v1035
      %v1141 = vmul.f32 %v1140, %v1139
      %v1142 = vmul.f32 0.5, %v1141
      %v1143 = vsub.f32 1.5, %v1142
      %v1144 = vmul.f32 %v1139, %v1143
      %vm1145 = vweird.f32 %v1035
      %vm1146 = vweird.f32 %v1139
      %vm1147 = vmor %vm1145, %vm1146
      %v1148 = vsel %vm1147, %v1139, %v1144
      %v1149 = vrsqrt.pop %v1036
      %v1150 = vmul.f32 %v1149, %v1036
      %v1151 = vmul.f32 %v1150, %v1149
      %v1152 = vmul.f32 0.5, %v1151
      %v1153 = vsub.f32 1.5, %v1152
      %v1154 = vmul.f32 %v1149, %v1153
      %vm1155 = vweird.f32 %v1036
      %vm1156 = vweird.f32 %v1149
      %vm1157 = vmor %vm1155, %vm1156
      %v1158 = vsel %vm1157, %v1149, %v1154
      %v1159 = vrsqrt.pop %v1037
      %v1160 = vmul.f32 %v1159, %v1037
      %v1161 = vmul.f32 %v1160, %v1159
      %v1162 = vmul.f32 0.5, %v1161
      %v1163 = vsub.f32 1.5, %v1162
      %v1164 = vmul.f32 %v1159, %v1163
      %vm1165 = vweird.f32 %v1037
      %vm1166 = vweird.f32 %v1159
      %vm1167 = vmor %vm1165, %vm1166
      %v1168 = vsel %vm1167, %v1159, %v1164
      %v1169 = vrsqrt.pop %v1038
      %v1170 = vmul.f32 %v1169, %v1038
      %v1171 = vmul.f32 %v1170, %v1169
      %v1172 = vmul.f32 0.5, %v1171
      %v1173 = vsub.f32 1.5, %v1172
      %v1174 = vmul.f32 %v1169, %v1173
      %vm1175 = vweird.f32 %v1038
      %vm1176 = vweird.f32 %v1169
      %vm1177 = vmor %vm1175, %vm1176
      %v1178 = vsel %vm1177, %v1169, %v1174
      %v1179 = vrsqrt.pop %v1039
      %v1180 = vmul.f32 %v1179, %v1039
      %v1181 = vmul.f32 %v1180, %v1179
      %v1182 = vmul.f32 0.5, %v1181
      %v1183 = vsub.f32 1.5, %v1182
      %v1184 = vmul.f32 %v1179, %v1183
      %vm1185 = vweird.f32 %v1039
      %vm1186 = vweird.f32 %v1179
      %vm1187 = vmor %vm1185, %vm1186
      %v1188 = vsel %vm1187, %v1179, %v1184
      %v1189 = vrsqrt.pop %v1040
      %v1190 = vmul.f32 %v1189, %v1040
      %v1191 = vmul.f32 %v1190, %v1189
      %v1192 = vmul.f32 0.5, %v1191
      %v1193 = vsub.f32 1.5, %v1192
      %v1194 = vmul.f32 %v1189, %v1193
      %vm1195 = vweird.f32 %v1040
      %vm1196 = vweird.f32 %v1189
      %vm1197 = vmor %vm1195, %vm1196
      %v1198 = vsel %vm1197, %v1189, %v1194
      %v1199 = vrsqrt.pop %v1041
      %v1200 = vmul.f32 %v1199, %v1041
      %v1201 = vmul.f32 %v1200, %v1199
      %v1202 = vmul.f32 0.5, %v1201
      %v1203 = vsub.f32 1.5, %v1202
      %v1204 = vmul.f32 %v1199, %v1203
      %vm1205 = vweird.f32 %v1041
      %vm1206 = vweird.f32 %v1199
      %vm1207 = vmor %vm1205, %vm1206
      %v1208 = vsel %vm1207, %v1199, %v1204
      %v1209 = vrsqrt.pop %v1042
      %v1210 = vmul.f32 %v1209, %v1042
      %v1211 = vmul.f32 %v1210, %v1209
      %v1212 = vmul.f32 0.5, %v1211
      %v1213 = vsub.f32 1.5, %v1212
      %v1214 = vmul.f32 %v1209, %v1213
      %vm1215 = vweird.f32 %v1042
      %vm1216 = vweird.f32 %v1209
      %vm1217 = vmor %vm1215, %vm1216
      %v1218 = vsel %vm1217, %v1209, %v1214
      %v1219 = vrsqrt.pop %v1043
      %v1220 = vmul.f32 %v1219, %v1043
      %v1221 = vmul.f32 %v1220, %v1219
      %v1222 = vmul.f32 0.5, %v1221
      %v1223 = vsub.f32 1.5, %v1222
      %v1224 = vmul.f32 %v1219, %v1223
      %vm1225 = vweird.f32 %v1043
      %vm1226 = vweird.f32 %v1219
      %vm1227 = vmor %vm1225, %vm1226
      %v1228 = vsel %vm1227, %v1219, %v1224
      %v1229 = vrsqrt.pop %v1044
      %v1230 = vmul.f32 %v1229, %v1044
      %v1231 = vmul.f32 %v1230, %v1229
      %v1232 = vmul.f32 0.5, %v1231
      %v1233 = vsub.f32 1.5, %v1232
      %v1234 = vmul.f32 %v1229, %v1233
      %vm1235 = vweird.f32 %v1044
      %vm1236 = vweird.f32 %v1229
      %vm1237 = vmor %vm1235, %vm1236
      %v1238 = vsel %vm1237, %v1229, %v1234
      %v1239 = vrsqrt.pop %v1045
      %v1240 = vmul.f32 %v1239, %v1045
      %v1241 = vmul.f32 %v1240, %v1239
      %v1242 = vmul.f32 0.5, %v1241
      %v1243 = vsub.f32 1.5, %v1242
      %v1244 = vmul.f32 %v1239, %v1243
      %vm1245 = vweird.f32 %v1045
      %vm1246 = vweird.f32 %v1239
      %vm1247 = vmor %vm1245, %vm1246
      %v1248 = vsel %vm1247, %v1239, %v1244
      %v1249 = vrsqrt.pop %v1046
      %v1250 = vmul.f32 %v1249, %v1046
      %v1251 = vmul.f32 %v1250, %v1249
      %v1252 = vmul.f32 0.5, %v1251
      %v1253 = vsub.f32 1.5, %v1252
      %v1254 = vmul.f32 %v1249, %v1253
      %vm1255 = vweird.f32 %v1046
      %vm1256 = vweird.f32 %v1249
      %vm1257 = vmor %vm1255, %vm1256
      %v1258 = vsel %vm1257, %v1249, %v1254
      %v1259 = vrsqrt.pop %v1047
      %v1260 = vmul.f32 %v1259, %v1047
      %v1261 = vmul.f32 %v1260, %v1259
      %v1262 = vmul.f32 0.5, %v1261
      %v1263 = vsub.f32 1.5, %v1262
      %v1264 = vmul.f32 %v1259, %v1263
      %vm1265 = vweird.f32 %v1047
      %vm1266 = vweird.f32 %v1259
      %vm1267 = vmor %vm1265, %vm1266
      %v1268 = vsel %vm1267, %v1259, %v1264
      %v1269 = vrsqrt.pop %v1048
      %v1270 = vmul.f32 %v1269, %v1048
      %v1271 = vmul.f32 %v1270, %v1269
      %v1272 = vmul.f32 0.5, %v1271
      %v1273 = vsub.f32 1.5, %v1272
      %v1274 = vmul.f32 %v1269, %v1273
      %vm1275 = vweird.f32 %v1048
      %vm1276 = vweird.f32 %v1269
      %vm1277 = vmor %vm1275, %vm1276
      %v1278 = vsel %vm1277, %v1269, %v1274
      %v1279 = vrsqrt.pop %v1049
      %v1280 = vmul.f32 %v1279, %v1049
      %v1281 = vmul.f32 %v1280, %v1279
      %v1282 = vmul.f32 0.5, %v1281
      %v1283 = vsub.f32 1.5, %v1282
      %v1284 = vmul.f32 %v1279, %v1283
      %vm1285 = vweird.f32 %v1049
      %vm1286 = vweird.f32 %v1279
      %vm1287 = vmor %vm1285, %vm1286
      %v1288 = vsel %vm1287, %v1279, %v1284
      %v1289 = vrsqrt.pop %v1050
      %v1290 = vmul.f32 %v1289, %v1050
      %v1291 = vmul.f32 %v1290, %v1289
      %v1292 = vmul.f32 0.5, %v1291
      %v1293 = vsub.f32 1.5, %v1292
      %v1294 = vmul.f32 %v1289, %v1293
      %vm1295 = vweird.f32 %v1050
      %vm1296 = vweird.f32 %v1289
      %vm1297 = vmor %vm1295, %vm1296
      %v1298 = vsel %vm1297, %v1289, %v1294
      %v1299 = vrsqrt.pop %v1051
      %v1300 = vmul.f32 %v1299, %v1051
      %v1301 = vmul.f32 %v1300, %v1299
      %v1302 = vmul.f32 0.5, %v1301
      %v1303 = vsub.f32 1.5, %v1302
      %v1304 = vmul.f32 %v1299, %v1303
      %vm1305 = vweird.f32 %v1051
      %vm1306 = vweird.f32 %v1299
      %vm1307 = vmor %vm1305, %vm1306
      %v1308 = vsel %vm1307, %v1299, %v1304
      %v1309 = vrsqrt.pop %v1052
      %v1310 = vmul.f32 %v1309, %v1052
      %v1311 = vmul.f32 %v1310, %v1309
      %v1312 = vmul.f32 0.5, %v1311
      %v1313 = vsub.f32 1.5, %v1312
      %v1314 = vmul.f32 %v1309, %v1313
      %vm1315 = vweird.f32 %v1052
      %vm1316 = vweird.f32 %v1309
      %vm1317 = vmor %vm1315, %vm1316
      %v1318 = vsel %vm1317, %v1309, %v1314
      %v1319 = vrsqrt.pop %v1053
      %v1320 = vmul.f32 %v1319, %v1053
      %v1321 = vmul.f32 %v1320, %v1319
      %v1322 = vmul.f32 0.5, %v1321
      %v1323 = vsub.f32 1.5, %v1322
      %v1324 = vmul.f32 %v1319, %v1323
      %vm1325 = vweird.f32 %v1053
      %vm1326 = vweird.f32 %v1319
      %vm1327 = vmor %vm1325, %vm1326
      %v1328 = vsel %vm1327, %v1319, %v1324
      %v1329 = vrsqrt.pop %v1054
      %v1330 = vmul.f32 %v1329, %v1054
      %v1331 = vmul.f32 %v1330, %v1329
      %v1332 = vmul.f32 0.5, %v1331
      %v1333 = vsub.f32 1.5, %v1332
      %v1334 = vmul.f32 %v1329, %v1333
      %vm1335 = vweird.f32 %v1054
      %vm1336 = vweird.f32 %v1329
      %vm1337 = vmor %vm1335, %vm1336
      %v1338 = vsel %vm1337, %v1329, %v1334
      %v1339 = vrsqrt.pop %v1055
      %v1340 = vmul.f32 %v1339, %v1055
      %v1341 = vmul.f32 %v1340, %v1339
      %v1342 = vmul.f32 0.5, %v1341
      %v1343 = vsub.f32 1.5, %v1342
      %v1344 = vmul.f32 %v1339, %v1343
      %vm1345 = vweird.f32 %v1055
      %vm1346 = vweird.f32 %v1339
      %vm1347 = vmor %vm1345, %vm1346
      %v1348 = vsel %vm1347, %v1339, %v1344
      %v1349 = vrsqrt.pop %v1056
      %v1350 = vmul.f32 %v1349, %v1056
      %v1351 = vmul.f32 %v1350, %v1349
      %v1352 = vmul.f32 0.5, %v1351
      %v1353 = vsub.f32 1.5, %v1352
      %v1354 = vmul.f32 %v1349, %v1353
      %vm1355 = vweird.f32 %v1056
      %vm1356 = vweird.f32 %v1349
      %vm1357 = vmor %vm1355, %vm1356
      %v1358 = vsel %vm1357, %v1349, %v1354
      %v1359 = vrsqrt.pop %v1057
      %v1360 = vmul.f32 %v1359, %v1057
      %v1361 = vmul.f32 %v1360, %v1359
      %v1362 = vmul.f32 0.5, %v1361
      %v1363 = vsub.f32 1.5, %v1362
      %v1364 = vmul.f32 %v1359, %v1363
      %vm1365 = vweird.f32 %v1057
      %vm1366 = vweird.f32 %v1359
      %vm1367 = vmor %vm1365, %vm1366
      %v1368 = vsel %vm1367, %v1359, %v1364
      %v1369 = vrsqrt.pop %v1058
      %v1370 = vmul.f32 %v1369, %v1058
      %v1371 = vmul.f32 %v1370, %v1369
      %v1372 = vmul.f32 0.5, %v1371
      %v1373 = vsub.f32 1.5, %v1372
      %v1374 = vmul.f32 %v1369, %v1373
      %vm1375 = vweird.f32 %v1058
      %vm1376 = vweird.f32 %v1369
      %vm1377 = vmor %vm1375, %vm1376
      %v1378 = vsel %vm1377, %v1369, %v1374
      %v1379 = vmul.f32 %v835, %v1068
      %v1380 = vmul.f32 %v836, %v1078
      %v1381 = vmul.f32 %v837, %v1088
      %v1382 = vmul.f32 %v838, %v1098
      %v1383 = vmul.f32 %v839, %v1108
      %v1384 = vmul.f32 %v840, %v1118
      %v1385 = vmul.f32 %v841, %v1128
      %v1386 = vmul.f32 %v842, %v1138
      %v1387 = vmul.f32 %v843, %v1148
      %v1388 = vmul.f32 %v844, %v1158
      %v1389 = vmul.f32 %v845, %v1168
      %v1390 = vmul.f32 %v846, %v1178
      %v1391 = vmul.f32 %v847, %v1188
      %v1392 = vmul.f32 %v848, %v1198
      %v1393 = vmul.f32 %v849, %v1208
      %v1394 = vmul.f32 %v850, %v1218
      %v1395 = vmul.f32 %v851, %v1228
      %v1396 = vmul.f32 %v852, %v1238
      %v1397 = vmul.f32 %v853, %v1248
      %v1398 = vmul.f32 %v854, %v1258
      %v1399 = vmul.f32 %v855, %v1268
      %v1400 = vmul.f32 %v856, %v1278
      %v1401 = vmul.f32 %v857, %v1288
      %v1402 = vmul.f32 %v858, %v1298
      %v1403 = vmul.f32 %v859, %v1308
      %v1404 = vmul.f32 %v860, %v1318
      %v1405 = vmul.f32 %v861, %v1328
      %v1406 = vmul.f32 %v862, %v1338
      %v1407 = vmul.f32 %v863, %v1348
      %v1408 = vmul.f32 %v864, %v1358
      %v1409 = vmul.f32 %v865, %v1368
      %v1410 = vmul.f32 %v866, %v1378
      %v1412 = vperm.slane %v697, 0
      %v1414 = vmul.f32 %v1379, %v1412
      %v1415 = vmul.f32 %v1380, %v1412
      %v1416 = vmul.f32 %v1381, %v1412
      %v1417 = vmul.f32 %v1382, %v1412
      %v1418 = vmul.f32 %v1383, %v1412
      %v1419 = vmul.f32 %v1384, %v1412
      %v1420 = vmul.f32 %v1385, %v1412
      %v1421 = vmul.f32 %v1386, %v1412
      %v1422 = vmul.f32 %v1387, %v1412
      %v1423 = vmul.f32 %v1388, %v1412
      %v1424 = vmul.f32 %v1389, %v1412
      %v1425 = vmul.f32 %v1390, %v1412
      %v1426 = vmul.f32 %v1391, %v1412
      %v1427 = vmul.f32 %v1392, %v1412
      %v1428 = vmul.f32 %v1393, %v1412
      %v1429 = vmul.f32 %v1394, %v1412
      %v1430 = vmul.f32 %v1395, %v1412
      %v1431 = vmul.f32 %v1396, %v1412
      %v1432 = vmul.f32 %v1397, %v1412
      %v1433 = vmul.f32 %v1398, %v1412
      %v1434 = vmul.f32 %v1399, %v1412
      %v1435 = vmul.f32 %v1400, %v1412
      %v1436 = vmul.f32 %v1401, %v1412
      %v1437 = vmul.f32 %v1402, %v1412
      %v1438 = vmul.f32 %v1403, %v1412
      %v1439 = vmul.f32 %v1404, %v1412
      %v1440 = vmul.f32 %v1405, %v1412
      %v1441 = vmul.f32 %v1406, %v1412
      %v1442 = vmul.f32 %v1407, %v1412
      %v1443 = vmul.f32 %v1408, %v1412
      %v1444 = vmul.f32 %v1409, %v1412
      %v1445 = vmul.f32 %v1410, %v1412
      %v1447 = vperm.slane %v698, 0
      %v1449 = vadd.f32 %v1414, %v1447
      %v1450 = vadd.f32 %v1415, %v1447
      %v1451 = vadd.f32 %v1416, %v1447
      %v1452 = vadd.f32 %v1417, %v1447
      %v1453 = vadd.f32 %v1418, %v1447
      %v1454 = vadd.f32 %v1419, %v1447
      %v1455 = vadd.f32 %v1420, %v1447
      %v1456 = vadd.f32 %v1421, %v1447
      %v1457 = vadd.f32 %v1422, %v1447
      %v1458 = vadd.f32 %v1423, %v1447
      %v1459 = vadd.f32 %v1424, %v1447
      %v1460 = vadd.f32 %v1425, %v1447
      %v1461 = vadd.f32 %v1426, %v1447
      %v1462 = vadd.f32 %v1427, %v1447
      %v1463 = vadd.f32 %v1428, %v1447
      %v1464 = vadd.f32 %v1429, %v1447
      %v1465 = vadd.f32 %v1430, %v1447
      %v1466 = vadd.f32 %v1431, %v1447
      %v1467 = vadd.f32 %v1432, %v1447
      %v1468 = vadd.f32 %v1433, %v1447
      %v1469 = vadd.f32 %v1434, %v1447
      %v1470 = vadd.f32 %v1435, %v1447
      %v1471 = vadd.f32 %v1436, %v1447
      %v1472 = vadd.f32 %v1437, %v1447
      %v1473 = vadd.f32 %v1438, %v1447
      %v1474 = vadd.f32 %v1439, %v1447
      %v1475 = vadd.f32 %v1440, %v1447
      %v1476 = vadd.f32 %v1441, %v1447
      %v1477 = vadd.f32 %v1442, %v1447
      %v1478 = vadd.f32 %v1443, %v1447
      %v1479 = vadd.f32 %v1444, %v1447
      %v1480 = vadd.f32 %v1445, %v1447
      %v1481 = vpack.c.bf16 %v1450, %v1449
      %v1482 = vpack.c.bf16 %v1452, %v1451
      %v1483 = vpack.c.bf16 %v1454, %v1453
      %v1484 = vpack.c.bf16 %v1456, %v1455
      %v1485 = vpack.c.bf16 %v1458, %v1457
      %v1486 = vpack.c.bf16 %v1460, %v1459
      %v1487 = vpack.c.bf16 %v1462, %v1461
      %v1488 = vpack.c.bf16 %v1464, %v1463
      %v1489 = vpack.c.bf16 %v1466, %v1465
      %v1490 = vpack.c.bf16 %v1468, %v1467
      %v1491 = vpack.c.bf16 %v1470, %v1469
      %v1492 = vpack.c.bf16 %v1472, %v1471
      %v1493 = vpack.c.bf16 %v1474, %v1473
      %v1494 = vpack.c.bf16 %v1476, %v1475
      %v1495 = vpack.c.bf16 %v1478, %v1477
      %v1496 = vpack.c.bf16 %v1480, %v1479
      %v1497 = vld [vmem:[%s5] sm:$0xff]
      %v1498 = vld [vmem:[%s5 + $0x8] sm:$0xff]
      %v1499 = vld [vmem:[%s5 + $0x40] sm:$0xff]
      %v1500 = vld [vmem:[%s5 + $0x48] sm:$0xff]
      %v1501 = vld [vmem:[%s5 + $0x80] sm:$0xff]
      %v1502 = vld [vmem:[%s5 + $0x88] sm:$0xff]
      %v1503 = vld [vmem:[%s5 + $0xc0] sm:$0xff]
      %v1504 = vld [vmem:[%s5 + $0xc8] sm:$0xff]
      %v1505 = vld [vmem:[%s5 + $0x100] sm:$0xff]
      %v1506 = vld [vmem:[%s5 + $0x108] sm:$0xff]
      %v1507 = vld [vmem:[%s5 + $0x140] sm:$0xff]
      %v1508 = vld [vmem:[%s5 + $0x148] sm:$0xff]
      %v1509 = vld [vmem:[%s5 + $0x180] sm:$0xff]
      %v1510 = vld [vmem:[%s5 + $0x188] sm:$0xff]
      %v1511 = vld [vmem:[%s5 + $0x1c0] sm:$0xff]
      %v1512 = vld [vmem:[%s5 + $0x1c8] sm:$0xff]
      %v1513 = vld [vmem:[%s6] sm:$0xf]
      %v1515 = vperm.slane %v1513, 0
      %v1516 = vperm.slane %v1513, 1
      %v1517 = vperm.slane %v1513, 2
      %v1518 = vperm.slane %v1513, 3
      %v1539 = vunpack.c.l.b16 %v1497
      %v1540 = vunpack.c.h.b16 %v1497
      %v1541 = vunpack.c.l.b16 %v1498
      %v1542 = vunpack.c.h.b16 %v1498
      %v1543 = vunpack.c.l.b16 %v1499
      %v1544 = vunpack.c.h.b16 %v1499
      %v1545 = vunpack.c.l.b16 %v1500
      %v1546 = vunpack.c.h.b16 %v1500
      %v1547 = vunpack.c.l.b16 %v1501
      %v1548 = vunpack.c.h.b16 %v1501
      %v1549 = vunpack.c.l.b16 %v1502
      %v1550 = vunpack.c.h.b16 %v1502
      %v1551 = vunpack.c.l.b16 %v1503
      %v1552 = vunpack.c.h.b16 %v1503
      %v1553 = vunpack.c.l.b16 %v1504
      %v1554 = vunpack.c.h.b16 %v1504
      %v1555 = vunpack.c.l.b16 %v1505
      %v1556 = vunpack.c.h.b16 %v1505
      %v1557 = vunpack.c.l.b16 %v1506
      %v1558 = vunpack.c.h.b16 %v1506
      %v1559 = vunpack.c.l.b16 %v1507
      %v1560 = vunpack.c.h.b16 %v1507
      %v1561 = vunpack.c.l.b16 %v1508
      %v1562 = vunpack.c.h.b16 %v1508
      %v1563 = vunpack.c.l.b16 %v1509
      %v1564 = vunpack.c.h.b16 %v1509
      %v1565 = vunpack.c.l.b16 %v1510
      %v1566 = vunpack.c.h.b16 %v1510
      %v1567 = vunpack.c.l.b16 %v1511
      %v1568 = vunpack.c.h.b16 %v1511
      %v1569 = vunpack.c.l.b16 %v1512
      %v1570 = vunpack.c.h.b16 %v1512
      %v1571 = vpack.c.b16 %v1543, %v1539
      %v1572 = vpack.c.b16 %v1544, %v1540
      %v1573 = vpack.c.b16 %v1545, %v1541
      %v1574 = vpack.c.b16 %v1546, %v1542
      %v1575 = vpack.c.b16 %v1551, %v1547
      %v1576 = vpack.c.b16 %v1552, %v1548
      %v1577 = vpack.c.b16 %v1553, %v1549
      %v1578 = vpack.c.b16 %v1554, %v1550
      %v1579 = vpack.c.b16 %v1559, %v1555
      %v1580 = vpack.c.b16 %v1560, %v1556
      %v1581 = vpack.c.b16 %v1561, %v1557
      %v1582 = vpack.c.b16 %v1562, %v1558
      %v1583 = vpack.c.b16 %v1567, %v1563
      %v1584 = vpack.c.b16 %v1568, %v1564
      %v1585 = vpack.c.b16 %v1569, %v1565
      %v1586 = vpack.c.b16 %v1570, %v1566
      %v1604 = vsel %vm699, %v1481, 0
      %v1607 = vsel %vm699, %v1482, 0
      %v1610 = vsel %vm699, %v1483, 0
      %v1613 = vsel %vm699, %v1484, 0
      %v1616 = vsel %vm699, %v1485, 0
      %v1619 = vsel %vm699, %v1486, 0
      %v1622 = vsel %vm699, %v1487, 0
      %v1625 = vsel %vm699, %v1488, 0
      %v1628 = vsel %vm699, %v1489, 0
      %v1631 = vsel %vm699, %v1490, 0
      %v1634 = vsel %vm699, %v1491, 0
      %v1637 = vsel %vm699, %v1492, 0
      %v1640 = vsel %vm699, %v1493, 0
      %v1643 = vsel %vm699, %v1494, 0
      %v1646 = vsel %vm699, %v1495, 0
      %v1649 = vsel %vm699, %v1496, 0
      %1651 = vmatpush.bf16.msra.mxu0 0
      %1652 = vmatpush.bf16.msra.mxu0 0
      %1653 = vmatpush.bf16.msra.mxu0 0
      %1654 = vmatpush.bf16.msra.mxu0 0
      %1655 = vmatpush.bf16.msra.mxu0 %v1583
      %1656 = vmatpush.bf16.msra.mxu0 %v1579
      %1657 = vmatpush.bf16.msra.mxu0 %v1575
      %1658 = vmatpush.bf16.msra.mxu0 %v1571
      %1659 = vmatmul.bf16.gmra.mxu0 %v1604
      %v1660 = vpop.f32.mrf.mxu0
      %v1661 = vadd.f32 %v1515, %v1660
      %v1662 = vpop.f32.mrf.mxu0
      %v1663 = vadd.f32 %v1515, %v1662
      %1664 = vmatmul.bf16.gmra.mxu0 %v1607
      %v1665 = vpop.f32.mrf.mxu0
      %v1666 = vadd.f32 %v1515, %v1665
      %v1667 = vpop.f32.mrf.mxu0
      %v1668 = vadd.f32 %v1515, %v1667
      %1669 = vmatmul.bf16.gmra.mxu0 %v1610
      %v1670 = vpop.f32.mrf.mxu0
      %v1671 = vadd.f32 %v1515, %v1670
      %v1672 = vpop.f32.mrf.mxu0
      %v1673 = vadd.f32 %v1515, %v1672
      %1674 = vmatmul.bf16.gmra.mxu0 %v1613
      %v1675 = vpop.f32.mrf.mxu0
      %v1676 = vadd.f32 %v1515, %v1675
      %v1677 = vpop.f32.mrf.mxu0
      %v1678 = vadd.f32 %v1515, %v1677
      %1679 = vmatmul.bf16.gmra.mxu0 %v1616
      %v1680 = vpop.f32.mrf.mxu0
      %v1681 = vadd.f32 %v1515, %v1680
      %v1682 = vpop.f32.mrf.mxu0
      %v1683 = vadd.f32 %v1515, %v1682
      %1684 = vmatmul.bf16.gmra.mxu0 %v1619
      %v1685 = vpop.f32.mrf.mxu0
      %v1686 = vadd.f32 %v1515, %v1685
      %v1687 = vpop.f32.mrf.mxu0
      %v1688 = vadd.f32 %v1515, %v1687
      %1689 = vmatmul.bf16.gmra.mxu0 %v1622
      %v1690 = vpop.f32.mrf.mxu0
      %v1691 = vadd.f32 %v1515, %v1690
      %v1692 = vpop.f32.mrf.mxu0
      %v1693 = vadd.f32 %v1515, %v1692
      %1694 = vmatmul.bf16.gmra.mxu0 %v1625
      %v1695 = vpop.f32.mrf.mxu0
      %v1696 = vadd.f32 %v1515, %v1695
      %v1697 = vpop.f32.mrf.mxu0
      %v1698 = vadd.f32 %v1515, %v1697
      %1699 = vmatmul.bf16.gmra.mxu0 %v1628
      %v1700 = vpop.f32.mrf.mxu0
      %v1701 = vadd.f32 %v1515, %v1700
      %v1702 = vpop.f32.mrf.mxu0
      %v1703 = vadd.f32 %v1515, %v1702
      %1704 = vmatmul.bf16.gmra.mxu0 %v1631
      %v1705 = vpop.f32.mrf.mxu0
      %v1706 = vadd.f32 %v1515, %v1705
      %v1707 = vpop.f32.mrf.mxu0
      %v1708 = vadd.f32 %v1515, %v1707
      %1709 = vmatmul.bf16.gmra.mxu0 %v1634
      %v1710 = vpop.f32.mrf.mxu0
      %v1711 = vadd.f32 %v1515, %v1710
      %v1712 = vpop.f32.mrf.mxu0
      %v1713 = vadd.f32 %v1515, %v1712
      %1714 = vmatmul.bf16.gmra.mxu0 %v1637
      %v1715 = vpop.f32.mrf.mxu0
      %v1716 = vadd.f32 %v1515, %v1715
      %v1717 = vpop.f32.mrf.mxu0
      %v1718 = vadd.f32 %v1515, %v1717
      %1719 = vmatmul.bf16.gmra.mxu0 %v1640
      %v1720 = vpop.f32.mrf.mxu0
      %v1721 = vadd.f32 %v1515, %v1720
      %v1722 = vpop.f32.mrf.mxu0
      %v1723 = vadd.f32 %v1515, %v1722
      %1724 = vmatmul.bf16.gmra.mxu0 %v1643
      %v1725 = vpop.f32.mrf.mxu0
      %v1726 = vadd.f32 %v1515, %v1725
      %v1727 = vpop.f32.mrf.mxu0
      %v1728 = vadd.f32 %v1515, %v1727
      %1729 = vmatmul.bf16.gmra.mxu0 %v1646
      %v1730 = vpop.f32.mrf.mxu0
      %v1731 = vadd.f32 %v1515, %v1730
      %v1732 = vpop.f32.mrf.mxu0
      %v1733 = vadd.f32 %v1515, %v1732
      %1734 = vmatmul.bf16.gmra.mxu0 %v1649
      %v1735 = vpop.f32.mrf.mxu0
      %v1736 = vadd.f32 %v1515, %v1735
      %v1737 = vpop.f32.mrf.mxu0
      %v1738 = vadd.f32 %v1515, %v1737
      %1739 = vdwg.mxu0
      %1740 = vmatpush.bf16.msra.mxu0 0
      %1741 = vmatpush.bf16.msra.mxu0 0
      %1742 = vmatpush.bf16.msra.mxu0 0
      %1743 = vmatpush.bf16.msra.mxu0 0
      %1744 = vmatpush.bf16.msra.mxu0 %v1584
      %1745 = vmatpush.bf16.msra.mxu0 %v1580
      %1746 = vmatpush.bf16.msra.mxu0 %v1576
      %1747 = vmatpush.bf16.msra.mxu0 %v1572
      %1748 = vmatmul.bf16.gmra.mxu0 %v1604
      %v1749 = vpop.f32.mrf.mxu0
      %v1750 = vadd.f32 %v1516, %v1749
      %v1751 = vpop.f32.mrf.mxu0
      %v1752 = vadd.f32 %v1516, %v1751
      %1753 = vmatmul.bf16.gmra.mxu0 %v1607
      %v1754 = vpop.f32.mrf.mxu0
      %v1755 = vadd.f32 %v1516, %v1754
      %v1756 = vpop.f32.mrf.mxu0
      %v1757 = vadd.f32 %v1516, %v1756
      %1758 = vmatmul.bf16.gmra.mxu0 %v1610
      %v1759 = vpop.f32.mrf.mxu0
      %v1760 = vadd.f32 %v1516, %v1759
      %v1761 = vpop.f32.mrf.mxu0
      %v1762 = vadd.f32 %v1516, %v1761
      %1763 = vmatmul.bf16.gmra.mxu0 %v1613
      %v1764 = vpop.f32.mrf.mxu0
      %v1765 = vadd.f32 %v1516, %v1764
      %v1766 = vpop.f32.mrf.mxu0
      %v1767 = vadd.f32 %v1516, %v1766
      %1768 = vmatmul.bf16.gmra.mxu0 %v1616
      %v1769 = vpop.f32.mrf.mxu0
      %v1770 = vadd.f32 %v1516, %v1769
      %v1771 = vpop.f32.mrf.mxu0
      %v1772 = vadd.f32 %v1516, %v1771
      %1773 = vmatmul.bf16.gmra.mxu0 %v1619
      %v1774 = vpop.f32.mrf.mxu0
      %v1775 = vadd.f32 %v1516, %v1774
      %v1776 = vpop.f32.mrf.mxu0
      %v1777 = vadd.f32 %v1516, %v1776
      %1778 = vmatmul.bf16.gmra.mxu0 %v1622
      %v1779 = vpop.f32.mrf.mxu0
      %v1780 = vadd.f32 %v1516, %v1779
      %v1781 = vpop.f32.mrf.mxu0
      %v1782 = vadd.f32 %v1516, %v1781
      %1783 = vmatmul.bf16.gmra.mxu0 %v1625
      %v1784 = vpop.f32.mrf.mxu0
      %v1785 = vadd.f32 %v1516, %v1784
      %v1786 = vpop.f32.mrf.mxu0
      %v1787 = vadd.f32 %v1516, %v1786
      %1788 = vmatmul.bf16.gmra.mxu0 %v1628
      %v1789 = vpop.f32.mrf.mxu0
      %v1790 = vadd.f32 %v1516, %v1789
      %v1791 = vpop.f32.mrf.mxu0
      %v1792 = vadd.f32 %v1516, %v1791
      %1793 = vmatmul.bf16.gmra.mxu0 %v1631
      %v1794 = vpop.f32.mrf.mxu0
      %v1795 = vadd.f32 %v1516, %v1794
      %v1796 = vpop.f32.mrf.mxu0
      %v1797 = vadd.f32 %v1516, %v1796
      %1798 = vmatmul.bf16.gmra.mxu0 %v1634
      %v1799 = vpop.f32.mrf.mxu0
      %v1800 = vadd.f32 %v1516, %v1799
      %v1801 = vpop.f32.mrf.mxu0
      %v1802 = vadd.f32 %v1516, %v1801
      %1803 = vmatmul.bf16.gmra.mxu0 %v1637
      %v1804 = vpop.f32.mrf.mxu0
      %v1805 = vadd.f32 %v1516, %v1804
      %v1806 = vpop.f32.mrf.mxu0
      %v1807 = vadd.f32 %v1516, %v1806
      %1808 = vmatmul.bf16.gmra.mxu0 %v1640
      %v1809 = vpop.f32.mrf.mxu0
      %v1810 = vadd.f32 %v1516, %v1809
      %v1811 = vpop.f32.mrf.mxu0
      %v1812 = vadd.f32 %v1516, %v1811
      %1813 = vmatmul.bf16.gmra.mxu0 %v1643
      %v1814 = vpop.f32.mrf.mxu0
      %v1815 = vadd.f32 %v1516, %v1814
      %v1816 = vpop.f32.mrf.mxu0
      %v1817 = vadd.f32 %v1516, %v1816
      %1818 = vmatmul.bf16.gmra.mxu0 %v1646
      %v1819 = vpop.f32.mrf.mxu0
      %v1820 = vadd.f32 %v1516, %v1819
      %v1821 = vpop.f32.mrf.mxu0
      %v1822 = vadd.f32 %v1516, %v1821
      %1823 = vmatmul.bf16.gmra.mxu0 %v1649
      %v1824 = vpop.f32.mrf.mxu0
      %v1825 = vadd.f32 %v1516, %v1824
      %v1826 = vpop.f32.mrf.mxu0
      %v1827 = vadd.f32 %v1516, %v1826
      %1828 = vdwg.mxu0
      %1829 = vmatpush.bf16.msra.mxu0 0
      %1830 = vmatpush.bf16.msra.mxu0 0
      %1831 = vmatpush.bf16.msra.mxu0 0
      %1832 = vmatpush.bf16.msra.mxu0 0
      %1833 = vmatpush.bf16.msra.mxu0 %v1585
      %1834 = vmatpush.bf16.msra.mxu0 %v1581
      %1835 = vmatpush.bf16.msra.mxu0 %v1577
      %1836 = vmatpush.bf16.msra.mxu0 %v1573
      %1837 = vmatmul.bf16.gmra.mxu0 %v1604
      %v1838 = vpop.f32.mrf.mxu0
      %v1839 = vadd.f32 %v1517, %v1838
      %v1840 = vpop.f32.mrf.mxu0
      %v1841 = vadd.f32 %v1517, %v1840
      %1842 = vmatmul.bf16.gmra.mxu0 %v1607
      %v1843 = vpop.f32.mrf.mxu0
      %v1844 = vadd.f32 %v1517, %v1843
      %v1845 = vpop.f32.mrf.mxu0
      %v1846 = vadd.f32 %v1517, %v1845
      %1847 = vmatmul.bf16.gmra.mxu0 %v1610
      %v1848 = vpop.f32.mrf.mxu0
      %v1849 = vadd.f32 %v1517, %v1848
      %v1850 = vpop.f32.mrf.mxu0
      %v1851 = vadd.f32 %v1517, %v1850
      %1852 = vmatmul.bf16.gmra.mxu0 %v1613
      %v1853 = vpop.f32.mrf.mxu0
      %v1854 = vadd.f32 %v1517, %v1853
      %v1855 = vpop.f32.mrf.mxu0
      %v1856 = vadd.f32 %v1517, %v1855
      %1857 = vmatmul.bf16.gmra.mxu0 %v1616
      %v1858 = vpop.f32.mrf.mxu0
      %v1859 = vadd.f32 %v1517, %v1858
      %v1860 = vpop.f32.mrf.mxu0
      %v1861 = vadd.f32 %v1517, %v1860
      %1862 = vmatmul.bf16.gmra.mxu0 %v1619
      %v1863 = vpop.f32.mrf.mxu0
      %v1864 = vadd.f32 %v1517, %v1863
      %v1865 = vpop.f32.mrf.mxu0
      %v1866 = vadd.f32 %v1517, %v1865
      %1867 = vmatmul.bf16.gmra.mxu0 %v1622
      %v1868 = vpop.f32.mrf.mxu0
      %v1869 = vadd.f32 %v1517, %v1868
      %v1870 = vpop.f32.mrf.mxu0
      %v1871 = vadd.f32 %v1517, %v1870
      %1872 = vmatmul.bf16.gmra.mxu0 %v1625
      %v1873 = vpop.f32.mrf.mxu0
      %v1874 = vadd.f32 %v1517, %v1873
      %v1875 = vpop.f32.mrf.mxu0
      %v1876 = vadd.f32 %v1517, %v1875
      %1877 = vmatmul.bf16.gmra.mxu0 %v1628
      %v1878 = vpop.f32.mrf.mxu0
      %v1879 = vadd.f32 %v1517, %v1878
      %v1880 = vpop.f32.mrf.mxu0
      %v1881 = vadd.f32 %v1517, %v1880
      %1882 = vmatmul.bf16.gmra.mxu0 %v1631
      %v1883 = vpop.f32.mrf.mxu0
      %v1884 = vadd.f32 %v1517, %v1883
      %v1885 = vpop.f32.mrf.mxu0
      %v1886 = vadd.f32 %v1517, %v1885
      %1887 = vmatmul.bf16.gmra.mxu0 %v1634
      %v1888 = vpop.f32.mrf.mxu0
      %v1889 = vadd.f32 %v1517, %v1888
      %v1890 = vpop.f32.mrf.mxu0
      %v1891 = vadd.f32 %v1517, %v1890
      %1892 = vmatmul.bf16.gmra.mxu0 %v1637
      %v1893 = vpop.f32.mrf.mxu0
      %v1894 = vadd.f32 %v1517, %v1893
      %v1895 = vpop.f32.mrf.mxu0
      %v1896 = vadd.f32 %v1517, %v1895
      %1897 = vmatmul.bf16.gmra.mxu0 %v1640
      %v1898 = vpop.f32.mrf.mxu0
      %v1899 = vadd.f32 %v1517, %v1898
      %v1900 = vpop.f32.mrf.mxu0
      %v1901 = vadd.f32 %v1517, %v1900
      %1902 = vmatmul.bf16.gmra.mxu0 %v1643
      %v1903 = vpop.f32.mrf.mxu0
      %v1904 = vadd.f32 %v1517, %v1903
      %v1905 = vpop.f32.mrf.mxu0
      %v1906 = vadd.f32 %v1517, %v1905
      %1907 = vmatmul.bf16.gmra.mxu0 %v1646
      %v1908 = vpop.f32.mrf.mxu0
      %v1909 = vadd.f32 %v1517, %v1908
      %v1910 = vpop.f32.mrf.mxu0
      %v1911 = vadd.f32 %v1517, %v1910
      %1912 = vmatmul.bf16.gmra.mxu0 %v1649
      %v1913 = vpop.f32.mrf.mxu0
      %v1914 = vadd.f32 %v1517, %v1913
      %v1915 = vpop.f32.mrf.mxu0
      %v1916 = vadd.f32 %v1517, %v1915
      %1917 = vdwg.mxu0
      %1918 = vmatpush.bf16.msra.mxu0 0
      %1919 = vmatpush.bf16.msra.mxu0 0
      %1920 = vmatpush.bf16.msra.mxu0 0
      %1921 = vmatpush.bf16.msra.mxu0 0
      %1922 = vmatpush.bf16.msra.mxu0 %v1586
      %1923 = vmatpush.bf16.msra.mxu0 %v1582
      %1924 = vmatpush.bf16.msra.mxu0 %v1578
      %1925 = vmatpush.bf16.msra.mxu0 %v1574
      %1926 = vmatmul.bf16.gmra.mxu0 %v1604
      %v1927 = vpop.f32.mrf.mxu0
      %v1928 = vadd.f32 %v1518, %v1927
      %v1929 = vpop.f32.mrf.mxu0
      %v1930 = vadd.f32 %v1518, %v1929
      %1931 = vmatmul.bf16.gmra.mxu0 %v1607
      %v1932 = vpop.f32.mrf.mxu0
      %v1933 = vadd.f32 %v1518, %v1932
      %v1934 = vpop.f32.mrf.mxu0
      %v1935 = vadd.f32 %v1518, %v1934
      %1936 = vmatmul.bf16.gmra.mxu0 %v1610
      %v1937 = vpop.f32.mrf.mxu0
      %v1938 = vadd.f32 %v1518, %v1937
      %v1939 = vpop.f32.mrf.mxu0
      %v1940 = vadd.f32 %v1518, %v1939
      %1941 = vmatmul.bf16.gmra.mxu0 %v1613
      %v1942 = vpop.f32.mrf.mxu0
      %v1943 = vadd.f32 %v1518, %v1942
      %v1944 = vpop.f32.mrf.mxu0
      %v1945 = vadd.f32 %v1518, %v1944
      %1946 = vmatmul.bf16.gmra.mxu0 %v1616
      %v1947 = vpop.f32.mrf.mxu0
      %v1948 = vadd.f32 %v1518, %v1947
      %v1949 = vpop.f32.mrf.mxu0
      %v1950 = vadd.f32 %v1518, %v1949
      %1951 = vmatmul.bf16.gmra.mxu0 %v1619
      %v1952 = vpop.f32.mrf.mxu0
      %v1953 = vadd.f32 %v1518, %v1952
      %v1954 = vpop.f32.mrf.mxu0
      %v1955 = vadd.f32 %v1518, %v1954
      %1956 = vmatmul.bf16.gmra.mxu0 %v1622
      %v1957 = vpop.f32.mrf.mxu0
      %v1958 = vadd.f32 %v1518, %v1957
      %v1959 = vpop.f32.mrf.mxu0
      %v1960 = vadd.f32 %v1518, %v1959
      %1961 = vmatmul.bf16.gmra.mxu0 %v1625
      %v1962 = vpop.f32.mrf.mxu0
      %v1963 = vadd.f32 %v1518, %v1962
      %v1964 = vpop.f32.mrf.mxu0
      %v1965 = vadd.f32 %v1518, %v1964
      %1966 = vmatmul.bf16.gmra.mxu0 %v1628
      %v1967 = vpop.f32.mrf.mxu0
      %v1968 = vadd.f32 %v1518, %v1967
      %v1969 = vpop.f32.mrf.mxu0
      %v1970 = vadd.f32 %v1518, %v1969
      %1971 = vmatmul.bf16.gmra.mxu0 %v1631
      %v1972 = vpop.f32.mrf.mxu0
      %v1973 = vadd.f32 %v1518, %v1972
      %v1974 = vpop.f32.mrf.mxu0
      %v1975 = vadd.f32 %v1518, %v1974
      %1976 = vmatmul.bf16.gmra.mxu0 %v1634
      %v1977 = vpop.f32.mrf.mxu0
      %v1978 = vadd.f32 %v1518, %v1977
      %v1979 = vpop.f32.mrf.mxu0
      %v1980 = vadd.f32 %v1518, %v1979
      %1981 = vmatmul.bf16.gmra.mxu0 %v1637
      %v1982 = vpop.f32.mrf.mxu0
      %v1983 = vadd.f32 %v1518, %v1982
      %v1984 = vpop.f32.mrf.mxu0
      %v1985 = vadd.f32 %v1518, %v1984
      %1986 = vmatmul.bf16.gmra.mxu0 %v1640
      %v1987 = vpop.f32.mrf.mxu0
      %v1988 = vadd.f32 %v1518, %v1987
      %v1989 = vpop.f32.mrf.mxu0
      %v1990 = vadd.f32 %v1518, %v1989
      %1991 = vmatmul.bf16.gmra.mxu0 %v1643
      %v1992 = vpop.f32.mrf.mxu0
      %v1993 = vadd.f32 %v1518, %v1992
      %v1994 = vpop.f32.mrf.mxu0
      %v1995 = vadd.f32 %v1518, %v1994
      %1996 = vmatmul.bf16.gmra.mxu0 %v1646
      %v1997 = vpop.f32.mrf.mxu0
      %v1998 = vadd.f32 %v1518, %v1997
      %v1999 = vpop.f32.mrf.mxu0
      %v2000 = vadd.f32 %v1518, %v1999
      %2001 = vmatmul.bf16.gmra.mxu0 %v1649
      %v2002 = vpop.f32.mrf.mxu0
      %v2003 = vadd.f32 %v1518, %v2002
      %v2004 = vpop.f32.mrf.mxu0
      %v2005 = vadd.f32 %v1518, %v2004
      %2006 = vdwg.mxu0
      %v2007 = vmax.f32 %v1661, 0.0
      %v2008 = vmax.f32 %v1750, 0.0
      %v2009 = vmax.f32 %v1839, 0.0
      %v2010 = vmax.f32 %v1928, 0.0
      %v2011 = vmax.f32 %v1663, 0.0
      %v2012 = vmax.f32 %v1752, 0.0
      %v2013 = vmax.f32 %v1841, 0.0
      %v2014 = vmax.f32 %v1930, 0.0
      %v2015 = vmax.f32 %v1666, 0.0
      %v2016 = vmax.f32 %v1755, 0.0
      %v2017 = vmax.f32 %v1844, 0.0
      %v2018 = vmax.f32 %v1933, 0.0
      %v2019 = vmax.f32 %v1668, 0.0
      %v2020 = vmax.f32 %v1757, 0.0
      %v2021 = vmax.f32 %v1846, 0.0
      %v2022 = vmax.f32 %v1935, 0.0
      %v2023 = vmax.f32 %v1671, 0.0
      %v2024 = vmax.f32 %v1760, 0.0
      %v2025 = vmax.f32 %v1849, 0.0
      %v2026 = vmax.f32 %v1938, 0.0
      %v2027 = vmax.f32 %v1673, 0.0
      %v2028 = vmax.f32 %v1762, 0.0
      %v2029 = vmax.f32 %v1851, 0.0
      %v2030 = vmax.f32 %v1940, 0.0
      %v2031 = vmax.f32 %v1676, 0.0
      %v2032 = vmax.f32 %v1765, 0.0
      %v2033 = vmax.f32 %v1854, 0.0
      %v2034 = vmax.f32 %v1943, 0.0
      %v2035 = vmax.f32 %v1678, 0.0
      %v2036 = vmax.f32 %v1767, 0.0
      %v2037 = vmax.f32 %v1856, 0.0
      %v2038 = vmax.f32 %v1945, 0.0
      %v2039 = vmax.f32 %v1681, 0.0
      %v2040 = vmax.f32 %v1770, 0.0
      %v2041 = vmax.f32 %v1859, 0.0
      %v2042 = vmax.f32 %v1948, 0.0
      %v2043 = vmax.f32 %v1683, 0.0
      %v2044 = vmax.f32 %v1772, 0.0
      %v2045 = vmax.f32 %v1861, 0.0
      %v2046 = vmax.f32 %v1950, 0.0
      %v2047 = vmax.f32 %v1686, 0.0
      %v2048 = vmax.f32 %v1775, 0.0
      %v2049 = vmax.f32 %v1864, 0.0
      %v2050 = vmax.f32 %v1953, 0.0
      %v2051 = vmax.f32 %v1688, 0.0
      %v2052 = vmax.f32 %v1777, 0.0
      %v2053 = vmax.f32 %v1866, 0.0
      %v2054 = vmax.f32 %v1955, 0.0
      %v2055 = vmax.f32 %v1691, 0.0
      %v2056 = vmax.f32 %v1780, 0.0
      %v2057 = vmax.f32 %v1869, 0.0
      %v2058 = vmax.f32 %v1958, 0.0
      %v2059 = vmax.f32 %v1693, 0.0
      %v2060 = vmax.f32 %v1782, 0.0
      %v2061 = vmax.f32 %v1871, 0.0
      %v2062 = vmax.f32 %v1960, 0.0
      %v2063 = vmax.f32 %v1696, 0.0
      %v2064 = vmax.f32 %v1785, 0.0
      %v2065 = vmax.f32 %v1874, 0.0
      %v2066 = vmax.f32 %v1963, 0.0
      %v2067 = vmax.f32 %v1698, 0.0
      %v2068 = vmax.f32 %v1787, 0.0
      %v2069 = vmax.f32 %v1876, 0.0
      %v2070 = vmax.f32 %v1965, 0.0
      %v2071 = vmax.f32 %v1701, 0.0
      %v2072 = vmax.f32 %v1790, 0.0
      %v2073 = vmax.f32 %v1879, 0.0
      %v2074 = vmax.f32 %v1968, 0.0
      %v2075 = vmax.f32 %v1703, 0.0
      %v2076 = vmax.f32 %v1792, 0.0
      %v2077 = vmax.f32 %v1881, 0.0
      %v2078 = vmax.f32 %v1970, 0.0
      %v2079 = vmax.f32 %v1706, 0.0
      %v2080 = vmax.f32 %v1795, 0.0
      %v2081 = vmax.f32 %v1884, 0.0
      %v2082 = vmax.f32 %v1973, 0.0
      %v2083 = vmax.f32 %v1708, 0.0
      %v2084 = vmax.f32 %v1797, 0.0
      %v2085 = vmax.f32 %v1886, 0.0
      %v2086 = vmax.f32 %v1975, 0.0
      %v2087 = vmax.f32 %v1711, 0.0
      %v2088 = vmax.f32 %v1800, 0.0
      %v2089 = vmax.f32 %v1889, 0.0
      %v2090 = vmax.f32 %v1978, 0.0
      %v2091 = vmax.f32 %v1713, 0.0
      %v2092 = vmax.f32 %v1802, 0.0
      %v2093 = vmax.f32 %v1891, 0.0
      %v2094 = vmax.f32 %v1980, 0.0
      %v2095 = vmax.f32 %v1716, 0.0
      %v2096 = vmax.f32 %v1805, 0.0
      %v2097 = vmax.f32 %v1894, 0.0
      %v2098 = vmax.f32 %v1983, 0.0
      %v2099 = vmax.f32 %v1718, 0.0
      %v2100 = vmax.f32 %v1807, 0.0
      %v2101 = vmax.f32 %v1896, 0.0
      %v2102 = vmax.f32 %v1985, 0.0
      %v2103 = vmax.f32 %v1721, 0.0
      %v2104 = vmax.f32 %v1810, 0.0
      %v2105 = vmax.f32 %v1899, 0.0
      %v2106 = vmax.f32 %v1988, 0.0
      %v2107 = vmax.f32 %v1723, 0.0
      %v2108 = vmax.f32 %v1812, 0.0
      %v2109 = vmax.f32 %v1901, 0.0
      %v2110 = vmax.f32 %v1990, 0.0
      %v2111 = vmax.f32 %v1726, 0.0
      %v2112 = vmax.f32 %v1815, 0.0
      %v2113 = vmax.f32 %v1904, 0.0
      %v2114 = vmax.f32 %v1993, 0.0
      %v2115 = vmax.f32 %v1728, 0.0
      %v2116 = vmax.f32 %v1817, 0.0
      %v2117 = vmax.f32 %v1906, 0.0
      %v2118 = vmax.f32 %v1995, 0.0
      %v2119 = vmax.f32 %v1731, 0.0
      %v2120 = vmax.f32 %v1820, 0.0
      %v2121 = vmax.f32 %v1909, 0.0
      %v2122 = vmax.f32 %v1998, 0.0
      %v2123 = vmax.f32 %v1733, 0.0
      %v2124 = vmax.f32 %v1822, 0.0
      %v2125 = vmax.f32 %v1911, 0.0
      %v2126 = vmax.f32 %v2000, 0.0
      %v2127 = vmax.f32 %v1736, 0.0
      %v2128 = vmax.f32 %v1825, 0.0
      %v2129 = vmax.f32 %v1914, 0.0
      %v2130 = vmax.f32 %v2003, 0.0
      %v2131 = vmax.f32 %v1738, 0.0
      %v2132 = vmax.f32 %v1827, 0.0
      %v2133 = vmax.f32 %v1916, 0.0
      %v2134 = vmax.f32 %v2005, 0.0
      %v2135 = vpack.c.bf16 %v2011, %v2007
      %v2136 = vpack.c.bf16 %v2012, %v2008
      %v2137 = vpack.c.bf16 %v2013, %v2009
      %v2138 = vpack.c.bf16 %v2014, %v2010
      %v2139 = vpack.c.bf16 %v2019, %v2015
      %v2140 = vpack.c.bf16 %v2020, %v2016
      %v2141 = vpack.c.bf16 %v2021, %v2017
      %v2142 = vpack.c.bf16 %v2022, %v2018
      %v2143 = vpack.c.bf16 %v2027, %v2023
      %v2144 = vpack.c.bf16 %v2028, %v2024
      %v2145 = vpack.c.bf16 %v2029, %v2025
      %v2146 = vpack.c.bf16 %v2030, %v2026
      %v2147 = vpack.c.bf16 %v2035, %v2031
      %v2148 = vpack.c.bf16 %v2036, %v2032
      %v2149 = vpack.c.bf16 %v2037, %v2033
      %v2150 = vpack.c.bf16 %v2038, %v2034
      %v2151 = vpack.c.bf16 %v2043, %v2039
      %v2152 = vpack.c.bf16 %v2044, %v2040
      %v2153 = vpack.c.bf16 %v2045, %v2041
      %v2154 = vpack.c.bf16 %v2046, %v2042
      %v2155 = vpack.c.bf16 %v2051, %v2047
      %v2156 = vpack.c.bf16 %v2052, %v2048
      %v2157 = vpack.c.bf16 %v2053, %v2049
      %v2158 = vpack.c.bf16 %v2054, %v2050
      %v2159 = vpack.c.bf16 %v2059, %v2055
      %v2160 = vpack.c.bf16 %v2060, %v2056
      %v2161 = vpack.c.bf16 %v2061, %v2057
      %v2162 = vpack.c.bf16 %v2062, %v2058
      %v2163 = vpack.c.bf16 %v2067, %v2063
      %v2164 = vpack.c.bf16 %v2068, %v2064
      %v2165 = vpack.c.bf16 %v2069, %v2065
      %v2166 = vpack.c.bf16 %v2070, %v2066
      %v2167 = vpack.c.bf16 %v2075, %v2071
      %v2168 = vpack.c.bf16 %v2076, %v2072
      %v2169 = vpack.c.bf16 %v2077, %v2073
      %v2170 = vpack.c.bf16 %v2078, %v2074
      %v2171 = vpack.c.bf16 %v2083, %v2079
      %v2172 = vpack.c.bf16 %v2084, %v2080
      %v2173 = vpack.c.bf16 %v2085, %v2081
      %v2174 = vpack.c.bf16 %v2086, %v2082
      %v2175 = vpack.c.bf16 %v2091, %v2087
      %v2176 = vpack.c.bf16 %v2092, %v2088
      %v2177 = vpack.c.bf16 %v2093, %v2089
      %v2178 = vpack.c.bf16 %v2094, %v2090
      %v2179 = vpack.c.bf16 %v2099, %v2095
      %v2180 = vpack.c.bf16 %v2100, %v2096
      %v2181 = vpack.c.bf16 %v2101, %v2097
      %v2182 = vpack.c.bf16 %v2102, %v2098
      %v2183 = vpack.c.bf16 %v2107, %v2103
      %v2184 = vpack.c.bf16 %v2108, %v2104
      %v2185 = vpack.c.bf16 %v2109, %v2105
      %v2186 = vpack.c.bf16 %v2110, %v2106
      %v2187 = vpack.c.bf16 %v2115, %v2111
      %v2188 = vpack.c.bf16 %v2116, %v2112
      %v2189 = vpack.c.bf16 %v2117, %v2113
      %v2190 = vpack.c.bf16 %v2118, %v2114
      %v2191 = vpack.c.bf16 %v2123, %v2119
      %v2192 = vpack.c.bf16 %v2124, %v2120
      %v2193 = vpack.c.bf16 %v2125, %v2121
      %v2194 = vpack.c.bf16 %v2126, %v2122
      %v2195 = vpack.c.bf16 %v2131, %v2127
      %v2196 = vpack.c.bf16 %v2132, %v2128
      %v2197 = vpack.c.bf16 %v2133, %v2129
      %v2198 = vpack.c.bf16 %v2134, %v2130
      %v2199 = vld [vmem:[%s7] sm:$0xf]
      %v2200 = vld [vmem:[%s7 + $0x4] sm:$0xf]
      %v2201 = vld [vmem:[%s7 + $0x8] sm:$0xf]
      %v2202 = vld [vmem:[%s7 + $0xc] sm:$0xf]
      %v2203 = vld [vmem:[%s7 + $0x10] sm:$0xf]
      %v2204 = vld [vmem:[%s7 + $0x14] sm:$0xf]
      %v2205 = vld [vmem:[%s7 + $0x18] sm:$0xf]
      %v2206 = vld [vmem:[%s7 + $0x1c] sm:$0xf]
      %v2207 = vld [vmem:[%s7 + $0x20] sm:$0xf]
      %v2208 = vld [vmem:[%s7 + $0x24] sm:$0xf]
      %v2209 = vld [vmem:[%s7 + $0x28] sm:$0xf]
      %v2210 = vld [vmem:[%s7 + $0x2c] sm:$0xf]
      %v2211 = vld [vmem:[%s7 + $0x30] sm:$0xf]
      %v2212 = vld [vmem:[%s7 + $0x34] sm:$0xf]
      %v2213 = vld [vmem:[%s7 + $0x38] sm:$0xf]
      %v2214 = vld [vmem:[%s7 + $0x3c] sm:$0xf]
      %v2215 = vld [vmem:[%s7 + $0x40] sm:$0xf]
      %v2216 = vld [vmem:[%s7 + $0x44] sm:$0xf]
      %v2217 = vld [vmem:[%s7 + $0x48] sm:$0xf]
      %v2218 = vld [vmem:[%s7 + $0x4c] sm:$0xf]
      %v2219 = vld [vmem:[%s7 + $0x50] sm:$0xf]
      %v2220 = vld [vmem:[%s7 + $0x54] sm:$0xf]
      %v2221 = vld [vmem:[%s7 + $0x58] sm:$0xf]
      %v2222 = vld [vmem:[%s7 + $0x5c] sm:$0xf]
      %v2223 = vld [vmem:[%s7 + $0x60] sm:$0xf]
      %v2224 = vld [vmem:[%s7 + $0x64] sm:$0xf]
      %v2225 = vld [vmem:[%s7 + $0x68] sm:$0xf]
      %v2226 = vld [vmem:[%s7 + $0x6c] sm:$0xf]
      %v2227 = vld [vmem:[%s7 + $0x70] sm:$0xf]
      %v2228 = vld [vmem:[%s7 + $0x74] sm:$0xf]
      %v2229 = vld [vmem:[%s7 + $0x78] sm:$0xf]
      %v2230 = vld [vmem:[%s7 + $0x7c] sm:$0xf]
      %v2231 = vld [vmem:[%s7 + $0x80] sm:$0xf]
      %v2232 = vld [vmem:[%s7 + $0x84] sm:$0xf]
      %v2233 = vld [vmem:[%s7 + $0x88] sm:$0xf]
      %v2234 = vld [vmem:[%s7 + $0x8c] sm:$0xf]
      %v2235 = vld [vmem:[%s7 + $0x90] sm:$0xf]
      %v2236 = vld [vmem:[%s7 + $0x94] sm:$0xf]
      %v2237 = vld [vmem:[%s7 + $0x98] sm:$0xf]
      %v2238 = vld [vmem:[%s7 + $0x9c] sm:$0xf]
      %v2239 = vld [vmem:[%s7 + $0xa0] sm:$0xf]
      %v2240 = vld [vmem:[%s7 + $0xa4] sm:$0xf]
      %v2241 = vld [vmem:[%s7 + $0xa8] sm:$0xf]
      %v2242 = vld [vmem:[%s7 + $0xac] sm:$0xf]
      %v2243 = vld [vmem:[%s7 + $0xb0] sm:$0xf]
      %v2244 = vld [vmem:[%s7 + $0xb4] sm:$0xf]
      %v2245 = vld [vmem:[%s7 + $0xb8] sm:$0xf]
      %v2246 = vld [vmem:[%s7 + $0xbc] sm:$0xf]
      %v2247 = vld [vmem:[%s7 + $0xc0] sm:$0xf]
      %v2248 = vld [vmem:[%s7 + $0xc4] sm:$0xf]
      %v2249 = vld [vmem:[%s7 + $0xc8] sm:$0xf]
      %v2250 = vld [vmem:[%s7 + $0xcc] sm:$0xf]
      %v2251 = vld [vmem:[%s7 + $0xd0] sm:$0xf]
      %v2252 = vld [vmem:[%s7 + $0xd4] sm:$0xf]
      %v2253 = vld [vmem:[%s7 + $0xd8] sm:$0xf]
      %v2254 = vld [vmem:[%s7 + $0xdc] sm:$0xf]
      %v2255 = vld [vmem:[%s7 + $0xe0] sm:$0xf]
      %v2256 = vld [vmem:[%s7 + $0xe4] sm:$0xf]
      %v2257 = vld [vmem:[%s7 + $0xe8] sm:$0xf]
      %v2258 = vld [vmem:[%s7 + $0xec] sm:$0xf]
      %v2259 = vld [vmem:[%s7 + $0xf0] sm:$0xf]
      %v2260 = vld [vmem:[%s7 + $0xf4] sm:$0xf]
      %v2261 = vld [vmem:[%s7 + $0xf8] sm:$0xf]
      %v2262 = vld [vmem:[%s7 + $0xfc] sm:$0xf]
      %v2263 = vld [vmem:[%s5 + $0x10] sm:$0xff]
      %v2264 = vld [vmem:[%s5 + $0x18] sm:$0xff]
      %v2265 = vld [vmem:[%s5 + $0x50] sm:$0xff]
      %v2266 = vld [vmem:[%s5 + $0x58] sm:$0xff]
      %v2267 = vld [vmem:[%s5 + $0x90] sm:$0xff]
      %v2268 = vld [vmem:[%s5 + $0x98] sm:$0xff]
      %v2269 = vld [vmem:[%s5 + $0xd0] sm:$0xff]
      %v2270 = vld [vmem:[%s5 + $0xd8] sm:$0xff]
      %v2271 = vld [vmem:[%s5 + $0x110] sm:$0xff]
      %v2272 = vld [vmem:[%s5 + $0x118] sm:$0xff]
      %v2273 = vld [vmem:[%s5 + $0x150] sm:$0xff]
      %v2274 = vld [vmem:[%s5 + $0x158] sm:$0xff]
      %v2275 = vld [vmem:[%s5 + $0x190] sm:$0xff]
      %v2276 = vld [vmem:[%s5 + $0x198] sm:$0xff]
      %v2277 = vld [vmem:[%s5 + $0x1d0] sm:$0xff]
      %v2278 = vld [vmem:[%s5 + $0x1d8] sm:$0xff]
      %v2279 = vld [vmem:[%s6 + $0x4] sm:$0xf]
      %v2281 = vperm.slane %v2279, 0
      %v2282 = vperm.slane %v2279, 1
      %v2283 = vperm.slane %v2279, 2
      %v2284 = vperm.slane %v2279, 3
      %v2305 = vunpack.c.l.b16 %v2263
      %v2306 = vunpack.c.h.b16 %v2263
      %v2307 = vunpack.c.l.b16 %v2264
      %v2308 = vunpack.c.h.b16 %v2264
      %v2309 = vunpack.c.l.b16 %v2265
      %v2310 = vunpack.c.h.b16 %v2265
      %v2311 = vunpack.c.l.b16 %v2266
      %v2312 = vunpack.c.h.b16 %v2266
      %v2313 = vunpack.c.l.b16 %v2267
      %v2314 = vunpack.c.h.b16 %v2267
      %v2315 = vunpack.c.l.b16 %v2268
      %v2316 = vunpack.c.h.b16 %v2268
      %v2317 = vunpack.c.l.b16 %v2269
      %v2318 = vunpack.c.h.b16 %v2269
      %v2319 = vunpack.c.l.b16 %v2270
      %v2320 = vunpack.c.h.b16 %v2270
      %v2321 = vunpack.c.l.b16 %v2271
      %v2322 = vunpack.c.h.b16 %v2271
      %v2323 = vunpack.c.l.b16 %v2272
      %v2324 = vunpack.c.h.b16 %v2272
      %v2325 = vunpack.c.l.b16 %v2273
      %v2326 = vunpack.c.h.b16 %v2273
      %v2327 = vunpack.c.l.b16 %v2274
      %v2328 = vunpack.c.h.b16 %v2274
      %v2329 = vunpack.c.l.b16 %v2275
      %v2330 = vunpack.c.h.b16 %v2275
      %v2331 = vunpack.c.l.b16 %v2276
      %v2332 = vunpack.c.h.b16 %v2276
      %v2333 = vunpack.c.l.b16 %v2277
      %v2334 = vunpack.c.h.b16 %v2277
      %v2335 = vunpack.c.l.b16 %v2278
      %v2336 = vunpack.c.h.b16 %v2278
      %v2337 = vpack.c.b16 %v2309, %v2305
      %v2338 = vpack.c.b16 %v2310, %v2306
      %v2339 = vpack.c.b16 %v2311, %v2307
      %v2340 = vpack.c.b16 %v2312, %v2308
      %v2341 = vpack.c.b16 %v2317, %v2313
      %v2342 = vpack.c.b16 %v2318, %v2314
      %v2343 = vpack.c.b16 %v2319, %v2315
      %v2344 = vpack.c.b16 %v2320, %v2316
      %v2345 = vpack.c.b16 %v2325, %v2321
      %v2346 = vpack.c.b16 %v2326, %v2322
      %v2347 = vpack.c.b16 %v2327, %v2323
      %v2348 = vpack.c.b16 %v2328, %v2324
      %v2349 = vpack.c.b16 %v2333, %v2329
      %v2350 = vpack.c.b16 %v2334, %v2330
      %v2351 = vpack.c.b16 %v2335, %v2331
      %v2352 = vpack.c.b16 %v2336, %v2332
      %2369 = vmatpush.bf16.msra.mxu0 0
      %2370 = vmatpush.bf16.msra.mxu0 0
      %2371 = vmatpush.bf16.msra.mxu0 0
      %2372 = vmatpush.bf16.msra.mxu0 0
      %2373 = vmatpush.bf16.msra.mxu0 %v2349
      %2374 = vmatpush.bf16.msra.mxu0 %v2345
      %2375 = vmatpush.bf16.msra.mxu0 %v2341
      %2376 = vmatpush.bf16.msra.mxu0 %v2337
      %2377 = vmatmul.bf16.gmra.mxu0 %v1604
      %v2378 = vpop.f32.mrf.mxu0
      %v2379 = vadd.f32 %v2281, %v2378
      %v2380 = vpop.f32.mrf.mxu0
      %v2381 = vadd.f32 %v2281, %v2380
      %2382 = vmatmul.bf16.gmra.mxu0 %v1607
      %v2383 = vpop.f32.mrf.mxu0
      %v2384 = vadd.f32 %v2281, %v2383
      %v2385 = vpop.f32.mrf.mxu0
      %v2386 = vadd.f32 %v2281, %v2385
      %2387 = vmatmul.bf16.gmra.mxu0 %v1610
      %v2388 = vpop.f32.mrf.mxu0
      %v2389 = vadd.f32 %v2281, %v2388
      %v2390 = vpop.f32.mrf.mxu0
      %v2391 = vadd.f32 %v2281, %v2390
      %2392 = vmatmul.bf16.gmra.mxu0 %v1613
      %v2393 = vpop.f32.mrf.mxu0
      %v2394 = vadd.f32 %v2281, %v2393
      %v2395 = vpop.f32.mrf.mxu0
      %v2396 = vadd.f32 %v2281, %v2395
      %2397 = vmatmul.bf16.gmra.mxu0 %v1616
      %v2398 = vpop.f32.mrf.mxu0
      %v2399 = vadd.f32 %v2281, %v2398
      %v2400 = vpop.f32.mrf.mxu0
      %v2401 = vadd.f32 %v2281, %v2400
      %2402 = vmatmul.bf16.gmra.mxu0 %v1619
      %v2403 = vpop.f32.mrf.mxu0
      %v2404 = vadd.f32 %v2281, %v2403
      %v2405 = vpop.f32.mrf.mxu0
      %v2406 = vadd.f32 %v2281, %v2405
      %2407 = vmatmul.bf16.gmra.mxu0 %v1622
      %v2408 = vpop.f32.mrf.mxu0
      %v2409 = vadd.f32 %v2281, %v2408
      %v2410 = vpop.f32.mrf.mxu0
      %v2411 = vadd.f32 %v2281, %v2410
      %2412 = vmatmul.bf16.gmra.mxu0 %v1625
      %v2413 = vpop.f32.mrf.mxu0
      %v2414 = vadd.f32 %v2281, %v2413
      %v2415 = vpop.f32.mrf.mxu0
      %v2416 = vadd.f32 %v2281, %v2415
      %2417 = vmatmul.bf16.gmra.mxu0 %v1628
      %v2418 = vpop.f32.mrf.mxu0
      %v2419 = vadd.f32 %v2281, %v2418
      %v2420 = vpop.f32.mrf.mxu0
      %v2421 = vadd.f32 %v2281, %v2420
      %2422 = vmatmul.bf16.gmra.mxu0 %v1631
      %v2423 = vpop.f32.mrf.mxu0
      %v2424 = vadd.f32 %v2281, %v2423
      %v2425 = vpop.f32.mrf.mxu0
      %v2426 = vadd.f32 %v2281, %v2425
      %2427 = vmatmul.bf16.gmra.mxu0 %v1634
      %v2428 = vpop.f32.mrf.mxu0
      %v2429 = vadd.f32 %v2281, %v2428
      %v2430 = vpop.f32.mrf.mxu0
      %v2431 = vadd.f32 %v2281, %v2430
      %2432 = vmatmul.bf16.gmra.mxu0 %v1637
      %v2433 = vpop.f32.mrf.mxu0
      %v2434 = vadd.f32 %v2281, %v2433
      %v2435 = vpop.f32.mrf.mxu0
      %v2436 = vadd.f32 %v2281, %v2435
      %2437 = vmatmul.bf16.gmra.mxu0 %v1640
      %v2438 = vpop.f32.mrf.mxu0
      %v2439 = vadd.f32 %v2281, %v2438
      %v2440 = vpop.f32.mrf.mxu0
      %v2441 = vadd.f32 %v2281, %v2440
      %2442 = vmatmul.bf16.gmra.mxu0 %v1643
      %v2443 = vpop.f32.mrf.mxu0
      %v2444 = vadd.f32 %v2281, %v2443
      %v2445 = vpop.f32.mrf.mxu0
      %v2446 = vadd.f32 %v2281, %v2445
      %2447 = vmatmul.bf16.gmra.mxu0 %v1646
      %v2448 = vpop.f32.mrf.mxu0
      %v2449 = vadd.f32 %v2281, %v2448
      %v2450 = vpop.f32.mrf.mxu0
      %v2451 = vadd.f32 %v2281, %v2450
      %2452 = vmatmul.bf16.gmra.mxu0 %v1649
      %v2453 = vpop.f32.mrf.mxu0
      %v2454 = vadd.f32 %v2281, %v2453
      %v2455 = vpop.f32.mrf.mxu0
      %v2456 = vadd.f32 %v2281, %v2455
      %2457 = vdwg.mxu0
      %2458 = vmatpush.bf16.msra.mxu0 0
      %2459 = vmatpush.bf16.msra.mxu0 0
      %2460 = vmatpush.bf16.msra.mxu0 0
      %2461 = vmatpush.bf16.msra.mxu0 0
      %2462 = vmatpush.bf16.msra.mxu0 %v2350
      %2463 = vmatpush.bf16.msra.mxu0 %v2346
      %2464 = vmatpush.bf16.msra.mxu0 %v2342
      %2465 = vmatpush.bf16.msra.mxu0 %v2338
      %2466 = vmatmul.bf16.gmra.mxu0 %v1604
      %v2467 = vpop.f32.mrf.mxu0
      %v2468 = vadd.f32 %v2282, %v2467
      %v2469 = vpop.f32.mrf.mxu0
      %v2470 = vadd.f32 %v2282, %v2469
      %2471 = vmatmul.bf16.gmra.mxu0 %v1607
      %v2472 = vpop.f32.mrf.mxu0
      %v2473 = vadd.f32 %v2282, %v2472
      %v2474 = vpop.f32.mrf.mxu0
      %v2475 = vadd.f32 %v2282, %v2474
      %2476 = vmatmul.bf16.gmra.mxu0 %v1610
      %v2477 = vpop.f32.mrf.mxu0
      %v2478 = vadd.f32 %v2282, %v2477
      %v2479 = vpop.f32.mrf.mxu0
      %v2480 = vadd.f32 %v2282, %v2479
      %2481 = vmatmul.bf16.gmra.mxu0 %v1613
      %v2482 = vpop.f32.mrf.mxu0
      %v2483 = vadd.f32 %v2282, %v2482
      %v2484 = vpop.f32.mrf.mxu0
      %v2485 = vadd.f32 %v2282, %v2484
      %2486 = vmatmul.bf16.gmra.mxu0 %v1616
      %v2487 = vpop.f32.mrf.mxu0
      %v2488 = vadd.f32 %v2282, %v2487
      %v2489 = vpop.f32.mrf.mxu0
      %v2490 = vadd.f32 %v2282, %v2489
      %2491 = vmatmul.bf16.gmra.mxu0 %v1619
      %v2492 = vpop.f32.mrf.mxu0
      %v2493 = vadd.f32 %v2282, %v2492
      %v2494 = vpop.f32.mrf.mxu0
      %v2495 = vadd.f32 %v2282, %v2494
      %2496 = vmatmul.bf16.gmra.mxu0 %v1622
      %v2497 = vpop.f32.mrf.mxu0
      %v2498 = vadd.f32 %v2282, %v2497
      %v2499 = vpop.f32.mrf.mxu0
      %v2500 = vadd.f32 %v2282, %v2499
      %2501 = vmatmul.bf16.gmra.mxu0 %v1625
      %v2502 = vpop.f32.mrf.mxu0
      %v2503 = vadd.f32 %v2282, %v2502
      %v2504 = vpop.f32.mrf.mxu0
      %v2505 = vadd.f32 %v2282, %v2504
      %2506 = vmatmul.bf16.gmra.mxu0 %v1628
      %v2507 = vpop.f32.mrf.mxu0
      %v2508 = vadd.f32 %v2282, %v2507
      %v2509 = vpop.f32.mrf.mxu0
      %v2510 = vadd.f32 %v2282, %v2509
      %2511 = vmatmul.bf16.gmra.mxu0 %v1631
      %v2512 = vpop.f32.mrf.mxu0
      %v2513 = vadd.f32 %v2282, %v2512
      %v2514 = vpop.f32.mrf.mxu0
      %v2515 = vadd.f32 %v2282, %v2514
      %2516 = vmatmul.bf16.gmra.mxu0 %v1634
      %v2517 = vpop.f32.mrf.mxu0
      %v2518 = vadd.f32 %v2282, %v2517
      %v2519 = vpop.f32.mrf.mxu0
      %v2520 = vadd.f32 %v2282, %v2519
      %2521 = vmatmul.bf16.gmra.mxu0 %v1637
      %v2522 = vpop.f32.mrf.mxu0
      %v2523 = vadd.f32 %v2282, %v2522
      %v2524 = vpop.f32.mrf.mxu0
      %v2525 = vadd.f32 %v2282, %v2524
      %2526 = vmatmul.bf16.gmra.mxu0 %v1640
      %v2527 = vpop.f32.mrf.mxu0
      %v2528 = vadd.f32 %v2282, %v2527
      %v2529 = vpop.f32.mrf.mxu0
      %v2530 = vadd.f32 %v2282, %v2529
      %2531 = vmatmul.bf16.gmra.mxu0 %v1643
      %v2532 = vpop.f32.mrf.mxu0
      %v2533 = vadd.f32 %v2282, %v2532
      %v2534 = vpop.f32.mrf.mxu0
      %v2535 = vadd.f32 %v2282, %v2534
      %2536 = vmatmul.bf16.gmra.mxu0 %v1646
      %v2537 = vpop.f32.mrf.mxu0
      %v2538 = vadd.f32 %v2282, %v2537
      %v2539 = vpop.f32.mrf.mxu0
      %v2540 = vadd.f32 %v2282, %v2539
      %2541 = vmatmul.bf16.gmra.mxu0 %v1649
      %v2542 = vpop.f32.mrf.mxu0
      %v2543 = vadd.f32 %v2282, %v2542
      %v2544 = vpop.f32.mrf.mxu0
      %v2545 = vadd.f32 %v2282, %v2544
      %2546 = vdwg.mxu0
      %2547 = vmatpush.bf16.msra.mxu0 0
      %2548 = vmatpush.bf16.msra.mxu0 0
      %2549 = vmatpush.bf16.msra.mxu0 0
      %2550 = vmatpush.bf16.msra.mxu0 0
      %2551 = vmatpush.bf16.msra.mxu0 %v2351
      %2552 = vmatpush.bf16.msra.mxu0 %v2347
      %2553 = vmatpush.bf16.msra.mxu0 %v2343
      %2554 = vmatpush.bf16.msra.mxu0 %v2339
      %2555 = vmatmul.bf16.gmra.mxu0 %v1604
      %v2556 = vpop.f32.mrf.mxu0
      %v2557 = vadd.f32 %v2283, %v2556
      %v2558 = vpop.f32.mrf.mxu0
      %v2559 = vadd.f32 %v2283, %v2558
      %2560 = vmatmul.bf16.gmra.mxu0 %v1607
      %v2561 = vpop.f32.mrf.mxu0
      %v2562 = vadd.f32 %v2283, %v2561
      %v2563 = vpop.f32.mrf.mxu0
      %v2564 = vadd.f32 %v2283, %v2563
      %2565 = vmatmul.bf16.gmra.mxu0 %v1610
      %v2566 = vpop.f32.mrf.mxu0
      %v2567 = vadd.f32 %v2283, %v2566
      %v2568 = vpop.f32.mrf.mxu0
      %v2569 = vadd.f32 %v2283, %v2568
      %2570 = vmatmul.bf16.gmra.mxu0 %v1613
      %v2571 = vpop.f32.mrf.mxu0
      %v2572 = vadd.f32 %v2283, %v2571
      %v2573 = vpop.f32.mrf.mxu0
      %v2574 = vadd.f32 %v2283, %v2573
      %2575 = vmatmul.bf16.gmra.mxu0 %v1616
      %v2576 = vpop.f32.mrf.mxu0
      %v2577 = vadd.f32 %v2283, %v2576
      %v2578 = vpop.f32.mrf.mxu0
      %v2579 = vadd.f32 %v2283, %v2578
      %2580 = vmatmul.bf16.gmra.mxu0 %v1619
      %v2581 = vpop.f32.mrf.mxu0
      %v2582 = vadd.f32 %v2283, %v2581
      %v2583 = vpop.f32.mrf.mxu0
      %v2584 = vadd.f32 %v2283, %v2583
      %2585 = vmatmul.bf16.gmra.mxu0 %v1622
      %v2586 = vpop.f32.mrf.mxu0
      %v2587 = vadd.f32 %v2283, %v2586
      %v2588 = vpop.f32.mrf.mxu0
      %v2589 = vadd.f32 %v2283, %v2588
      %2590 = vmatmul.bf16.gmra.mxu0 %v1625
      %v2591 = vpop.f32.mrf.mxu0
      %v2592 = vadd.f32 %v2283, %v2591
      %v2593 = vpop.f32.mrf.mxu0
      %v2594 = vadd.f32 %v2283, %v2593
      %2595 = vmatmul.bf16.gmra.mxu0 %v1628
      %v2596 = vpop.f32.mrf.mxu0
      %v2597 = vadd.f32 %v2283, %v2596
      %v2598 = vpop.f32.mrf.mxu0
      %v2599 = vadd.f32 %v2283, %v2598
      %2600 = vmatmul.bf16.gmra.mxu0 %v1631
      %v2601 = vpop.f32.mrf.mxu0
      %v2602 = vadd.f32 %v2283, %v2601
      %v2603 = vpop.f32.mrf.mxu0
      %v2604 = vadd.f32 %v2283, %v2603
      %2605 = vmatmul.bf16.gmra.mxu0 %v1634
      %v2606 = vpop.f32.mrf.mxu0
      %v2607 = vadd.f32 %v2283, %v2606
      %v2608 = vpop.f32.mrf.mxu0
      %v2609 = vadd.f32 %v2283, %v2608
      %2610 = vmatmul.bf16.gmra.mxu0 %v1637
      %v2611 = vpop.f32.mrf.mxu0
      %v2612 = vadd.f32 %v2283, %v2611
      %v2613 = vpop.f32.mrf.mxu0
      %v2614 = vadd.f32 %v2283, %v2613
      %2615 = vmatmul.bf16.gmra.mxu0 %v1640
      %v2616 = vpop.f32.mrf.mxu0
      %v2617 = vadd.f32 %v2283, %v2616
      %v2618 = vpop.f32.mrf.mxu0
      %v2619 = vadd.f32 %v2283, %v2618
      %2620 = vmatmul.bf16.gmra.mxu0 %v1643
      %v2621 = vpop.f32.mrf.mxu0
      %v2622 = vadd.f32 %v2283, %v2621
      %v2623 = vpop.f32.mrf.mxu0
      %v2624 = vadd.f32 %v2283, %v2623
      %2625 = vmatmul.bf16.gmra.mxu0 %v1646
      %v2626 = vpop.f32.mrf.mxu0
      %v2627 = vadd.f32 %v2283, %v2626
      %v2628 = vpop.f32.mrf.mxu0
      %v2629 = vadd.f32 %v2283, %v2628
      %2630 = vmatmul.bf16.gmra.mxu0 %v1649
      %v2631 = vpop.f32.mrf.mxu0
      %v2632 = vadd.f32 %v2283, %v2631
      %v2633 = vpop.f32.mrf.mxu0
      %v2634 = vadd.f32 %v2283, %v2633
      %2635 = vdwg.mxu0
      %2636 = vmatpush.bf16.msra.mxu0 0
      %2637 = vmatpush.bf16.msra.mxu0 0
      %2638 = vmatpush.bf16.msra.mxu0 0
      %2639 = vmatpush.bf16.msra.mxu0 0
      %2640 = vmatpush.bf16.msra.mxu0 %v2352
      %2641 = vmatpush.bf16.msra.mxu0 %v2348
      %2642 = vmatpush.bf16.msra.mxu0 %v2344
      %2643 = vmatpush.bf16.msra.mxu0 %v2340
      %2644 = vmatmul.bf16.gmra.mxu0 %v1604
      %v2645 = vpop.f32.mrf.mxu0
      %v2646 = vadd.f32 %v2284, %v2645
      %v2647 = vpop.f32.mrf.mxu0
      %v2648 = vadd.f32 %v2284, %v2647
      %2649 = vmatmul.bf16.gmra.mxu0 %v1607
      %v2650 = vpop.f32.mrf.mxu0
      %v2651 = vadd.f32 %v2284, %v2650
      %v2652 = vpop.f32.mrf.mxu0
      %v2653 = vadd.f32 %v2284, %v2652
      %2654 = vmatmul.bf16.gmra.mxu0 %v1610
      %v2655 = vpop.f32.mrf.mxu0
      %v2656 = vadd.f32 %v2284, %v2655
      %v2657 = vpop.f32.mrf.mxu0
      %v2658 = vadd.f32 %v2284, %v2657
      %2659 = vmatmul.bf16.gmra.mxu0 %v1613
      %v2660 = vpop.f32.mrf.mxu0
      %v2661 = vadd.f32 %v2284, %v2660
      %v2662 = vpop.f32.mrf.mxu0
      %v2663 = vadd.f32 %v2284, %v2662
      %2664 = vmatmul.bf16.gmra.mxu0 %v1616
      %v2665 = vpop.f32.mrf.mxu0
      %v2666 = vadd.f32 %v2284, %v2665
      %v2667 = vpop.f32.mrf.mxu0
      %v2668 = vadd.f32 %v2284, %v2667
      %2669 = vmatmul.bf16.gmra.mxu0 %v1619
      %v2670 = vpop.f32.mrf.mxu0
      %v2671 = vadd.f32 %v2284, %v2670
      %v2672 = vpop.f32.mrf.mxu0
      %v2673 = vadd.f32 %v2284, %v2672
      %2674 = vmatmul.bf16.gmra.mxu0 %v1622
      %v2675 = vpop.f32.mrf.mxu0
      %v2676 = vadd.f32 %v2284, %v2675
      %v2677 = vpop.f32.mrf.mxu0
      %v2678 = vadd.f32 %v2284, %v2677
      %2679 = vmatmul.bf16.gmra.mxu0 %v1625
      %v2680 = vpop.f32.mrf.mxu0
      %v2681 = vadd.f32 %v2284, %v2680
      %v2682 = vpop.f32.mrf.mxu0
      %v2683 = vadd.f32 %v2284, %v2682
      %2684 = vmatmul.bf16.gmra.mxu0 %v1628
      %v2685 = vpop.f32.mrf.mxu0
      %v2686 = vadd.f32 %v2284, %v2685
      %v2687 = vpop.f32.mrf.mxu0
      %v2688 = vadd.f32 %v2284, %v2687
      %2689 = vmatmul.bf16.gmra.mxu0 %v1631
      %v2690 = vpop.f32.mrf.mxu0
      %v2691 = vadd.f32 %v2284, %v2690
      %v2692 = vpop.f32.mrf.mxu0
      %v2693 = vadd.f32 %v2284, %v2692
      %2694 = vmatmul.bf16.gmra.mxu0 %v1634
      %v2695 = vpop.f32.mrf.mxu0
      %v2696 = vadd.f32 %v2284, %v2695
      %v2697 = vpop.f32.mrf.mxu0
      %v2698 = vadd.f32 %v2284, %v2697
      %2699 = vmatmul.bf16.gmra.mxu0 %v1637
      %v2700 = vpop.f32.mrf.mxu0
      %v2701 = vadd.f32 %v2284, %v2700
      %v2702 = vpop.f32.mrf.mxu0
      %v2703 = vadd.f32 %v2284, %v2702
      %2704 = vmatmul.bf16.gmra.mxu0 %v1640
      %v2705 = vpop.f32.mrf.mxu0
      %v2706 = vadd.f32 %v2284, %v2705
      %v2707 = vpop.f32.mrf.mxu0
      %v2708 = vadd.f32 %v2284, %v2707
      %2709 = vmatmul.bf16.gmra.mxu0 %v1643
      %v2710 = vpop.f32.mrf.mxu0
      %v2711 = vadd.f32 %v2284, %v2710
      %v2712 = vpop.f32.mrf.mxu0
      %v2713 = vadd.f32 %v2284, %v2712
      %2714 = vmatmul.bf16.gmra.mxu0 %v1646
      %v2715 = vpop.f32.mrf.mxu0
      %v2716 = vadd.f32 %v2284, %v2715
      %v2717 = vpop.f32.mrf.mxu0
      %v2718 = vadd.f32 %v2284, %v2717
      %2719 = vmatmul.bf16.gmra.mxu0 %v1649
      %v2720 = vpop.f32.mrf.mxu0
      %v2721 = vadd.f32 %v2284, %v2720
      %v2722 = vpop.f32.mrf.mxu0
      %v2723 = vadd.f32 %v2284, %v2722
      %2724 = vdwg.mxu0
      %v2725 = vmax.f32 %v2379, 0.0
      %v2726 = vmax.f32 %v2468, 0.0
      %v2727 = vmax.f32 %v2557, 0.0
      %v2728 = vmax.f32 %v2646, 0.0
      %v2729 = vmax.f32 %v2381, 0.0
      %v2730 = vmax.f32 %v2470, 0.0
      %v2731 = vmax.f32 %v2559, 0.0
      %v2732 = vmax.f32 %v2648, 0.0
      %v2733 = vmax.f32 %v2384, 0.0
      %v2734 = vmax.f32 %v2473, 0.0
      %v2735 = vmax.f32 %v2562, 0.0
      %v2736 = vmax.f32 %v2651, 0.0
      %v2737 = vmax.f32 %v2386, 0.0
      %v2738 = vmax.f32 %v2475, 0.0
      %v2739 = vmax.f32 %v2564, 0.0
      %v2740 = vmax.f32 %v2653, 0.0
      %v2741 = vmax.f32 %v2389, 0.0
      %v2742 = vmax.f32 %v2478, 0.0
      %v2743 = vmax.f32 %v2567, 0.0
      %v2744 = vmax.f32 %v2656, 0.0
      %v2745 = vmax.f32 %v2391, 0.0
      %v2746 = vmax.f32 %v2480, 0.0
      %v2747 = vmax.f32 %v2569, 0.0
      %v2748 = vmax.f32 %v2658, 0.0
      %v2749 = vmax.f32 %v2394, 0.0
      %v2750 = vmax.f32 %v2483, 0.0
      %v2751 = vmax.f32 %v2572, 0.0
      %v2752 = vmax.f32 %v2661, 0.0
      %v2753 = vmax.f32 %v2396, 0.0
      %v2754 = vmax.f32 %v2485, 0.0
      %v2755 = vmax.f32 %v2574, 0.0
      %v2756 = vmax.f32 %v2663, 0.0
      %v2757 = vmax.f32 %v2399, 0.0
      %v2758 = vmax.f32 %v2488, 0.0
      %v2759 = vmax.f32 %v2577, 0.0
      %v2760 = vmax.f32 %v2666, 0.0
      %v2761 = vmax.f32 %v2401, 0.0
      %v2762 = vmax.f32 %v2490, 0.0
      %v2763 = vmax.f32 %v2579, 0.0
      %v2764 = vmax.f32 %v2668, 0.0
      %v2765 = vmax.f32 %v2404, 0.0
      %v2766 = vmax.f32 %v2493, 0.0
      %v2767 = vmax.f32 %v2582, 0.0
      %v2768 = vmax.f32 %v2671, 0.0
      %v2769 = vmax.f32 %v2406, 0.0
      %v2770 = vmax.f32 %v2495, 0.0
      %v2771 = vmax.f32 %v2584, 0.0
      %v2772 = vmax.f32 %v2673, 0.0
      %v2773 = vmax.f32 %v2409, 0.0
      %v2774 = vmax.f32 %v2498, 0.0
      %v2775 = vmax.f32 %v2587, 0.0
      %v2776 = vmax.f32 %v2676, 0.0
      %v2777 = vmax.f32 %v2411, 0.0
      %v2778 = vmax.f32 %v2500, 0.0
      %v2779 = vmax.f32 %v2589, 0.0
      %v2780 = vmax.f32 %v2678, 0.0
      %v2781 = vmax.f32 %v2414, 0.0
      %v2782 = vmax.f32 %v2503, 0.0
      %v2783 = vmax.f32 %v2592, 0.0
      %v2784 = vmax.f32 %v2681, 0.0
      %v2785 = vmax.f32 %v2416, 0.0
      %v2786 = vmax.f32 %v2505, 0.0
      %v2787 = vmax.f32 %v2594, 0.0
      %v2788 = vmax.f32 %v2683, 0.0
      %v2789 = vmax.f32 %v2419, 0.0
      %v2790 = vmax.f32 %v2508, 0.0
      %v2791 = vmax.f32 %v2597, 0.0
      %v2792 = vmax.f32 %v2686, 0.0
      %v2793 = vmax.f32 %v2421, 0.0
      %v2794 = vmax.f32 %v2510, 0.0
      %v2795 = vmax.f32 %v2599, 0.0
      %v2796 = vmax.f32 %v2688, 0.0
      %v2797 = vmax.f32 %v2424, 0.0
      %v2798 = vmax.f32 %v2513, 0.0
      %v2799 = vmax.f32 %v2602, 0.0
      %v2800 = vmax.f32 %v2691, 0.0
      %v2801 = vmax.f32 %v2426, 0.0
      %v2802 = vmax.f32 %v2515, 0.0
      %v2803 = vmax.f32 %v2604, 0.0
      %v2804 = vmax.f32 %v2693, 0.0
      %v2805 = vmax.f32 %v2429, 0.0
      %v2806 = vmax.f32 %v2518, 0.0
      %v2807 = vmax.f32 %v2607, 0.0
      %v2808 = vmax.f32 %v2696, 0.0
      %v2809 = vmax.f32 %v2431, 0.0
      %v2810 = vmax.f32 %v2520, 0.0
      %v2811 = vmax.f32 %v2609, 0.0
      %v2812 = vmax.f32 %v2698, 0.0
      %v2813 = vmax.f32 %v2434, 0.0
      %v2814 = vmax.f32 %v2523, 0.0
      %v2815 = vmax.f32 %v2612, 0.0
      %v2816 = vmax.f32 %v2701, 0.0
      %v2817 = vmax.f32 %v2436, 0.0
      %v2818 = vmax.f32 %v2525, 0.0
      %v2819 = vmax.f32 %v2614, 0.0
      %v2820 = vmax.f32 %v2703, 0.0
      %v2821 = vmax.f32 %v2439, 0.0
      %v2822 = vmax.f32 %v2528, 0.0
      %v2823 = vmax.f32 %v2617, 0.0
      %v2824 = vmax.f32 %v2706, 0.0
      %v2825 = vmax.f32 %v2441, 0.0
      %v2826 = vmax.f32 %v2530, 0.0
      %v2827 = vmax.f32 %v2619, 0.0
      %v2828 = vmax.f32 %v2708, 0.0
      %v2829 = vmax.f32 %v2444, 0.0
      %v2830 = vmax.f32 %v2533, 0.0
      %v2831 = vmax.f32 %v2622, 0.0
      %v2832 = vmax.f32 %v2711, 0.0
      %v2833 = vmax.f32 %v2446, 0.0
      %v2834 = vmax.f32 %v2535, 0.0
      %v2835 = vmax.f32 %v2624, 0.0
      %v2836 = vmax.f32 %v2713, 0.0
      %v2837 = vmax.f32 %v2449, 0.0
      %v2838 = vmax.f32 %v2538, 0.0
      %v2839 = vmax.f32 %v2627, 0.0
      %v2840 = vmax.f32 %v2716, 0.0
      %v2841 = vmax.f32 %v2451, 0.0
      %v2842 = vmax.f32 %v2540, 0.0
      %v2843 = vmax.f32 %v2629, 0.0
      %v2844 = vmax.f32 %v2718, 0.0
      %v2845 = vmax.f32 %v2454, 0.0
      %v2846 = vmax.f32 %v2543, 0.0
      %v2847 = vmax.f32 %v2632, 0.0
      %v2848 = vmax.f32 %v2721, 0.0
      %v2849 = vmax.f32 %v2456, 0.0
      %v2850 = vmax.f32 %v2545, 0.0
      %v2851 = vmax.f32 %v2634, 0.0
      %v2852 = vmax.f32 %v2723, 0.0
      %v2853 = vpack.c.bf16 %v2729, %v2725
      %v2854 = vpack.c.bf16 %v2730, %v2726
      %v2855 = vpack.c.bf16 %v2731, %v2727
      %v2856 = vpack.c.bf16 %v2732, %v2728
      %v2857 = vpack.c.bf16 %v2737, %v2733
      %v2858 = vpack.c.bf16 %v2738, %v2734
      %v2859 = vpack.c.bf16 %v2739, %v2735
      %v2860 = vpack.c.bf16 %v2740, %v2736
      %v2861 = vpack.c.bf16 %v2745, %v2741
      %v2862 = vpack.c.bf16 %v2746, %v2742
      %v2863 = vpack.c.bf16 %v2747, %v2743
      %v2864 = vpack.c.bf16 %v2748, %v2744
      %v2865 = vpack.c.bf16 %v2753, %v2749
      %v2866 = vpack.c.bf16 %v2754, %v2750
      %v2867 = vpack.c.bf16 %v2755, %v2751
      %v2868 = vpack.c.bf16 %v2756, %v2752
      %v2869 = vpack.c.bf16 %v2761, %v2757
      %v2870 = vpack.c.bf16 %v2762, %v2758
      %v2871 = vpack.c.bf16 %v2763, %v2759
      %v2872 = vpack.c.bf16 %v2764, %v2760
      %v2873 = vpack.c.bf16 %v2769, %v2765
      %v2874 = vpack.c.bf16 %v2770, %v2766
      %v2875 = vpack.c.bf16 %v2771, %v2767
      %v2876 = vpack.c.bf16 %v2772, %v2768
      %v2877 = vpack.c.bf16 %v2777, %v2773
      %v2878 = vpack.c.bf16 %v2778, %v2774
      %v2879 = vpack.c.bf16 %v2779, %v2775
      %v2880 = vpack.c.bf16 %v2780, %v2776
      %v2881 = vpack.c.bf16 %v2785, %v2781
      %v2882 = vpack.c.bf16 %v2786, %v2782
      %v2883 = vpack.c.bf16 %v2787, %v2783
      %v2884 = vpack.c.bf16 %v2788, %v2784
      %v2885 = vpack.c.bf16 %v2793, %v2789
      %v2886 = vpack.c.bf16 %v2794, %v2790
      %v2887 = vpack.c.bf16 %v2795, %v2791
      %v2888 = vpack.c.bf16 %v2796, %v2792
      %v2889 = vpack.c.bf16 %v2801, %v2797
      %v2890 = vpack.c.bf16 %v2802, %v2798
      %v2891 = vpack.c.bf16 %v2803, %v2799
      %v2892 = vpack.c.bf16 %v2804, %v2800
      %v2893 = vpack.c.bf16 %v2809, %v2805
      %v2894 = vpack.c.bf16 %v2810, %v2806
      %v2895 = vpack.c.bf16 %v2811, %v2807
      %v2896 = vpack.c.bf16 %v2812, %v2808
      %v2897 = vpack.c.bf16 %v2817, %v2813
      %v2898 = vpack.c.bf16 %v2818, %v2814
      %v2899 = vpack.c.bf16 %v2819, %v2815
      %v2900 = vpack.c.bf16 %v2820, %v2816
      %v2901 = vpack.c.bf16 %v2825, %v2821
      %v2902 = vpack.c.bf16 %v2826, %v2822
      %v2903 = vpack.c.bf16 %v2827, %v2823
      %v2904 = vpack.c.bf16 %v2828, %v2824
      %v2905 = vpack.c.bf16 %v2833, %v2829
      %v2906 = vpack.c.bf16 %v2834, %v2830
      %v2907 = vpack.c.bf16 %v2835, %v2831
      %v2908 = vpack.c.bf16 %v2836, %v2832
      %v2909 = vpack.c.bf16 %v2841, %v2837
      %v2910 = vpack.c.bf16 %v2842, %v2838
      %v2911 = vpack.c.bf16 %v2843, %v2839
      %v2912 = vpack.c.bf16 %v2844, %v2840
      %v2913 = vpack.c.bf16 %v2849, %v2845
      %v2914 = vpack.c.bf16 %v2850, %v2846
      %v2915 = vpack.c.bf16 %v2851, %v2847
      %v2916 = vpack.c.bf16 %v2852, %v2848
      %v2917 = vld [vmem:[%s7 + $0x100] sm:$0xf]
      %v2918 = vld [vmem:[%s7 + $0x104] sm:$0xf]
      %v2919 = vld [vmem:[%s7 + $0x108] sm:$0xf]
      %v2920 = vld [vmem:[%s7 + $0x10c] sm:$0xf]
      %v2921 = vld [vmem:[%s7 + $0x110] sm:$0xf]
      %v2922 = vld [vmem:[%s7 + $0x114] sm:$0xf]
      %v2923 = vld [vmem:[%s7 + $0x118] sm:$0xf]
      %v2924 = vld [vmem:[%s7 + $0x11c] sm:$0xf]
      %v2925 = vld [vmem:[%s7 + $0x120] sm:$0xf]
      %v2926 = vld [vmem:[%s7 + $0x124] sm:$0xf]
      %v2927 = vld [vmem:[%s7 + $0x128] sm:$0xf]
      %v2928 = vld [vmem:[%s7 + $0x12c] sm:$0xf]
      %v2929 = vld [vmem:[%s7 + $0x130] sm:$0xf]
      %v2930 = vld [vmem:[%s7 + $0x134] sm:$0xf]
      %v2931 = vld [vmem:[%s7 + $0x138] sm:$0xf]
      %v2932 = vld [vmem:[%s7 + $0x13c] sm:$0xf]
      %v2933 = vld [vmem:[%s7 + $0x140] sm:$0xf]
      %v2934 = vld [vmem:[%s7 + $0x144] sm:$0xf]
      %v2935 = vld [vmem:[%s7 + $0x148] sm:$0xf]
      %v2936 = vld [vmem:[%s7 + $0x14c] sm:$0xf]
      %v2937 = vld [vmem:[%s7 + $0x150] sm:$0xf]
      %v2938 = vld [vmem:[%s7 + $0x154] sm:$0xf]
      %v2939 = vld [vmem:[%s7 + $0x158] sm:$0xf]
      %v2940 = vld [vmem:[%s7 + $0x15c] sm:$0xf]
      %v2941 = vld [vmem:[%s7 + $0x160] sm:$0xf]
      %v2942 = vld [vmem:[%s7 + $0x164] sm:$0xf]
      %v2943 = vld [vmem:[%s7 + $0x168] sm:$0xf]
      %v2944 = vld [vmem:[%s7 + $0x16c] sm:$0xf]
      %v2945 = vld [vmem:[%s7 + $0x170] sm:$0xf]
      %v2946 = vld [vmem:[%s7 + $0x174] sm:$0xf]
      %v2947 = vld [vmem:[%s7 + $0x178] sm:$0xf]
      %v2948 = vld [vmem:[%s7 + $0x17c] sm:$0xf]
      %v2949 = vld [vmem:[%s7 + $0x180] sm:$0xf]
      %v2950 = vld [vmem:[%s7 + $0x184] sm:$0xf]
      %v2951 = vld [vmem:[%s7 + $0x188] sm:$0xf]
      %v2952 = vld [vmem:[%s7 + $0x18c] sm:$0xf]
      %v2953 = vld [vmem:[%s7 + $0x190] sm:$0xf]
      %v2954 = vld [vmem:[%s7 + $0x194] sm:$0xf]
      %v2955 = vld [vmem:[%s7 + $0x198] sm:$0xf]
      %v2956 = vld [vmem:[%s7 + $0x19c] sm:$0xf]
      %v2957 = vld [vmem:[%s7 + $0x1a0] sm:$0xf]
      %v2958 = vld [vmem:[%s7 + $0x1a4] sm:$0xf]
      %v2959 = vld [vmem:[%s7 + $0x1a8] sm:$0xf]
      %v2960 = vld [vmem:[%s7 + $0x1ac] sm:$0xf]
      %v2961 = vld [vmem:[%s7 + $0x1b0] sm:$0xf]
      %v2962 = vld [vmem:[%s7 + $0x1b4] sm:$0xf]
      %v2963 = vld [vmem:[%s7 + $0x1b8] sm:$0xf]
      %v2964 = vld [vmem:[%s7 + $0x1bc] sm:$0xf]
      %v2965 = vld [vmem:[%s7 + $0x1c0] sm:$0xf]
      %v2966 = vld [vmem:[%s7 + $0x1c4] sm:$0xf]
      %v2967 = vld [vmem:[%s7 + $0x1c8] sm:$0xf]
      %v2968 = vld [vmem:[%s7 + $0x1cc] sm:$0xf]
      %v2969 = vld [vmem:[%s7 + $0x1d0] sm:$0xf]
      %v2970 = vld [vmem:[%s7 + $0x1d4] sm:$0xf]
      %v2971 = vld [vmem:[%s7 + $0x1d8] sm:$0xf]
      %v2972 = vld [vmem:[%s7 + $0x1dc] sm:$0xf]
      %v2973 = vld [vmem:[%s7 + $0x1e0] sm:$0xf]
      %v2974 = vld [vmem:[%s7 + $0x1e4] sm:$0xf]
      %v2975 = vld [vmem:[%s7 + $0x1e8] sm:$0xf]
      %v2976 = vld [vmem:[%s7 + $0x1ec] sm:$0xf]
      %v2977 = vld [vmem:[%s7 + $0x1f0] sm:$0xf]
      %v2978 = vld [vmem:[%s7 + $0x1f4] sm:$0xf]
      %v2979 = vld [vmem:[%s7 + $0x1f8] sm:$0xf]
      %v2980 = vld [vmem:[%s7 + $0x1fc] sm:$0xf]
      %v3045 = vunpack.c.l.b16 %v2917
      %v3046 = vunpack.c.l.b16 %v2918
      %v3047 = vunpack.c.l.b16 %v2919
      %v3048 = vunpack.c.l.b16 %v2920
      %v3049 = vunpack.c.l.b16 %v2921
      %v3050 = vunpack.c.l.b16 %v2922
      %v3051 = vunpack.c.l.b16 %v2923
      %v3052 = vunpack.c.l.b16 %v2924
      %v3053 = vunpack.c.l.b16 %v2925
      %v3054 = vunpack.c.l.b16 %v2926
      %v3055 = vunpack.c.l.b16 %v2927
      %v3056 = vunpack.c.l.b16 %v2928
      %v3057 = vunpack.c.l.b16 %v2929
      %v3058 = vunpack.c.l.b16 %v2930
      %v3059 = vunpack.c.l.b16 %v2931
      %v3060 = vunpack.c.l.b16 %v2932
      %v3061 = vunpack.c.l.b16 %v2933
      %v3062 = vunpack.c.l.b16 %v2934
      %v3063 = vunpack.c.l.b16 %v2935
      %v3064 = vunpack.c.l.b16 %v2936
      %v3065 = vunpack.c.l.b16 %v2937
      %v3066 = vunpack.c.l.b16 %v2938
      %v3067 = vunpack.c.l.b16 %v2939
      %v3068 = vunpack.c.l.b16 %v2940
      %v3069 = vunpack.c.l.b16 %v2941
      %v3070 = vunpack.c.l.b16 %v2942
      %v3071 = vunpack.c.l.b16 %v2943
      %v3072 = vunpack.c.l.b16 %v2944
      %v3073 = vunpack.c.l.b16 %v2945
      %v3074 = vunpack.c.l.b16 %v2946
      %v3075 = vunpack.c.l.b16 %v2947
      %v3076 = vunpack.c.l.b16 %v2948
      %v3077 = vunpack.c.l.b16 %v2949
      %v3078 = vunpack.c.l.b16 %v2950
      %v3079 = vunpack.c.l.b16 %v2951
      %v3080 = vunpack.c.l.b16 %v2952
      %v3081 = vunpack.c.l.b16 %v2953
      %v3082 = vunpack.c.l.b16 %v2954
      %v3083 = vunpack.c.l.b16 %v2955
      %v3084 = vunpack.c.l.b16 %v2956
      %v3085 = vunpack.c.l.b16 %v2957
      %v3086 = vunpack.c.l.b16 %v2958
      %v3087 = vunpack.c.l.b16 %v2959
      %v3088 = vunpack.c.l.b16 %v2960
      %v3089 = vunpack.c.l.b16 %v2961
      %v3090 = vunpack.c.l.b16 %v2962
      %v3091 = vunpack.c.l.b16 %v2963
      %v3092 = vunpack.c.l.b16 %v2964
      %v3093 = vunpack.c.l.b16 %v2965
      %v3094 = vunpack.c.l.b16 %v2966
      %v3095 = vunpack.c.l.b16 %v2967
      %v3096 = vunpack.c.l.b16 %v2968
      %v3097 = vunpack.c.l.b16 %v2969
      %v3098 = vunpack.c.l.b16 %v2970
      %v3099 = vunpack.c.l.b16 %v2971
      %v3100 = vunpack.c.l.b16 %v2972
      %v3101 = vunpack.c.l.b16 %v2973
      %v3102 = vunpack.c.l.b16 %v2974
      %v3103 = vunpack.c.l.b16 %v2975
      %v3104 = vunpack.c.l.b16 %v2976
      %v3105 = vunpack.c.l.b16 %v2977
      %v3106 = vunpack.c.l.b16 %v2978
      %v3107 = vunpack.c.l.b16 %v2979
      %v3108 = vunpack.c.l.b16 %v2980
      %v3109 = vpack.c.b16 %v3046, %v3045
      %v3110 = vpack.c.b16 %v3048, %v3047
      %v3111 = vpack.c.b16 %v3050, %v3049
      %v3112 = vpack.c.b16 %v3052, %v3051
      %v3113 = vpack.c.b16 %v3054, %v3053
      %v3114 = vpack.c.b16 %v3056, %v3055
      %v3115 = vpack.c.b16 %v3058, %v3057
      %v3116 = vpack.c.b16 %v3060, %v3059
      %v3117 = vpack.c.b16 %v3062, %v3061
      %v3118 = vpack.c.b16 %v3064, %v3063
      %v3119 = vpack.c.b16 %v3066, %v3065
      %v3120 = vpack.c.b16 %v3068, %v3067
      %v3121 = vpack.c.b16 %v3070, %v3069
      %v3122 = vpack.c.b16 %v3072, %v3071
      %v3123 = vpack.c.b16 %v3074, %v3073
      %v3124 = vpack.c.b16 %v3076, %v3075
      %v3125 = vpack.c.b16 %v3078, %v3077
      %v3126 = vpack.c.b16 %v3080, %v3079
      %v3127 = vpack.c.b16 %v3082, %v3081
      %v3128 = vpack.c.b16 %v3084, %v3083
      %v3129 = vpack.c.b16 %v3086, %v3085
      %v3130 = vpack.c.b16 %v3088, %v3087
      %v3131 = vpack.c.b16 %v3090, %v3089
      %v3132 = vpack.c.b16 %v3092, %v3091
      %v3133 = vpack.c.b16 %v3094, %v3093
      %v3134 = vpack.c.b16 %v3096, %v3095
      %v3135 = vpack.c.b16 %v3098, %v3097
      %v3136 = vpack.c.b16 %v3100, %v3099
      %v3137 = vpack.c.b16 %v3102, %v3101
      %v3138 = vpack.c.b16 %v3104, %v3103
      %v3139 = vpack.c.b16 %v3106, %v3105
      %v3140 = vpack.c.b16 %v3108, %v3107
      %3173 = vmatpush.bf16.msra.mxu0 %v3116
      %3174 = vmatpush.bf16.msra.mxu0 %v3115
      %3175 = vmatpush.bf16.msra.mxu0 %v3114
      %3176 = vmatpush.bf16.msra.mxu0 %v3113
      %3177 = vmatpush.bf16.msra.mxu0 %v3112
      %3178 = vmatpush.bf16.msra.mxu0 %v3111
      %3179 = vmatpush.bf16.msra.mxu0 %v3110
      %3180 = vmatpush.bf16.msra.mxu0 %v3109
      %3181 = vmatmul.bf16.gmra.mxu0 %v2853
      %v3182 = vpop.f32.mrf.mxu0
      %v3183 = vadd.f32 0.0, %v3182
      %v3184 = vpop.f32.mrf.mxu0
      %v3185 = vadd.f32 0.0, %v3184
      %3186 = vmatmul.bf16.gmra.mxu0 %v2857
      %v3187 = vpop.f32.mrf.mxu0
      %v3188 = vadd.f32 0.0, %v3187
      %v3189 = vpop.f32.mrf.mxu0
      %v3190 = vadd.f32 0.0, %v3189
      %3191 = vmatmul.bf16.gmra.mxu0 %v2861
      %v3192 = vpop.f32.mrf.mxu0
      %v3193 = vadd.f32 0.0, %v3192
      %v3194 = vpop.f32.mrf.mxu0
      %v3195 = vadd.f32 0.0, %v3194
      %3196 = vmatmul.bf16.gmra.mxu0 %v2865
      %v3197 = vpop.f32.mrf.mxu0
      %v3198 = vadd.f32 0.0, %v3197
      %v3199 = vpop.f32.mrf.mxu0
      %v3200 = vadd.f32 0.0, %v3199
      %3201 = vmatmul.bf16.gmra.mxu0 %v2869
      %v3202 = vpop.f32.mrf.mxu0
      %v3203 = vadd.f32 0.0, %v3202
      %v3204 = vpop.f32.mrf.mxu0
      %v3205 = vadd.f32 0.0, %v3204
      %3206 = vmatmul.bf16.gmra.mxu0 %v2873
      %v3207 = vpop.f32.mrf.mxu0
      %v3208 = vadd.f32 0.0, %v3207
      %v3209 = vpop.f32.mrf.mxu0
      %v3210 = vadd.f32 0.0, %v3209
      %3211 = vmatmul.bf16.gmra.mxu0 %v2877
      %v3212 = vpop.f32.mrf.mxu0
      %v3213 = vadd.f32 0.0, %v3212
      %v3214 = vpop.f32.mrf.mxu0
      %v3215 = vadd.f32 0.0, %v3214
      %3216 = vmatmul.bf16.gmra.mxu0 %v2881
      %v3217 = vpop.f32.mrf.mxu0
      %v3218 = vadd.f32 0.0, %v3217
      %v3219 = vpop.f32.mrf.mxu0
      %v3220 = vadd.f32 0.0, %v3219
      %3221 = vmatmul.bf16.gmra.mxu0 %v2885
      %v3222 = vpop.f32.mrf.mxu0
      %v3223 = vadd.f32 0.0, %v3222
      %v3224 = vpop.f32.mrf.mxu0
      %v3225 = vadd.f32 0.0, %v3224
      %3226 = vmatmul.bf16.gmra.mxu0 %v2889
      %v3227 = vpop.f32.mrf.mxu0
      %v3228 = vadd.f32 0.0, %v3227
      %v3229 = vpop.f32.mrf.mxu0
      %v3230 = vadd.f32 0.0, %v3229
      %3231 = vmatmul.bf16.gmra.mxu0 %v2893
      %v3232 = vpop.f32.mrf.mxu0
      %v3233 = vadd.f32 0.0, %v3232
      %v3234 = vpop.f32.mrf.mxu0
      %v3235 = vadd.f32 0.0, %v3234
      %3236 = vmatmul.bf16.gmra.mxu0 %v2897
      %v3237 = vpop.f32.mrf.mxu0
      %v3238 = vadd.f32 0.0, %v3237
      %v3239 = vpop.f32.mrf.mxu0
      %v3240 = vadd.f32 0.0, %v3239
      %3241 = vmatmul.bf16.gmra.mxu0 %v2901
      %v3242 = vpop.f32.mrf.mxu0
      %v3243 = vadd.f32 0.0, %v3242
      %v3244 = vpop.f32.mrf.mxu0
      %v3245 = vadd.f32 0.0, %v3244
      %3246 = vmatmul.bf16.gmra.mxu0 %v2905
      %v3247 = vpop.f32.mrf.mxu0
      %v3248 = vadd.f32 0.0, %v3247
      %v3249 = vpop.f32.mrf.mxu0
      %v3250 = vadd.f32 0.0, %v3249
      %3251 = vmatmul.bf16.gmra.mxu0 %v2909
      %v3252 = vpop.f32.mrf.mxu0
      %v3253 = vadd.f32 0.0, %v3252
      %v3254 = vpop.f32.mrf.mxu0
      %v3255 = vadd.f32 0.0, %v3254
      %3256 = vmatmul.bf16.gmra.mxu0 %v2913
      %v3257 = vpop.f32.mrf.mxu0
      %v3258 = vadd.f32 0.0, %v3257
      %v3259 = vpop.f32.mrf.mxu0
      %v3260 = vadd.f32 0.0, %v3259
      %3261 = vdwg.mxu0
      %3262 = vmatpush.bf16.msra.mxu0 %v3124
      %3263 = vmatpush.bf16.msra.mxu0 %v3123
      %3264 = vmatpush.bf16.msra.mxu0 %v3122
      %3265 = vmatpush.bf16.msra.mxu0 %v3121
      %3266 = vmatpush.bf16.msra.mxu0 %v3120
      %3267 = vmatpush.bf16.msra.mxu0 %v3119
      %3268 = vmatpush.bf16.msra.mxu0 %v3118
      %3269 = vmatpush.bf16.msra.mxu0 %v3117
      %3270 = vmatmul.bf16.gmra.mxu0 %v2854
      %v3271 = vpop.f32.mrf.mxu0
      %v3272 = vadd.f32 %v3183, %v3271
      %v3273 = vpop.f32.mrf.mxu0
      %v3274 = vadd.f32 %v3185, %v3273
      %3275 = vmatmul.bf16.gmra.mxu0 %v2858
      %v3276 = vpop.f32.mrf.mxu0
      %v3277 = vadd.f32 %v3188, %v3276
      %v3278 = vpop.f32.mrf.mxu0
      %v3279 = vadd.f32 %v3190, %v3278
      %3280 = vmatmul.bf16.gmra.mxu0 %v2862
      %v3281 = vpop.f32.mrf.mxu0
      %v3282 = vadd.f32 %v3193, %v3281
      %v3283 = vpop.f32.mrf.mxu0
      %v3284 = vadd.f32 %v3195, %v3283
      %3285 = vmatmul.bf16.gmra.mxu0 %v2866
      %v3286 = vpop.f32.mrf.mxu0
      %v3287 = vadd.f32 %v3198, %v3286
      %v3288 = vpop.f32.mrf.mxu0
      %v3289 = vadd.f32 %v3200, %v3288
      %3290 = vmatmul.bf16.gmra.mxu0 %v2870
      %v3291 = vpop.f32.mrf.mxu0
      %v3292 = vadd.f32 %v3203, %v3291
      %v3293 = vpop.f32.mrf.mxu0
      %v3294 = vadd.f32 %v3205, %v3293
      %3295 = vmatmul.bf16.gmra.mxu0 %v2874
      %v3296 = vpop.f32.mrf.mxu0
      %v3297 = vadd.f32 %v3208, %v3296
      %v3298 = vpop.f32.mrf.mxu0
      %v3299 = vadd.f32 %v3210, %v3298
      %3300 = vmatmul.bf16.gmra.mxu0 %v2878
      %v3301 = vpop.f32.mrf.mxu0
      %v3302 = vadd.f32 %v3213, %v3301
      %v3303 = vpop.f32.mrf.mxu0
      %v3304 = vadd.f32 %v3215, %v3303
      %3305 = vmatmul.bf16.gmra.mxu0 %v2882
      %v3306 = vpop.f32.mrf.mxu0
      %v3307 = vadd.f32 %v3218, %v3306
      %v3308 = vpop.f32.mrf.mxu0
      %v3309 = vadd.f32 %v3220, %v3308
      %3310 = vmatmul.bf16.gmra.mxu0 %v2886
      %v3311 = vpop.f32.mrf.mxu0
      %v3312 = vadd.f32 %v3223, %v3311
      %v3313 = vpop.f32.mrf.mxu0
      %v3314 = vadd.f32 %v3225, %v3313
      %3315 = vmatmul.bf16.gmra.mxu0 %v2890
      %v3316 = vpop.f32.mrf.mxu0
      %v3317 = vadd.f32 %v3228, %v3316
      %v3318 = vpop.f32.mrf.mxu0
      %v3319 = vadd.f32 %v3230, %v3318
      %3320 = vmatmul.bf16.gmra.mxu0 %v2894
      %v3321 = vpop.f32.mrf.mxu0
      %v3322 = vadd.f32 %v3233, %v3321
      %v3323 = vpop.f32.mrf.mxu0
      %v3324 = vadd.f32 %v3235, %v3323
      %3325 = vmatmul.bf16.gmra.mxu0 %v2898
      %v3326 = vpop.f32.mrf.mxu0
      %v3327 = vadd.f32 %v3238, %v3326
      %v3328 = vpop.f32.mrf.mxu0
      %v3329 = vadd.f32 %v3240, %v3328
      %3330 = vmatmul.bf16.gmra.mxu0 %v2902
      %v3331 = vpop.f32.mrf.mxu0
      %v3332 = vadd.f32 %v3243, %v3331
      %v3333 = vpop.f32.mrf.mxu0
      %v3334 = vadd.f32 %v3245, %v3333
      %3335 = vmatmul.bf16.gmra.mxu0 %v2906
      %v3336 = vpop.f32.mrf.mxu0
      %v3337 = vadd.f32 %v3248, %v3336
      %v3338 = vpop.f32.mrf.mxu0
      %v3339 = vadd.f32 %v3250, %v3338
      %3340 = vmatmul.bf16.gmra.mxu0 %v2910
      %v3341 = vpop.f32.mrf.mxu0
      %v3342 = vadd.f32 %v3253, %v3341
      %v3343 = vpop.f32.mrf.mxu0
      %v3344 = vadd.f32 %v3255, %v3343
      %3345 = vmatmul.bf16.gmra.mxu0 %v2914
      %v3346 = vpop.f32.mrf.mxu0
      %v3347 = vadd.f32 %v3258, %v3346
      %v3348 = vpop.f32.mrf.mxu0
      %v3349 = vadd.f32 %v3260, %v3348
      %3350 = vdwg.mxu0
      %3351 = vmatpush.bf16.msra.mxu0 %v3132
      %3352 = vmatpush.bf16.msra.mxu0 %v3131
      %3353 = vmatpush.bf16.msra.mxu0 %v3130
      %3354 = vmatpush.bf16.msra.mxu0 %v3129
      %3355 = vmatpush.bf16.msra.mxu0 %v3128
      %3356 = vmatpush.bf16.msra.mxu0 %v3127
      %3357 = vmatpush.bf16.msra.mxu0 %v3126
      %3358 = vmatpush.bf16.msra.mxu0 %v3125
      %3359 = vmatmul.bf16.gmra.mxu0 %v2855
      %v3360 = vpop.f32.mrf.mxu0
      %v3361 = vadd.f32 %v3272, %v3360
      %v3362 = vpop.f32.mrf.mxu0
      %v3363 = vadd.f32 %v3274, %v3362
      %3364 = vmatmul.bf16.gmra.mxu0 %v2859
      %v3365 = vpop.f32.mrf.mxu0
      %v3366 = vadd.f32 %v3277, %v3365
      %v3367 = vpop.f32.mrf.mxu0
      %v3368 = vadd.f32 %v3279, %v3367
      %3369 = vmatmul.bf16.gmra.mxu0 %v2863
      %v3370 = vpop.f32.mrf.mxu0
      %v3371 = vadd.f32 %v3282, %v3370
      %v3372 = vpop.f32.mrf.mxu0
      %v3373 = vadd.f32 %v3284, %v3372
      %3374 = vmatmul.bf16.gmra.mxu0 %v2867
      %v3375 = vpop.f32.mrf.mxu0
      %v3376 = vadd.f32 %v3287, %v3375
      %v3377 = vpop.f32.mrf.mxu0
      %v3378 = vadd.f32 %v3289, %v3377
      %3379 = vmatmul.bf16.gmra.mxu0 %v2871
      %v3380 = vpop.f32.mrf.mxu0
      %v3381 = vadd.f32 %v3292, %v3380
      %v3382 = vpop.f32.mrf.mxu0
      %v3383 = vadd.f32 %v3294, %v3382
      %3384 = vmatmul.bf16.gmra.mxu0 %v2875
      %v3385 = vpop.f32.mrf.mxu0
      %v3386 = vadd.f32 %v3297, %v3385
      %v3387 = vpop.f32.mrf.mxu0
      %v3388 = vadd.f32 %v3299, %v3387
      %3389 = vmatmul.bf16.gmra.mxu0 %v2879
      %v3390 = vpop.f32.mrf.mxu0
      %v3391 = vadd.f32 %v3302, %v3390
      %v3392 = vpop.f32.mrf.mxu0
      %v3393 = vadd.f32 %v3304, %v3392
      %3394 = vmatmul.bf16.gmra.mxu0 %v2883
      %v3395 = vpop.f32.mrf.mxu0
      %v3396 = vadd.f32 %v3307, %v3395
      %v3397 = vpop.f32.mrf.mxu0
      %v3398 = vadd.f32 %v3309, %v3397
      %3399 = vmatmul.bf16.gmra.mxu0 %v2887
      %v3400 = vpop.f32.mrf.mxu0
      %v3401 = vadd.f32 %v3312, %v3400
      %v3402 = vpop.f32.mrf.mxu0
      %v3403 = vadd.f32 %v3314, %v3402
      %3404 = vmatmul.bf16.gmra.mxu0 %v2891
      %v3405 = vpop.f32.mrf.mxu0
      %v3406 = vadd.f32 %v3317, %v3405
      %v3407 = vpop.f32.mrf.mxu0
      %v3408 = vadd.f32 %v3319, %v3407
      %3409 = vmatmul.bf16.gmra.mxu0 %v2895
      %v3410 = vpop.f32.mrf.mxu0
      %v3411 = vadd.f32 %v3322, %v3410
      %v3412 = vpop.f32.mrf.mxu0
      %v3413 = vadd.f32 %v3324, %v3412
      %3414 = vmatmul.bf16.gmra.mxu0 %v2899
      %v3415 = vpop.f32.mrf.mxu0
      %v3416 = vadd.f32 %v3327, %v3415
      %v3417 = vpop.f32.mrf.mxu0
      %v3418 = vadd.f32 %v3329, %v3417
      %3419 = vmatmul.bf16.gmra.mxu0 %v2903
      %v3420 = vpop.f32.mrf.mxu0
      %v3421 = vadd.f32 %v3332, %v3420
      %v3422 = vpop.f32.mrf.mxu0
      %v3423 = vadd.f32 %v3334, %v3422
      %3424 = vmatmul.bf16.gmra.mxu0 %v2907
      %v3425 = vpop.f32.mrf.mxu0
      %v3426 = vadd.f32 %v3337, %v3425
      %v3427 = vpop.f32.mrf.mxu0
      %v3428 = vadd.f32 %v3339, %v3427
      %3429 = vmatmul.bf16.gmra.mxu0 %v2911
      %v3430 = vpop.f32.mrf.mxu0
      %v3431 = vadd.f32 %v3342, %v3430
      %v3432 = vpop.f32.mrf.mxu0
      %v3433 = vadd.f32 %v3344, %v3432
      %3434 = vmatmul.bf16.gmra.mxu0 %v2915
      %v3435 = vpop.f32.mrf.mxu0
      %v3436 = vadd.f32 %v3347, %v3435
      %v3437 = vpop.f32.mrf.mxu0
      %v3438 = vadd.f32 %v3349, %v3437
      %3439 = vdwg.mxu0
      %3440 = vmatpush.bf16.msra.mxu0 %v3140
      %3441 = vmatpush.bf16.msra.mxu0 %v3139
      %3442 = vmatpush.bf16.msra.mxu0 %v3138
      %3443 = vmatpush.bf16.msra.mxu0 %v3137
      %3444 = vmatpush.bf16.msra.mxu0 %v3136
      %3445 = vmatpush.bf16.msra.mxu0 %v3135
      %3446 = vmatpush.bf16.msra.mxu0 %v3134
      %3447 = vmatpush.bf16.msra.mxu0 %v3133
      %3448 = vmatmul.bf16.gmra.mxu0 %v2856
      %v3449 = vpop.f32.mrf.mxu0
      %v3450 = vadd.f32 %v3361, %v3449
      %v3451 = vpop.f32.mrf.mxu0
      %v3452 = vadd.f32 %v3363, %v3451
      %3453 = vmatmul.bf16.gmra.mxu0 %v2860
      %v3454 = vpop.f32.mrf.mxu0
      %v3455 = vadd.f32 %v3366, %v3454
      %v3456 = vpop.f32.mrf.mxu0
      %v3457 = vadd.f32 %v3368, %v3456
      %3458 = vmatmul.bf16.gmra.mxu0 %v2864
      %v3459 = vpop.f32.mrf.mxu0
      %v3460 = vadd.f32 %v3371, %v3459
      %v3461 = vpop.f32.mrf.mxu0
      %v3462 = vadd.f32 %v3373, %v3461
      %3463 = vmatmul.bf16.gmra.mxu0 %v2868
      %v3464 = vpop.f32.mrf.mxu0
      %v3465 = vadd.f32 %v3376, %v3464
      %v3466 = vpop.f32.mrf.mxu0
      %v3467 = vadd.f32 %v3378, %v3466
      %3468 = vmatmul.bf16.gmra.mxu0 %v2872
      %v3469 = vpop.f32.mrf.mxu0
      %v3470 = vadd.f32 %v3381, %v3469
      %v3471 = vpop.f32.mrf.mxu0
      %v3472 = vadd.f32 %v3383, %v3471
      %3473 = vmatmul.bf16.gmra.mxu0 %v2876
      %v3474 = vpop.f32.mrf.mxu0
      %v3475 = vadd.f32 %v3386, %v3474
      %v3476 = vpop.f32.mrf.mxu0
      %v3477 = vadd.f32 %v3388, %v3476
      %3478 = vmatmul.bf16.gmra.mxu0 %v2880
      %v3479 = vpop.f32.mrf.mxu0
      %v3480 = vadd.f32 %v3391, %v3479
      %v3481 = vpop.f32.mrf.mxu0
      %v3482 = vadd.f32 %v3393, %v3481
      %3483 = vmatmul.bf16.gmra.mxu0 %v2884
      %v3484 = vpop.f32.mrf.mxu0
      %v3485 = vadd.f32 %v3396, %v3484
      %v3486 = vpop.f32.mrf.mxu0
      %v3487 = vadd.f32 %v3398, %v3486
      %3488 = vmatmul.bf16.gmra.mxu0 %v2888
      %v3489 = vpop.f32.mrf.mxu0
      %v3490 = vadd.f32 %v3401, %v3489
      %v3491 = vpop.f32.mrf.mxu0
      %v3492 = vadd.f32 %v3403, %v3491
      %3493 = vmatmul.bf16.gmra.mxu0 %v2892
      %v3494 = vpop.f32.mrf.mxu0
      %v3495 = vadd.f32 %v3406, %v3494
      %v3496 = vpop.f32.mrf.mxu0
      %v3497 = vadd.f32 %v3408, %v3496
      %3498 = vmatmul.bf16.gmra.mxu0 %v2896
      %v3499 = vpop.f32.mrf.mxu0
      %v3500 = vadd.f32 %v3411, %v3499
      %v3501 = vpop.f32.mrf.mxu0
      %v3502 = vadd.f32 %v3413, %v3501
      %3503 = vmatmul.bf16.gmra.mxu0 %v2900
      %v3504 = vpop.f32.mrf.mxu0
      %v3505 = vadd.f32 %v3416, %v3504
      %v3506 = vpop.f32.mrf.mxu0
      %v3507 = vadd.f32 %v3418, %v3506
      %3508 = vmatmul.bf16.gmra.mxu0 %v2904
      %v3509 = vpop.f32.mrf.mxu0
      %v3510 = vadd.f32 %v3421, %v3509
      %v3511 = vpop.f32.mrf.mxu0
      %v3512 = vadd.f32 %v3423, %v3511
      %3513 = vmatmul.bf16.gmra.mxu0 %v2908
      %v3514 = vpop.f32.mrf.mxu0
      %v3515 = vadd.f32 %v3426, %v3514
      %v3516 = vpop.f32.mrf.mxu0
      %v3517 = vadd.f32 %v3428, %v3516
      %3518 = vmatmul.bf16.gmra.mxu0 %v2912
      %v3519 = vpop.f32.mrf.mxu0
      %v3520 = vadd.f32 %v3431, %v3519
      %v3521 = vpop.f32.mrf.mxu0
      %v3522 = vadd.f32 %v3433, %v3521
      %3523 = vmatmul.bf16.gmra.mxu0 %v2916
      %v3524 = vpop.f32.mrf.mxu0
      %v3525 = vadd.f32 %v3436, %v3524
      %v3526 = vpop.f32.mrf.mxu0
      %v3527 = vadd.f32 %v3438, %v3526
      %3528 = vdwg.mxu0
      %v3593 = vunpack.c.l.b16 %v2199
      %v3594 = vunpack.c.l.b16 %v2200
      %v3595 = vunpack.c.l.b16 %v2201
      %v3596 = vunpack.c.l.b16 %v2202
      %v3597 = vunpack.c.l.b16 %v2203
      %v3598 = vunpack.c.l.b16 %v2204
      %v3599 = vunpack.c.l.b16 %v2205
      %v3600 = vunpack.c.l.b16 %v2206
      %v3601 = vunpack.c.l.b16 %v2207
      %v3602 = vunpack.c.l.b16 %v2208
      %v3603 = vunpack.c.l.b16 %v2209
      %v3604 = vunpack.c.l.b16 %v2210
      %v3605 = vunpack.c.l.b16 %v2211
      %v3606 = vunpack.c.l.b16 %v2212
      %v3607 = vunpack.c.l.b16 %v2213
      %v3608 = vunpack.c.l.b16 %v2214
      %v3609 = vunpack.c.l.b16 %v2215
      %v3610 = vunpack.c.l.b16 %v2216
      %v3611 = vunpack.c.l.b16 %v2217
      %v3612 = vunpack.c.l.b16 %v2218
      %v3613 = vunpack.c.l.b16 %v2219
      %v3614 = vunpack.c.l.b16 %v2220
      %v3615 = vunpack.c.l.b16 %v2221
      %v3616 = vunpack.c.l.b16 %v2222
      %v3617 = vunpack.c.l.b16 %v2223
      %v3618 = vunpack.c.l.b16 %v2224
      %v3619 = vunpack.c.l.b16 %v2225
      %v3620 = vunpack.c.l.b16 %v2226
      %v3621 = vunpack.c.l.b16 %v2227
      %v3622 = vunpack.c.l.b16 %v2228
      %v3623 = vunpack.c.l.b16 %v2229
      %v3624 = vunpack.c.l.b16 %v2230
      %v3625 = vunpack.c.l.b16 %v2231
      %v3626 = vunpack.c.l.b16 %v2232
      %v3627 = vunpack.c.l.b16 %v2233
      %v3628 = vunpack.c.l.b16 %v2234
      %v3629 = vunpack.c.l.b16 %v2235
      %v3630 = vunpack.c.l.b16 %v2236
      %v3631 = vunpack.c.l.b16 %v2237
      %v3632 = vunpack.c.l.b16 %v2238
      %v3633 = vunpack.c.l.b16 %v2239
      %v3634 = vunpack.c.l.b16 %v2240
      %v3635 = vunpack.c.l.b16 %v2241
      %v3636 = vunpack.c.l.b16 %v2242
      %v3637 = vunpack.c.l.b16 %v2243
      %v3638 = vunpack.c.l.b16 %v2244
      %v3639 = vunpack.c.l.b16 %v2245
      %v3640 = vunpack.c.l.b16 %v2246
      %v3641 = vunpack.c.l.b16 %v2247
      %v3642 = vunpack.c.l.b16 %v2248
      %v3643 = vunpack.c.l.b16 %v2249
      %v3644 = vunpack.c.l.b16 %v2250
      %v3645 = vunpack.c.l.b16 %v2251
      %v3646 = vunpack.c.l.b16 %v2252
      %v3647 = vunpack.c.l.b16 %v2253
      %v3648 = vunpack.c.l.b16 %v2254
      %v3649 = vunpack.c.l.b16 %v2255
      %v3650 = vunpack.c.l.b16 %v2256
      %v3651 = vunpack.c.l.b16 %v2257
      %v3652 = vunpack.c.l.b16 %v2258
      %v3653 = vunpack.c.l.b16 %v2259
      %v3654 = vunpack.c.l.b16 %v2260
      %v3655 = vunpack.c.l.b16 %v2261
      %v3656 = vunpack.c.l.b16 %v2262
      %v3657 = vpack.c.b16 %v3594, %v3593
      %v3658 = vpack.c.b16 %v3596, %v3595
      %v3659 = vpack.c.b16 %v3598, %v3597
      %v3660 = vpack.c.b16 %v3600, %v3599
      %v3661 = vpack.c.b16 %v3602, %v3601
      %v3662 = vpack.c.b16 %v3604, %v3603
      %v3663 = vpack.c.b16 %v3606, %v3605
      %v3664 = vpack.c.b16 %v3608, %v3607
      %v3665 = vpack.c.b16 %v3610, %v3609
      %v3666 = vpack.c.b16 %v3612, %v3611
      %v3667 = vpack.c.b16 %v3614, %v3613
      %v3668 = vpack.c.b16 %v3616, %v3615
      %v3669 = vpack.c.b16 %v3618, %v3617
      %v3670 = vpack.c.b16 %v3620, %v3619
      %v3671 = vpack.c.b16 %v3622, %v3621
      %v3672 = vpack.c.b16 %v3624, %v3623
      %v3673 = vpack.c.b16 %v3626, %v3625
      %v3674 = vpack.c.b16 %v3628, %v3627
      %v3675 = vpack.c.b16 %v3630, %v3629
      %v3676 = vpack.c.b16 %v3632, %v3631
      %v3677 = vpack.c.b16 %v3634, %v3633
      %v3678 = vpack.c.b16 %v3636, %v3635
      %v3679 = vpack.c.b16 %v3638, %v3637
      %v3680 = vpack.c.b16 %v3640, %v3639
      %v3681 = vpack.c.b16 %v3642, %v3641
      %v3682 = vpack.c.b16 %v3644, %v3643
      %v3683 = vpack.c.b16 %v3646, %v3645
      %v3684 = vpack.c.b16 %v3648, %v3647
      %v3685 = vpack.c.b16 %v3650, %v3649
      %v3686 = vpack.c.b16 %v3652, %v3651
      %v3687 = vpack.c.b16 %v3654, %v3653
      %v3688 = vpack.c.b16 %v3656, %v3655
      %3721 = vmatpush.bf16.msra.mxu0 %v3664
      %3722 = vmatpush.bf16.msra.mxu0 %v3663
      %3723 = vmatpush.bf16.msra.mxu0 %v3662
      %3724 = vmatpush.bf16.msra.mxu0 %v3661
      %3725 = vmatpush.bf16.msra.mxu0 %v3660
      %3726 = vmatpush.bf16.msra.mxu0 %v3659
      %3727 = vmatpush.bf16.msra.mxu0 %v3658
      %3728 = vmatpush.bf16.msra.mxu0 %v3657
      %3729 = vmatmul.bf16.gmra.mxu0 %v2135
      %v3730 = vpop.f32.mrf.mxu0
      %v3731 = vadd.f32 %v3450, %v3730
      %v3732 = vpop.f32.mrf.mxu0
      %v3733 = vadd.f32 %v3452, %v3732
      %3734 = vmatmul.bf16.gmra.mxu0 %v2139
      %v3735 = vpop.f32.mrf.mxu0
      %v3736 = vadd.f32 %v3455, %v3735
      %v3737 = vpop.f32.mrf.mxu0
      %v3738 = vadd.f32 %v3457, %v3737
      %3739 = vmatmul.bf16.gmra.mxu0 %v2143
      %v3740 = vpop.f32.mrf.mxu0
      %v3741 = vadd.f32 %v3460, %v3740
      %v3742 = vpop.f32.mrf.mxu0
      %v3743 = vadd.f32 %v3462, %v3742
      %3744 = vmatmul.bf16.gmra.mxu0 %v2147
      %v3745 = vpop.f32.mrf.mxu0
      %v3746 = vadd.f32 %v3465, %v3745
      %v3747 = vpop.f32.mrf.mxu0
      %v3748 = vadd.f32 %v3467, %v3747
      %3749 = vmatmul.bf16.gmra.mxu0 %v2151
      %v3750 = vpop.f32.mrf.mxu0
      %v3751 = vadd.f32 %v3470, %v3750
      %v3752 = vpop.f32.mrf.mxu0
      %v3753 = vadd.f32 %v3472, %v3752
      %3754 = vmatmul.bf16.gmra.mxu0 %v2155
      %v3755 = vpop.f32.mrf.mxu0
      %v3756 = vadd.f32 %v3475, %v3755
      %v3757 = vpop.f32.mrf.mxu0
      %v3758 = vadd.f32 %v3477, %v3757
      %3759 = vmatmul.bf16.gmra.mxu0 %v2159
      %v3760 = vpop.f32.mrf.mxu0
      %v3761 = vadd.f32 %v3480, %v3760
      %v3762 = vpop.f32.mrf.mxu0
      %v3763 = vadd.f32 %v3482, %v3762
      %3764 = vmatmul.bf16.gmra.mxu0 %v2163
      %v3765 = vpop.f32.mrf.mxu0
      %v3766 = vadd.f32 %v3485, %v3765
      %v3767 = vpop.f32.mrf.mxu0
      %v3768 = vadd.f32 %v3487, %v3767
      %3769 = vmatmul.bf16.gmra.mxu0 %v2167
      %v3770 = vpop.f32.mrf.mxu0
      %v3771 = vadd.f32 %v3490, %v3770
      %v3772 = vpop.f32.mrf.mxu0
      %v3773 = vadd.f32 %v3492, %v3772
      %3774 = vmatmul.bf16.gmra.mxu0 %v2171
      %v3775 = vpop.f32.mrf.mxu0
      %v3776 = vadd.f32 %v3495, %v3775
      %v3777 = vpop.f32.mrf.mxu0
      %v3778 = vadd.f32 %v3497, %v3777
      %3779 = vmatmul.bf16.gmra.mxu0 %v2175
      %v3780 = vpop.f32.mrf.mxu0
      %v3781 = vadd.f32 %v3500, %v3780
      %v3782 = vpop.f32.mrf.mxu0
      %v3783 = vadd.f32 %v3502, %v3782
      %3784 = vmatmul.bf16.gmra.mxu0 %v2179
      %v3785 = vpop.f32.mrf.mxu0
      %v3786 = vadd.f32 %v3505, %v3785
      %v3787 = vpop.f32.mrf.mxu0
      %v3788 = vadd.f32 %v3507, %v3787
      %3789 = vmatmul.bf16.gmra.mxu0 %v2183
      %v3790 = vpop.f32.mrf.mxu0
      %v3791 = vadd.f32 %v3510, %v3790
      %v3792 = vpop.f32.mrf.mxu0
      %v3793 = vadd.f32 %v3512, %v3792
      %3794 = vmatmul.bf16.gmra.mxu0 %v2187
      %v3795 = vpop.f32.mrf.mxu0
      %v3796 = vadd.f32 %v3515, %v3795
      %v3797 = vpop.f32.mrf.mxu0
      %v3798 = vadd.f32 %v3517, %v3797
      %3799 = vmatmul.bf16.gmra.mxu0 %v2191
      %v3800 = vpop.f32.mrf.mxu0
      %v3801 = vadd.f32 %v3520, %v3800
      %v3802 = vpop.f32.mrf.mxu0
      %v3803 = vadd.f32 %v3522, %v3802
      %3804 = vmatmul.bf16.gmra.mxu0 %v2195
      %v3805 = vpop.f32.mrf.mxu0
      %v3806 = vadd.f32 %v3525, %v3805
      %v3807 = vpop.f32.mrf.mxu0
      %v3808 = vadd.f32 %v3527, %v3807
      %3809 = vdwg.mxu0
      %3810 = vmatpush.bf16.msra.mxu0 %v3672
      %3811 = vmatpush.bf16.msra.mxu0 %v3671
      %3812 = vmatpush.bf16.msra.mxu0 %v3670
      %3813 = vmatpush.bf16.msra.mxu0 %v3669
      %3814 = vmatpush.bf16.msra.mxu0 %v3668
      %3815 = vmatpush.bf16.msra.mxu0 %v3667
      %3816 = vmatpush.bf16.msra.mxu0 %v3666
      %3817 = vmatpush.bf16.msra.mxu0 %v3665
      %3818 = vmatmul.bf16.gmra.mxu0 %v2136
      %v3819 = vpop.f32.mrf.mxu0
      %v3820 = vadd.f32 %v3731, %v3819
      %v3821 = vpop.f32.mrf.mxu0
      %v3822 = vadd.f32 %v3733, %v3821
      %3823 = vmatmul.bf16.gmra.mxu0 %v2140
      %v3824 = vpop.f32.mrf.mxu0
      %v3825 = vadd.f32 %v3736, %v3824
      %v3826 = vpop.f32.mrf.mxu0
      %v3827 = vadd.f32 %v3738, %v3826
      %3828 = vmatmul.bf16.gmra.mxu0 %v2144
      %v3829 = vpop.f32.mrf.mxu0
      %v3830 = vadd.f32 %v3741, %v3829
      %v3831 = vpop.f32.mrf.mxu0
      %v3832 = vadd.f32 %v3743, %v3831
      %3833 = vmatmul.bf16.gmra.mxu0 %v2148
      %v3834 = vpop.f32.mrf.mxu0
      %v3835 = vadd.f32 %v3746, %v3834
      %v3836 = vpop.f32.mrf.mxu0
      %v3837 = vadd.f32 %v3748, %v3836
      %3838 = vmatmul.bf16.gmra.mxu0 %v2152
      %v3839 = vpop.f32.mrf.mxu0
      %v3840 = vadd.f32 %v3751, %v3839
      %v3841 = vpop.f32.mrf.mxu0
      %v3842 = vadd.f32 %v3753, %v3841
      %3843 = vmatmul.bf16.gmra.mxu0 %v2156
      %v3844 = vpop.f32.mrf.mxu0
      %v3845 = vadd.f32 %v3756, %v3844
      %v3846 = vpop.f32.mrf.mxu0
      %v3847 = vadd.f32 %v3758, %v3846
      %3848 = vmatmul.bf16.gmra.mxu0 %v2160
      %v3849 = vpop.f32.mrf.mxu0
      %v3850 = vadd.f32 %v3761, %v3849
      %v3851 = vpop.f32.mrf.mxu0
      %v3852 = vadd.f32 %v3763, %v3851
      %3853 = vmatmul.bf16.gmra.mxu0 %v2164
      %v3854 = vpop.f32.mrf.mxu0
      %v3855 = vadd.f32 %v3766, %v3854
      %v3856 = vpop.f32.mrf.mxu0
      %v3857 = vadd.f32 %v3768, %v3856
      %3858 = vmatmul.bf16.gmra.mxu0 %v2168
      %v3859 = vpop.f32.mrf.mxu0
      %v3860 = vadd.f32 %v3771, %v3859
      %v3861 = vpop.f32.mrf.mxu0
      %v3862 = vadd.f32 %v3773, %v3861
      %3863 = vmatmul.bf16.gmra.mxu0 %v2172
      %v3864 = vpop.f32.mrf.mxu0
      %v3865 = vadd.f32 %v3776, %v3864
      %v3866 = vpop.f32.mrf.mxu0
      %v3867 = vadd.f32 %v3778, %v3866
      %3868 = vmatmul.bf16.gmra.mxu0 %v2176
      %v3869 = vpop.f32.mrf.mxu0
      %v3870 = vadd.f32 %v3781, %v3869
      %v3871 = vpop.f32.mrf.mxu0
      %v3872 = vadd.f32 %v3783, %v3871
      %3873 = vmatmul.bf16.gmra.mxu0 %v2180
      %v3874 = vpop.f32.mrf.mxu0
      %v3875 = vadd.f32 %v3786, %v3874
      %v3876 = vpop.f32.mrf.mxu0
      %v3877 = vadd.f32 %v3788, %v3876
      %3878 = vmatmul.bf16.gmra.mxu0 %v2184
      %v3879 = vpop.f32.mrf.mxu0
      %v3880 = vadd.f32 %v3791, %v3879
      %v3881 = vpop.f32.mrf.mxu0
      %v3882 = vadd.f32 %v3793, %v3881
      %3883 = vmatmul.bf16.gmra.mxu0 %v2188
      %v3884 = vpop.f32.mrf.mxu0
      %v3885 = vadd.f32 %v3796, %v3884
      %v3886 = vpop.f32.mrf.mxu0
      %v3887 = vadd.f32 %v3798, %v3886
      %3888 = vmatmul.bf16.gmra.mxu0 %v2192
      %v3889 = vpop.f32.mrf.mxu0
      %v3890 = vadd.f32 %v3801, %v3889
      %v3891 = vpop.f32.mrf.mxu0
      %v3892 = vadd.f32 %v3803, %v3891
      %3893 = vmatmul.bf16.gmra.mxu0 %v2196
      %v3894 = vpop.f32.mrf.mxu0
      %v3895 = vadd.f32 %v3806, %v3894
      %v3896 = vpop.f32.mrf.mxu0
      %v3897 = vadd.f32 %v3808, %v3896
      %3898 = vdwg.mxu0
      %3899 = vmatpush.bf16.msra.mxu0 %v3680
      %3900 = vmatpush.bf16.msra.mxu0 %v3679
      %3901 = vmatpush.bf16.msra.mxu0 %v3678
      %3902 = vmatpush.bf16.msra.mxu0 %v3677
      %3903 = vmatpush.bf16.msra.mxu0 %v3676
      %3904 = vmatpush.bf16.msra.mxu0 %v3675
      %3905 = vmatpush.bf16.msra.mxu0 %v3674
      %3906 = vmatpush.bf16.msra.mxu0 %v3673
      %3907 = vmatmul.bf16.gmra.mxu0 %v2137
      %v3908 = vpop.f32.mrf.mxu0
      %v3909 = vadd.f32 %v3820, %v3908
      %v3910 = vpop.f32.mrf.mxu0
      %v3911 = vadd.f32 %v3822, %v3910
      %3912 = vmatmul.bf16.gmra.mxu0 %v2141
      %v3913 = vpop.f32.mrf.mxu0
      %v3914 = vadd.f32 %v3825, %v3913
      %v3915 = vpop.f32.mrf.mxu0
      %v3916 = vadd.f32 %v3827, %v3915
      %3917 = vmatmul.bf16.gmra.mxu0 %v2145
      %v3918 = vpop.f32.mrf.mxu0
      %v3919 = vadd.f32 %v3830, %v3918
      %v3920 = vpop.f32.mrf.mxu0
      %v3921 = vadd.f32 %v3832, %v3920
      %3922 = vmatmul.bf16.gmra.mxu0 %v2149
      %v3923 = vpop.f32.mrf.mxu0
      %v3924 = vadd.f32 %v3835, %v3923
      %v3925 = vpop.f32.mrf.mxu0
      %v3926 = vadd.f32 %v3837, %v3925
      %3927 = vmatmul.bf16.gmra.mxu0 %v2153
      %v3928 = vpop.f32.mrf.mxu0
      %v3929 = vadd.f32 %v3840, %v3928
      %v3930 = vpop.f32.mrf.mxu0
      %v3931 = vadd.f32 %v3842, %v3930
      %3932 = vmatmul.bf16.gmra.mxu0 %v2157
      %v3933 = vpop.f32.mrf.mxu0
      %v3934 = vadd.f32 %v3845, %v3933
      %v3935 = vpop.f32.mrf.mxu0
      %v3936 = vadd.f32 %v3847, %v3935
      %3937 = vmatmul.bf16.gmra.mxu0 %v2161
      %v3938 = vpop.f32.mrf.mxu0
      %v3939 = vadd.f32 %v3850, %v3938
      %v3940 = vpop.f32.mrf.mxu0
      %v3941 = vadd.f32 %v3852, %v3940
      %3942 = vmatmul.bf16.gmra.mxu0 %v2165
      %v3943 = vpop.f32.mrf.mxu0
      %v3944 = vadd.f32 %v3855, %v3943
      %v3945 = vpop.f32.mrf.mxu0
      %v3946 = vadd.f32 %v3857, %v3945
      %3947 = vmatmul.bf16.gmra.mxu0 %v2169
      %v3948 = vpop.f32.mrf.mxu0
      %v3949 = vadd.f32 %v3860, %v3948
      %v3950 = vpop.f32.mrf.mxu0
      %v3951 = vadd.f32 %v3862, %v3950
      %3952 = vmatmul.bf16.gmra.mxu0 %v2173
      %v3953 = vpop.f32.mrf.mxu0
      %v3954 = vadd.f32 %v3865, %v3953
      %v3955 = vpop.f32.mrf.mxu0
      %v3956 = vadd.f32 %v3867, %v3955
      %3957 = vmatmul.bf16.gmra.mxu0 %v2177
      %v3958 = vpop.f32.mrf.mxu0
      %v3959 = vadd.f32 %v3870, %v3958
      %v3960 = vpop.f32.mrf.mxu0
      %v3961 = vadd.f32 %v3872, %v3960
      %3962 = vmatmul.bf16.gmra.mxu0 %v2181
      %v3963 = vpop.f32.mrf.mxu0
      %v3964 = vadd.f32 %v3875, %v3963
      %v3965 = vpop.f32.mrf.mxu0
      %v3966 = vadd.f32 %v3877, %v3965
      %3967 = vmatmul.bf16.gmra.mxu0 %v2185
      %v3968 = vpop.f32.mrf.mxu0
      %v3969 = vadd.f32 %v3880, %v3968
      %v3970 = vpop.f32.mrf.mxu0
      %v3971 = vadd.f32 %v3882, %v3970
      %3972 = vmatmul.bf16.gmra.mxu0 %v2189
      %v3973 = vpop.f32.mrf.mxu0
      %v3974 = vadd.f32 %v3885, %v3973
      %v3975 = vpop.f32.mrf.mxu0
      %v3976 = vadd.f32 %v3887, %v3975
      %3977 = vmatmul.bf16.gmra.mxu0 %v2193
      %v3978 = vpop.f32.mrf.mxu0
      %v3979 = vadd.f32 %v3890, %v3978
      %v3980 = vpop.f32.mrf.mxu0
      %v3981 = vadd.f32 %v3892, %v3980
      %3982 = vmatmul.bf16.gmra.mxu0 %v2197
      %v3983 = vpop.f32.mrf.mxu0
      %v3984 = vadd.f32 %v3895, %v3983
      %v3985 = vpop.f32.mrf.mxu0
      %v3986 = vadd.f32 %v3897, %v3985
      %3987 = vdwg.mxu0
      %3988 = vmatpush.bf16.msra.mxu0 %v3688
      %3989 = vmatpush.bf16.msra.mxu0 %v3687
      %3990 = vmatpush.bf16.msra.mxu0 %v3686
      %3991 = vmatpush.bf16.msra.mxu0 %v3685
      %3992 = vmatpush.bf16.msra.mxu0 %v3684
      %3993 = vmatpush.bf16.msra.mxu0 %v3683
      %3994 = vmatpush.bf16.msra.mxu0 %v3682
      %3995 = vmatpush.bf16.msra.mxu0 %v3681
      %3996 = vmatmul.bf16.gmra.mxu0 %v2138
      %v3997 = vpop.f32.mrf.mxu0
      %v3998 = vadd.f32 %v3909, %v3997
      %v3999 = vpop.f32.mrf.mxu0
      %v4000 = vadd.f32 %v3911, %v3999
      %4001 = vmatmul.bf16.gmra.mxu0 %v2142
      %v4002 = vpop.f32.mrf.mxu0
      %v4003 = vadd.f32 %v3914, %v4002
      %v4004 = vpop.f32.mrf.mxu0
      %v4005 = vadd.f32 %v3916, %v4004
      %4006 = vmatmul.bf16.gmra.mxu0 %v2146
      %v4007 = vpop.f32.mrf.mxu0
      %v4008 = vadd.f32 %v3919, %v4007
      %v4009 = vpop.f32.mrf.mxu0
      %v4010 = vadd.f32 %v3921, %v4009
      %4011 = vmatmul.bf16.gmra.mxu0 %v2150
      %v4012 = vpop.f32.mrf.mxu0
      %v4013 = vadd.f32 %v3924, %v4012
      %v4014 = vpop.f32.mrf.mxu0
      %v4015 = vadd.f32 %v3926, %v4014
      %4016 = vmatmul.bf16.gmra.mxu0 %v2154
      %v4017 = vpop.f32.mrf.mxu0
      %v4018 = vadd.f32 %v3929, %v4017
      %v4019 = vpop.f32.mrf.mxu0
      %v4020 = vadd.f32 %v3931, %v4019
      %4021 = vmatmul.bf16.gmra.mxu0 %v2158
      %v4022 = vpop.f32.mrf.mxu0
      %v4023 = vadd.f32 %v3934, %v4022
      %v4024 = vpop.f32.mrf.mxu0
      %v4025 = vadd.f32 %v3936, %v4024
      %4026 = vmatmul.bf16.gmra.mxu0 %v2162
      %v4027 = vpop.f32.mrf.mxu0
      %v4028 = vadd.f32 %v3939, %v4027
      %v4029 = vpop.f32.mrf.mxu0
      %v4030 = vadd.f32 %v3941, %v4029
      %4031 = vmatmul.bf16.gmra.mxu0 %v2166
      %v4032 = vpop.f32.mrf.mxu0
      %v4033 = vadd.f32 %v3944, %v4032
      %v4034 = vpop.f32.mrf.mxu0
      %v4035 = vadd.f32 %v3946, %v4034
      %4036 = vmatmul.bf16.gmra.mxu0 %v2170
      %v4037 = vpop.f32.mrf.mxu0
      %v4038 = vadd.f32 %v3949, %v4037
      %v4039 = vpop.f32.mrf.mxu0
      %v4040 = vadd.f32 %v3951, %v4039
      %4041 = vmatmul.bf16.gmra.mxu0 %v2174
      %v4042 = vpop.f32.mrf.mxu0
      %v4043 = vadd.f32 %v3954, %v4042
      %v4044 = vpop.f32.mrf.mxu0
      %v4045 = vadd.f32 %v3956, %v4044
      %4046 = vmatmul.bf16.gmra.mxu0 %v2178
      %v4047 = vpop.f32.mrf.mxu0
      %v4048 = vadd.f32 %v3959, %v4047
      %v4049 = vpop.f32.mrf.mxu0
      %v4050 = vadd.f32 %v3961, %v4049
      %4051 = vmatmul.bf16.gmra.mxu0 %v2182
      %v4052 = vpop.f32.mrf.mxu0
      %v4053 = vadd.f32 %v3964, %v4052
      %v4054 = vpop.f32.mrf.mxu0
      %v4055 = vadd.f32 %v3966, %v4054
      %4056 = vmatmul.bf16.gmra.mxu0 %v2186
      %v4057 = vpop.f32.mrf.mxu0
      %v4058 = vadd.f32 %v3969, %v4057
      %v4059 = vpop.f32.mrf.mxu0
      %v4060 = vadd.f32 %v3971, %v4059
      %4061 = vmatmul.bf16.gmra.mxu0 %v2190
      %v4062 = vpop.f32.mrf.mxu0
      %v4063 = vadd.f32 %v3974, %v4062
      %v4064 = vpop.f32.mrf.mxu0
      %v4065 = vadd.f32 %v3976, %v4064
      %4066 = vmatmul.bf16.gmra.mxu0 %v2194
      %v4067 = vpop.f32.mrf.mxu0
      %v4068 = vadd.f32 %v3979, %v4067
      %v4069 = vpop.f32.mrf.mxu0
      %v4070 = vadd.f32 %v3981, %v4069
      %4071 = vmatmul.bf16.gmra.mxu0 %v2198
      %v4072 = vpop.f32.mrf.mxu0
      %v4073 = vadd.f32 %v3984, %v4072
      %v4074 = vpop.f32.mrf.mxu0
      %v4075 = vadd.f32 %v3986, %v4074
      %4076 = vdwg.mxu0
      %v4077 = vld [vmem:[%s5 + $0x20] sm:$0xff]
      %v4078 = vld [vmem:[%s5 + $0x28] sm:$0xff]
      %v4079 = vld [vmem:[%s5 + $0x60] sm:$0xff]
      %v4080 = vld [vmem:[%s5 + $0x68] sm:$0xff]
      %v4081 = vld [vmem:[%s5 + $0xa0] sm:$0xff]
      %v4082 = vld [vmem:[%s5 + $0xa8] sm:$0xff]
      %v4083 = vld [vmem:[%s5 + $0xe0] sm:$0xff]
      %v4084 = vld [vmem:[%s5 + $0xe8] sm:$0xff]
      %v4085 = vld [vmem:[%s5 + $0x120] sm:$0xff]
      %v4086 = vld [vmem:[%s5 + $0x128] sm:$0xff]
      %v4087 = vld [vmem:[%s5 + $0x160] sm:$0xff]
      %v4088 = vld [vmem:[%s5 + $0x168] sm:$0xff]
      %v4089 = vld [vmem:[%s5 + $0x1a0] sm:$0xff]
      %v4090 = vld [vmem:[%s5 + $0x1a8] sm:$0xff]
      %v4091 = vld [vmem:[%s5 + $0x1e0] sm:$0xff]
      %v4092 = vld [vmem:[%s5 + $0x1e8] sm:$0xff]
      %v4093 = vld [vmem:[%s6 + $0x8] sm:$0xf]
      %v4095 = vperm.slane %v4093, 0
      %v4096 = vperm.slane %v4093, 1
      %v4097 = vperm.slane %v4093, 2
      %v4098 = vperm.slane %v4093, 3
      %v4119 = vunpack.c.l.b16 %v4077
      %v4120 = vunpack.c.h.b16 %v4077
      %v4121 = vunpack.c.l.b16 %v4078
      %v4122 = vunpack.c.h.b16 %v4078
      %v4123 = vunpack.c.l.b16 %v4079
      %v4124 = vunpack.c.h.b16 %v4079
      %v4125 = vunpack.c.l.b16 %v4080
      %v4126 = vunpack.c.h.b16 %v4080
      %v4127 = vunpack.c.l.b16 %v4081
      %v4128 = vunpack.c.h.b16 %v4081
      %v4129 = vunpack.c.l.b16 %v4082
      %v4130 = vunpack.c.h.b16 %v4082
      %v4131 = vunpack.c.l.b16 %v4083
      %v4132 = vunpack.c.h.b16 %v4083
      %v4133 = vunpack.c.l.b16 %v4084
      %v4134 = vunpack.c.h.b16 %v4084
      %v4135 = vunpack.c.l.b16 %v4085
      %v4136 = vunpack.c.h.b16 %v4085
      %v4137 = vunpack.c.l.b16 %v4086
      %v4138 = vunpack.c.h.b16 %v4086
      %v4139 = vunpack.c.l.b16 %v4087
      %v4140 = vunpack.c.h.b16 %v4087
      %v4141 = vunpack.c.l.b16 %v4088
      %v4142 = vunpack.c.h.b16 %v4088
      %v4143 = vunpack.c.l.b16 %v4089
      %v4144 = vunpack.c.h.b16 %v4089
      %v4145 = vunpack.c.l.b16 %v4090
      %v4146 = vunpack.c.h.b16 %v4090
      %v4147 = vunpack.c.l.b16 %v4091
      %v4148 = vunpack.c.h.b16 %v4091
      %v4149 = vunpack.c.l.b16 %v4092
      %v4150 = vunpack.c.h.b16 %v4092
      %v4151 = vpack.c.b16 %v4123, %v4119
      %v4152 = vpack.c.b16 %v4124, %v4120
      %v4153 = vpack.c.b16 %v4125, %v4121
      %v4154 = vpack.c.b16 %v4126, %v4122
      %v4155 = vpack.c.b16 %v4131, %v4127
      %v4156 = vpack.c.b16 %v4132, %v4128
      %v4157 = vpack.c.b16 %v4133, %v4129
      %v4158 = vpack.c.b16 %v4134, %v4130
      %v4159 = vpack.c.b16 %v4139, %v4135
      %v4160 = vpack.c.b16 %v4140, %v4136
      %v4161 = vpack.c.b16 %v4141, %v4137
      %v4162 = vpack.c.b16 %v4142, %v4138
      %v4163 = vpack.c.b16 %v4147, %v4143
      %v4164 = vpack.c.b16 %v4148, %v4144
      %v4165 = vpack.c.b16 %v4149, %v4145
      %v4166 = vpack.c.b16 %v4150, %v4146
      %4183 = vmatpush.bf16.msra.mxu0 0
      %4184 = vmatpush.bf16.msra.mxu0 0
      %4185 = vmatpush.bf16.msra.mxu0 0
      %4186 = vmatpush.bf16.msra.mxu0 0
      %4187 = vmatpush.bf16.msra.mxu0 %v4163
      %4188 = vmatpush.bf16.msra.mxu0 %v4159
      %4189 = vmatpush.bf16.msra.mxu0 %v4155
      %4190 = vmatpush.bf16.msra.mxu0 %v4151
      %4191 = vmatmul.bf16.gmra.mxu0 %v1604
      %v4192 = vpop.f32.mrf.mxu0
      %v4193 = vadd.f32 %v4095, %v4192
      %v4194 = vpop.f32.mrf.mxu0
      %v4195 = vadd.f32 %v4095, %v4194
      %4196 = vmatmul.bf16.gmra.mxu0 %v1607
      %v4197 = vpop.f32.mrf.mxu0
      %v4198 = vadd.f32 %v4095, %v4197
      %v4199 = vpop.f32.mrf.mxu0
      %v4200 = vadd.f32 %v4095, %v4199
      %4201 = vmatmul.bf16.gmra.mxu0 %v1610
      %v4202 = vpop.f32.mrf.mxu0
      %v4203 = vadd.f32 %v4095, %v4202
      %v4204 = vpop.f32.mrf.mxu0
      %v4205 = vadd.f32 %v4095, %v4204
      %4206 = vmatmul.bf16.gmra.mxu0 %v1613
      %v4207 = vpop.f32.mrf.mxu0
      %v4208 = vadd.f32 %v4095, %v4207
      %v4209 = vpop.f32.mrf.mxu0
      %v4210 = vadd.f32 %v4095, %v4209
      %4211 = vmatmul.bf16.gmra.mxu0 %v1616
      %v4212 = vpop.f32.mrf.mxu0
      %v4213 = vadd.f32 %v4095, %v4212
      %v4214 = vpop.f32.mrf.mxu0
      %v4215 = vadd.f32 %v4095, %v4214
      %4216 = vmatmul.bf16.gmra.mxu0 %v1619
      %v4217 = vpop.f32.mrf.mxu0
      %v4218 = vadd.f32 %v4095, %v4217
      %v4219 = vpop.f32.mrf.mxu0
      %v4220 = vadd.f32 %v4095, %v4219
      %4221 = vmatmul.bf16.gmra.mxu0 %v1622
      %v4222 = vpop.f32.mrf.mxu0
      %v4223 = vadd.f32 %v4095, %v4222
      %v4224 = vpop.f32.mrf.mxu0
      %v4225 = vadd.f32 %v4095, %v4224
      %4226 = vmatmul.bf16.gmra.mxu0 %v1625
      %v4227 = vpop.f32.mrf.mxu0
      %v4228 = vadd.f32 %v4095, %v4227
      %v4229 = vpop.f32.mrf.mxu0
      %v4230 = vadd.f32 %v4095, %v4229
      %4231 = vmatmul.bf16.gmra.mxu0 %v1628
      %v4232 = vpop.f32.mrf.mxu0
      %v4233 = vadd.f32 %v4095, %v4232
      %v4234 = vpop.f32.mrf.mxu0
      %v4235 = vadd.f32 %v4095, %v4234
      %4236 = vmatmul.bf16.gmra.mxu0 %v1631
      %v4237 = vpop.f32.mrf.mxu0
      %v4238 = vadd.f32 %v4095, %v4237
      %v4239 = vpop.f32.mrf.mxu0
      %v4240 = vadd.f32 %v4095, %v4239
      %4241 = vmatmul.bf16.gmra.mxu0 %v1634
      %v4242 = vpop.f32.mrf.mxu0
      %v4243 = vadd.f32 %v4095, %v4242
      %v4244 = vpop.f32.mrf.mxu0
      %v4245 = vadd.f32 %v4095, %v4244
      %4246 = vmatmul.bf16.gmra.mxu0 %v1637
      %v4247 = vpop.f32.mrf.mxu0
      %v4248 = vadd.f32 %v4095, %v4247
      %v4249 = vpop.f32.mrf.mxu0
      %v4250 = vadd.f32 %v4095, %v4249
      %4251 = vmatmul.bf16.gmra.mxu0 %v1640
      %v4252 = vpop.f32.mrf.mxu0
      %v4253 = vadd.f32 %v4095, %v4252
      %v4254 = vpop.f32.mrf.mxu0
      %v4255 = vadd.f32 %v4095, %v4254
      %4256 = vmatmul.bf16.gmra.mxu0 %v1643
      %v4257 = vpop.f32.mrf.mxu0
      %v4258 = vadd.f32 %v4095, %v4257
      %v4259 = vpop.f32.mrf.mxu0
      %v4260 = vadd.f32 %v4095, %v4259
      %4261 = vmatmul.bf16.gmra.mxu0 %v1646
      %v4262 = vpop.f32.mrf.mxu0
      %v4263 = vadd.f32 %v4095, %v4262
      %v4264 = vpop.f32.mrf.mxu0
      %v4265 = vadd.f32 %v4095, %v4264
      %4266 = vmatmul.bf16.gmra.mxu0 %v1649
      %v4267 = vpop.f32.mrf.mxu0
      %v4268 = vadd.f32 %v4095, %v4267
      %v4269 = vpop.f32.mrf.mxu0
      %v4270 = vadd.f32 %v4095, %v4269
      %4271 = vdwg.mxu0
      %4272 = vmatpush.bf16.msra.mxu0 0
      %4273 = vmatpush.bf16.msra.mxu0 0
      %4274 = vmatpush.bf16.msra.mxu0 0
      %4275 = vmatpush.bf16.msra.mxu0 0
      %4276 = vmatpush.bf16.msra.mxu0 %v4164
      %4277 = vmatpush.bf16.msra.mxu0 %v4160
      %4278 = vmatpush.bf16.msra.mxu0 %v4156
      %4279 = vmatpush.bf16.msra.mxu0 %v4152
      %4280 = vmatmul.bf16.gmra.mxu0 %v1604
      %v4281 = vpop.f32.mrf.mxu0
      %v4282 = vadd.f32 %v4096, %v4281
      %v4283 = vpop.f32.mrf.mxu0
      %v4284 = vadd.f32 %v4096, %v4283
      %4285 = vmatmul.bf16.gmra.mxu0 %v1607
      %v4286 = vpop.f32.mrf.mxu0
      %v4287 = vadd.f32 %v4096, %v4286
      %v4288 = vpop.f32.mrf.mxu0
      %v4289 = vadd.f32 %v4096, %v4288
      %4290 = vmatmul.bf16.gmra.mxu0 %v1610
      %v4291 = vpop.f32.mrf.mxu0
      %v4292 = vadd.f32 %v4096, %v4291
      %v4293 = vpop.f32.mrf.mxu0
      %v4294 = vadd.f32 %v4096, %v4293
      %4295 = vmatmul.bf16.gmra.mxu0 %v1613
      %v4296 = vpop.f32.mrf.mxu0
      %v4297 = vadd.f32 %v4096, %v4296
      %v4298 = vpop.f32.mrf.mxu0
      %v4299 = vadd.f32 %v4096, %v4298
      %4300 = vmatmul.bf16.gmra.mxu0 %v1616
      %v4301 = vpop.f32.mrf.mxu0
      %v4302 = vadd.f32 %v4096, %v4301
      %v4303 = vpop.f32.mrf.mxu0
      %v4304 = vadd.f32 %v4096, %v4303
      %4305 = vmatmul.bf16.gmra.mxu0 %v1619
      %v4306 = vpop.f32.mrf.mxu0
      %v4307 = vadd.f32 %v4096, %v4306
      %v4308 = vpop.f32.mrf.mxu0
      %v4309 = vadd.f32 %v4096, %v4308
      %4310 = vmatmul.bf16.gmra.mxu0 %v1622
      %v4311 = vpop.f32.mrf.mxu0
      %v4312 = vadd.f32 %v4096, %v4311
      %v4313 = vpop.f32.mrf.mxu0
      %v4314 = vadd.f32 %v4096, %v4313
      %4315 = vmatmul.bf16.gmra.mxu0 %v1625
      %v4316 = vpop.f32.mrf.mxu0
      %v4317 = vadd.f32 %v4096, %v4316
      %v4318 = vpop.f32.mrf.mxu0
      %v4319 = vadd.f32 %v4096, %v4318
      %4320 = vmatmul.bf16.gmra.mxu0 %v1628
      %v4321 = vpop.f32.mrf.mxu0
      %v4322 = vadd.f32 %v4096, %v4321
      %v4323 = vpop.f32.mrf.mxu0
      %v4324 = vadd.f32 %v4096, %v4323
      %4325 = vmatmul.bf16.gmra.mxu0 %v1631
      %v4326 = vpop.f32.mrf.mxu0
      %v4327 = vadd.f32 %v4096, %v4326
      %v4328 = vpop.f32.mrf.mxu0
      %v4329 = vadd.f32 %v4096, %v4328
      %4330 = vmatmul.bf16.gmra.mxu0 %v1634
      %v4331 = vpop.f32.mrf.mxu0
      %v4332 = vadd.f32 %v4096, %v4331
      %v4333 = vpop.f32.mrf.mxu0
      %v4334 = vadd.f32 %v4096, %v4333
      %4335 = vmatmul.bf16.gmra.mxu0 %v1637
      %v4336 = vpop.f32.mrf.mxu0
      %v4337 = vadd.f32 %v4096, %v4336
      %v4338 = vpop.f32.mrf.mxu0
      %v4339 = vadd.f32 %v4096, %v4338
      %4340 = vmatmul.bf16.gmra.mxu0 %v1640
      %v4341 = vpop.f32.mrf.mxu0
      %v4342 = vadd.f32 %v4096, %v4341
      %v4343 = vpop.f32.mrf.mxu0
      %v4344 = vadd.f32 %v4096, %v4343
      %4345 = vmatmul.bf16.gmra.mxu0 %v1643
      %v4346 = vpop.f32.mrf.mxu0
      %v4347 = vadd.f32 %v4096, %v4346
      %v4348 = vpop.f32.mrf.mxu0
      %v4349 = vadd.f32 %v4096, %v4348
      %4350 = vmatmul.bf16.gmra.mxu0 %v1646
      %v4351 = vpop.f32.mrf.mxu0
      %v4352 = vadd.f32 %v4096, %v4351
      %v4353 = vpop.f32.mrf.mxu0
      %v4354 = vadd.f32 %v4096, %v4353
      %4355 = vmatmul.bf16.gmra.mxu0 %v1649
      %v4356 = vpop.f32.mrf.mxu0
      %v4357 = vadd.f32 %v4096, %v4356
      %v4358 = vpop.f32.mrf.mxu0
      %v4359 = vadd.f32 %v4096, %v4358
      %4360 = vdwg.mxu0
      %4361 = vmatpush.bf16.msra.mxu0 0
      %4362 = vmatpush.bf16.msra.mxu0 0
      %4363 = vmatpush.bf16.msra.mxu0 0
      %4364 = vmatpush.bf16.msra.mxu0 0
      %4365 = vmatpush.bf16.msra.mxu0 %v4165
      %4366 = vmatpush.bf16.msra.mxu0 %v4161
      %4367 = vmatpush.bf16.msra.mxu0 %v4157
      %4368 = vmatpush.bf16.msra.mxu0 %v4153
      %4369 = vmatmul.bf16.gmra.mxu0 %v1604
      %v4370 = vpop.f32.mrf.mxu0
      %v4371 = vadd.f32 %v4097, %v4370
      %v4372 = vpop.f32.mrf.mxu0
      %v4373 = vadd.f32 %v4097, %v4372
      %4374 = vmatmul.bf16.gmra.mxu0 %v1607
      %v4375 = vpop.f32.mrf.mxu0
      %v4376 = vadd.f32 %v4097, %v4375
      %v4377 = vpop.f32.mrf.mxu0
      %v4378 = vadd.f32 %v4097, %v4377
      %4379 = vmatmul.bf16.gmra.mxu0 %v1610
      %v4380 = vpop.f32.mrf.mxu0
      %v4381 = vadd.f32 %v4097, %v4380
      %v4382 = vpop.f32.mrf.mxu0
      %v4383 = vadd.f32 %v4097, %v4382
      %4384 = vmatmul.bf16.gmra.mxu0 %v1613
      %v4385 = vpop.f32.mrf.mxu0
      %v4386 = vadd.f32 %v4097, %v4385
      %v4387 = vpop.f32.mrf.mxu0
      %v4388 = vadd.f32 %v4097, %v4387
      %4389 = vmatmul.bf16.gmra.mxu0 %v1616
      %v4390 = vpop.f32.mrf.mxu0
      %v4391 = vadd.f32 %v4097, %v4390
      %v4392 = vpop.f32.mrf.mxu0
      %v4393 = vadd.f32 %v4097, %v4392
      %4394 = vmatmul.bf16.gmra.mxu0 %v1619
      %v4395 = vpop.f32.mrf.mxu0
      %v4396 = vadd.f32 %v4097, %v4395
      %v4397 = vpop.f32.mrf.mxu0
      %v4398 = vadd.f32 %v4097, %v4397
      %4399 = vmatmul.bf16.gmra.mxu0 %v1622
      %v4400 = vpop.f32.mrf.mxu0
      %v4401 = vadd.f32 %v4097, %v4400
      %v4402 = vpop.f32.mrf.mxu0
      %v4403 = vadd.f32 %v4097, %v4402
      %4404 = vmatmul.bf16.gmra.mxu0 %v1625
      %v4405 = vpop.f32.mrf.mxu0
      %v4406 = vadd.f32 %v4097, %v4405
      %v4407 = vpop.f32.mrf.mxu0
      %v4408 = vadd.f32 %v4097, %v4407
      %4409 = vmatmul.bf16.gmra.mxu0 %v1628
      %v4410 = vpop.f32.mrf.mxu0
      %v4411 = vadd.f32 %v4097, %v4410
      %v4412 = vpop.f32.mrf.mxu0
      %v4413 = vadd.f32 %v4097, %v4412
      %4414 = vmatmul.bf16.gmra.mxu0 %v1631
      %v4415 = vpop.f32.mrf.mxu0
      %v4416 = vadd.f32 %v4097, %v4415
      %v4417 = vpop.f32.mrf.mxu0
      %v4418 = vadd.f32 %v4097, %v4417
      %4419 = vmatmul.bf16.gmra.mxu0 %v1634
      %v4420 = vpop.f32.mrf.mxu0
      %v4421 = vadd.f32 %v4097, %v4420
      %v4422 = vpop.f32.mrf.mxu0
      %v4423 = vadd.f32 %v4097, %v4422
      %4424 = vmatmul.bf16.gmra.mxu0 %v1637
      %v4425 = vpop.f32.mrf.mxu0
      %v4426 = vadd.f32 %v4097, %v4425
      %v4427 = vpop.f32.mrf.mxu0
      %v4428 = vadd.f32 %v4097, %v4427
      %4429 = vmatmul.bf16.gmra.mxu0 %v1640
      %v4430 = vpop.f32.mrf.mxu0
      %v4431 = vadd.f32 %v4097, %v4430
      %v4432 = vpop.f32.mrf.mxu0
      %v4433 = vadd.f32 %v4097, %v4432
      %4434 = vmatmul.bf16.gmra.mxu0 %v1643
      %v4435 = vpop.f32.mrf.mxu0
      %v4436 = vadd.f32 %v4097, %v4435
      %v4437 = vpop.f32.mrf.mxu0
      %v4438 = vadd.f32 %v4097, %v4437
      %4439 = vmatmul.bf16.gmra.mxu0 %v1646
      %v4440 = vpop.f32.mrf.mxu0
      %v4441 = vadd.f32 %v4097, %v4440
      %v4442 = vpop.f32.mrf.mxu0
      %v4443 = vadd.f32 %v4097, %v4442
      %4444 = vmatmul.bf16.gmra.mxu0 %v1649
      %v4445 = vpop.f32.mrf.mxu0
      %v4446 = vadd.f32 %v4097, %v4445
      %v4447 = vpop.f32.mrf.mxu0
      %v4448 = vadd.f32 %v4097, %v4447
      %4449 = vdwg.mxu0
      %4450 = vmatpush.bf16.msra.mxu0 0
      %4451 = vmatpush.bf16.msra.mxu0 0
      %4452 = vmatpush.bf16.msra.mxu0 0
      %4453 = vmatpush.bf16.msra.mxu0 0
      %4454 = vmatpush.bf16.msra.mxu0 %v4166
      %4455 = vmatpush.bf16.msra.mxu0 %v4162
      %4456 = vmatpush.bf16.msra.mxu0 %v4158
      %4457 = vmatpush.bf16.msra.mxu0 %v4154
      %4458 = vmatmul.bf16.gmra.mxu0 %v1604
      %v4459 = vpop.f32.mrf.mxu0
      %v4460 = vadd.f32 %v4098, %v4459
      %v4461 = vpop.f32.mrf.mxu0
      %v4462 = vadd.f32 %v4098, %v4461
      %4463 = vmatmul.bf16.gmra.mxu0 %v1607
      %v4464 = vpop.f32.mrf.mxu0
      %v4465 = vadd.f32 %v4098, %v4464
      %v4466 = vpop.f32.mrf.mxu0
      %v4467 = vadd.f32 %v4098, %v4466
      %4468 = vmatmul.bf16.gmra.mxu0 %v1610
      %v4469 = vpop.f32.mrf.mxu0
      %v4470 = vadd.f32 %v4098, %v4469
      %v4471 = vpop.f32.mrf.mxu0
      %v4472 = vadd.f32 %v4098, %v4471
      %4473 = vmatmul.bf16.gmra.mxu0 %v1613
      %v4474 = vpop.f32.mrf.mxu0
      %v4475 = vadd.f32 %v4098, %v4474
      %v4476 = vpop.f32.mrf.mxu0
      %v4477 = vadd.f32 %v4098, %v4476
      %4478 = vmatmul.bf16.gmra.mxu0 %v1616
      %v4479 = vpop.f32.mrf.mxu0
      %v4480 = vadd.f32 %v4098, %v4479
      %v4481 = vpop.f32.mrf.mxu0
      %v4482 = vadd.f32 %v4098, %v4481
      %4483 = vmatmul.bf16.gmra.mxu0 %v1619
      %v4484 = vpop.f32.mrf.mxu0
      %v4485 = vadd.f32 %v4098, %v4484
      %v4486 = vpop.f32.mrf.mxu0
      %v4487 = vadd.f32 %v4098, %v4486
      %4488 = vmatmul.bf16.gmra.mxu0 %v1622
      %v4489 = vpop.f32.mrf.mxu0
      %v4490 = vadd.f32 %v4098, %v4489
      %v4491 = vpop.f32.mrf.mxu0
      %v4492 = vadd.f32 %v4098, %v4491
      %4493 = vmatmul.bf16.gmra.mxu0 %v1625
      %v4494 = vpop.f32.mrf.mxu0
      %v4495 = vadd.f32 %v4098, %v4494
      %v4496 = vpop.f32.mrf.mxu0
      %v4497 = vadd.f32 %v4098, %v4496
      %4498 = vmatmul.bf16.gmra.mxu0 %v1628
      %v4499 = vpop.f32.mrf.mxu0
      %v4500 = vadd.f32 %v4098, %v4499
      %v4501 = vpop.f32.mrf.mxu0
      %v4502 = vadd.f32 %v4098, %v4501
      %4503 = vmatmul.bf16.gmra.mxu0 %v1631
      %v4504 = vpop.f32.mrf.mxu0
      %v4505 = vadd.f32 %v4098, %v4504
      %v4506 = vpop.f32.mrf.mxu0
      %v4507 = vadd.f32 %v4098, %v4506
      %4508 = vmatmul.bf16.gmra.mxu0 %v1634
      %v4509 = vpop.f32.mrf.mxu0
      %v4510 = vadd.f32 %v4098, %v4509
      %v4511 = vpop.f32.mrf.mxu0
      %v4512 = vadd.f32 %v4098, %v4511
      %4513 = vmatmul.bf16.gmra.mxu0 %v1637
      %v4514 = vpop.f32.mrf.mxu0
      %v4515 = vadd.f32 %v4098, %v4514
      %v4516 = vpop.f32.mrf.mxu0
      %v4517 = vadd.f32 %v4098, %v4516
      %4518 = vmatmul.bf16.gmra.mxu0 %v1640
      %v4519 = vpop.f32.mrf.mxu0
      %v4520 = vadd.f32 %v4098, %v4519
      %v4521 = vpop.f32.mrf.mxu0
      %v4522 = vadd.f32 %v4098, %v4521
      %4523 = vmatmul.bf16.gmra.mxu0 %v1643
      %v4524 = vpop.f32.mrf.mxu0
      %v4525 = vadd.f32 %v4098, %v4524
      %v4526 = vpop.f32.mrf.mxu0
      %v4527 = vadd.f32 %v4098, %v4526
      %4528 = vmatmul.bf16.gmra.mxu0 %v1646
      %v4529 = vpop.f32.mrf.mxu0
      %v4530 = vadd.f32 %v4098, %v4529
      %v4531 = vpop.f32.mrf.mxu0
      %v4532 = vadd.f32 %v4098, %v4531
      %4533 = vmatmul.bf16.gmra.mxu0 %v1649
      %v4534 = vpop.f32.mrf.mxu0
      %v4535 = vadd.f32 %v4098, %v4534
      %v4536 = vpop.f32.mrf.mxu0
      %v4537 = vadd.f32 %v4098, %v4536
      %4538 = vdwg.mxu0
      %v4539 = vmax.f32 %v4193, 0.0
      %v4540 = vmax.f32 %v4282, 0.0
      %v4541 = vmax.f32 %v4371, 0.0
      %v4542 = vmax.f32 %v4460, 0.0
      %v4543 = vmax.f32 %v4195, 0.0
      %v4544 = vmax.f32 %v4284, 0.0
      %v4545 = vmax.f32 %v4373, 0.0
      %v4546 = vmax.f32 %v4462, 0.0
      %v4547 = vmax.f32 %v4198, 0.0
      %v4548 = vmax.f32 %v4287, 0.0
      %v4549 = vmax.f32 %v4376, 0.0
      %v4550 = vmax.f32 %v4465, 0.0
      %v4551 = vmax.f32 %v4200, 0.0
      %v4552 = vmax.f32 %v4289, 0.0
      %v4553 = vmax.f32 %v4378, 0.0
      %v4554 = vmax.f32 %v4467, 0.0
      %v4555 = vmax.f32 %v4203, 0.0
      %v4556 = vmax.f32 %v4292, 0.0
      %v4557 = vmax.f32 %v4381, 0.0
      %v4558 = vmax.f32 %v4470, 0.0
      %v4559 = vmax.f32 %v4205, 0.0
      %v4560 = vmax.f32 %v4294, 0.0
      %v4561 = vmax.f32 %v4383, 0.0
      %v4562 = vmax.f32 %v4472, 0.0
      %v4563 = vmax.f32 %v4208, 0.0
      %v4564 = vmax.f32 %v4297, 0.0
      %v4565 = vmax.f32 %v4386, 0.0
      %v4566 = vmax.f32 %v4475, 0.0
      %v4567 = vmax.f32 %v4210, 0.0
      %v4568 = vmax.f32 %v4299, 0.0
      %v4569 = vmax.f32 %v4388, 0.0
      %v4570 = vmax.f32 %v4477, 0.0
      %v4571 = vmax.f32 %v4213, 0.0
      %v4572 = vmax.f32 %v4302, 0.0
      %v4573 = vmax.f32 %v4391, 0.0
      %v4574 = vmax.f32 %v4480, 0.0
      %v4575 = vmax.f32 %v4215, 0.0
      %v4576 = vmax.f32 %v4304, 0.0
      %v4577 = vmax.f32 %v4393, 0.0
      %v4578 = vmax.f32 %v4482, 0.0
      %v4579 = vmax.f32 %v4218, 0.0
      %v4580 = vmax.f32 %v4307, 0.0
      %v4581 = vmax.f32 %v4396, 0.0
      %v4582 = vmax.f32 %v4485, 0.0
      %v4583 = vmax.f32 %v4220, 0.0
      %v4584 = vmax.f32 %v4309, 0.0
      %v4585 = vmax.f32 %v4398, 0.0
      %v4586 = vmax.f32 %v4487, 0.0
      %v4587 = vmax.f32 %v4223, 0.0
      %v4588 = vmax.f32 %v4312, 0.0
      %v4589 = vmax.f32 %v4401, 0.0
      %v4590 = vmax.f32 %v4490, 0.0
      %v4591 = vmax.f32 %v4225, 0.0
      %v4592 = vmax.f32 %v4314, 0.0
      %v4593 = vmax.f32 %v4403, 0.0
      %v4594 = vmax.f32 %v4492, 0.0
      %v4595 = vmax.f32 %v4228, 0.0
      %v4596 = vmax.f32 %v4317, 0.0
      %v4597 = vmax.f32 %v4406, 0.0
      %v4598 = vmax.f32 %v4495, 0.0
      %v4599 = vmax.f32 %v4230, 0.0
      %v4600 = vmax.f32 %v4319, 0.0
      %v4601 = vmax.f32 %v4408, 0.0
      %v4602 = vmax.f32 %v4497, 0.0
      %v4603 = vmax.f32 %v4233, 0.0
      %v4604 = vmax.f32 %v4322, 0.0
      %v4605 = vmax.f32 %v4411, 0.0
      %v4606 = vmax.f32 %v4500, 0.0
      %v4607 = vmax.f32 %v4235, 0.0
      %v4608 = vmax.f32 %v4324, 0.0
      %v4609 = vmax.f32 %v4413, 0.0
      %v4610 = vmax.f32 %v4502, 0.0
      %v4611 = vmax.f32 %v4238, 0.0
      %v4612 = vmax.f32 %v4327, 0.0
      %v4613 = vmax.f32 %v4416, 0.0
      %v4614 = vmax.f32 %v4505, 0.0
      %v4615 = vmax.f32 %v4240, 0.0
      %v4616 = vmax.f32 %v4329, 0.0
      %v4617 = vmax.f32 %v4418, 0.0
      %v4618 = vmax.f32 %v4507, 0.0
      %v4619 = vmax.f32 %v4243, 0.0
      %v4620 = vmax.f32 %v4332, 0.0
      %v4621 = vmax.f32 %v4421, 0.0
      %v4622 = vmax.f32 %v4510, 0.0
      %v4623 = vmax.f32 %v4245, 0.0
      %v4624 = vmax.f32 %v4334, 0.0
      %v4625 = vmax.f32 %v4423, 0.0
      %v4626 = vmax.f32 %v4512, 0.0
      %v4627 = vmax.f32 %v4248, 0.0
      %v4628 = vmax.f32 %v4337, 0.0
      %v4629 = vmax.f32 %v4426, 0.0
      %v4630 = vmax.f32 %v4515, 0.0
      %v4631 = vmax.f32 %v4250, 0.0
      %v4632 = vmax.f32 %v4339, 0.0
      %v4633 = vmax.f32 %v4428, 0.0
      %v4634 = vmax.f32 %v4517, 0.0
      %v4635 = vmax.f32 %v4253, 0.0
      %v4636 = vmax.f32 %v4342, 0.0
      %v4637 = vmax.f32 %v4431, 0.0
      %v4638 = vmax.f32 %v4520, 0.0
      %v4639 = vmax.f32 %v4255, 0.0
      %v4640 = vmax.f32 %v4344, 0.0
      %v4641 = vmax.f32 %v4433, 0.0
      %v4642 = vmax.f32 %v4522, 0.0
      %v4643 = vmax.f32 %v4258, 0.0
      %v4644 = vmax.f32 %v4347, 0.0
      %v4645 = vmax.f32 %v4436, 0.0
      %v4646 = vmax.f32 %v4525, 0.0
      %v4647 = vmax.f32 %v4260, 0.0
      %v4648 = vmax.f32 %v4349, 0.0
      %v4649 = vmax.f32 %v4438, 0.0
      %v4650 = vmax.f32 %v4527, 0.0
      %v4651 = vmax.f32 %v4263, 0.0
      %v4652 = vmax.f32 %v4352, 0.0
      %v4653 = vmax.f32 %v4441, 0.0
      %v4654 = vmax.f32 %v4530, 0.0
      %v4655 = vmax.f32 %v4265, 0.0
      %v4656 = vmax.f32 %v4354, 0.0
      %v4657 = vmax.f32 %v4443, 0.0
      %v4658 = vmax.f32 %v4532, 0.0
      %v4659 = vmax.f32 %v4268, 0.0
      %v4660 = vmax.f32 %v4357, 0.0
      %v4661 = vmax.f32 %v4446, 0.0
      %v4662 = vmax.f32 %v4535, 0.0
      %v4663 = vmax.f32 %v4270, 0.0
      %v4664 = vmax.f32 %v4359, 0.0
      %v4665 = vmax.f32 %v4448, 0.0
      %v4666 = vmax.f32 %v4537, 0.0
      %v4667 = vpack.c.bf16 %v4543, %v4539
      %v4668 = vpack.c.bf16 %v4544, %v4540
      %v4669 = vpack.c.bf16 %v4545, %v4541
      %v4670 = vpack.c.bf16 %v4546, %v4542
      %v4671 = vpack.c.bf16 %v4551, %v4547
      %v4672 = vpack.c.bf16 %v4552, %v4548
      %v4673 = vpack.c.bf16 %v4553, %v4549
      %v4674 = vpack.c.bf16 %v4554, %v4550
      %v4675 = vpack.c.bf16 %v4559, %v4555
      %v4676 = vpack.c.bf16 %v4560, %v4556
      %v4677 = vpack.c.bf16 %v4561, %v4557
      %v4678 = vpack.c.bf16 %v4562, %v4558
      %v4679 = vpack.c.bf16 %v4567, %v4563
      %v4680 = vpack.c.bf16 %v4568, %v4564
      %v4681 = vpack.c.bf16 %v4569, %v4565
      %v4682 = vpack.c.bf16 %v4570, %v4566
      %v4683 = vpack.c.bf16 %v4575, %v4571
      %v4684 = vpack.c.bf16 %v4576, %v4572
      %v4685 = vpack.c.bf16 %v4577, %v4573
      %v4686 = vpack.c.bf16 %v4578, %v4574
      %v4687 = vpack.c.bf16 %v4583, %v4579
      %v4688 = vpack.c.bf16 %v4584, %v4580
      %v4689 = vpack.c.bf16 %v4585, %v4581
      %v4690 = vpack.c.bf16 %v4586, %v4582
      %v4691 = vpack.c.bf16 %v4591, %v4587
      %v4692 = vpack.c.bf16 %v4592, %v4588
      %v4693 = vpack.c.bf16 %v4593, %v4589
      %v4694 = vpack.c.bf16 %v4594, %v4590
      %v4695 = vpack.c.bf16 %v4599, %v4595
      %v4696 = vpack.c.bf16 %v4600, %v4596
      %v4697 = vpack.c.bf16 %v4601, %v4597
      %v4698 = vpack.c.bf16 %v4602, %v4598
      %v4699 = vpack.c.bf16 %v4607, %v4603
      %v4700 = vpack.c.bf16 %v4608, %v4604
      %v4701 = vpack.c.bf16 %v4609, %v4605
      %v4702 = vpack.c.bf16 %v4610, %v4606
      %v4703 = vpack.c.bf16 %v4615, %v4611
      %v4704 = vpack.c.bf16 %v4616, %v4612
      %v4705 = vpack.c.bf16 %v4617, %v4613
      %v4706 = vpack.c.bf16 %v4618, %v4614
      %v4707 = vpack.c.bf16 %v4623, %v4619
      %v4708 = vpack.c.bf16 %v4624, %v4620
      %v4709 = vpack.c.bf16 %v4625, %v4621
      %v4710 = vpack.c.bf16 %v4626, %v4622
      %v4711 = vpack.c.bf16 %v4631, %v4627
      %v4712 = vpack.c.bf16 %v4632, %v4628
      %v4713 = vpack.c.bf16 %v4633, %v4629
      %v4714 = vpack.c.bf16 %v4634, %v4630
      %v4715 = vpack.c.bf16 %v4639, %v4635
      %v4716 = vpack.c.bf16 %v4640, %v4636
      %v4717 = vpack.c.bf16 %v4641, %v4637
      %v4718 = vpack.c.bf16 %v4642, %v4638
      %v4719 = vpack.c.bf16 %v4647, %v4643
      %v4720 = vpack.c.bf16 %v4648, %v4644
      %v4721 = vpack.c.bf16 %v4649, %v4645
      %v4722 = vpack.c.bf16 %v4650, %v4646
      %v4723 = vpack.c.bf16 %v4655, %v4651
      %v4724 = vpack.c.bf16 %v4656, %v4652
      %v4725 = vpack.c.bf16 %v4657, %v4653
      %v4726 = vpack.c.bf16 %v4658, %v4654
      %v4727 = vpack.c.bf16 %v4663, %v4659
      %v4728 = vpack.c.bf16 %v4664, %v4660
      %v4729 = vpack.c.bf16 %v4665, %v4661
      %v4730 = vpack.c.bf16 %v4666, %v4662
      %v4731 = vld [vmem:[%s7 + $0x200] sm:$0xf]
      %v4732 = vld [vmem:[%s7 + $0x204] sm:$0xf]
      %v4733 = vld [vmem:[%s7 + $0x208] sm:$0xf]
      %v4734 = vld [vmem:[%s7 + $0x20c] sm:$0xf]
      %v4735 = vld [vmem:[%s7 + $0x210] sm:$0xf]
      %v4736 = vld [vmem:[%s7 + $0x214] sm:$0xf]
      %v4737 = vld [vmem:[%s7 + $0x218] sm:$0xf]
      %v4738 = vld [vmem:[%s7 + $0x21c] sm:$0xf]
      %v4739 = vld [vmem:[%s7 + $0x220] sm:$0xf]
      %v4740 = vld [vmem:[%s7 + $0x224] sm:$0xf]
      %v4741 = vld [vmem:[%s7 + $0x228] sm:$0xf]
      %v4742 = vld [vmem:[%s7 + $0x22c] sm:$0xf]
      %v4743 = vld [vmem:[%s7 + $0x230] sm:$0xf]
      %v4744 = vld [vmem:[%s7 + $0x234] sm:$0xf]
      %v4745 = vld [vmem:[%s7 + $0x238] sm:$0xf]
      %v4746 = vld [vmem:[%s7 + $0x23c] sm:$0xf]
      %v4747 = vld [vmem:[%s7 + $0x240] sm:$0xf]
      %v4748 = vld [vmem:[%s7 + $0x244] sm:$0xf]
      %v4749 = vld [vmem:[%s7 + $0x248] sm:$0xf]
      %v4750 = vld [vmem:[%s7 + $0x24c] sm:$0xf]
      %v4751 = vld [vmem:[%s7 + $0x250] sm:$0xf]
      %v4752 = vld [vmem:[%s7 + $0x254] sm:$0xf]
      %v4753 = vld [vmem:[%s7 + $0x258] sm:$0xf]
      %v4754 = vld [vmem:[%s7 + $0x25c] sm:$0xf]
      %v4755 = vld [vmem:[%s7 + $0x260] sm:$0xf]
      %v4756 = vld [vmem:[%s7 + $0x264] sm:$0xf]
      %v4757 = vld [vmem:[%s7 + $0x268] sm:$0xf]
      %v4758 = vld [vmem:[%s7 + $0x26c] sm:$0xf]
      %v4759 = vld [vmem:[%s7 + $0x270] sm:$0xf]
      %v4760 = vld [vmem:[%s7 + $0x274] sm:$0xf]
      %v4761 = vld [vmem:[%s7 + $0x278] sm:$0xf]
      %v4762 = vld [vmem:[%s7 + $0x27c] sm:$0xf]
      %v4763 = vld [vmem:[%s7 + $0x280] sm:$0xf]
      %v4764 = vld [vmem:[%s7 + $0x284] sm:$0xf]
      %v4765 = vld [vmem:[%s7 + $0x288] sm:$0xf]
      %v4766 = vld [vmem:[%s7 + $0x28c] sm:$0xf]
      %v4767 = vld [vmem:[%s7 + $0x290] sm:$0xf]
      %v4768 = vld [vmem:[%s7 + $0x294] sm:$0xf]
      %v4769 = vld [vmem:[%s7 + $0x298] sm:$0xf]
      %v4770 = vld [vmem:[%s7 + $0x29c] sm:$0xf]
      %v4771 = vld [vmem:[%s7 + $0x2a0] sm:$0xf]
      %v4772 = vld [vmem:[%s7 + $0x2a4] sm:$0xf]
      %v4773 = vld [vmem:[%s7 + $0x2a8] sm:$0xf]
      %v4774 = vld [vmem:[%s7 + $0x2ac] sm:$0xf]
      %v4775 = vld [vmem:[%s7 + $0x2b0] sm:$0xf]
      %v4776 = vld [vmem:[%s7 + $0x2b4] sm:$0xf]
      %v4777 = vld [vmem:[%s7 + $0x2b8] sm:$0xf]
      %v4778 = vld [vmem:[%s7 + $0x2bc] sm:$0xf]
      %v4779 = vld [vmem:[%s7 + $0x2c0] sm:$0xf]
      %v4780 = vld [vmem:[%s7 + $0x2c4] sm:$0xf]
      %v4781 = vld [vmem:[%s7 + $0x2c8] sm:$0xf]
      %v4782 = vld [vmem:[%s7 + $0x2cc] sm:$0xf]
      %v4783 = vld [vmem:[%s7 + $0x2d0] sm:$0xf]
      %v4784 = vld [vmem:[%s7 + $0x2d4] sm:$0xf]
      %v4785 = vld [vmem:[%s7 + $0x2d8] sm:$0xf]
      %v4786 = vld [vmem:[%s7 + $0x2dc] sm:$0xf]
      %v4787 = vld [vmem:[%s7 + $0x2e0] sm:$0xf]
      %v4788 = vld [vmem:[%s7 + $0x2e4] sm:$0xf]
      %v4789 = vld [vmem:[%s7 + $0x2e8] sm:$0xf]
      %v4790 = vld [vmem:[%s7 + $0x2ec] sm:$0xf]
      %v4791 = vld [vmem:[%s7 + $0x2f0] sm:$0xf]
      %v4792 = vld [vmem:[%s7 + $0x2f4] sm:$0xf]
      %v4793 = vld [vmem:[%s7 + $0x2f8] sm:$0xf]
      %v4794 = vld [vmem:[%s7 + $0x2fc] sm:$0xf]
      %v4859 = vunpack.c.l.b16 %v4731
      %v4860 = vunpack.c.l.b16 %v4732
      %v4861 = vunpack.c.l.b16 %v4733
      %v4862 = vunpack.c.l.b16 %v4734
      %v4863 = vunpack.c.l.b16 %v4735
      %v4864 = vunpack.c.l.b16 %v4736
      %v4865 = vunpack.c.l.b16 %v4737
      %v4866 = vunpack.c.l.b16 %v4738
      %v4867 = vunpack.c.l.b16 %v4739
      %v4868 = vunpack.c.l.b16 %v4740
      %v4869 = vunpack.c.l.b16 %v4741
      %v4870 = vunpack.c.l.b16 %v4742
      %v4871 = vunpack.c.l.b16 %v4743
      %v4872 = vunpack.c.l.b16 %v4744
      %v4873 = vunpack.c.l.b16 %v4745
      %v4874 = vunpack.c.l.b16 %v4746
      %v4875 = vunpack.c.l.b16 %v4747
      %v4876 = vunpack.c.l.b16 %v4748
      %v4877 = vunpack.c.l.b16 %v4749
      %v4878 = vunpack.c.l.b16 %v4750
      %v4879 = vunpack.c.l.b16 %v4751
      %v4880 = vunpack.c.l.b16 %v4752
      %v4881 = vunpack.c.l.b16 %v4753
      %v4882 = vunpack.c.l.b16 %v4754
      %v4883 = vunpack.c.l.b16 %v4755
      %v4884 = vunpack.c.l.b16 %v4756
      %v4885 = vunpack.c.l.b16 %v4757
      %v4886 = vunpack.c.l.b16 %v4758
      %v4887 = vunpack.c.l.b16 %v4759
      %v4888 = vunpack.c.l.b16 %v4760
      %v4889 = vunpack.c.l.b16 %v4761
      %v4890 = vunpack.c.l.b16 %v4762
      %v4891 = vunpack.c.l.b16 %v4763
      %v4892 = vunpack.c.l.b16 %v4764
      %v4893 = vunpack.c.l.b16 %v4765
      %v4894 = vunpack.c.l.b16 %v4766
      %v4895 = vunpack.c.l.b16 %v4767
      %v4896 = vunpack.c.l.b16 %v4768
      %v4897 = vunpack.c.l.b16 %v4769
      %v4898 = vunpack.c.l.b16 %v4770
      %v4899 = vunpack.c.l.b16 %v4771
      %v4900 = vunpack.c.l.b16 %v4772
      %v4901 = vunpack.c.l.b16 %v4773
      %v4902 = vunpack.c.l.b16 %v4774
      %v4903 = vunpack.c.l.b16 %v4775
      %v4904 = vunpack.c.l.b16 %v4776
      %v4905 = vunpack.c.l.b16 %v4777
      %v4906 = vunpack.c.l.b16 %v4778
      %v4907 = vunpack.c.l.b16 %v4779
      %v4908 = vunpack.c.l.b16 %v4780
      %v4909 = vunpack.c.l.b16 %v4781
      %v4910 = vunpack.c.l.b16 %v4782
      %v4911 = vunpack.c.l.b16 %v4783
      %v4912 = vunpack.c.l.b16 %v4784
      %v4913 = vunpack.c.l.b16 %v4785
      %v4914 = vunpack.c.l.b16 %v4786
      %v4915 = vunpack.c.l.b16 %v4787
      %v4916 = vunpack.c.l.b16 %v4788
      %v4917 = vunpack.c.l.b16 %v4789
      %v4918 = vunpack.c.l.b16 %v4790
      %v4919 = vunpack.c.l.b16 %v4791
      %v4920 = vunpack.c.l.b16 %v4792
      %v4921 = vunpack.c.l.b16 %v4793
      %v4922 = vunpack.c.l.b16 %v4794
      %v4923 = vpack.c.b16 %v4860, %v4859
      %v4924 = vpack.c.b16 %v4862, %v4861
      %v4925 = vpack.c.b16 %v4864, %v4863
      %v4926 = vpack.c.b16 %v4866, %v4865
      %v4927 = vpack.c.b16 %v4868, %v4867
      %v4928 = vpack.c.b16 %v4870, %v4869
      %v4929 = vpack.c.b16 %v4872, %v4871
      %v4930 = vpack.c.b16 %v4874, %v4873
      %v4931 = vpack.c.b16 %v4876, %v4875
      %v4932 = vpack.c.b16 %v4878, %v4877
      %v4933 = vpack.c.b16 %v4880, %v4879
      %v4934 = vpack.c.b16 %v4882, %v4881
      %v4935 = vpack.c.b16 %v4884, %v4883
      %v4936 = vpack.c.b16 %v4886, %v4885
      %v4937 = vpack.c.b16 %v4888, %v4887
      %v4938 = vpack.c.b16 %v4890, %v4889
      %v4939 = vpack.c.b16 %v4892, %v4891
      %v4940 = vpack.c.b16 %v4894, %v4893
      %v4941 = vpack.c.b16 %v4896, %v4895
      %v4942 = vpack.c.b16 %v4898, %v4897
      %v4943 = vpack.c.b16 %v4900, %v4899
      %v4944 = vpack.c.b16 %v4902, %v4901
      %v4945 = vpack.c.b16 %v4904, %v4903
      %v4946 = vpack.c.b16 %v4906, %v4905
      %v4947 = vpack.c.b16 %v4908, %v4907
      %v4948 = vpack.c.b16 %v4910, %v4909
      %v4949 = vpack.c.b16 %v4912, %v4911
      %v4950 = vpack.c.b16 %v4914, %v4913
      %v4951 = vpack.c.b16 %v4916, %v4915
      %v4952 = vpack.c.b16 %v4918, %v4917
      %v4953 = vpack.c.b16 %v4920, %v4919
      %v4954 = vpack.c.b16 %v4922, %v4921
      %4987 = vmatpush.bf16.msra.mxu0 %v4930
      %4988 = vmatpush.bf16.msra.mxu0 %v4929
      %4989 = vmatpush.bf16.msra.mxu0 %v4928
      %4990 = vmatpush.bf16.msra.mxu0 %v4927
      %4991 = vmatpush.bf16.msra.mxu0 %v4926
      %4992 = vmatpush.bf16.msra.mxu0 %v4925
      %4993 = vmatpush.bf16.msra.mxu0 %v4924
      %4994 = vmatpush.bf16.msra.mxu0 %v4923
      %4995 = vmatmul.bf16.gmra.mxu0 %v4667
      %v4996 = vpop.f32.mrf.mxu0
      %v4997 = vadd.f32 0.0, %v4996
      %v4998 = vpop.f32.mrf.mxu0
      %v4999 = vadd.f32 0.0, %v4998
      %5000 = vmatmul.bf16.gmra.mxu0 %v4671
      %v5001 = vpop.f32.mrf.mxu0
      %v5002 = vadd.f32 0.0, %v5001
      %v5003 = vpop.f32.mrf.mxu0
      %v5004 = vadd.f32 0.0, %v5003
      %5005 = vmatmul.bf16.gmra.mxu0 %v4675
      %v5006 = vpop.f32.mrf.mxu0
      %v5007 = vadd.f32 0.0, %v5006
      %v5008 = vpop.f32.mrf.mxu0
      %v5009 = vadd.f32 0.0, %v5008
      %5010 = vmatmul.bf16.gmra.mxu0 %v4679
      %v5011 = vpop.f32.mrf.mxu0
      %v5012 = vadd.f32 0.0, %v5011
      %v5013 = vpop.f32.mrf.mxu0
      %v5014 = vadd.f32 0.0, %v5013
      %5015 = vmatmul.bf16.gmra.mxu0 %v4683
      %v5016 = vpop.f32.mrf.mxu0
      %v5017 = vadd.f32 0.0, %v5016
      %v5018 = vpop.f32.mrf.mxu0
      %v5019 = vadd.f32 0.0, %v5018
      %5020 = vmatmul.bf16.gmra.mxu0 %v4687
      %v5021 = vpop.f32.mrf.mxu0
      %v5022 = vadd.f32 0.0, %v5021
      %v5023 = vpop.f32.mrf.mxu0
      %v5024 = vadd.f32 0.0, %v5023
      %5025 = vmatmul.bf16.gmra.mxu0 %v4691
      %v5026 = vpop.f32.mrf.mxu0
      %v5027 = vadd.f32 0.0, %v5026
      %v5028 = vpop.f32.mrf.mxu0
      %v5029 = vadd.f32 0.0, %v5028
      %5030 = vmatmul.bf16.gmra.mxu0 %v4695
      %v5031 = vpop.f32.mrf.mxu0
      %v5032 = vadd.f32 0.0, %v5031
      %v5033 = vpop.f32.mrf.mxu0
      %v5034 = vadd.f32 0.0, %v5033
      %5035 = vmatmul.bf16.gmra.mxu0 %v4699
      %v5036 = vpop.f32.mrf.mxu0
      %v5037 = vadd.f32 0.0, %v5036
      %v5038 = vpop.f32.mrf.mxu0
      %v5039 = vadd.f32 0.0, %v5038
      %5040 = vmatmul.bf16.gmra.mxu0 %v4703
      %v5041 = vpop.f32.mrf.mxu0
      %v5042 = vadd.f32 0.0, %v5041
      %v5043 = vpop.f32.mrf.mxu0
      %v5044 = vadd.f32 0.0, %v5043
      %5045 = vmatmul.bf16.gmra.mxu0 %v4707
      %v5046 = vpop.f32.mrf.mxu0
      %v5047 = vadd.f32 0.0, %v5046
      %v5048 = vpop.f32.mrf.mxu0
      %v5049 = vadd.f32 0.0, %v5048
      %5050 = vmatmul.bf16.gmra.mxu0 %v4711
      %v5051 = vpop.f32.mrf.mxu0
      %v5052 = vadd.f32 0.0, %v5051
      %v5053 = vpop.f32.mrf.mxu0
      %v5054 = vadd.f32 0.0, %v5053
      %5055 = vmatmul.bf16.gmra.mxu0 %v4715
      %v5056 = vpop.f32.mrf.mxu0
      %v5057 = vadd.f32 0.0, %v5056
      %v5058 = vpop.f32.mrf.mxu0
      %v5059 = vadd.f32 0.0, %v5058
      %5060 = vmatmul.bf16.gmra.mxu0 %v4719
      %v5061 = vpop.f32.mrf.mxu0
      %v5062 = vadd.f32 0.0, %v5061
      %v5063 = vpop.f32.mrf.mxu0
      %v5064 = vadd.f32 0.0, %v5063
      %5065 = vmatmul.bf16.gmra.mxu0 %v4723
      %v5066 = vpop.f32.mrf.mxu0
      %v5067 = vadd.f32 0.0, %v5066
      %v5068 = vpop.f32.mrf.mxu0
      %v5069 = vadd.f32 0.0, %v5068
      %5070 = vmatmul.bf16.gmra.mxu0 %v4727
      %v5071 = vpop.f32.mrf.mxu0
      %v5072 = vadd.f32 0.0, %v5071
      %v5073 = vpop.f32.mrf.mxu0
      %v5074 = vadd.f32 0.0, %v5073
      %5075 = vdwg.mxu0
      %5076 = vmatpush.bf16.msra.mxu0 %v4938
      %5077 = vmatpush.bf16.msra.mxu0 %v4937
      %5078 = vmatpush.bf16.msra.mxu0 %v4936
      %5079 = vmatpush.bf16.msra.mxu0 %v4935
      %5080 = vmatpush.bf16.msra.mxu0 %v4934
      %5081 = vmatpush.bf16.msra.mxu0 %v4933
      %5082 = vmatpush.bf16.msra.mxu0 %v4932
      %5083 = vmatpush.bf16.msra.mxu0 %v4931
      %5084 = vmatmul.bf16.gmra.mxu0 %v4668
      %v5085 = vpop.f32.mrf.mxu0
      %v5086 = vadd.f32 %v4997, %v5085
      %v5087 = vpop.f32.mrf.mxu0
      %v5088 = vadd.f32 %v4999, %v5087
      %5089 = vmatmul.bf16.gmra.mxu0 %v4672
      %v5090 = vpop.f32.mrf.mxu0
      %v5091 = vadd.f32 %v5002, %v5090
      %v5092 = vpop.f32.mrf.mxu0
      %v5093 = vadd.f32 %v5004, %v5092
      %5094 = vmatmul.bf16.gmra.mxu0 %v4676
      %v5095 = vpop.f32.mrf.mxu0
      %v5096 = vadd.f32 %v5007, %v5095
      %v5097 = vpop.f32.mrf.mxu0
      %v5098 = vadd.f32 %v5009, %v5097
      %5099 = vmatmul.bf16.gmra.mxu0 %v4680
      %v5100 = vpop.f32.mrf.mxu0
      %v5101 = vadd.f32 %v5012, %v5100
      %v5102 = vpop.f32.mrf.mxu0
      %v5103 = vadd.f32 %v5014, %v5102
      %5104 = vmatmul.bf16.gmra.mxu0 %v4684
      %v5105 = vpop.f32.mrf.mxu0
      %v5106 = vadd.f32 %v5017, %v5105
      %v5107 = vpop.f32.mrf.mxu0
      %v5108 = vadd.f32 %v5019, %v5107
      %5109 = vmatmul.bf16.gmra.mxu0 %v4688
      %v5110 = vpop.f32.mrf.mxu0
      %v5111 = vadd.f32 %v5022, %v5110
      %v5112 = vpop.f32.mrf.mxu0
      %v5113 = vadd.f32 %v5024, %v5112
      %5114 = vmatmul.bf16.gmra.mxu0 %v4692
      %v5115 = vpop.f32.mrf.mxu0
      %v5116 = vadd.f32 %v5027, %v5115
      %v5117 = vpop.f32.mrf.mxu0
      %v5118 = vadd.f32 %v5029, %v5117
      %5119 = vmatmul.bf16.gmra.mxu0 %v4696
      %v5120 = vpop.f32.mrf.mxu0
      %v5121 = vadd.f32 %v5032, %v5120
      %v5122 = vpop.f32.mrf.mxu0
      %v5123 = vadd.f32 %v5034, %v5122
      %5124 = vmatmul.bf16.gmra.mxu0 %v4700
      %v5125 = vpop.f32.mrf.mxu0
      %v5126 = vadd.f32 %v5037, %v5125
      %v5127 = vpop.f32.mrf.mxu0
      %v5128 = vadd.f32 %v5039, %v5127
      %5129 = vmatmul.bf16.gmra.mxu0 %v4704
      %v5130 = vpop.f32.mrf.mxu0
      %v5131 = vadd.f32 %v5042, %v5130
      %v5132 = vpop.f32.mrf.mxu0
      %v5133 = vadd.f32 %v5044, %v5132
      %5134 = vmatmul.bf16.gmra.mxu0 %v4708
      %v5135 = vpop.f32.mrf.mxu0
      %v5136 = vadd.f32 %v5047, %v5135
      %v5137 = vpop.f32.mrf.mxu0
      %v5138 = vadd.f32 %v5049, %v5137
      %5139 = vmatmul.bf16.gmra.mxu0 %v4712
      %v5140 = vpop.f32.mrf.mxu0
      %v5141 = vadd.f32 %v5052, %v5140
      %v5142 = vpop.f32.mrf.mxu0
      %v5143 = vadd.f32 %v5054, %v5142
      %5144 = vmatmul.bf16.gmra.mxu0 %v4716
      %v5145 = vpop.f32.mrf.mxu0
      %v5146 = vadd.f32 %v5057, %v5145
      %v5147 = vpop.f32.mrf.mxu0
      %v5148 = vadd.f32 %v5059, %v5147
      %5149 = vmatmul.bf16.gmra.mxu0 %v4720
      %v5150 = vpop.f32.mrf.mxu0
      %v5151 = vadd.f32 %v5062, %v5150
      %v5152 = vpop.f32.mrf.mxu0
      %v5153 = vadd.f32 %v5064, %v5152
      %5154 = vmatmul.bf16.gmra.mxu0 %v4724
      %v5155 = vpop.f32.mrf.mxu0
      %v5156 = vadd.f32 %v5067, %v5155
      %v5157 = vpop.f32.mrf.mxu0
      %v5158 = vadd.f32 %v5069, %v5157
      %5159 = vmatmul.bf16.gmra.mxu0 %v4728
      %v5160 = vpop.f32.mrf.mxu0
      %v5161 = vadd.f32 %v5072, %v5160
      %v5162 = vpop.f32.mrf.mxu0
      %v5163 = vadd.f32 %v5074, %v5162
      %5164 = vdwg.mxu0
      %5165 = vmatpush.bf16.msra.mxu0 %v4946
      %5166 = vmatpush.bf16.msra.mxu0 %v4945
      %5167 = vmatpush.bf16.msra.mxu0 %v4944
      %5168 = vmatpush.bf16.msra.mxu0 %v4943
      %5169 = vmatpush.bf16.msra.mxu0 %v4942
      %5170 = vmatpush.bf16.msra.mxu0 %v4941
      %5171 = vmatpush.bf16.msra.mxu0 %v4940
      %5172 = vmatpush.bf16.msra.mxu0 %v4939
      %5173 = vmatmul.bf16.gmra.mxu0 %v4669
      %v5174 = vpop.f32.mrf.mxu0
      %v5175 = vadd.f32 %v5086, %v5174
      %v5176 = vpop.f32.mrf.mxu0
      %v5177 = vadd.f32 %v5088, %v5176
      %5178 = vmatmul.bf16.gmra.mxu0 %v4673
      %v5179 = vpop.f32.mrf.mxu0
      %v5180 = vadd.f32 %v5091, %v5179
      %v5181 = vpop.f32.mrf.mxu0
      %v5182 = vadd.f32 %v5093, %v5181
      %5183 = vmatmul.bf16.gmra.mxu0 %v4677
      %v5184 = vpop.f32.mrf.mxu0
      %v5185 = vadd.f32 %v5096, %v5184
      %v5186 = vpop.f32.mrf.mxu0
      %v5187 = vadd.f32 %v5098, %v5186
      %5188 = vmatmul.bf16.gmra.mxu0 %v4681
      %v5189 = vpop.f32.mrf.mxu0
      %v5190 = vadd.f32 %v5101, %v5189
      %v5191 = vpop.f32.mrf.mxu0
      %v5192 = vadd.f32 %v5103, %v5191
      %5193 = vmatmul.bf16.gmra.mxu0 %v4685
      %v5194 = vpop.f32.mrf.mxu0
      %v5195 = vadd.f32 %v5106, %v5194
      %v5196 = vpop.f32.mrf.mxu0
      %v5197 = vadd.f32 %v5108, %v5196
      %5198 = vmatmul.bf16.gmra.mxu0 %v4689
      %v5199 = vpop.f32.mrf.mxu0
      %v5200 = vadd.f32 %v5111, %v5199
      %v5201 = vpop.f32.mrf.mxu0
      %v5202 = vadd.f32 %v5113, %v5201
      %5203 = vmatmul.bf16.gmra.mxu0 %v4693
      %v5204 = vpop.f32.mrf.mxu0
      %v5205 = vadd.f32 %v5116, %v5204
      %v5206 = vpop.f32.mrf.mxu0
      %v5207 = vadd.f32 %v5118, %v5206
      %5208 = vmatmul.bf16.gmra.mxu0 %v4697
      %v5209 = vpop.f32.mrf.mxu0
      %v5210 = vadd.f32 %v5121, %v5209
      %v5211 = vpop.f32.mrf.mxu0
      %v5212 = vadd.f32 %v5123, %v5211
      %5213 = vmatmul.bf16.gmra.mxu0 %v4701
      %v5214 = vpop.f32.mrf.mxu0
      %v5215 = vadd.f32 %v5126, %v5214
      %v5216 = vpop.f32.mrf.mxu0
      %v5217 = vadd.f32 %v5128, %v5216
      %5218 = vmatmul.bf16.gmra.mxu0 %v4705
      %v5219 = vpop.f32.mrf.mxu0
      %v5220 = vadd.f32 %v5131, %v5219
      %v5221 = vpop.f32.mrf.mxu0
      %v5222 = vadd.f32 %v5133, %v5221
      %5223 = vmatmul.bf16.gmra.mxu0 %v4709
      %v5224 = vpop.f32.mrf.mxu0
      %v5225 = vadd.f32 %v5136, %v5224
      %v5226 = vpop.f32.mrf.mxu0
      %v5227 = vadd.f32 %v5138, %v5226
      %5228 = vmatmul.bf16.gmra.mxu0 %v4713
      %v5229 = vpop.f32.mrf.mxu0
      %v5230 = vadd.f32 %v5141, %v5229
      %v5231 = vpop.f32.mrf.mxu0
      %v5232 = vadd.f32 %v5143, %v5231
      %5233 = vmatmul.bf16.gmra.mxu0 %v4717
      %v5234 = vpop.f32.mrf.mxu0
      %v5235 = vadd.f32 %v5146, %v5234
      %v5236 = vpop.f32.mrf.mxu0
      %v5237 = vadd.f32 %v5148, %v5236
      %5238 = vmatmul.bf16.gmra.mxu0 %v4721
      %v5239 = vpop.f32.mrf.mxu0
      %v5240 = vadd.f32 %v5151, %v5239
      %v5241 = vpop.f32.mrf.mxu0
      %v5242 = vadd.f32 %v5153, %v5241
      %5243 = vmatmul.bf16.gmra.mxu0 %v4725
      %v5244 = vpop.f32.mrf.mxu0
      %v5245 = vadd.f32 %v5156, %v5244
      %v5246 = vpop.f32.mrf.mxu0
      %v5247 = vadd.f32 %v5158, %v5246
      %5248 = vmatmul.bf16.gmra.mxu0 %v4729
      %v5249 = vpop.f32.mrf.mxu0
      %v5250 = vadd.f32 %v5161, %v5249
      %v5251 = vpop.f32.mrf.mxu0
      %v5252 = vadd.f32 %v5163, %v5251
      %5253 = vdwg.mxu0
      %5254 = vmatpush.bf16.msra.mxu0 %v4954
      %5255 = vmatpush.bf16.msra.mxu0 %v4953
      %5256 = vmatpush.bf16.msra.mxu0 %v4952
      %5257 = vmatpush.bf16.msra.mxu0 %v4951
      %5258 = vmatpush.bf16.msra.mxu0 %v4950
      %5259 = vmatpush.bf16.msra.mxu0 %v4949
      %5260 = vmatpush.bf16.msra.mxu0 %v4948
      %5261 = vmatpush.bf16.msra.mxu0 %v4947
      %5262 = vmatmul.bf16.gmra.mxu0 %v4670
      %v5263 = vpop.f32.mrf.mxu0
      %v5264 = vadd.f32 %v5175, %v5263
      %v5265 = vpop.f32.mrf.mxu0
      %v5266 = vadd.f32 %v5177, %v5265
      %5267 = vmatmul.bf16.gmra.mxu0 %v4674
      %v5268 = vpop.f32.mrf.mxu0
      %v5269 = vadd.f32 %v5180, %v5268
      %v5270 = vpop.f32.mrf.mxu0
      %v5271 = vadd.f32 %v5182, %v5270
      %5272 = vmatmul.bf16.gmra.mxu0 %v4678
      %v5273 = vpop.f32.mrf.mxu0
      %v5274 = vadd.f32 %v5185, %v5273
      %v5275 = vpop.f32.mrf.mxu0
      %v5276 = vadd.f32 %v5187, %v5275
      %5277 = vmatmul.bf16.gmra.mxu0 %v4682
      %v5278 = vpop.f32.mrf.mxu0
      %v5279 = vadd.f32 %v5190, %v5278
      %v5280 = vpop.f32.mrf.mxu0
      %v5281 = vadd.f32 %v5192, %v5280
      %5282 = vmatmul.bf16.gmra.mxu0 %v4686
      %v5283 = vpop.f32.mrf.mxu0
      %v5284 = vadd.f32 %v5195, %v5283
      %v5285 = vpop.f32.mrf.mxu0
      %v5286 = vadd.f32 %v5197, %v5285
      %5287 = vmatmul.bf16.gmra.mxu0 %v4690
      %v5288 = vpop.f32.mrf.mxu0
      %v5289 = vadd.f32 %v5200, %v5288
      %v5290 = vpop.f32.mrf.mxu0
      %v5291 = vadd.f32 %v5202, %v5290
      %5292 = vmatmul.bf16.gmra.mxu0 %v4694
      %v5293 = vpop.f32.mrf.mxu0
      %v5294 = vadd.f32 %v5205, %v5293
      %v5295 = vpop.f32.mrf.mxu0
      %v5296 = vadd.f32 %v5207, %v5295
      %5297 = vmatmul.bf16.gmra.mxu0 %v4698
      %v5298 = vpop.f32.mrf.mxu0
      %v5299 = vadd.f32 %v5210, %v5298
      %v5300 = vpop.f32.mrf.mxu0
      %v5301 = vadd.f32 %v5212, %v5300
      %5302 = vmatmul.bf16.gmra.mxu0 %v4702
      %v5303 = vpop.f32.mrf.mxu0
      %v5304 = vadd.f32 %v5215, %v5303
      %v5305 = vpop.f32.mrf.mxu0
      %v5306 = vadd.f32 %v5217, %v5305
      %5307 = vmatmul.bf16.gmra.mxu0 %v4706
      %v5308 = vpop.f32.mrf.mxu0
      %v5309 = vadd.f32 %v5220, %v5308
      %v5310 = vpop.f32.mrf.mxu0
      %v5311 = vadd.f32 %v5222, %v5310
      %5312 = vmatmul.bf16.gmra.mxu0 %v4710
      %v5313 = vpop.f32.mrf.mxu0
      %v5314 = vadd.f32 %v5225, %v5313
      %v5315 = vpop.f32.mrf.mxu0
      %v5316 = vadd.f32 %v5227, %v5315
      %5317 = vmatmul.bf16.gmra.mxu0 %v4714
      %v5318 = vpop.f32.mrf.mxu0
      %v5319 = vadd.f32 %v5230, %v5318
      %v5320 = vpop.f32.mrf.mxu0
      %v5321 = vadd.f32 %v5232, %v5320
      %5322 = vmatmul.bf16.gmra.mxu0 %v4718
      %v5323 = vpop.f32.mrf.mxu0
      %v5324 = vadd.f32 %v5235, %v5323
      %v5325 = vpop.f32.mrf.mxu0
      %v5326 = vadd.f32 %v5237, %v5325
      %5327 = vmatmul.bf16.gmra.mxu0 %v4722
      %v5328 = vpop.f32.mrf.mxu0
      %v5329 = vadd.f32 %v5240, %v5328
      %v5330 = vpop.f32.mrf.mxu0
      %v5331 = vadd.f32 %v5242, %v5330
      %5332 = vmatmul.bf16.gmra.mxu0 %v4726
      %v5333 = vpop.f32.mrf.mxu0
      %v5334 = vadd.f32 %v5245, %v5333
      %v5335 = vpop.f32.mrf.mxu0
      %v5336 = vadd.f32 %v5247, %v5335
      %5337 = vmatmul.bf16.gmra.mxu0 %v4730
      %v5338 = vpop.f32.mrf.mxu0
      %v5339 = vadd.f32 %v5250, %v5338
      %v5340 = vpop.f32.mrf.mxu0
      %v5341 = vadd.f32 %v5252, %v5340
      %5342 = vdwg.mxu0
      %v5343 = vadd.f32 %v3998, %v5264
      %v5344 = vadd.f32 %v4000, %v5266
      %v5345 = vadd.f32 %v4003, %v5269
      %v5346 = vadd.f32 %v4005, %v5271
      %v5347 = vadd.f32 %v4008, %v5274
      %v5348 = vadd.f32 %v4010, %v5276
      %v5349 = vadd.f32 %v4013, %v5279
      %v5350 = vadd.f32 %v4015, %v5281
      %v5351 = vadd.f32 %v4018, %v5284
      %v5352 = vadd.f32 %v4020, %v5286
      %v5353 = vadd.f32 %v4023, %v5289
      %v5354 = vadd.f32 %v4025, %v5291
      %v5355 = vadd.f32 %v4028, %v5294
      %v5356 = vadd.f32 %v4030, %v5296
      %v5357 = vadd.f32 %v4033, %v5299
      %v5358 = vadd.f32 %v4035, %v5301
      %v5359 = vadd.f32 %v4038, %v5304
      %v5360 = vadd.f32 %v4040, %v5306
      %v5361 = vadd.f32 %v4043, %v5309
      %v5362 = vadd.f32 %v4045, %v5311
      %v5363 = vadd.f32 %v4048, %v5314
      %v5364 = vadd.f32 %v4050, %v5316
      %v5365 = vadd.f32 %v4053, %v5319
      %v5366 = vadd.f32 %v4055, %v5321
      %v5367 = vadd.f32 %v4058, %v5324
      %v5368 = vadd.f32 %v4060, %v5326
      %v5369 = vadd.f32 %v4063, %v5329
      %v5370 = vadd.f32 %v4065, %v5331
      %v5371 = vadd.f32 %v4068, %v5334
      %v5372 = vadd.f32 %v4070, %v5336
      %v5373 = vadd.f32 %v4073, %v5339
      %v5374 = vadd.f32 %v4075, %v5341
      %v5375 = vld [vmem:[%s5 + $0x30] sm:$0xff]
      %v5376 = vld [vmem:[%s5 + $0x38] sm:$0xff]
      %v5377 = vld [vmem:[%s5 + $0x70] sm:$0xff]
      %v5378 = vld [vmem:[%s5 + $0x78] sm:$0xff]
      %v5379 = vld [vmem:[%s5 + $0xb0] sm:$0xff]
      %v5380 = vld [vmem:[%s5 + $0xb8] sm:$0xff]
      %v5381 = vld [vmem:[%s5 + $0xf0] sm:$0xff]
      %v5382 = vld [vmem:[%s5 + $0xf8] sm:$0xff]
      %v5383 = vld [vmem:[%s5 + $0x130] sm:$0xff]
      %v5384 = vld [vmem:[%s5 + $0x138] sm:$0xff]
      %v5385 = vld [vmem:[%s5 + $0x170] sm:$0xff]
      %v5386 = vld [vmem:[%s5 + $0x178] sm:$0xff]
      %v5387 = vld [vmem:[%s5 + $0x1b0] sm:$0xff]
      %v5388 = vld [vmem:[%s5 + $0x1b8] sm:$0xff]
      %v5389 = vld [vmem:[%s5 + $0x1f0] sm:$0xff]
      %v5390 = vld [vmem:[%s5 + $0x1f8] sm:$0xff]
      %v5391 = vld [vmem:[%s6 + $0xc] sm:$0xf]
      %v5393 = vperm.slane %v5391, 0
      %v5394 = vperm.slane %v5391, 1
      %v5395 = vperm.slane %v5391, 2
      %v5396 = vperm.slane %v5391, 3
      %v5417 = vunpack.c.l.b16 %v5375
      %v5418 = vunpack.c.h.b16 %v5375
      %v5419 = vunpack.c.l.b16 %v5376
      %v5420 = vunpack.c.h.b16 %v5376
      %v5421 = vunpack.c.l.b16 %v5377
      %v5422 = vunpack.c.h.b16 %v5377
      %v5423 = vunpack.c.l.b16 %v5378
      %v5424 = vunpack.c.h.b16 %v5378
      %v5425 = vunpack.c.l.b16 %v5379
      %v5426 = vunpack.c.h.b16 %v5379
      %v5427 = vunpack.c.l.b16 %v5380
      %v5428 = vunpack.c.h.b16 %v5380
      %v5429 = vunpack.c.l.b16 %v5381
      %v5430 = vunpack.c.h.b16 %v5381
      %v5431 = vunpack.c.l.b16 %v5382
      %v5432 = vunpack.c.h.b16 %v5382
      %v5433 = vunpack.c.l.b16 %v5383
      %v5434 = vunpack.c.h.b16 %v5383
      %v5435 = vunpack.c.l.b16 %v5384
      %v5436 = vunpack.c.h.b16 %v5384
      %v5437 = vunpack.c.l.b16 %v5385
      %v5438 = vunpack.c.h.b16 %v5385
      %v5439 = vunpack.c.l.b16 %v5386
      %v5440 = vunpack.c.h.b16 %v5386
      %v5441 = vunpack.c.l.b16 %v5387
      %v5442 = vunpack.c.h.b16 %v5387
      %v5443 = vunpack.c.l.b16 %v5388
      %v5444 = vunpack.c.h.b16 %v5388
      %v5445 = vunpack.c.l.b16 %v5389
      %v5446 = vunpack.c.h.b16 %v5389
      %v5447 = vunpack.c.l.b16 %v5390
      %v5448 = vunpack.c.h.b16 %v5390
      %v5449 = vpack.c.b16 %v5421, %v5417
      %v5450 = vpack.c.b16 %v5422, %v5418
      %v5451 = vpack.c.b16 %v5423, %v5419
      %v5452 = vpack.c.b16 %v5424, %v5420
      %v5453 = vpack.c.b16 %v5429, %v5425
      %v5454 = vpack.c.b16 %v5430, %v5426
      %v5455 = vpack.c.b16 %v5431, %v5427
      %v5456 = vpack.c.b16 %v5432, %v5428
      %v5457 = vpack.c.b16 %v5437, %v5433
      %v5458 = vpack.c.b16 %v5438, %v5434
      %v5459 = vpack.c.b16 %v5439, %v5435
      %v5460 = vpack.c.b16 %v5440, %v5436
      %v5461 = vpack.c.b16 %v5445, %v5441
      %v5462 = vpack.c.b16 %v5446, %v5442
      %v5463 = vpack.c.b16 %v5447, %v5443
      %v5464 = vpack.c.b16 %v5448, %v5444
      %5481 = vmatpush.bf16.msra.mxu0 0
      %5482 = vmatpush.bf16.msra.mxu0 0
      %5483 = vmatpush.bf16.msra.mxu0 0
      %5484 = vmatpush.bf16.msra.mxu0 0
      %5485 = vmatpush.bf16.msra.mxu0 %v5461
      %5486 = vmatpush.bf16.msra.mxu0 %v5457
      %5487 = vmatpush.bf16.msra.mxu0 %v5453
      %5488 = vmatpush.bf16.msra.mxu0 %v5449
      %5489 = vmatmul.bf16.gmra.mxu0 %v1604
      %v5490 = vpop.f32.mrf.mxu0
      %v5491 = vadd.f32 %v5393, %v5490
      %v5492 = vpop.f32.mrf.mxu0
      %v5493 = vadd.f32 %v5393, %v5492
      %5494 = vmatmul.bf16.gmra.mxu0 %v1607
      %v5495 = vpop.f32.mrf.mxu0
      %v5496 = vadd.f32 %v5393, %v5495
      %v5497 = vpop.f32.mrf.mxu0
      %v5498 = vadd.f32 %v5393, %v5497
      %5499 = vmatmul.bf16.gmra.mxu0 %v1610
      %v5500 = vpop.f32.mrf.mxu0
      %v5501 = vadd.f32 %v5393, %v5500
      %v5502 = vpop.f32.mrf.mxu0
      %v5503 = vadd.f32 %v5393, %v5502
      %5504 = vmatmul.bf16.gmra.mxu0 %v1613
      %v5505 = vpop.f32.mrf.mxu0
      %v5506 = vadd.f32 %v5393, %v5505
      %v5507 = vpop.f32.mrf.mxu0
      %v5508 = vadd.f32 %v5393, %v5507
      %5509 = vmatmul.bf16.gmra.mxu0 %v1616
      %v5510 = vpop.f32.mrf.mxu0
      %v5511 = vadd.f32 %v5393, %v5510
      %v5512 = vpop.f32.mrf.mxu0
      %v5513 = vadd.f32 %v5393, %v5512
      %5514 = vmatmul.bf16.gmra.mxu0 %v1619
      %v5515 = vpop.f32.mrf.mxu0
      %v5516 = vadd.f32 %v5393, %v5515
      %v5517 = vpop.f32.mrf.mxu0
      %v5518 = vadd.f32 %v5393, %v5517
      %5519 = vmatmul.bf16.gmra.mxu0 %v1622
      %v5520 = vpop.f32.mrf.mxu0
      %v5521 = vadd.f32 %v5393, %v5520
      %v5522 = vpop.f32.mrf.mxu0
      %v5523 = vadd.f32 %v5393, %v5522
      %5524 = vmatmul.bf16.gmra.mxu0 %v1625
      %v5525 = vpop.f32.mrf.mxu0
      %v5526 = vadd.f32 %v5393, %v5525
      %v5527 = vpop.f32.mrf.mxu0
      %v5528 = vadd.f32 %v5393, %v5527
      %5529 = vmatmul.bf16.gmra.mxu0 %v1628
      %v5530 = vpop.f32.mrf.mxu0
      %v5531 = vadd.f32 %v5393, %v5530
      %v5532 = vpop.f32.mrf.mxu0
      %v5533 = vadd.f32 %v5393, %v5532
      %5534 = vmatmul.bf16.gmra.mxu0 %v1631
      %v5535 = vpop.f32.mrf.mxu0
      %v5536 = vadd.f32 %v5393, %v5535
      %v5537 = vpop.f32.mrf.mxu0
      %v5538 = vadd.f32 %v5393, %v5537
      %5539 = vmatmul.bf16.gmra.mxu0 %v1634
      %v5540 = vpop.f32.mrf.mxu0
      %v5541 = vadd.f32 %v5393, %v5540
      %v5542 = vpop.f32.mrf.mxu0
      %v5543 = vadd.f32 %v5393, %v5542
      %5544 = vmatmul.bf16.gmra.mxu0 %v1637
      %v5545 = vpop.f32.mrf.mxu0
      %v5546 = vadd.f32 %v5393, %v5545
      %v5547 = vpop.f32.mrf.mxu0
      %v5548 = vadd.f32 %v5393, %v5547
      %5549 = vmatmul.bf16.gmra.mxu0 %v1640
      %v5550 = vpop.f32.mrf.mxu0
      %v5551 = vadd.f32 %v5393, %v5550
      %v5552 = vpop.f32.mrf.mxu0
      %v5553 = vadd.f32 %v5393, %v5552
      %5554 = vmatmul.bf16.gmra.mxu0 %v1643
      %v5555 = vpop.f32.mrf.mxu0
      %v5556 = vadd.f32 %v5393, %v5555
      %v5557 = vpop.f32.mrf.mxu0
      %v5558 = vadd.f32 %v5393, %v5557
      %5559 = vmatmul.bf16.gmra.mxu0 %v1646
      %v5560 = vpop.f32.mrf.mxu0
      %v5561 = vadd.f32 %v5393, %v5560
      %v5562 = vpop.f32.mrf.mxu0
      %v5563 = vadd.f32 %v5393, %v5562
      %5564 = vmatmul.bf16.gmra.mxu0 %v1649
      %v5565 = vpop.f32.mrf.mxu0
      %v5566 = vadd.f32 %v5393, %v5565
      %v5567 = vpop.f32.mrf.mxu0
      %v5568 = vadd.f32 %v5393, %v5567
      %5569 = vdwg.mxu0
      %5570 = vmatpush.bf16.msra.mxu0 0
      %5571 = vmatpush.bf16.msra.mxu0 0
      %5572 = vmatpush.bf16.msra.mxu0 0
      %5573 = vmatpush.bf16.msra.mxu0 0
      %5574 = vmatpush.bf16.msra.mxu0 %v5462
      %5575 = vmatpush.bf16.msra.mxu0 %v5458
      %5576 = vmatpush.bf16.msra.mxu0 %v5454
      %5577 = vmatpush.bf16.msra.mxu0 %v5450
      %5578 = vmatmul.bf16.gmra.mxu0 %v1604
      %v5579 = vpop.f32.mrf.mxu0
      %v5580 = vadd.f32 %v5394, %v5579
      %v5581 = vpop.f32.mrf.mxu0
      %v5582 = vadd.f32 %v5394, %v5581
      %5583 = vmatmul.bf16.gmra.mxu0 %v1607
      %v5584 = vpop.f32.mrf.mxu0
      %v5585 = vadd.f32 %v5394, %v5584
      %v5586 = vpop.f32.mrf.mxu0
      %v5587 = vadd.f32 %v5394, %v5586
      %5588 = vmatmul.bf16.gmra.mxu0 %v1610
      %v5589 = vpop.f32.mrf.mxu0
      %v5590 = vadd.f32 %v5394, %v5589
      %v5591 = vpop.f32.mrf.mxu0
      %v5592 = vadd.f32 %v5394, %v5591
      %5593 = vmatmul.bf16.gmra.mxu0 %v1613
      %v5594 = vpop.f32.mrf.mxu0
      %v5595 = vadd.f32 %v5394, %v5594
      %v5596 = vpop.f32.mrf.mxu0
      %v5597 = vadd.f32 %v5394, %v5596
      %5598 = vmatmul.bf16.gmra.mxu0 %v1616
      %v5599 = vpop.f32.mrf.mxu0
      %v5600 = vadd.f32 %v5394, %v5599
      %v5601 = vpop.f32.mrf.mxu0
      %v5602 = vadd.f32 %v5394, %v5601
      %5603 = vmatmul.bf16.gmra.mxu0 %v1619
      %v5604 = vpop.f32.mrf.mxu0
      %v5605 = vadd.f32 %v5394, %v5604
      %v5606 = vpop.f32.mrf.mxu0
      %v5607 = vadd.f32 %v5394, %v5606
      %5608 = vmatmul.bf16.gmra.mxu0 %v1622
      %v5609 = vpop.f32.mrf.mxu0
      %v5610 = vadd.f32 %v5394, %v5609
      %v5611 = vpop.f32.mrf.mxu0
      %v5612 = vadd.f32 %v5394, %v5611
      %5613 = vmatmul.bf16.gmra.mxu0 %v1625
      %v5614 = vpop.f32.mrf.mxu0
      %v5615 = vadd.f32 %v5394, %v5614
      %v5616 = vpop.f32.mrf.mxu0
      %v5617 = vadd.f32 %v5394, %v5616
      %5618 = vmatmul.bf16.gmra.mxu0 %v1628
      %v5619 = vpop.f32.mrf.mxu0
      %v5620 = vadd.f32 %v5394, %v5619
      %v5621 = vpop.f32.mrf.mxu0
      %v5622 = vadd.f32 %v5394, %v5621
      %5623 = vmatmul.bf16.gmra.mxu0 %v1631
      %v5624 = vpop.f32.mrf.mxu0
      %v5625 = vadd.f32 %v5394, %v5624
      %v5626 = vpop.f32.mrf.mxu0
      %v5627 = vadd.f32 %v5394, %v5626
      %5628 = vmatmul.bf16.gmra.mxu0 %v1634
      %v5629 = vpop.f32.mrf.mxu0
      %v5630 = vadd.f32 %v5394, %v5629
      %v5631 = vpop.f32.mrf.mxu0
      %v5632 = vadd.f32 %v5394, %v5631
      %5633 = vmatmul.bf16.gmra.mxu0 %v1637
      %v5634 = vpop.f32.mrf.mxu0
      %v5635 = vadd.f32 %v5394, %v5634
      %v5636 = vpop.f32.mrf.mxu0
      %v5637 = vadd.f32 %v5394, %v5636
      %5638 = vmatmul.bf16.gmra.mxu0 %v1640
      %v5639 = vpop.f32.mrf.mxu0
      %v5640 = vadd.f32 %v5394, %v5639
      %v5641 = vpop.f32.mrf.mxu0
      %v5642 = vadd.f32 %v5394, %v5641
      %5643 = vmatmul.bf16.gmra.mxu0 %v1643
      %v5644 = vpop.f32.mrf.mxu0
      %v5645 = vadd.f32 %v5394, %v5644
      %v5646 = vpop.f32.mrf.mxu0
      %v5647 = vadd.f32 %v5394, %v5646
      %5648 = vmatmul.bf16.gmra.mxu0 %v1646
      %v5649 = vpop.f32.mrf.mxu0
      %v5650 = vadd.f32 %v5394, %v5649
      %v5651 = vpop.f32.mrf.mxu0
      %v5652 = vadd.f32 %v5394, %v5651
      %5653 = vmatmul.bf16.gmra.mxu0 %v1649
      %v5654 = vpop.f32.mrf.mxu0
      %v5655 = vadd.f32 %v5394, %v5654
      %v5656 = vpop.f32.mrf.mxu0
      %v5657 = vadd.f32 %v5394, %v5656
      %5658 = vdwg.mxu0
      %5659 = vmatpush.bf16.msra.mxu0 0
      %5660 = vmatpush.bf16.msra.mxu0 0
      %5661 = vmatpush.bf16.msra.mxu0 0
      %5662 = vmatpush.bf16.msra.mxu0 0
      %5663 = vmatpush.bf16.msra.mxu0 %v5463
      %5664 = vmatpush.bf16.msra.mxu0 %v5459
      %5665 = vmatpush.bf16.msra.mxu0 %v5455
      %5666 = vmatpush.bf16.msra.mxu0 %v5451
      %5667 = vmatmul.bf16.gmra.mxu0 %v1604
      %v5668 = vpop.f32.mrf.mxu0
      %v5669 = vadd.f32 %v5395, %v5668
      %v5670 = vpop.f32.mrf.mxu0
      %v5671 = vadd.f32 %v5395, %v5670
      %5672 = vmatmul.bf16.gmra.mxu0 %v1607
      %v5673 = vpop.f32.mrf.mxu0
      %v5674 = vadd.f32 %v5395, %v5673
      %v5675 = vpop.f32.mrf.mxu0
      %v5676 = vadd.f32 %v5395, %v5675
      %5677 = vmatmul.bf16.gmra.mxu0 %v1610
      %v5678 = vpop.f32.mrf.mxu0
      %v5679 = vadd.f32 %v5395, %v5678
      %v5680 = vpop.f32.mrf.mxu0
      %v5681 = vadd.f32 %v5395, %v5680
      %5682 = vmatmul.bf16.gmra.mxu0 %v1613
      %v5683 = vpop.f32.mrf.mxu0
      %v5684 = vadd.f32 %v5395, %v5683
      %v5685 = vpop.f32.mrf.mxu0
      %v5686 = vadd.f32 %v5395, %v5685
      %5687 = vmatmul.bf16.gmra.mxu0 %v1616
      %v5688 = vpop.f32.mrf.mxu0
      %v5689 = vadd.f32 %v5395, %v5688
      %v5690 = vpop.f32.mrf.mxu0
      %v5691 = vadd.f32 %v5395, %v5690
      %5692 = vmatmul.bf16.gmra.mxu0 %v1619
      %v5693 = vpop.f32.mrf.mxu0
      %v5694 = vadd.f32 %v5395, %v5693
      %v5695 = vpop.f32.mrf.mxu0
      %v5696 = vadd.f32 %v5395, %v5695
      %5697 = vmatmul.bf16.gmra.mxu0 %v1622
      %v5698 = vpop.f32.mrf.mxu0
      %v5699 = vadd.f32 %v5395, %v5698
      %v5700 = vpop.f32.mrf.mxu0
      %v5701 = vadd.f32 %v5395, %v5700
      %5702 = vmatmul.bf16.gmra.mxu0 %v1625
      %v5703 = vpop.f32.mrf.mxu0
      %v5704 = vadd.f32 %v5395, %v5703
      %v5705 = vpop.f32.mrf.mxu0
      %v5706 = vadd.f32 %v5395, %v5705
      %5707 = vmatmul.bf16.gmra.mxu0 %v1628
      %v5708 = vpop.f32.mrf.mxu0
      %v5709 = vadd.f32 %v5395, %v5708
      %v5710 = vpop.f32.mrf.mxu0
      %v5711 = vadd.f32 %v5395, %v5710
      %5712 = vmatmul.bf16.gmra.mxu0 %v1631
      %v5713 = vpop.f32.mrf.mxu0
      %v5714 = vadd.f32 %v5395, %v5713
      %v5715 = vpop.f32.mrf.mxu0
      %v5716 = vadd.f32 %v5395, %v5715
      %5717 = vmatmul.bf16.gmra.mxu0 %v1634
      %v5718 = vpop.f32.mrf.mxu0
      %v5719 = vadd.f32 %v5395, %v5718
      %v5720 = vpop.f32.mrf.mxu0
      %v5721 = vadd.f32 %v5395, %v5720
      %5722 = vmatmul.bf16.gmra.mxu0 %v1637
      %v5723 = vpop.f32.mrf.mxu0
      %v5724 = vadd.f32 %v5395, %v5723
      %v5725 = vpop.f32.mrf.mxu0
      %v5726 = vadd.f32 %v5395, %v5725
      %5727 = vmatmul.bf16.gmra.mxu0 %v1640
      %v5728 = vpop.f32.mrf.mxu0
      %v5729 = vadd.f32 %v5395, %v5728
      %v5730 = vpop.f32.mrf.mxu0
      %v5731 = vadd.f32 %v5395, %v5730
      %5732 = vmatmul.bf16.gmra.mxu0 %v1643
      %v5733 = vpop.f32.mrf.mxu0
      %v5734 = vadd.f32 %v5395, %v5733
      %v5735 = vpop.f32.mrf.mxu0
      %v5736 = vadd.f32 %v5395, %v5735
      %5737 = vmatmul.bf16.gmra.mxu0 %v1646
      %v5738 = vpop.f32.mrf.mxu0
      %v5739 = vadd.f32 %v5395, %v5738
      %v5740 = vpop.f32.mrf.mxu0
      %v5741 = vadd.f32 %v5395, %v5740
      %5742 = vmatmul.bf16.gmra.mxu0 %v1649
      %v5743 = vpop.f32.mrf.mxu0
      %v5744 = vadd.f32 %v5395, %v5743
      %v5745 = vpop.f32.mrf.mxu0
      %v5746 = vadd.f32 %v5395, %v5745
      %5747 = vdwg.mxu0
      %5748 = vmatpush.bf16.msra.mxu0 0
      %5749 = vmatpush.bf16.msra.mxu0 0
      %5750 = vmatpush.bf16.msra.mxu0 0
      %5751 = vmatpush.bf16.msra.mxu0 0
      %5752 = vmatpush.bf16.msra.mxu0 %v5464
      %5753 = vmatpush.bf16.msra.mxu0 %v5460
      %5754 = vmatpush.bf16.msra.mxu0 %v5456
      %5755 = vmatpush.bf16.msra.mxu0 %v5452
      %5756 = vmatmul.bf16.gmra.mxu0 %v1604
      %v5757 = vpop.f32.mrf.mxu0
      %v5758 = vadd.f32 %v5396, %v5757
      %v5759 = vpop.f32.mrf.mxu0
      %v5760 = vadd.f32 %v5396, %v5759
      %5761 = vmatmul.bf16.gmra.mxu0 %v1607
      %v5762 = vpop.f32.mrf.mxu0
      %v5763 = vadd.f32 %v5396, %v5762
      %v5764 = vpop.f32.mrf.mxu0
      %v5765 = vadd.f32 %v5396, %v5764
      %5766 = vmatmul.bf16.gmra.mxu0 %v1610
      %v5767 = vpop.f32.mrf.mxu0
      %v5768 = vadd.f32 %v5396, %v5767
      %v5769 = vpop.f32.mrf.mxu0
      %v5770 = vadd.f32 %v5396, %v5769
      %5771 = vmatmul.bf16.gmra.mxu0 %v1613
      %v5772 = vpop.f32.mrf.mxu0
      %v5773 = vadd.f32 %v5396, %v5772
      %v5774 = vpop.f32.mrf.mxu0
      %v5775 = vadd.f32 %v5396, %v5774
      %5776 = vmatmul.bf16.gmra.mxu0 %v1616
      %v5777 = vpop.f32.mrf.mxu0
      %v5778 = vadd.f32 %v5396, %v5777
      %v5779 = vpop.f32.mrf.mxu0
      %v5780 = vadd.f32 %v5396, %v5779
      %5781 = vmatmul.bf16.gmra.mxu0 %v1619
      %v5782 = vpop.f32.mrf.mxu0
      %v5783 = vadd.f32 %v5396, %v5782
      %v5784 = vpop.f32.mrf.mxu0
      %v5785 = vadd.f32 %v5396, %v5784
      %5786 = vmatmul.bf16.gmra.mxu0 %v1622
      %v5787 = vpop.f32.mrf.mxu0
      %v5788 = vadd.f32 %v5396, %v5787
      %v5789 = vpop.f32.mrf.mxu0
      %v5790 = vadd.f32 %v5396, %v5789
      %5791 = vmatmul.bf16.gmra.mxu0 %v1625
      %v5792 = vpop.f32.mrf.mxu0
      %v5793 = vadd.f32 %v5396, %v5792
      %v5794 = vpop.f32.mrf.mxu0
      %v5795 = vadd.f32 %v5396, %v5794
      %5796 = vmatmul.bf16.gmra.mxu0 %v1628
      %v5797 = vpop.f32.mrf.mxu0
      %v5798 = vadd.f32 %v5396, %v5797
      %v5799 = vpop.f32.mrf.mxu0
      %v5800 = vadd.f32 %v5396, %v5799
      %5801 = vmatmul.bf16.gmra.mxu0 %v1631
      %v5802 = vpop.f32.mrf.mxu0
      %v5803 = vadd.f32 %v5396, %v5802
      %v5804 = vpop.f32.mrf.mxu0
      %v5805 = vadd.f32 %v5396, %v5804
      %5806 = vmatmul.bf16.gmra.mxu0 %v1634
      %v5807 = vpop.f32.mrf.mxu0
      %v5808 = vadd.f32 %v5396, %v5807
      %v5809 = vpop.f32.mrf.mxu0
      %v5810 = vadd.f32 %v5396, %v5809
      %5811 = vmatmul.bf16.gmra.mxu0 %v1637
      %v5812 = vpop.f32.mrf.mxu0
      %v5813 = vadd.f32 %v5396, %v5812
      %v5814 = vpop.f32.mrf.mxu0
      %v5815 = vadd.f32 %v5396, %v5814
      %5816 = vmatmul.bf16.gmra.mxu0 %v1640
      %v5817 = vpop.f32.mrf.mxu0
      %v5818 = vadd.f32 %v5396, %v5817
      %v5819 = vpop.f32.mrf.mxu0
      %v5820 = vadd.f32 %v5396, %v5819
      %5821 = vmatmul.bf16.gmra.mxu0 %v1643
      %v5822 = vpop.f32.mrf.mxu0
      %v5823 = vadd.f32 %v5396, %v5822
      %v5824 = vpop.f32.mrf.mxu0
      %v5825 = vadd.f32 %v5396, %v5824
      %5826 = vmatmul.bf16.gmra.mxu0 %v1646
      %v5827 = vpop.f32.mrf.mxu0
      %v5828 = vadd.f32 %v5396, %v5827
      %v5829 = vpop.f32.mrf.mxu0
      %v5830 = vadd.f32 %v5396, %v5829
      %5831 = vmatmul.bf16.gmra.mxu0 %v1649
      %v5832 = vpop.f32.mrf.mxu0
      %v5833 = vadd.f32 %v5396, %v5832
      %v5834 = vpop.f32.mrf.mxu0
      %v5835 = vadd.f32 %v5396, %v5834
      %5836 = vdwg.mxu0
      %v5837 = vmax.f32 %v5491, 0.0
      %v5838 = vmax.f32 %v5580, 0.0
      %v5839 = vmax.f32 %v5669, 0.0
      %v5840 = vmax.f32 %v5758, 0.0
      %v5841 = vmax.f32 %v5493, 0.0
      %v5842 = vmax.f32 %v5582, 0.0
      %v5843 = vmax.f32 %v5671, 0.0
      %v5844 = vmax.f32 %v5760, 0.0
      %v5845 = vmax.f32 %v5496, 0.0
      %v5846 = vmax.f32 %v5585, 0.0
      %v5847 = vmax.f32 %v5674, 0.0
      %v5848 = vmax.f32 %v5763, 0.0
      %v5849 = vmax.f32 %v5498, 0.0
      %v5850 = vmax.f32 %v5587, 0.0
      %v5851 = vmax.f32 %v5676, 0.0
      %v5852 = vmax.f32 %v5765, 0.0
      %v5853 = vmax.f32 %v5501, 0.0
      %v5854 = vmax.f32 %v5590, 0.0
      %v5855 = vmax.f32 %v5679, 0.0
      %v5856 = vmax.f32 %v5768, 0.0
      %v5857 = vmax.f32 %v5503, 0.0
      %v5858 = vmax.f32 %v5592, 0.0
      %v5859 = vmax.f32 %v5681, 0.0
      %v5860 = vmax.f32 %v5770, 0.0
      %v5861 = vmax.f32 %v5506, 0.0
      %v5862 = vmax.f32 %v5595, 0.0
      %v5863 = vmax.f32 %v5684, 0.0
      %v5864 = vmax.f32 %v5773, 0.0
      %v5865 = vmax.f32 %v5508, 0.0
      %v5866 = vmax.f32 %v5597, 0.0
      %v5867 = vmax.f32 %v5686, 0.0
      %v5868 = vmax.f32 %v5775, 0.0
      %v5869 = vmax.f32 %v5511, 0.0
      %v5870 = vmax.f32 %v5600, 0.0
      %v5871 = vmax.f32 %v5689, 0.0
      %v5872 = vmax.f32 %v5778, 0.0
      %v5873 = vmax.f32 %v5513, 0.0
      %v5874 = vmax.f32 %v5602, 0.0
      %v5875 = vmax.f32 %v5691, 0.0
      %v5876 = vmax.f32 %v5780, 0.0
      %v5877 = vmax.f32 %v5516, 0.0
      %v5878 = vmax.f32 %v5605, 0.0
      %v5879 = vmax.f32 %v5694, 0.0
      %v5880 = vmax.f32 %v5783, 0.0
      %v5881 = vmax.f32 %v5518, 0.0
      %v5882 = vmax.f32 %v5607, 0.0
      %v5883 = vmax.f32 %v5696, 0.0
      %v5884 = vmax.f32 %v5785, 0.0
      %v5885 = vmax.f32 %v5521, 0.0
      %v5886 = vmax.f32 %v5610, 0.0
      %v5887 = vmax.f32 %v5699, 0.0
      %v5888 = vmax.f32 %v5788, 0.0
      %v5889 = vmax.f32 %v5523, 0.0
      %v5890 = vmax.f32 %v5612, 0.0
      %v5891 = vmax.f32 %v5701, 0.0
      %v5892 = vmax.f32 %v5790, 0.0
      %v5893 = vmax.f32 %v5526, 0.0
      %v5894 = vmax.f32 %v5615, 0.0
      %v5895 = vmax.f32 %v5704, 0.0
      %v5896 = vmax.f32 %v5793, 0.0
      %v5897 = vmax.f32 %v5528, 0.0
      %v5898 = vmax.f32 %v5617, 0.0
      %v5899 = vmax.f32 %v5706, 0.0
      %v5900 = vmax.f32 %v5795, 0.0
      %v5901 = vmax.f32 %v5531, 0.0
      %v5902 = vmax.f32 %v5620, 0.0
      %v5903 = vmax.f32 %v5709, 0.0
      %v5904 = vmax.f32 %v5798, 0.0
      %v5905 = vmax.f32 %v5533, 0.0
      %v5906 = vmax.f32 %v5622, 0.0
      %v5907 = vmax.f32 %v5711, 0.0
      %v5908 = vmax.f32 %v5800, 0.0
      %v5909 = vmax.f32 %v5536, 0.0
      %v5910 = vmax.f32 %v5625, 0.0
      %v5911 = vmax.f32 %v5714, 0.0
      %v5912 = vmax.f32 %v5803, 0.0
      %v5913 = vmax.f32 %v5538, 0.0
      %v5914 = vmax.f32 %v5627, 0.0
      %v5915 = vmax.f32 %v5716, 0.0
      %v5916 = vmax.f32 %v5805, 0.0
      %v5917 = vmax.f32 %v5541, 0.0
      %v5918 = vmax.f32 %v5630, 0.0
      %v5919 = vmax.f32 %v5719, 0.0
      %v5920 = vmax.f32 %v5808, 0.0
      %v5921 = vmax.f32 %v5543, 0.0
      %v5922 = vmax.f32 %v5632, 0.0
      %v5923 = vmax.f32 %v5721, 0.0
      %v5924 = vmax.f32 %v5810, 0.0
      %v5925 = vmax.f32 %v5546, 0.0
      %v5926 = vmax.f32 %v5635, 0.0
      %v5927 = vmax.f32 %v5724, 0.0
      %v5928 = vmax.f32 %v5813, 0.0
      %v5929 = vmax.f32 %v5548, 0.0
      %v5930 = vmax.f32 %v5637, 0.0
      %v5931 = vmax.f32 %v5726, 0.0
      %v5932 = vmax.f32 %v5815, 0.0
      %v5933 = vmax.f32 %v5551, 0.0
      %v5934 = vmax.f32 %v5640, 0.0
      %v5935 = vmax.f32 %v5729, 0.0
      %v5936 = vmax.f32 %v5818, 0.0
      %v5937 = vmax.f32 %v5553, 0.0
      %v5938 = vmax.f32 %v5642, 0.0
      %v5939 = vmax.f32 %v5731, 0.0
      %v5940 = vmax.f32 %v5820, 0.0
      %v5941 = vmax.f32 %v5556, 0.0
      %v5942 = vmax.f32 %v5645, 0.0
      %v5943 = vmax.f32 %v5734, 0.0
      %v5944 = vmax.f32 %v5823, 0.0
      %v5945 = vmax.f32 %v5558, 0.0
      %v5946 = vmax.f32 %v5647, 0.0
      %v5947 = vmax.f32 %v5736, 0.0
      %v5948 = vmax.f32 %v5825, 0.0
      %v5949 = vmax.f32 %v5561, 0.0
      %v5950 = vmax.f32 %v5650, 0.0
      %v5951 = vmax.f32 %v5739, 0.0
      %v5952 = vmax.f32 %v5828, 0.0
      %v5953 = vmax.f32 %v5563, 0.0
      %v5954 = vmax.f32 %v5652, 0.0
      %v5955 = vmax.f32 %v5741, 0.0
      %v5956 = vmax.f32 %v5830, 0.0
      %v5957 = vmax.f32 %v5566, 0.0
      %v5958 = vmax.f32 %v5655, 0.0
      %v5959 = vmax.f32 %v5744, 0.0
      %v5960 = vmax.f32 %v5833, 0.0
      %v5961 = vmax.f32 %v5568, 0.0
      %v5962 = vmax.f32 %v5657, 0.0
      %v5963 = vmax.f32 %v5746, 0.0
      %v5964 = vmax.f32 %v5835, 0.0
      %v5965 = vpack.c.bf16 %v5841, %v5837
      %v5966 = vpack.c.bf16 %v5842, %v5838
      %v5967 = vpack.c.bf16 %v5843, %v5839
      %v5968 = vpack.c.bf16 %v5844, %v5840
      %v5969 = vpack.c.bf16 %v5849, %v5845
      %v5970 = vpack.c.bf16 %v5850, %v5846
      %v5971 = vpack.c.bf16 %v5851, %v5847
      %v5972 = vpack.c.bf16 %v5852, %v5848
      %v5973 = vpack.c.bf16 %v5857, %v5853
      %v5974 = vpack.c.bf16 %v5858, %v5854
      %v5975 = vpack.c.bf16 %v5859, %v5855
      %v5976 = vpack.c.bf16 %v5860, %v5856
      %v5977 = vpack.c.bf16 %v5865, %v5861
      %v5978 = vpack.c.bf16 %v5866, %v5862
      %v5979 = vpack.c.bf16 %v5867, %v5863
      %v5980 = vpack.c.bf16 %v5868, %v5864
      %v5981 = vpack.c.bf16 %v5873, %v5869
      %v5982 = vpack.c.bf16 %v5874, %v5870
      %v5983 = vpack.c.bf16 %v5875, %v5871
      %v5984 = vpack.c.bf16 %v5876, %v5872
      %v5985 = vpack.c.bf16 %v5881, %v5877
      %v5986 = vpack.c.bf16 %v5882, %v5878
      %v5987 = vpack.c.bf16 %v5883, %v5879
      %v5988 = vpack.c.bf16 %v5884, %v5880
      %v5989 = vpack.c.bf16 %v5889, %v5885
      %v5990 = vpack.c.bf16 %v5890, %v5886
      %v5991 = vpack.c.bf16 %v5891, %v5887
      %v5992 = vpack.c.bf16 %v5892, %v5888
      %v5993 = vpack.c.bf16 %v5897, %v5893
      %v5994 = vpack.c.bf16 %v5898, %v5894
      %v5995 = vpack.c.bf16 %v5899, %v5895
      %v5996 = vpack.c.bf16 %v5900, %v5896
      %v5997 = vpack.c.bf16 %v5905, %v5901
      %v5998 = vpack.c.bf16 %v5906, %v5902
      %v5999 = vpack.c.bf16 %v5907, %v5903
      %v6000 = vpack.c.bf16 %v5908, %v5904
      %v6001 = vpack.c.bf16 %v5913, %v5909
      %v6002 = vpack.c.bf16 %v5914, %v5910
      %v6003 = vpack.c.bf16 %v5915, %v5911
      %v6004 = vpack.c.bf16 %v5916, %v5912
      %v6005 = vpack.c.bf16 %v5921, %v5917
      %v6006 = vpack.c.bf16 %v5922, %v5918
      %v6007 = vpack.c.bf16 %v5923, %v5919
      %v6008 = vpack.c.bf16 %v5924, %v5920
      %v6009 = vpack.c.bf16 %v5929, %v5925
      %v6010 = vpack.c.bf16 %v5930, %v5926
      %v6011 = vpack.c.bf16 %v5931, %v5927
      %v6012 = vpack.c.bf16 %v5932, %v5928
      %v6013 = vpack.c.bf16 %v5937, %v5933
      %v6014 = vpack.c.bf16 %v5938, %v5934
      %v6015 = vpack.c.bf16 %v5939, %v5935
      %v6016 = vpack.c.bf16 %v5940, %v5936
      %v6017 = vpack.c.bf16 %v5945, %v5941
      %v6018 = vpack.c.bf16 %v5946, %v5942
      %v6019 = vpack.c.bf16 %v5947, %v5943
      %v6020 = vpack.c.bf16 %v5948, %v5944
      %v6021 = vpack.c.bf16 %v5953, %v5949
      %v6022 = vpack.c.bf16 %v5954, %v5950
      %v6023 = vpack.c.bf16 %v5955, %v5951
      %v6024 = vpack.c.bf16 %v5956, %v5952
      %v6025 = vpack.c.bf16 %v5961, %v5957
      %v6026 = vpack.c.bf16 %v5962, %v5958
      %v6027 = vpack.c.bf16 %v5963, %v5959
      %v6028 = vpack.c.bf16 %v5964, %v5960
      %v6029 = vld [vmem:[%s7 + $0x300] sm:$0xf]
      %v6030 = vld [vmem:[%s7 + $0x304] sm:$0xf]
      %v6031 = vld [vmem:[%s7 + $0x308] sm:$0xf]
      %v6032 = vld [vmem:[%s7 + $0x30c] sm:$0xf]
      %v6033 = vld [vmem:[%s7 + $0x310] sm:$0xf]
      %v6034 = vld [vmem:[%s7 + $0x314] sm:$0xf]
      %v6035 = vld [vmem:[%s7 + $0x318] sm:$0xf]
      %v6036 = vld [vmem:[%s7 + $0x31c] sm:$0xf]
      %v6037 = vld [vmem:[%s7 + $0x320] sm:$0xf]
      %v6038 = vld [vmem:[%s7 + $0x324] sm:$0xf]
      %v6039 = vld [vmem:[%s7 + $0x328] sm:$0xf]
      %v6040 = vld [vmem:[%s7 + $0x32c] sm:$0xf]
      %v6041 = vld [vmem:[%s7 + $0x330] sm:$0xf]
      %v6042 = vld [vmem:[%s7 + $0x334] sm:$0xf]
      %v6043 = vld [vmem:[%s7 + $0x338] sm:$0xf]
      %v6044 = vld [vmem:[%s7 + $0x33c] sm:$0xf]
      %v6045 = vld [vmem:[%s7 + $0x340] sm:$0xf]
      %v6046 = vld [vmem:[%s7 + $0x344] sm:$0xf]
      %v6047 = vld [vmem:[%s7 + $0x348] sm:$0xf]
      %v6048 = vld [vmem:[%s7 + $0x34c] sm:$0xf]
      %v6049 = vld [vmem:[%s7 + $0x350] sm:$0xf]
      %v6050 = vld [vmem:[%s7 + $0x354] sm:$0xf]
      %v6051 = vld [vmem:[%s7 + $0x358] sm:$0xf]
      %v6052 = vld [vmem:[%s7 + $0x35c] sm:$0xf]
      %v6053 = vld [vmem:[%s7 + $0x360] sm:$0xf]
      %v6054 = vld [vmem:[%s7 + $0x364] sm:$0xf]
      %v6055 = vld [vmem:[%s7 + $0x368] sm:$0xf]
      %v6056 = vld [vmem:[%s7 + $0x36c] sm:$0xf]
      %v6057 = vld [vmem:[%s7 + $0x370] sm:$0xf]
      %v6058 = vld [vmem:[%s7 + $0x374] sm:$0xf]
      %v6059 = vld [vmem:[%s7 + $0x378] sm:$0xf]
      %v6060 = vld [vmem:[%s7 + $0x37c] sm:$0xf]
      %v6061 = vld [vmem:[%s7 + $0x380] sm:$0xf]
      %v6062 = vld [vmem:[%s7 + $0x384] sm:$0xf]
      %v6063 = vld [vmem:[%s7 + $0x388] sm:$0xf]
      %v6064 = vld [vmem:[%s7 + $0x38c] sm:$0xf]
      %v6065 = vld [vmem:[%s7 + $0x390] sm:$0xf]
      %v6066 = vld [vmem:[%s7 + $0x394] sm:$0xf]
      %v6067 = vld [vmem:[%s7 + $0x398] sm:$0xf]
      %v6068 = vld [vmem:[%s7 + $0x39c] sm:$0xf]
      %v6069 = vld [vmem:[%s7 + $0x3a0] sm:$0xf]
      %v6070 = vld [vmem:[%s7 + $0x3a4] sm:$0xf]
      %v6071 = vld [vmem:[%s7 + $0x3a8] sm:$0xf]
      %v6072 = vld [vmem:[%s7 + $0x3ac] sm:$0xf]
      %v6073 = vld [vmem:[%s7 + $0x3b0] sm:$0xf]
      %v6074 = vld [vmem:[%s7 + $0x3b4] sm:$0xf]
      %v6075 = vld [vmem:[%s7 + $0x3b8] sm:$0xf]
      %v6076 = vld [vmem:[%s7 + $0x3bc] sm:$0xf]
      %v6077 = vld [vmem:[%s7 + $0x3c0] sm:$0xf]
      %v6078 = vld [vmem:[%s7 + $0x3c4] sm:$0xf]
      %v6079 = vld [vmem:[%s7 + $0x3c8] sm:$0xf]
      %v6080 = vld [vmem:[%s7 + $0x3cc] sm:$0xf]
      %v6081 = vld [vmem:[%s7 + $0x3d0] sm:$0xf]
      %v6082 = vld [vmem:[%s7 + $0x3d4] sm:$0xf]
      %v6083 = vld [vmem:[%s7 + $0x3d8] sm:$0xf]
      %v6084 = vld [vmem:[%s7 + $0x3dc] sm:$0xf]
      %v6085 = vld [vmem:[%s7 + $0x3e0] sm:$0xf]
      %v6086 = vld [vmem:[%s7 + $0x3e4] sm:$0xf]
      %v6087 = vld [vmem:[%s7 + $0x3e8] sm:$0xf]
      %v6088 = vld [vmem:[%s7 + $0x3ec] sm:$0xf]
      %v6089 = vld [vmem:[%s7 + $0x3f0] sm:$0xf]
      %v6090 = vld [vmem:[%s7 + $0x3f4] sm:$0xf]
      %v6091 = vld [vmem:[%s7 + $0x3f8] sm:$0xf]
      %v6092 = vld [vmem:[%s7 + $0x3fc] sm:$0xf]
      %v6157 = vunpack.c.l.b16 %v6029
      %v6158 = vunpack.c.l.b16 %v6030
      %v6159 = vunpack.c.l.b16 %v6031
      %v6160 = vunpack.c.l.b16 %v6032
      %v6161 = vunpack.c.l.b16 %v6033
      %v6162 = vunpack.c.l.b16 %v6034
      %v6163 = vunpack.c.l.b16 %v6035
      %v6164 = vunpack.c.l.b16 %v6036
      %v6165 = vunpack.c.l.b16 %v6037
      %v6166 = vunpack.c.l.b16 %v6038
      %v6167 = vunpack.c.l.b16 %v6039
      %v6168 = vunpack.c.l.b16 %v6040
      %v6169 = vunpack.c.l.b16 %v6041
      %v6170 = vunpack.c.l.b16 %v6042
      %v6171 = vunpack.c.l.b16 %v6043
      %v6172 = vunpack.c.l.b16 %v6044
      %v6173 = vunpack.c.l.b16 %v6045
      %v6174 = vunpack.c.l.b16 %v6046
      %v6175 = vunpack.c.l.b16 %v6047
      %v6176 = vunpack.c.l.b16 %v6048
      %v6177 = vunpack.c.l.b16 %v6049
      %v6178 = vunpack.c.l.b16 %v6050
      %v6179 = vunpack.c.l.b16 %v6051
      %v6180 = vunpack.c.l.b16 %v6052
      %v6181 = vunpack.c.l.b16 %v6053
      %v6182 = vunpack.c.l.b16 %v6054
      %v6183 = vunpack.c.l.b16 %v6055
      %v6184 = vunpack.c.l.b16 %v6056
      %v6185 = vunpack.c.l.b16 %v6057
      %v6186 = vunpack.c.l.b16 %v6058
      %v6187 = vunpack.c.l.b16 %v6059
      %v6188 = vunpack.c.l.b16 %v6060
      %v6189 = vunpack.c.l.b16 %v6061
      %v6190 = vunpack.c.l.b16 %v6062
      %v6191 = vunpack.c.l.b16 %v6063
      %v6192 = vunpack.c.l.b16 %v6064
      %v6193 = vunpack.c.l.b16 %v6065
      %v6194 = vunpack.c.l.b16 %v6066
      %v6195 = vunpack.c.l.b16 %v6067
      %v6196 = vunpack.c.l.b16 %v6068
      %v6197 = vunpack.c.l.b16 %v6069
      %v6198 = vunpack.c.l.b16 %v6070
      %v6199 = vunpack.c.l.b16 %v6071
      %v6200 = vunpack.c.l.b16 %v6072
      %v6201 = vunpack.c.l.b16 %v6073
      %v6202 = vunpack.c.l.b16 %v6074
      %v6203 = vunpack.c.l.b16 %v6075
      %v6204 = vunpack.c.l.b16 %v6076
      %v6205 = vunpack.c.l.b16 %v6077
      %v6206 = vunpack.c.l.b16 %v6078
      %v6207 = vunpack.c.l.b16 %v6079
      %v6208 = vunpack.c.l.b16 %v6080
      %v6209 = vunpack.c.l.b16 %v6081
      %v6210 = vunpack.c.l.b16 %v6082
      %v6211 = vunpack.c.l.b16 %v6083
      %v6212 = vunpack.c.l.b16 %v6084
      %v6213 = vunpack.c.l.b16 %v6085
      %v6214 = vunpack.c.l.b16 %v6086
      %v6215 = vunpack.c.l.b16 %v6087
      %v6216 = vunpack.c.l.b16 %v6088
      %v6217 = vunpack.c.l.b16 %v6089
      %v6218 = vunpack.c.l.b16 %v6090
      %v6219 = vunpack.c.l.b16 %v6091
      %v6220 = vunpack.c.l.b16 %v6092
      %v6221 = vpack.c.b16 %v6158, %v6157
      %v6222 = vpack.c.b16 %v6160, %v6159
      %v6223 = vpack.c.b16 %v6162, %v6161
      %v6224 = vpack.c.b16 %v6164, %v6163
      %v6225 = vpack.c.b16 %v6166, %v6165
      %v6226 = vpack.c.b16 %v6168, %v6167
      %v6227 = vpack.c.b16 %v6170, %v6169
      %v6228 = vpack.c.b16 %v6172, %v6171
      %v6229 = vpack.c.b16 %v6174, %v6173
      %v6230 = vpack.c.b16 %v6176, %v6175
      %v6231 = vpack.c.b16 %v6178, %v6177
      %v6232 = vpack.c.b16 %v6180, %v6179
      %v6233 = vpack.c.b16 %v6182, %v6181
      %v6234 = vpack.c.b16 %v6184, %v6183
      %v6235 = vpack.c.b16 %v6186, %v6185
      %v6236 = vpack.c.b16 %v6188, %v6187
      %v6237 = vpack.c.b16 %v6190, %v6189
      %v6238 = vpack.c.b16 %v6192, %v6191
      %v6239 = vpack.c.b16 %v6194, %v6193
      %v6240 = vpack.c.b16 %v6196, %v6195
      %v6241 = vpack.c.b16 %v6198, %v6197
      %v6242 = vpack.c.b16 %v6200, %v6199
      %v6243 = vpack.c.b16 %v6202, %v6201
      %v6244 = vpack.c.b16 %v6204, %v6203
      %v6245 = vpack.c.b16 %v6206, %v6205
      %v6246 = vpack.c.b16 %v6208, %v6207
      %v6247 = vpack.c.b16 %v6210, %v6209
      %v6248 = vpack.c.b16 %v6212, %v6211
      %v6249 = vpack.c.b16 %v6214, %v6213
      %v6250 = vpack.c.b16 %v6216, %v6215
      %v6251 = vpack.c.b16 %v6218, %v6217
      %v6252 = vpack.c.b16 %v6220, %v6219
      %6285 = vmatpush.bf16.msra.mxu0 %v6228
      %6286 = vmatpush.bf16.msra.mxu0 %v6227
      %6287 = vmatpush.bf16.msra.mxu0 %v6226
      %6288 = vmatpush.bf16.msra.mxu0 %v6225
      %6289 = vmatpush.bf16.msra.mxu0 %v6224
      %6290 = vmatpush.bf16.msra.mxu0 %v6223
      %6291 = vmatpush.bf16.msra.mxu0 %v6222
      %6292 = vmatpush.bf16.msra.mxu0 %v6221
      %6293 = vmatmul.bf16.gmra.mxu0 %v5965
      %v6294 = vpop.f32.mrf.mxu0
      %v6295 = vadd.f32 0.0, %v6294
      %v6296 = vpop.f32.mrf.mxu0
      %v6297 = vadd.f32 0.0, %v6296
      %6298 = vmatmul.bf16.gmra.mxu0 %v5969
      %v6299 = vpop.f32.mrf.mxu0
      %v6300 = vadd.f32 0.0, %v6299
      %v6301 = vpop.f32.mrf.mxu0
      %v6302 = vadd.f32 0.0, %v6301
      %6303 = vmatmul.bf16.gmra.mxu0 %v5973
      %v6304 = vpop.f32.mrf.mxu0
      %v6305 = vadd.f32 0.0, %v6304
      %v6306 = vpop.f32.mrf.mxu0
      %v6307 = vadd.f32 0.0, %v6306
      %6308 = vmatmul.bf16.gmra.mxu0 %v5977
      %v6309 = vpop.f32.mrf.mxu0
      %v6310 = vadd.f32 0.0, %v6309
      %v6311 = vpop.f32.mrf.mxu0
      %v6312 = vadd.f32 0.0, %v6311
      %6313 = vmatmul.bf16.gmra.mxu0 %v5981
      %v6314 = vpop.f32.mrf.mxu0
      %v6315 = vadd.f32 0.0, %v6314
      %v6316 = vpop.f32.mrf.mxu0
      %v6317 = vadd.f32 0.0, %v6316
      %6318 = vmatmul.bf16.gmra.mxu0 %v5985
      %v6319 = vpop.f32.mrf.mxu0
      %v6320 = vadd.f32 0.0, %v6319
      %v6321 = vpop.f32.mrf.mxu0
      %v6322 = vadd.f32 0.0, %v6321
      %6323 = vmatmul.bf16.gmra.mxu0 %v5989
      %v6324 = vpop.f32.mrf.mxu0
      %v6325 = vadd.f32 0.0, %v6324
      %v6326 = vpop.f32.mrf.mxu0
      %v6327 = vadd.f32 0.0, %v6326
      %6328 = vmatmul.bf16.gmra.mxu0 %v5993
      %v6329 = vpop.f32.mrf.mxu0
      %v6330 = vadd.f32 0.0, %v6329
      %v6331 = vpop.f32.mrf.mxu0
      %v6332 = vadd.f32 0.0, %v6331
      %6333 = vmatmul.bf16.gmra.mxu0 %v5997
      %v6334 = vpop.f32.mrf.mxu0
      %v6335 = vadd.f32 0.0, %v6334
      %v6336 = vpop.f32.mrf.mxu0
      %v6337 = vadd.f32 0.0, %v6336
      %6338 = vmatmul.bf16.gmra.mxu0 %v6001
      %v6339 = vpop.f32.mrf.mxu0
      %v6340 = vadd.f32 0.0, %v6339
      %v6341 = vpop.f32.mrf.mxu0
      %v6342 = vadd.f32 0.0, %v6341
      %6343 = vmatmul.bf16.gmra.mxu0 %v6005
      %v6344 = vpop.f32.mrf.mxu0
      %v6345 = vadd.f32 0.0, %v6344
      %v6346 = vpop.f32.mrf.mxu0
      %v6347 = vadd.f32 0.0, %v6346
      %6348 = vmatmul.bf16.gmra.mxu0 %v6009
      %v6349 = vpop.f32.mrf.mxu0
      %v6350 = vadd.f32 0.0, %v6349
      %v6351 = vpop.f32.mrf.mxu0
      %v6352 = vadd.f32 0.0, %v6351
      %6353 = vmatmul.bf16.gmra.mxu0 %v6013
      %v6354 = vpop.f32.mrf.mxu0
      %v6355 = vadd.f32 0.0, %v6354
      %v6356 = vpop.f32.mrf.mxu0
      %v6357 = vadd.f32 0.0, %v6356
      %6358 = vmatmul.bf16.gmra.mxu0 %v6017
      %v6359 = vpop.f32.mrf.mxu0
      %v6360 = vadd.f32 0.0, %v6359
      %v6361 = vpop.f32.mrf.mxu0
      %v6362 = vadd.f32 0.0, %v6361
      %6363 = vmatmul.bf16.gmra.mxu0 %v6021
      %v6364 = vpop.f32.mrf.mxu0
      %v6365 = vadd.f32 0.0, %v6364
      %v6366 = vpop.f32.mrf.mxu0
      %v6367 = vadd.f32 0.0, %v6366
      %6368 = vmatmul.bf16.gmra.mxu0 %v6025
      %v6369 = vpop.f32.mrf.mxu0
      %v6370 = vadd.f32 0.0, %v6369
      %v6371 = vpop.f32.mrf.mxu0
      %v6372 = vadd.f32 0.0, %v6371
      %6373 = vdwg.mxu0
      %6374 = vmatpush.bf16.msra.mxu0 %v6236
      %6375 = vmatpush.bf16.msra.mxu0 %v6235
      %6376 = vmatpush.bf16.msra.mxu0 %v6234
      %6377 = vmatpush.bf16.msra.mxu0 %v6233
      %6378 = vmatpush.bf16.msra.mxu0 %v6232
      %6379 = vmatpush.bf16.msra.mxu0 %v6231
      %6380 = vmatpush.bf16.msra.mxu0 %v6230
      %6381 = vmatpush.bf16.msra.mxu0 %v6229
      %6382 = vmatmul.bf16.gmra.mxu0 %v5966
      %v6383 = vpop.f32.mrf.mxu0
      %v6384 = vadd.f32 %v6295, %v6383
      %v6385 = vpop.f32.mrf.mxu0
      %v6386 = vadd.f32 %v6297, %v6385
      %6387 = vmatmul.bf16.gmra.mxu0 %v5970
      %v6388 = vpop.f32.mrf.mxu0
      %v6389 = vadd.f32 %v6300, %v6388
      %v6390 = vpop.f32.mrf.mxu0
      %v6391 = vadd.f32 %v6302, %v6390
      %6392 = vmatmul.bf16.gmra.mxu0 %v5974
      %v6393 = vpop.f32.mrf.mxu0
      %v6394 = vadd.f32 %v6305, %v6393
      %v6395 = vpop.f32.mrf.mxu0
      %v6396 = vadd.f32 %v6307, %v6395
      %6397 = vmatmul.bf16.gmra.mxu0 %v5978
      %v6398 = vpop.f32.mrf.mxu0
      %v6399 = vadd.f32 %v6310, %v6398
      %v6400 = vpop.f32.mrf.mxu0
      %v6401 = vadd.f32 %v6312, %v6400
      %6402 = vmatmul.bf16.gmra.mxu0 %v5982
      %v6403 = vpop.f32.mrf.mxu0
      %v6404 = vadd.f32 %v6315, %v6403
      %v6405 = vpop.f32.mrf.mxu0
      %v6406 = vadd.f32 %v6317, %v6405
      %6407 = vmatmul.bf16.gmra.mxu0 %v5986
      %v6408 = vpop.f32.mrf.mxu0
      %v6409 = vadd.f32 %v6320, %v6408
      %v6410 = vpop.f32.mrf.mxu0
      %v6411 = vadd.f32 %v6322, %v6410
      %6412 = vmatmul.bf16.gmra.mxu0 %v5990
      %v6413 = vpop.f32.mrf.mxu0
      %v6414 = vadd.f32 %v6325, %v6413
      %v6415 = vpop.f32.mrf.mxu0
      %v6416 = vadd.f32 %v6327, %v6415
      %6417 = vmatmul.bf16.gmra.mxu0 %v5994
      %v6418 = vpop.f32.mrf.mxu0
      %v6419 = vadd.f32 %v6330, %v6418
      %v6420 = vpop.f32.mrf.mxu0
      %v6421 = vadd.f32 %v6332, %v6420
      %6422 = vmatmul.bf16.gmra.mxu0 %v5998
      %v6423 = vpop.f32.mrf.mxu0
      %v6424 = vadd.f32 %v6335, %v6423
      %v6425 = vpop.f32.mrf.mxu0
      %v6426 = vadd.f32 %v6337, %v6425
      %6427 = vmatmul.bf16.gmra.mxu0 %v6002
      %v6428 = vpop.f32.mrf.mxu0
      %v6429 = vadd.f32 %v6340, %v6428
      %v6430 = vpop.f32.mrf.mxu0
      %v6431 = vadd.f32 %v6342, %v6430
      %6432 = vmatmul.bf16.gmra.mxu0 %v6006
      %v6433 = vpop.f32.mrf.mxu0
      %v6434 = vadd.f32 %v6345, %v6433
      %v6435 = vpop.f32.mrf.mxu0
      %v6436 = vadd.f32 %v6347, %v6435
      %6437 = vmatmul.bf16.gmra.mxu0 %v6010
      %v6438 = vpop.f32.mrf.mxu0
      %v6439 = vadd.f32 %v6350, %v6438
      %v6440 = vpop.f32.mrf.mxu0
      %v6441 = vadd.f32 %v6352, %v6440
      %6442 = vmatmul.bf16.gmra.mxu0 %v6014
      %v6443 = vpop.f32.mrf.mxu0
      %v6444 = vadd.f32 %v6355, %v6443
      %v6445 = vpop.f32.mrf.mxu0
      %v6446 = vadd.f32 %v6357, %v6445
      %6447 = vmatmul.bf16.gmra.mxu0 %v6018
      %v6448 = vpop.f32.mrf.mxu0
      %v6449 = vadd.f32 %v6360, %v6448
      %v6450 = vpop.f32.mrf.mxu0
      %v6451 = vadd.f32 %v6362, %v6450
      %6452 = vmatmul.bf16.gmra.mxu0 %v6022
      %v6453 = vpop.f32.mrf.mxu0
      %v6454 = vadd.f32 %v6365, %v6453
      %v6455 = vpop.f32.mrf.mxu0
      %v6456 = vadd.f32 %v6367, %v6455
      %6457 = vmatmul.bf16.gmra.mxu0 %v6026
      %v6458 = vpop.f32.mrf.mxu0
      %v6459 = vadd.f32 %v6370, %v6458
      %v6460 = vpop.f32.mrf.mxu0
      %v6461 = vadd.f32 %v6372, %v6460
      %6462 = vdwg.mxu0
      %6463 = vmatpush.bf16.msra.mxu0 %v6244
      %6464 = vmatpush.bf16.msra.mxu0 %v6243
      %6465 = vmatpush.bf16.msra.mxu0 %v6242
      %6466 = vmatpush.bf16.msra.mxu0 %v6241
      %6467 = vmatpush.bf16.msra.mxu0 %v6240
      %6468 = vmatpush.bf16.msra.mxu0 %v6239
      %6469 = vmatpush.bf16.msra.mxu0 %v6238
      %6470 = vmatpush.bf16.msra.mxu0 %v6237
      %6471 = vmatmul.bf16.gmra.mxu0 %v5967
      %v6472 = vpop.f32.mrf.mxu0
      %v6473 = vadd.f32 %v6384, %v6472
      %v6474 = vpop.f32.mrf.mxu0
      %v6475 = vadd.f32 %v6386, %v6474
      %6476 = vmatmul.bf16.gmra.mxu0 %v5971
      %v6477 = vpop.f32.mrf.mxu0
      %v6478 = vadd.f32 %v6389, %v6477
      %v6479 = vpop.f32.mrf.mxu0
      %v6480 = vadd.f32 %v6391, %v6479
      %6481 = vmatmul.bf16.gmra.mxu0 %v5975
      %v6482 = vpop.f32.mrf.mxu0
      %v6483 = vadd.f32 %v6394, %v6482
      %v6484 = vpop.f32.mrf.mxu0
      %v6485 = vadd.f32 %v6396, %v6484
      %6486 = vmatmul.bf16.gmra.mxu0 %v5979
      %v6487 = vpop.f32.mrf.mxu0
      %v6488 = vadd.f32 %v6399, %v6487
      %v6489 = vpop.f32.mrf.mxu0
      %v6490 = vadd.f32 %v6401, %v6489
      %6491 = vmatmul.bf16.gmra.mxu0 %v5983
      %v6492 = vpop.f32.mrf.mxu0
      %v6493 = vadd.f32 %v6404, %v6492
      %v6494 = vpop.f32.mrf.mxu0
      %v6495 = vadd.f32 %v6406, %v6494
      %6496 = vmatmul.bf16.gmra.mxu0 %v5987
      %v6497 = vpop.f32.mrf.mxu0
      %v6498 = vadd.f32 %v6409, %v6497
      %v6499 = vpop.f32.mrf.mxu0
      %v6500 = vadd.f32 %v6411, %v6499
      %6501 = vmatmul.bf16.gmra.mxu0 %v5991
      %v6502 = vpop.f32.mrf.mxu0
      %v6503 = vadd.f32 %v6414, %v6502
      %v6504 = vpop.f32.mrf.mxu0
      %v6505 = vadd.f32 %v6416, %v6504
      %6506 = vmatmul.bf16.gmra.mxu0 %v5995
      %v6507 = vpop.f32.mrf.mxu0
      %v6508 = vadd.f32 %v6419, %v6507
      %v6509 = vpop.f32.mrf.mxu0
      %v6510 = vadd.f32 %v6421, %v6509
      %6511 = vmatmul.bf16.gmra.mxu0 %v5999
      %v6512 = vpop.f32.mrf.mxu0
      %v6513 = vadd.f32 %v6424, %v6512
      %v6514 = vpop.f32.mrf.mxu0
      %v6515 = vadd.f32 %v6426, %v6514
      %6516 = vmatmul.bf16.gmra.mxu0 %v6003
      %v6517 = vpop.f32.mrf.mxu0
      %v6518 = vadd.f32 %v6429, %v6517
      %v6519 = vpop.f32.mrf.mxu0
      %v6520 = vadd.f32 %v6431, %v6519
      %6521 = vmatmul.bf16.gmra.mxu0 %v6007
      %v6522 = vpop.f32.mrf.mxu0
      %v6523 = vadd.f32 %v6434, %v6522
      %v6524 = vpop.f32.mrf.mxu0
      %v6525 = vadd.f32 %v6436, %v6524
      %6526 = vmatmul.bf16.gmra.mxu0 %v6011
      %v6527 = vpop.f32.mrf.mxu0
      %v6528 = vadd.f32 %v6439, %v6527
      %v6529 = vpop.f32.mrf.mxu0
      %v6530 = vadd.f32 %v6441, %v6529
      %6531 = vmatmul.bf16.gmra.mxu0 %v6015
      %v6532 = vpop.f32.mrf.mxu0
      %v6533 = vadd.f32 %v6444, %v6532
      %v6534 = vpop.f32.mrf.mxu0
      %v6535 = vadd.f32 %v6446, %v6534
      %6536 = vmatmul.bf16.gmra.mxu0 %v6019
      %v6537 = vpop.f32.mrf.mxu0
      %v6538 = vadd.f32 %v6449, %v6537
      %v6539 = vpop.f32.mrf.mxu0
      %v6540 = vadd.f32 %v6451, %v6539
      %6541 = vmatmul.bf16.gmra.mxu0 %v6023
      %v6542 = vpop.f32.mrf.mxu0
      %v6543 = vadd.f32 %v6454, %v6542
      %v6544 = vpop.f32.mrf.mxu0
      %v6545 = vadd.f32 %v6456, %v6544
      %6546 = vmatmul.bf16.gmra.mxu0 %v6027
      %v6547 = vpop.f32.mrf.mxu0
      %v6548 = vadd.f32 %v6459, %v6547
      %v6549 = vpop.f32.mrf.mxu0
      %v6550 = vadd.f32 %v6461, %v6549
      %6551 = vdwg.mxu0
      %6552 = vmatpush.bf16.msra.mxu0 %v6252
      %6553 = vmatpush.bf16.msra.mxu0 %v6251
      %6554 = vmatpush.bf16.msra.mxu0 %v6250
      %6555 = vmatpush.bf16.msra.mxu0 %v6249
      %6556 = vmatpush.bf16.msra.mxu0 %v6248
      %6557 = vmatpush.bf16.msra.mxu0 %v6247
      %6558 = vmatpush.bf16.msra.mxu0 %v6246
      %6559 = vmatpush.bf16.msra.mxu0 %v6245
      %6560 = vmatmul.bf16.gmra.mxu0 %v5968
      %v6561 = vpop.f32.mrf.mxu0
      %v6562 = vadd.f32 %v6473, %v6561
      %v6563 = vpop.f32.mrf.mxu0
      %v6564 = vadd.f32 %v6475, %v6563
      %6565 = vmatmul.bf16.gmra.mxu0 %v5972
      %v6566 = vpop.f32.mrf.mxu0
      %v6567 = vadd.f32 %v6478, %v6566
      %v6568 = vpop.f32.mrf.mxu0
      %v6569 = vadd.f32 %v6480, %v6568
      %6570 = vmatmul.bf16.gmra.mxu0 %v5976
      %v6571 = vpop.f32.mrf.mxu0
      %v6572 = vadd.f32 %v6483, %v6571
      %v6573 = vpop.f32.mrf.mxu0
      %v6574 = vadd.f32 %v6485, %v6573
      %6575 = vmatmul.bf16.gmra.mxu0 %v5980
      %v6576 = vpop.f32.mrf.mxu0
      %v6577 = vadd.f32 %v6488, %v6576
      %v6578 = vpop.f32.mrf.mxu0
      %v6579 = vadd.f32 %v6490, %v6578
      %6580 = vmatmul.bf16.gmra.mxu0 %v5984
      %v6581 = vpop.f32.mrf.mxu0
      %v6582 = vadd.f32 %v6493, %v6581
      %v6583 = vpop.f32.mrf.mxu0
      %v6584 = vadd.f32 %v6495, %v6583
      %6585 = vmatmul.bf16.gmra.mxu0 %v5988
      %v6586 = vpop.f32.mrf.mxu0
      %v6587 = vadd.f32 %v6498, %v6586
      %v6588 = vpop.f32.mrf.mxu0
      %v6589 = vadd.f32 %v6500, %v6588
      %6590 = vmatmul.bf16.gmra.mxu0 %v5992
      %v6591 = vpop.f32.mrf.mxu0
      %v6592 = vadd.f32 %v6503, %v6591
      %v6593 = vpop.f32.mrf.mxu0
      %v6594 = vadd.f32 %v6505, %v6593
      %6595 = vmatmul.bf16.gmra.mxu0 %v5996
      %v6596 = vpop.f32.mrf.mxu0
      %v6597 = vadd.f32 %v6508, %v6596
      %v6598 = vpop.f32.mrf.mxu0
      %v6599 = vadd.f32 %v6510, %v6598
      %6600 = vmatmul.bf16.gmra.mxu0 %v6000
      %v6601 = vpop.f32.mrf.mxu0
      %v6602 = vadd.f32 %v6513, %v6601
      %v6603 = vpop.f32.mrf.mxu0
      %v6604 = vadd.f32 %v6515, %v6603
      %6605 = vmatmul.bf16.gmra.mxu0 %v6004
      %v6606 = vpop.f32.mrf.mxu0
      %v6607 = vadd.f32 %v6518, %v6606
      %v6608 = vpop.f32.mrf.mxu0
      %v6609 = vadd.f32 %v6520, %v6608
      %6610 = vmatmul.bf16.gmra.mxu0 %v6008
      %v6611 = vpop.f32.mrf.mxu0
      %v6612 = vadd.f32 %v6523, %v6611
      %v6613 = vpop.f32.mrf.mxu0
      %v6614 = vadd.f32 %v6525, %v6613
      %6615 = vmatmul.bf16.gmra.mxu0 %v6012
      %v6616 = vpop.f32.mrf.mxu0
      %v6617 = vadd.f32 %v6528, %v6616
      %v6618 = vpop.f32.mrf.mxu0
      %v6619 = vadd.f32 %v6530, %v6618
      %6620 = vmatmul.bf16.gmra.mxu0 %v6016
      %v6621 = vpop.f32.mrf.mxu0
      %v6622 = vadd.f32 %v6533, %v6621
      %v6623 = vpop.f32.mrf.mxu0
      %v6624 = vadd.f32 %v6535, %v6623
      %6625 = vmatmul.bf16.gmra.mxu0 %v6020
      %v6626 = vpop.f32.mrf.mxu0
      %v6627 = vadd.f32 %v6538, %v6626
      %v6628 = vpop.f32.mrf.mxu0
      %v6629 = vadd.f32 %v6540, %v6628
      %6630 = vmatmul.bf16.gmra.mxu0 %v6024
      %v6631 = vpop.f32.mrf.mxu0
      %v6632 = vadd.f32 %v6543, %v6631
      %v6633 = vpop.f32.mrf.mxu0
      %v6634 = vadd.f32 %v6545, %v6633
      %6635 = vmatmul.bf16.gmra.mxu0 %v6028
      %v6636 = vpop.f32.mrf.mxu0
      %v6637 = vadd.f32 %v6548, %v6636
      %v6638 = vpop.f32.mrf.mxu0
      %v6639 = vadd.f32 %v6550, %v6638
      %6640 = vdwg.mxu0
      %v6641 = vadd.f32 %v5343, %v6562
      %v6642 = vadd.f32 %v5344, %v6564
      %v6643 = vadd.f32 %v5345, %v6567
      %v6644 = vadd.f32 %v5346, %v6569
      %v6645 = vadd.f32 %v5347, %v6572
      %v6646 = vadd.f32 %v5348, %v6574
      %v6647 = vadd.f32 %v5349, %v6577
      %v6648 = vadd.f32 %v5350, %v6579
      %v6649 = vadd.f32 %v5351, %v6582
      %v6650 = vadd.f32 %v5352, %v6584
      %v6651 = vadd.f32 %v5353, %v6587
      %v6652 = vadd.f32 %v5354, %v6589
      %v6653 = vadd.f32 %v5355, %v6592
      %v6654 = vadd.f32 %v5356, %v6594
      %v6655 = vadd.f32 %v5357, %v6597
      %v6656 = vadd.f32 %v5358, %v6599
      %v6657 = vadd.f32 %v5359, %v6602
      %v6658 = vadd.f32 %v5360, %v6604
      %v6659 = vadd.f32 %v5361, %v6607
      %v6660 = vadd.f32 %v5362, %v6609
      %v6661 = vadd.f32 %v5363, %v6612
      %v6662 = vadd.f32 %v5364, %v6614
      %v6663 = vadd.f32 %v5365, %v6617
      %v6664 = vadd.f32 %v5366, %v6619
      %v6665 = vadd.f32 %v5367, %v6622
      %v6666 = vadd.f32 %v5368, %v6624
      %v6667 = vadd.f32 %v5369, %v6627
      %v6668 = vadd.f32 %v5370, %v6629
      %v6669 = vadd.f32 %v5371, %v6632
      %v6670 = vadd.f32 %v5372, %v6634
      %v6671 = vadd.f32 %v5373, %v6637
      %v6672 = vadd.f32 %v5374, %v6639
      %v6673 = vld [vmem:[%s8] sm:$0x1]
      %v6675 = vperm.slane %v6673, 0
      %v6677 = vadd.f32 %v6641, %v6675
      %v6678 = vadd.f32 %v6642, %v6675
      %v6679 = vadd.f32 %v6643, %v6675
      %v6680 = vadd.f32 %v6644, %v6675
      %v6681 = vadd.f32 %v6645, %v6675
      %v6682 = vadd.f32 %v6646, %v6675
      %v6683 = vadd.f32 %v6647, %v6675
      %v6684 = vadd.f32 %v6648, %v6675
      %v6685 = vadd.f32 %v6649, %v6675
      %v6686 = vadd.f32 %v6650, %v6675
      %v6687 = vadd.f32 %v6651, %v6675
      %v6688 = vadd.f32 %v6652, %v6675
      %v6689 = vadd.f32 %v6653, %v6675
      %v6690 = vadd.f32 %v6654, %v6675
      %v6691 = vadd.f32 %v6655, %v6675
      %v6692 = vadd.f32 %v6656, %v6675
      %v6693 = vadd.f32 %v6657, %v6675
      %v6694 = vadd.f32 %v6658, %v6675
      %v6695 = vadd.f32 %v6659, %v6675
      %v6696 = vadd.f32 %v6660, %v6675
      %v6697 = vadd.f32 %v6661, %v6675
      %v6698 = vadd.f32 %v6662, %v6675
      %v6699 = vadd.f32 %v6663, %v6675
      %v6700 = vadd.f32 %v6664, %v6675
      %v6701 = vadd.f32 %v6665, %v6675
      %v6702 = vadd.f32 %v6666, %v6675
      %v6703 = vadd.f32 %v6667, %v6675
      %v6704 = vadd.f32 %v6668, %v6675
      %v6705 = vadd.f32 %v6669, %v6675
      %v6706 = vadd.f32 %v6670, %v6675
      %v6707 = vadd.f32 %v6671, %v6675
      %v6708 = vadd.f32 %v6672, %v6675
      %v6709 = vadd.f32 %v1449, %v6677
      %v6710 = vadd.f32 %v1450, %v6678
      %v6711 = vadd.f32 %v1451, %v6679
      %v6712 = vadd.f32 %v1452, %v6680
      %v6713 = vadd.f32 %v1453, %v6681
      %v6714 = vadd.f32 %v1454, %v6682
      %v6715 = vadd.f32 %v1455, %v6683
      %v6716 = vadd.f32 %v1456, %v6684
      %v6717 = vadd.f32 %v1457, %v6685
      %v6718 = vadd.f32 %v1458, %v6686
      %v6719 = vadd.f32 %v1459, %v6687
      %v6720 = vadd.f32 %v1460, %v6688
      %v6721 = vadd.f32 %v1461, %v6689
      %v6722 = vadd.f32 %v1462, %v6690
      %v6723 = vadd.f32 %v1463, %v6691
      %v6724 = vadd.f32 %v1464, %v6692
      %v6725 = vadd.f32 %v1465, %v6693
      %v6726 = vadd.f32 %v1466, %v6694
      %v6727 = vadd.f32 %v1467, %v6695
      %v6728 = vadd.f32 %v1468, %v6696
      %v6729 = vadd.f32 %v1469, %v6697
      %v6730 = vadd.f32 %v1470, %v6698
      %v6731 = vadd.f32 %v1471, %v6699
      %v6732 = vadd.f32 %v1472, %v6700
      %v6733 = vadd.f32 %v1473, %v6701
      %v6734 = vadd.f32 %v1474, %v6702
      %v6735 = vadd.f32 %v1475, %v6703
      %v6736 = vadd.f32 %v1476, %v6704
      %v6737 = vadd.f32 %v1477, %v6705
      %v6738 = vadd.f32 %v1478, %v6706
      %v6739 = vadd.f32 %v1479, %v6707
      %v6740 = vadd.f32 %v1480, %v6708
      %v6741 = vld [vmem:[%s9] sm:$0x1]
      %v6742 = vld [vmem:[%s10] sm:$0x1]
      %v6743 = vsel %vm699, %v6709, 0.0
      %6744 = vadd.xlane.f32.xlu0 %v6743
      %v6745 = vpop.xlane.xlu0 %6744
      %v6746 = vsel %vm699, %v6710, 0.0
      %6747 = vadd.xlane.f32.xlu0 %v6746
      %v6748 = vpop.xlane.xlu0 %6747
      %v6749 = vsel %vm699, %v6711, 0.0
      %6750 = vadd.xlane.f32.xlu0 %v6749
      %v6751 = vpop.xlane.xlu0 %6750
      %v6752 = vsel %vm699, %v6712, 0.0
      %6753 = vadd.xlane.f32.xlu0 %v6752
      %v6754 = vpop.xlane.xlu0 %6753
      %v6755 = vsel %vm699, %v6713, 0.0
      %6756 = vadd.xlane.f32.xlu0 %v6755
      %v6757 = vpop.xlane.xlu0 %6756
      %v6758 = vsel %vm699, %v6714, 0.0
      %6759 = vadd.xlane.f32.xlu0 %v6758
      %v6760 = vpop.xlane.xlu0 %6759
      %v6761 = vsel %vm699, %v6715, 0.0
      %6762 = vadd.xlane.f32.xlu0 %v6761
      %v6763 = vpop.xlane.xlu0 %6762
      %v6764 = vsel %vm699, %v6716, 0.0
      %6765 = vadd.xlane.f32.xlu0 %v6764
      %v6766 = vpop.xlane.xlu0 %6765
      %v6767 = vsel %vm699, %v6717, 0.0
      %6768 = vadd.xlane.f32.xlu0 %v6767
      %v6769 = vpop.xlane.xlu0 %6768
      %v6770 = vsel %vm699, %v6718, 0.0
      %6771 = vadd.xlane.f32.xlu0 %v6770
      %v6772 = vpop.xlane.xlu0 %6771
      %v6773 = vsel %vm699, %v6719, 0.0
      %6774 = vadd.xlane.f32.xlu0 %v6773
      %v6775 = vpop.xlane.xlu0 %6774
      %v6776 = vsel %vm699, %v6720, 0.0
      %6777 = vadd.xlane.f32.xlu0 %v6776
      %v6778 = vpop.xlane.xlu0 %6777
      %v6779 = vsel %vm699, %v6721, 0.0
      %6780 = vadd.xlane.f32.xlu0 %v6779
      %v6781 = vpop.xlane.xlu0 %6780
      %v6782 = vsel %vm699, %v6722, 0.0
      %6783 = vadd.xlane.f32.xlu0 %v6782
      %v6784 = vpop.xlane.xlu0 %6783
      %v6785 = vsel %vm699, %v6723, 0.0
      %6786 = vadd.xlane.f32.xlu0 %v6785
      %v6787 = vpop.xlane.xlu0 %6786
      %v6788 = vsel %vm699, %v6724, 0.0
      %6789 = vadd.xlane.f32.xlu0 %v6788
      %v6790 = vpop.xlane.xlu0 %6789
      %v6791 = vsel %vm699, %v6725, 0.0
      %6792 = vadd.xlane.f32.xlu0 %v6791
      %v6793 = vpop.xlane.xlu0 %6792
      %v6794 = vsel %vm699, %v6726, 0.0
      %6795 = vadd.xlane.f32.xlu0 %v6794
      %v6796 = vpop.xlane.xlu0 %6795
      %v6797 = vsel %vm699, %v6727, 0.0
      %6798 = vadd.xlane.f32.xlu0 %v6797
      %v6799 = vpop.xlane.xlu0 %6798
      %v6800 = vsel %vm699, %v6728, 0.0
      %6801 = vadd.xlane.f32.xlu0 %v6800
      %v6802 = vpop.xlane.xlu0 %6801
      %v6803 = vsel %vm699, %v6729, 0.0
      %6804 = vadd.xlane.f32.xlu0 %v6803
      %v6805 = vpop.xlane.xlu0 %6804
      %v6806 = vsel %vm699, %v6730, 0.0
      %6807 = vadd.xlane.f32.xlu0 %v6806
      %v6808 = vpop.xlane.xlu0 %6807
      %v6809 = vsel %vm699, %v6731, 0.0
      %6810 = vadd.xlane.f32.xlu0 %v6809
      %v6811 = vpop.xlane.xlu0 %6810
      %v6812 = vsel %vm699, %v6732, 0.0
      %6813 = vadd.xlane.f32.xlu0 %v6812
      %v6814 = vpop.xlane.xlu0 %6813
      %v6815 = vsel %vm699, %v6733, 0.0
      %6816 = vadd.xlane.f32.xlu0 %v6815
      %v6817 = vpop.xlane.xlu0 %6816
      %v6818 = vsel %vm699, %v6734, 0.0
      %6819 = vadd.xlane.f32.xlu0 %v6818
      %v6820 = vpop.xlane.xlu0 %6819
      %v6821 = vsel %vm699, %v6735, 0.0
      %6822 = vadd.xlane.f32.xlu0 %v6821
      %v6823 = vpop.xlane.xlu0 %6822
      %v6824 = vsel %vm699, %v6736, 0.0
      %6825 = vadd.xlane.f32.xlu0 %v6824
      %v6826 = vpop.xlane.xlu0 %6825
      %v6827 = vsel %vm699, %v6737, 0.0
      %6828 = vadd.xlane.f32.xlu0 %v6827
      %v6829 = vpop.xlane.xlu0 %6828
      %v6830 = vsel %vm699, %v6738, 0.0
      %6831 = vadd.xlane.f32.xlu0 %v6830
      %v6832 = vpop.xlane.xlu0 %6831
      %v6833 = vsel %vm699, %v6739, 0.0
      %6834 = vadd.xlane.f32.xlu0 %v6833
      %v6835 = vpop.xlane.xlu0 %6834
      %v6836 = vsel %vm699, %v6740, 0.0
      %6837 = vadd.xlane.f32.xlu0 %v6836
      %v6838 = vpop.xlane.xlu0 %6837
      %v6839 = vmul.f32 %v6745, %v802
      %v6840 = vmul.f32 %v6748, %v802
      %v6841 = vmul.f32 %v6751, %v802
      %v6842 = vmul.f32 %v6754, %v802
      %v6843 = vmul.f32 %v6757, %v802
      %v6844 = vmul.f32 %v6760, %v802
      %v6845 = vmul.f32 %v6763, %v802
      %v6846 = vmul.f32 %v6766, %v802
      %v6847 = vmul.f32 %v6769, %v802
      %v6848 = vmul.f32 %v6772, %v802
      %v6849 = vmul.f32 %v6775, %v802
      %v6850 = vmul.f32 %v6778, %v802
      %v6851 = vmul.f32 %v6781, %v802
      %v6852 = vmul.f32 %v6784, %v802
      %v6853 = vmul.f32 %v6787, %v802
      %v6854 = vmul.f32 %v6790, %v802
      %v6855 = vmul.f32 %v6793, %v802
      %v6856 = vmul.f32 %v6796, %v802
      %v6857 = vmul.f32 %v6799, %v802
      %v6858 = vmul.f32 %v6802, %v802
      %v6859 = vmul.f32 %v6805, %v802
      %v6860 = vmul.f32 %v6808, %v802
      %v6861 = vmul.f32 %v6811, %v802
      %v6862 = vmul.f32 %v6814, %v802
      %v6863 = vmul.f32 %v6817, %v802
      %v6864 = vmul.f32 %v6820, %v802
      %v6865 = vmul.f32 %v6823, %v802
      %v6866 = vmul.f32 %v6826, %v802
      %v6867 = vmul.f32 %v6829, %v802
      %v6868 = vmul.f32 %v6832, %v802
      %v6869 = vmul.f32 %v6835, %v802
      %v6870 = vmul.f32 %v6838, %v802
      %v6871 = vsub.f32 %v6709, %v6839
      %v6872 = vsub.f32 %v6710, %v6840
      %v6873 = vsub.f32 %v6711, %v6841
      %v6874 = vsub.f32 %v6712, %v6842
      %v6875 = vsub.f32 %v6713, %v6843
      %v6876 = vsub.f32 %v6714, %v6844
      %v6877 = vsub.f32 %v6715, %v6845
      %v6878 = vsub.f32 %v6716, %v6846
      %v6879 = vsub.f32 %v6717, %v6847
      %v6880 = vsub.f32 %v6718, %v6848
      %v6881 = vsub.f32 %v6719, %v6849
      %v6882 = vsub.f32 %v6720, %v6850
      %v6883 = vsub.f32 %v6721, %v6851
      %v6884 = vsub.f32 %v6722, %v6852
      %v6885 = vsub.f32 %v6723, %v6853
      %v6886 = vsub.f32 %v6724, %v6854
      %v6887 = vsub.f32 %v6725, %v6855
      %v6888 = vsub.f32 %v6726, %v6856
      %v6889 = vsub.f32 %v6727, %v6857
      %v6890 = vsub.f32 %v6728, %v6858
      %v6891 = vsub.f32 %v6729, %v6859
      %v6892 = vsub.f32 %v6730, %v6860
      %v6893 = vsub.f32 %v6731, %v6861
      %v6894 = vsub.f32 %v6732, %v6862
      %v6895 = vsub.f32 %v6733, %v6863
      %v6896 = vsub.f32 %v6734, %v6864
      %v6897 = vsub.f32 %v6735, %v6865
      %v6898 = vsub.f32 %v6736, %v6866
      %v6899 = vsub.f32 %v6737, %v6867
      %v6900 = vsub.f32 %v6738, %v6868
      %v6901 = vsub.f32 %v6739, %v6869
      %v6902 = vsub.f32 %v6740, %v6870
      %v6903 = vmul.f32 %v6871, %v6871
      %v6904 = vmul.f32 %v6872, %v6872
      %v6905 = vmul.f32 %v6873, %v6873
      %v6906 = vmul.f32 %v6874, %v6874
      %v6907 = vmul.f32 %v6875, %v6875
      %v6908 = vmul.f32 %v6876, %v6876
      %v6909 = vmul.f32 %v6877, %v6877
      %v6910 = vmul.f32 %v6878, %v6878
      %v6911 = vmul.f32 %v6879, %v6879
      %v6912 = vmul.f32 %v6880, %v6880
      %v6913 = vmul.f32 %v6881, %v6881
      %v6914 = vmul.f32 %v6882, %v6882
      %v6915 = vmul.f32 %v6883, %v6883
      %v6916 = vmul.f32 %v6884, %v6884
      %v6917 = vmul.f32 %v6885, %v6885
      %v6918 = vmul.f32 %v6886, %v6886
      %v6919 = vmul.f32 %v6887, %v6887
      %v6920 = vmul.f32 %v6888, %v6888
      %v6921 = vmul.f32 %v6889, %v6889
      %v6922 = vmul.f32 %v6890, %v6890
      %v6923 = vmul.f32 %v6891, %v6891
      %v6924 = vmul.f32 %v6892, %v6892
      %v6925 = vmul.f32 %v6893, %v6893
      %v6926 = vmul.f32 %v6894, %v6894
      %v6927 = vmul.f32 %v6895, %v6895
      %v6928 = vmul.f32 %v6896, %v6896
      %v6929 = vmul.f32 %v6897, %v6897
      %v6930 = vmul.f32 %v6898, %v6898
      %v6931 = vmul.f32 %v6899, %v6899
      %v6932 = vmul.f32 %v6900, %v6900
      %v6933 = vmul.f32 %v6901, %v6901
      %v6934 = vmul.f32 %v6902, %v6902
      %v6935 = vsel %vm699, %v6903, 0.0
      %6936 = vadd.xlane.f32.xlu0 %v6935
      %v6937 = vpop.xlane.xlu0 %6936
      %v6938 = vsel %vm699, %v6904, 0.0
      %6939 = vadd.xlane.f32.xlu0 %v6938
      %v6940 = vpop.xlane.xlu0 %6939
      %v6941 = vsel %vm699, %v6905, 0.0
      %6942 = vadd.xlane.f32.xlu0 %v6941
      %v6943 = vpop.xlane.xlu0 %6942
      %v6944 = vsel %vm699, %v6906, 0.0
      %6945 = vadd.xlane.f32.xlu0 %v6944
      %v6946 = vpop.xlane.xlu0 %6945
      %v6947 = vsel %vm699, %v6907, 0.0
      %6948 = vadd.xlane.f32.xlu0 %v6947
      %v6949 = vpop.xlane.xlu0 %6948
      %v6950 = vsel %vm699, %v6908, 0.0
      %6951 = vadd.xlane.f32.xlu0 %v6950
      %v6952 = vpop.xlane.xlu0 %6951
      %v6953 = vsel %vm699, %v6909, 0.0
      %6954 = vadd.xlane.f32.xlu0 %v6953
      %v6955 = vpop.xlane.xlu0 %6954
      %v6956 = vsel %vm699, %v6910, 0.0
      %6957 = vadd.xlane.f32.xlu0 %v6956
      %v6958 = vpop.xlane.xlu0 %6957
      %v6959 = vsel %vm699, %v6911, 0.0
      %6960 = vadd.xlane.f32.xlu0 %v6959
      %v6961 = vpop.xlane.xlu0 %6960
      %v6962 = vsel %vm699, %v6912, 0.0
      %6963 = vadd.xlane.f32.xlu0 %v6962
      %v6964 = vpop.xlane.xlu0 %6963
      %v6965 = vsel %vm699, %v6913, 0.0
      %6966 = vadd.xlane.f32.xlu0 %v6965
      %v6967 = vpop.xlane.xlu0 %6966
      %v6968 = vsel %vm699, %v6914, 0.0
      %6969 = vadd.xlane.f32.xlu0 %v6968
      %v6970 = vpop.xlane.xlu0 %6969
      %v6971 = vsel %vm699, %v6915, 0.0
      %6972 = vadd.xlane.f32.xlu0 %v6971
      %v6973 = vpop.xlane.xlu0 %6972
      %v6974 = vsel %vm699, %v6916, 0.0
      %6975 = vadd.xlane.f32.xlu0 %v6974
      %v6976 = vpop.xlane.xlu0 %6975
      %v6977 = vsel %vm699, %v6917, 0.0
      %6978 = vadd.xlane.f32.xlu0 %v6977
      %v6979 = vpop.xlane.xlu0 %6978
      %v6980 = vsel %vm699, %v6918, 0.0
      %6981 = vadd.xlane.f32.xlu0 %v6980
      %v6982 = vpop.xlane.xlu0 %6981
      %v6983 = vsel %vm699, %v6919, 0.0
      %6984 = vadd.xlane.f32.xlu0 %v6983
      %v6985 = vpop.xlane.xlu0 %6984
      %v6986 = vsel %vm699, %v6920, 0.0
      %6987 = vadd.xlane.f32.xlu0 %v6986
      %v6988 = vpop.xlane.xlu0 %6987
      %v6989 = vsel %vm699, %v6921, 0.0
      %6990 = vadd.xlane.f32.xlu0 %v6989
      %v6991 = vpop.xlane.xlu0 %6990
      %v6992 = vsel %vm699, %v6922, 0.0
      %6993 = vadd.xlane.f32.xlu0 %v6992
      %v6994 = vpop.xlane.xlu0 %6993
      %v6995 = vsel %vm699, %v6923, 0.0
      %6996 = vadd.xlane.f32.xlu0 %v6995
      %v6997 = vpop.xlane.xlu0 %6996
      %v6998 = vsel %vm699, %v6924, 0.0
      %6999 = vadd.xlane.f32.xlu0 %v6998
      %v7000 = vpop.xlane.xlu0 %6999
      %v7001 = vsel %vm699, %v6925, 0.0
      %7002 = vadd.xlane.f32.xlu0 %v7001
      %v7003 = vpop.xlane.xlu0 %7002
      %v7004 = vsel %vm699, %v6926, 0.0
      %7005 = vadd.xlane.f32.xlu0 %v7004
      %v7006 = vpop.xlane.xlu0 %7005
      %v7007 = vsel %vm699, %v6927, 0.0
      %7008 = vadd.xlane.f32.xlu0 %v7007
      %v7009 = vpop.xlane.xlu0 %7008
      %v7010 = vsel %vm699, %v6928, 0.0
      %7011 = vadd.xlane.f32.xlu0 %v7010
      %v7012 = vpop.xlane.xlu0 %7011
      %v7013 = vsel %vm699, %v6929, 0.0
      %7014 = vadd.xlane.f32.xlu0 %v7013
      %v7015 = vpop.xlane.xlu0 %7014
      %v7016 = vsel %vm699, %v6930, 0.0
      %7017 = vadd.xlane.f32.xlu0 %v7016
      %v7018 = vpop.xlane.xlu0 %7017
      %v7019 = vsel %vm699, %v6931, 0.0
      %7020 = vadd.xlane.f32.xlu0 %v7019
      %v7021 = vpop.xlane.xlu0 %7020
      %v7022 = vsel %vm699, %v6932, 0.0
      %7023 = vadd.xlane.f32.xlu0 %v7022
      %v7024 = vpop.xlane.xlu0 %7023
      %v7025 = vsel %vm699, %v6933, 0.0
      %7026 = vadd.xlane.f32.xlu0 %v7025
      %v7027 = vpop.xlane.xlu0 %7026
      %v7028 = vsel %vm699, %v6934, 0.0
      %7029 = vadd.xlane.f32.xlu0 %v7028
      %v7030 = vpop.xlane.xlu0 %7029
      %v7031 = vmul.f32 %v6937, %v802
      %v7032 = vmul.f32 %v6940, %v802
      %v7033 = vmul.f32 %v6943, %v802
      %v7034 = vmul.f32 %v6946, %v802
      %v7035 = vmul.f32 %v6949, %v802
      %v7036 = vmul.f32 %v6952, %v802
      %v7037 = vmul.f32 %v6955, %v802
      %v7038 = vmul.f32 %v6958, %v802
      %v7039 = vmul.f32 %v6961, %v802
      %v7040 = vmul.f32 %v6964, %v802
      %v7041 = vmul.f32 %v6967, %v802
      %v7042 = vmul.f32 %v6970, %v802
      %v7043 = vmul.f32 %v6973, %v802
      %v7044 = vmul.f32 %v6976, %v802
      %v7045 = vmul.f32 %v6979, %v802
      %v7046 = vmul.f32 %v6982, %v802
      %v7047 = vmul.f32 %v6985, %v802
      %v7048 = vmul.f32 %v6988, %v802
      %v7049 = vmul.f32 %v6991, %v802
      %v7050 = vmul.f32 %v6994, %v802
      %v7051 = vmul.f32 %v6997, %v802
      %v7052 = vmul.f32 %v7000, %v802
      %v7053 = vmul.f32 %v7003, %v802
      %v7054 = vmul.f32 %v7006, %v802
      %v7055 = vmul.f32 %v7009, %v802
      %v7056 = vmul.f32 %v7012, %v802
      %v7057 = vmul.f32 %v7015, %v802
      %v7058 = vmul.f32 %v7018, %v802
      %v7059 = vmul.f32 %v7021, %v802
      %v7060 = vmul.f32 %v7024, %v802
      %v7061 = vmul.f32 %v7027, %v802
      %v7062 = vmul.f32 %v7030, %v802
      %v7063 = vadd.f32 %v7031, 1e-05
      %v7064 = vadd.f32 %v7032, 1e-05
      %v7065 = vadd.f32 %v7033, 1e-05
      %v7066 = vadd.f32 %v7034, 1e-05
      %v7067 = vadd.f32 %v7035, 1e-05
      %v7068 = vadd.f32 %v7036, 1e-05
      %v7069 = vadd.f32 %v7037, 1e-05
      %v7070 = vadd.f32 %v7038, 1e-05
      %v7071 = vadd.f32 %v7039, 1e-05
      %v7072 = vadd.f32 %v7040, 1e-05
      %v7073 = vadd.f32 %v7041, 1e-05
      %v7074 = vadd.f32 %v7042, 1e-05
      %v7075 = vadd.f32 %v7043, 1e-05
      %v7076 = vadd.f32 %v7044, 1e-05
      %v7077 = vadd.f32 %v7045, 1e-05
      %v7078 = vadd.f32 %v7046, 1e-05
      %v7079 = vadd.f32 %v7047, 1e-05
      %v7080 = vadd.f32 %v7048, 1e-05
      %v7081 = vadd.f32 %v7049, 1e-05
      %v7082 = vadd.f32 %v7050, 1e-05
      %v7083 = vadd.f32 %v7051, 1e-05
      %v7084 = vadd.f32 %v7052, 1e-05
      %v7085 = vadd.f32 %v7053, 1e-05
      %v7086 = vadd.f32 %v7054, 1e-05
      %v7087 = vadd.f32 %v7055, 1e-05
      %v7088 = vadd.f32 %v7056, 1e-05
      %v7089 = vadd.f32 %v7057, 1e-05
      %v7090 = vadd.f32 %v7058, 1e-05
      %v7091 = vadd.f32 %v7059, 1e-05
      %v7092 = vadd.f32 %v7060, 1e-05
      %v7093 = vadd.f32 %v7061, 1e-05
      %v7094 = vadd.f32 %v7062, 1e-05
      %v7095 = vrsqrt.pop %v7063
      %v7096 = vmul.f32 %v7095, %v7063
      %v7097 = vmul.f32 %v7096, %v7095
      %v7098 = vmul.f32 0.5, %v7097
      %v7099 = vsub.f32 1.5, %v7098
      %v7100 = vmul.f32 %v7095, %v7099
      %vm7101 = vweird.f32 %v7063
      %vm7102 = vweird.f32 %v7095
      %vm7103 = vmor %vm7101, %vm7102
      %v7104 = vsel %vm7103, %v7095, %v7100
      %v7105 = vrsqrt.pop %v7064
      %v7106 = vmul.f32 %v7105, %v7064
      %v7107 = vmul.f32 %v7106, %v7105
      %v7108 = vmul.f32 0.5, %v7107
      %v7109 = vsub.f32 1.5, %v7108
      %v7110 = vmul.f32 %v7105, %v7109
      %vm7111 = vweird.f32 %v7064
      %vm7112 = vweird.f32 %v7105
      %vm7113 = vmor %vm7111, %vm7112
      %v7114 = vsel %vm7113, %v7105, %v7110
      %v7115 = vrsqrt.pop %v7065
      %v7116 = vmul.f32 %v7115, %v7065
      %v7117 = vmul.f32 %v7116, %v7115
      %v7118 = vmul.f32 0.5, %v7117
      %v7119 = vsub.f32 1.5, %v7118
      %v7120 = vmul.f32 %v7115, %v7119
      %vm7121 = vweird.f32 %v7065
      %vm7122 = vweird.f32 %v7115
      %vm7123 = vmor %vm7121, %vm7122
      %v7124 = vsel %vm7123, %v7115, %v7120
      %v7125 = vrsqrt.pop %v7066
      %v7126 = vmul.f32 %v7125, %v7066
      %v7127 = vmul.f32 %v7126, %v7125
      %v7128 = vmul.f32 0.5, %v7127
      %v7129 = vsub.f32 1.5, %v7128
      %v7130 = vmul.f32 %v7125, %v7129
      %vm7131 = vweird.f32 %v7066
      %vm7132 = vweird.f32 %v7125
      %vm7133 = vmor %vm7131, %vm7132
      %v7134 = vsel %vm7133, %v7125, %v7130
      %v7135 = vrsqrt.pop %v7067
      %v7136 = vmul.f32 %v7135, %v7067
      %v7137 = vmul.f32 %v7136, %v7135
      %v7138 = vmul.f32 0.5, %v7137
      %v7139 = vsub.f32 1.5, %v7138
      %v7140 = vmul.f32 %v7135, %v7139
      %vm7141 = vweird.f32 %v7067
      %vm7142 = vweird.f32 %v7135
      %vm7143 = vmor %vm7141, %vm7142
      %v7144 = vsel %vm7143, %v7135, %v7140
      %v7145 = vrsqrt.pop %v7068
      %v7146 = vmul.f32 %v7145, %v7068
      %v7147 = vmul.f32 %v7146, %v7145
      %v7148 = vmul.f32 0.5, %v7147
      %v7149 = vsub.f32 1.5, %v7148
      %v7150 = vmul.f32 %v7145, %v7149
      %vm7151 = vweird.f32 %v7068
      %vm7152 = vweird.f32 %v7145
      %vm7153 = vmor %vm7151, %vm7152
      %v7154 = vsel %vm7153, %v7145, %v7150
      %v7155 = vrsqrt.pop %v7069
      %v7156 = vmul.f32 %v7155, %v7069
      %v7157 = vmul.f32 %v7156, %v7155
      %v7158 = vmul.f32 0.5, %v7157
      %v7159 = vsub.f32 1.5, %v7158
      %v7160 = vmul.f32 %v7155, %v7159
      %vm7161 = vweird.f32 %v7069
      %vm7162 = vweird.f32 %v7155
      %vm7163 = vmor %vm7161, %vm7162
      %v7164 = vsel %vm7163, %v7155, %v7160
      %v7165 = vrsqrt.pop %v7070
      %v7166 = vmul.f32 %v7165, %v7070
      %v7167 = vmul.f32 %v7166, %v7165
      %v7168 = vmul.f32 0.5, %v7167
      %v7169 = vsub.f32 1.5, %v7168
      %v7170 = vmul.f32 %v7165, %v7169
      %vm7171 = vweird.f32 %v7070
      %vm7172 = vweird.f32 %v7165
      %vm7173 = vmor %vm7171, %vm7172
      %v7174 = vsel %vm7173, %v7165, %v7170
      %v7175 = vrsqrt.pop %v7071
      %v7176 = vmul.f32 %v7175, %v7071
      %v7177 = vmul.f32 %v7176, %v7175
      %v7178 = vmul.f32 0.5, %v7177
      %v7179 = vsub.f32 1.5, %v7178
      %v7180 = vmul.f32 %v7175, %v7179
      %vm7181 = vweird.f32 %v7071
      %vm7182 = vweird.f32 %v7175
      %vm7183 = vmor %vm7181, %vm7182
      %v7184 = vsel %vm7183, %v7175, %v7180
      %v7185 = vrsqrt.pop %v7072
      %v7186 = vmul.f32 %v7185, %v7072
      %v7187 = vmul.f32 %v7186, %v7185
      %v7188 = vmul.f32 0.5, %v7187
      %v7189 = vsub.f32 1.5, %v7188
      %v7190 = vmul.f32 %v7185, %v7189
      %vm7191 = vweird.f32 %v7072
      %vm7192 = vweird.f32 %v7185
      %vm7193 = vmor %vm7191, %vm7192
      %v7194 = vsel %vm7193, %v7185, %v7190
      %v7195 = vrsqrt.pop %v7073
      %v7196 = vmul.f32 %v7195, %v7073
      %v7197 = vmul.f32 %v7196, %v7195
      %v7198 = vmul.f32 0.5, %v7197
      %v7199 = vsub.f32 1.5, %v7198
      %v7200 = vmul.f32 %v7195, %v7199
      %vm7201 = vweird.f32 %v7073
      %vm7202 = vweird.f32 %v7195
      %vm7203 = vmor %vm7201, %vm7202
      %v7204 = vsel %vm7203, %v7195, %v7200
      %v7205 = vrsqrt.pop %v7074
      %v7206 = vmul.f32 %v7205, %v7074
      %v7207 = vmul.f32 %v7206, %v7205
      %v7208 = vmul.f32 0.5, %v7207
      %v7209 = vsub.f32 1.5, %v7208
      %v7210 = vmul.f32 %v7205, %v7209
      %vm7211 = vweird.f32 %v7074
      %vm7212 = vweird.f32 %v7205
      %vm7213 = vmor %vm7211, %vm7212
      %v7214 = vsel %vm7213, %v7205, %v7210
      %v7215 = vrsqrt.pop %v7075
      %v7216 = vmul.f32 %v7215, %v7075
      %v7217 = vmul.f32 %v7216, %v7215
      %v7218 = vmul.f32 0.5, %v7217
      %v7219 = vsub.f32 1.5, %v7218
      %v7220 = vmul.f32 %v7215, %v7219
      %vm7221 = vweird.f32 %v7075
      %vm7222 = vweird.f32 %v7215
      %vm7223 = vmor %vm7221, %vm7222
      %v7224 = vsel %vm7223, %v7215, %v7220
      %v7225 = vrsqrt.pop %v7076
      %v7226 = vmul.f32 %v7225, %v7076
      %v7227 = vmul.f32 %v7226, %v7225
      %v7228 = vmul.f32 0.5, %v7227
      %v7229 = vsub.f32 1.5, %v7228
      %v7230 = vmul.f32 %v7225, %v7229
      %vm7231 = vweird.f32 %v7076
      %vm7232 = vweird.f32 %v7225
      %vm7233 = vmor %vm7231, %vm7232
      %v7234 = vsel %vm7233, %v7225, %v7230
      %v7235 = vrsqrt.pop %v7077
      %v7236 = vmul.f32 %v7235, %v7077
      %v7237 = vmul.f32 %v7236, %v7235
      %v7238 = vmul.f32 0.5, %v7237
      %v7239 = vsub.f32 1.5, %v7238
      %v7240 = vmul.f32 %v7235, %v7239
      %vm7241 = vweird.f32 %v7077
      %vm7242 = vweird.f32 %v7235
      %vm7243 = vmor %vm7241, %vm7242
      %v7244 = vsel %vm7243, %v7235, %v7240
      %v7245 = vrsqrt.pop %v7078
      %v7246 = vmul.f32 %v7245, %v7078
      %v7247 = vmul.f32 %v7246, %v7245
      %v7248 = vmul.f32 0.5, %v7247
      %v7249 = vsub.f32 1.5, %v7248
      %v7250 = vmul.f32 %v7245, %v7249
      %vm7251 = vweird.f32 %v7078
      %vm7252 = vweird.f32 %v7245
      %vm7253 = vmor %vm7251, %vm7252
      %v7254 = vsel %vm7253, %v7245, %v7250
      %v7255 = vrsqrt.pop %v7079
      %v7256 = vmul.f32 %v7255, %v7079
      %v7257 = vmul.f32 %v7256, %v7255
      %v7258 = vmul.f32 0.5, %v7257
      %v7259 = vsub.f32 1.5, %v7258
      %v7260 = vmul.f32 %v7255, %v7259
      %vm7261 = vweird.f32 %v7079
      %vm7262 = vweird.f32 %v7255
      %vm7263 = vmor %vm7261, %vm7262
      %v7264 = vsel %vm7263, %v7255, %v7260
      %v7265 = vrsqrt.pop %v7080
      %v7266 = vmul.f32 %v7265, %v7080
      %v7267 = vmul.f32 %v7266, %v7265
      %v7268 = vmul.f32 0.5, %v7267
      %v7269 = vsub.f32 1.5, %v7268
      %v7270 = vmul.f32 %v7265, %v7269
      %vm7271 = vweird.f32 %v7080
      %vm7272 = vweird.f32 %v7265
      %vm7273 = vmor %vm7271, %vm7272
      %v7274 = vsel %vm7273, %v7265, %v7270
      %v7275 = vrsqrt.pop %v7081
      %v7276 = vmul.f32 %v7275, %v7081
      %v7277 = vmul.f32 %v7276, %v7275
      %v7278 = vmul.f32 0.5, %v7277
      %v7279 = vsub.f32 1.5, %v7278
      %v7280 = vmul.f32 %v7275, %v7279
      %vm7281 = vweird.f32 %v7081
      %vm7282 = vweird.f32 %v7275
      %vm7283 = vmor %vm7281, %vm7282
      %v7284 = vsel %vm7283, %v7275, %v7280
      %v7285 = vrsqrt.pop %v7082
      %v7286 = vmul.f32 %v7285, %v7082
      %v7287 = vmul.f32 %v7286, %v7285
      %v7288 = vmul.f32 0.5, %v7287
      %v7289 = vsub.f32 1.5, %v7288
      %v7290 = vmul.f32 %v7285, %v7289
      %vm7291 = vweird.f32 %v7082
      %vm7292 = vweird.f32 %v7285
      %vm7293 = vmor %vm7291, %vm7292
      %v7294 = vsel %vm7293, %v7285, %v7290
      %v7295 = vrsqrt.pop %v7083
      %v7296 = vmul.f32 %v7295, %v7083
      %v7297 = vmul.f32 %v7296, %v7295
      %v7298 = vmul.f32 0.5, %v7297
      %v7299 = vsub.f32 1.5, %v7298
      %v7300 = vmul.f32 %v7295, %v7299
      %vm7301 = vweird.f32 %v7083
      %vm7302 = vweird.f32 %v7295
      %vm7303 = vmor %vm7301, %vm7302
      %v7304 = vsel %vm7303, %v7295, %v7300
      %v7305 = vrsqrt.pop %v7084
      %v7306 = vmul.f32 %v7305, %v7084
      %v7307 = vmul.f32 %v7306, %v7305
      %v7308 = vmul.f32 0.5, %v7307
      %v7309 = vsub.f32 1.5, %v7308
      %v7310 = vmul.f32 %v7305, %v7309
      %vm7311 = vweird.f32 %v7084
      %vm7312 = vweird.f32 %v7305
      %vm7313 = vmor %vm7311, %vm7312
      %v7314 = vsel %vm7313, %v7305, %v7310
      %v7315 = vrsqrt.pop %v7085
      %v7316 = vmul.f32 %v7315, %v7085
      %v7317 = vmul.f32 %v7316, %v7315
      %v7318 = vmul.f32 0.5, %v7317
      %v7319 = vsub.f32 1.5, %v7318
      %v7320 = vmul.f32 %v7315, %v7319
      %vm7321 = vweird.f32 %v7085
      %vm7322 = vweird.f32 %v7315
      %vm7323 = vmor %vm7321, %vm7322
      %v7324 = vsel %vm7323, %v7315, %v7320
      %v7325 = vrsqrt.pop %v7086
      %v7326 = vmul.f32 %v7325, %v7086
      %v7327 = vmul.f32 %v7326, %v7325
      %v7328 = vmul.f32 0.5, %v7327
      %v7329 = vsub.f32 1.5, %v7328
      %v7330 = vmul.f32 %v7325, %v7329
      %vm7331 = vweird.f32 %v7086
      %vm7332 = vweird.f32 %v7325
      %vm7333 = vmor %vm7331, %vm7332
      %v7334 = vsel %vm7333, %v7325, %v7330
      %v7335 = vrsqrt.pop %v7087
      %v7336 = vmul.f32 %v7335, %v7087
      %v7337 = vmul.f32 %v7336, %v7335
      %v7338 = vmul.f32 0.5, %v7337
      %v7339 = vsub.f32 1.5, %v7338
      %v7340 = vmul.f32 %v7335, %v7339
      %vm7341 = vweird.f32 %v7087
      %vm7342 = vweird.f32 %v7335
      %vm7343 = vmor %vm7341, %vm7342
      %v7344 = vsel %vm7343, %v7335, %v7340
      %v7345 = vrsqrt.pop %v7088
      %v7346 = vmul.f32 %v7345, %v7088
      %v7347 = vmul.f32 %v7346, %v7345
      %v7348 = vmul.f32 0.5, %v7347
      %v7349 = vsub.f32 1.5, %v7348
      %v7350 = vmul.f32 %v7345, %v7349
      %vm7351 = vweird.f32 %v7088
      %vm7352 = vweird.f32 %v7345
      %vm7353 = vmor %vm7351, %vm7352
      %v7354 = vsel %vm7353, %v7345, %v7350
      %v7355 = vrsqrt.pop %v7089
      %v7356 = vmul.f32 %v7355, %v7089
      %v7357 = vmul.f32 %v7356, %v7355
      %v7358 = vmul.f32 0.5, %v7357
      %v7359 = vsub.f32 1.5, %v7358
      %v7360 = vmul.f32 %v7355, %v7359
      %vm7361 = vweird.f32 %v7089
      %vm7362 = vweird.f32 %v7355
      %vm7363 = vmor %vm7361, %vm7362
      %v7364 = vsel %vm7363, %v7355, %v7360
      %v7365 = vrsqrt.pop %v7090
      %v7366 = vmul.f32 %v7365, %v7090
      %v7367 = vmul.f32 %v7366, %v7365
      %v7368 = vmul.f32 0.5, %v7367
      %v7369 = vsub.f32 1.5, %v7368
      %v7370 = vmul.f32 %v7365, %v7369
      %vm7371 = vweird.f32 %v7090
      %vm7372 = vweird.f32 %v7365
      %vm7373 = vmor %vm7371, %vm7372
      %v7374 = vsel %vm7373, %v7365, %v7370
      %v7375 = vrsqrt.pop %v7091
      %v7376 = vmul.f32 %v7375, %v7091
      %v7377 = vmul.f32 %v7376, %v7375
      %v7378 = vmul.f32 0.5, %v7377
      %v7379 = vsub.f32 1.5, %v7378
      %v7380 = vmul.f32 %v7375, %v7379
      %vm7381 = vweird.f32 %v7091
      %vm7382 = vweird.f32 %v7375
      %vm7383 = vmor %vm7381, %vm7382
      %v7384 = vsel %vm7383, %v7375, %v7380
      %v7385 = vrsqrt.pop %v7092
      %v7386 = vmul.f32 %v7385, %v7092
      %v7387 = vmul.f32 %v7386, %v7385
      %v7388 = vmul.f32 0.5, %v7387
      %v7389 = vsub.f32 1.5, %v7388
      %v7390 = vmul.f32 %v7385, %v7389
      %vm7391 = vweird.f32 %v7092
      %vm7392 = vweird.f32 %v7385
      %vm7393 = vmor %vm7391, %vm7392
      %v7394 = vsel %vm7393, %v7385, %v7390
      %v7395 = vrsqrt.pop %v7093
      %v7396 = vmul.f32 %v7395, %v7093
      %v7397 = vmul.f32 %v7396, %v7395
      %v7398 = vmul.f32 0.5, %v7397
      %v7399 = vsub.f32 1.5, %v7398
      %v7400 = vmul.f32 %v7395, %v7399
      %vm7401 = vweird.f32 %v7093
      %vm7402 = vweird.f32 %v7395
      %vm7403 = vmor %vm7401, %vm7402
      %v7404 = vsel %vm7403, %v7395, %v7400
      %v7405 = vrsqrt.pop %v7094
      %v7406 = vmul.f32 %v7405, %v7094
      %v7407 = vmul.f32 %v7406, %v7405
      %v7408 = vmul.f32 0.5, %v7407
      %v7409 = vsub.f32 1.5, %v7408
      %v7410 = vmul.f32 %v7405, %v7409
      %vm7411 = vweird.f32 %v7094
      %vm7412 = vweird.f32 %v7405
      %vm7413 = vmor %vm7411, %vm7412
      %v7414 = vsel %vm7413, %v7405, %v7410
      %v7415 = vmul.f32 %v6871, %v7104
      %v7416 = vmul.f32 %v6872, %v7114
      %v7417 = vmul.f32 %v6873, %v7124
      %v7418 = vmul.f32 %v6874, %v7134
      %v7419 = vmul.f32 %v6875, %v7144
      %v7420 = vmul.f32 %v6876, %v7154
      %v7421 = vmul.f32 %v6877, %v7164
      %v7422 = vmul.f32 %v6878, %v7174
      %v7423 = vmul.f32 %v6879, %v7184
      %v7424 = vmul.f32 %v6880, %v7194
      %v7425 = vmul.f32 %v6881, %v7204
      %v7426 = vmul.f32 %v6882, %v7214
      %v7427 = vmul.f32 %v6883, %v7224
      %v7428 = vmul.f32 %v6884, %v7234
      %v7429 = vmul.f32 %v6885, %v7244
      %v7430 = vmul.f32 %v6886, %v7254
      %v7431 = vmul.f32 %v6887, %v7264
      %v7432 = vmul.f32 %v6888, %v7274
      %v7433 = vmul.f32 %v6889, %v7284
      %v7434 = vmul.f32 %v6890, %v7294
      %v7435 = vmul.f32 %v6891, %v7304
      %v7436 = vmul.f32 %v6892, %v7314
      %v7437 = vmul.f32 %v6893, %v7324
      %v7438 = vmul.f32 %v6894, %v7334
      %v7439 = vmul.f32 %v6895, %v7344
      %v7440 = vmul.f32 %v6896, %v7354
      %v7441 = vmul.f32 %v6897, %v7364
      %v7442 = vmul.f32 %v6898, %v7374
      %v7443 = vmul.f32 %v6899, %v7384
      %v7444 = vmul.f32 %v6900, %v7394
      %v7445 = vmul.f32 %v6901, %v7404
      %v7446 = vmul.f32 %v6902, %v7414
      %v7448 = vperm.slane %v6741, 0
      %v7450 = vmul.f32 %v7415, %v7448
      %v7451 = vmul.f32 %v7416, %v7448
      %v7452 = vmul.f32 %v7417, %v7448
      %v7453 = vmul.f32 %v7418, %v7448
      %v7454 = vmul.f32 %v7419, %v7448
      %v7455 = vmul.f32 %v7420, %v7448
      %v7456 = vmul.f32 %v7421, %v7448
      %v7457 = vmul.f32 %v7422, %v7448
      %v7458 = vmul.f32 %v7423, %v7448
      %v7459 = vmul.f32 %v7424, %v7448
      %v7460 = vmul.f32 %v7425, %v7448
      %v7461 = vmul.f32 %v7426, %v7448
      %v7462 = vmul.f32 %v7427, %v7448
      %v7463 = vmul.f32 %v7428, %v7448
      %v7464 = vmul.f32 %v7429, %v7448
      %v7465 = vmul.f32 %v7430, %v7448
      %v7466 = vmul.f32 %v7431, %v7448
      %v7467 = vmul.f32 %v7432, %v7448
      %v7468 = vmul.f32 %v7433, %v7448
      %v7469 = vmul.f32 %v7434, %v7448
      %v7470 = vmul.f32 %v7435, %v7448
      %v7471 = vmul.f32 %v7436, %v7448
      %v7472 = vmul.f32 %v7437, %v7448
      %v7473 = vmul.f32 %v7438, %v7448
      %v7474 = vmul.f32 %v7439, %v7448
      %v7475 = vmul.f32 %v7440, %v7448
      %v7476 = vmul.f32 %v7441, %v7448
      %v7477 = vmul.f32 %v7442, %v7448
      %v7478 = vmul.f32 %v7443, %v7448
      %v7479 = vmul.f32 %v7444, %v7448
      %v7480 = vmul.f32 %v7445, %v7448
      %v7481 = vmul.f32 %v7446, %v7448
      %v7483 = vperm.slane %v6742, 0
      %v7485 = vadd.f32 %v7450, %v7483
      %v7486 = vadd.f32 %v7451, %v7483
      %v7487 = vadd.f32 %v7452, %v7483
      %v7488 = vadd.f32 %v7453, %v7483
      %v7489 = vadd.f32 %v7454, %v7483
      %v7490 = vadd.f32 %v7455, %v7483
      %v7491 = vadd.f32 %v7456, %v7483
      %v7492 = vadd.f32 %v7457, %v7483
      %v7493 = vadd.f32 %v7458, %v7483
      %v7494 = vadd.f32 %v7459, %v7483
      %v7495 = vadd.f32 %v7460, %v7483
      %v7496 = vadd.f32 %v7461, %v7483
      %v7497 = vadd.f32 %v7462, %v7483
      %v7498 = vadd.f32 %v7463, %v7483
      %v7499 = vadd.f32 %v7464, %v7483
      %v7500 = vadd.f32 %v7465, %v7483
      %v7501 = vadd.f32 %v7466, %v7483
      %v7502 = vadd.f32 %v7467, %v7483
      %v7503 = vadd.f32 %v7468, %v7483
      %v7504 = vadd.f32 %v7469, %v7483
      %v7505 = vadd.f32 %v7470, %v7483
      %v7506 = vadd.f32 %v7471, %v7483
      %v7507 = vadd.f32 %v7472, %v7483
      %v7508 = vadd.f32 %v7473, %v7483
      %v7509 = vadd.f32 %v7474, %v7483
      %v7510 = vadd.f32 %v7475, %v7483
      %v7511 = vadd.f32 %v7476, %v7483
      %v7512 = vadd.f32 %v7477, %v7483
      %v7513 = vadd.f32 %v7478, %v7483
      %v7514 = vadd.f32 %v7479, %v7483
      %v7515 = vadd.f32 %v7480, %v7483
      %v7516 = vadd.f32 %v7481, %v7483
      %v7517 = vld [vmem:[%s11] sm:$0x1]
      %v7518 = vld [vmem:[%s12] sm:$0x1]
      %v7519 = vsel %vm699, %v7485, 0.0
      %7520 = vadd.xlane.f32.xlu0 %v7519
      %v7521 = vpop.xlane.xlu0 %7520
      %v7522 = vsel %vm699, %v7486, 0.0
      %7523 = vadd.xlane.f32.xlu0 %v7522
      %v7524 = vpop.xlane.xlu0 %7523
      %v7525 = vsel %vm699, %v7487, 0.0
      %7526 = vadd.xlane.f32.xlu0 %v7525
      %v7527 = vpop.xlane.xlu0 %7526
      %v7528 = vsel %vm699, %v7488, 0.0
      %7529 = vadd.xlane.f32.xlu0 %v7528
      %v7530 = vpop.xlane.xlu0 %7529
      %v7531 = vsel %vm699, %v7489, 0.0
      %7532 = vadd.xlane.f32.xlu0 %v7531
      %v7533 = vpop.xlane.xlu0 %7532
      %v7534 = vsel %vm699, %v7490, 0.0
      %7535 = vadd.xlane.f32.xlu0 %v7534
      %v7536 = vpop.xlane.xlu0 %7535
      %v7537 = vsel %vm699, %v7491, 0.0
      %7538 = vadd.xlane.f32.xlu0 %v7537
      %v7539 = vpop.xlane.xlu0 %7538
      %v7540 = vsel %vm699, %v7492, 0.0
      %7541 = vadd.xlane.f32.xlu0 %v7540
      %v7542 = vpop.xlane.xlu0 %7541
      %v7543 = vsel %vm699, %v7493, 0.0
      %7544 = vadd.xlane.f32.xlu0 %v7543
      %v7545 = vpop.xlane.xlu0 %7544
      %v7546 = vsel %vm699, %v7494, 0.0
      %7547 = vadd.xlane.f32.xlu0 %v7546
      %v7548 = vpop.xlane.xlu0 %7547
      %v7549 = vsel %vm699, %v7495, 0.0
      %7550 = vadd.xlane.f32.xlu0 %v7549
      %v7551 = vpop.xlane.xlu0 %7550
      %v7552 = vsel %vm699, %v7496, 0.0
      %7553 = vadd.xlane.f32.xlu0 %v7552
      %v7554 = vpop.xlane.xlu0 %7553
      %v7555 = vsel %vm699, %v7497, 0.0
      %7556 = vadd.xlane.f32.xlu0 %v7555
      %v7557 = vpop.xlane.xlu0 %7556
      %v7558 = vsel %vm699, %v7498, 0.0
      %7559 = vadd.xlane.f32.xlu0 %v7558
      %v7560 = vpop.xlane.xlu0 %7559
      %v7561 = vsel %vm699, %v7499, 0.0
      %7562 = vadd.xlane.f32.xlu0 %v7561
      %v7563 = vpop.xlane.xlu0 %7562
      %v7564 = vsel %vm699, %v7500, 0.0
      %7565 = vadd.xlane.f32.xlu0 %v7564
      %v7566 = vpop.xlane.xlu0 %7565
      %v7567 = vsel %vm699, %v7501, 0.0
      %7568 = vadd.xlane.f32.xlu0 %v7567
      %v7569 = vpop.xlane.xlu0 %7568
      %v7570 = vsel %vm699, %v7502, 0.0
      %7571 = vadd.xlane.f32.xlu0 %v7570
      %v7572 = vpop.xlane.xlu0 %7571
      %v7573 = vsel %vm699, %v7503, 0.0
      %7574 = vadd.xlane.f32.xlu0 %v7573
      %v7575 = vpop.xlane.xlu0 %7574
      %v7576 = vsel %vm699, %v7504, 0.0
      %7577 = vadd.xlane.f32.xlu0 %v7576
      %v7578 = vpop.xlane.xlu0 %7577
      %v7579 = vsel %vm699, %v7505, 0.0
      %7580 = vadd.xlane.f32.xlu0 %v7579
      %v7581 = vpop.xlane.xlu0 %7580
      %v7582 = vsel %vm699, %v7506, 0.0
      %7583 = vadd.xlane.f32.xlu0 %v7582
      %v7584 = vpop.xlane.xlu0 %7583
      %v7585 = vsel %vm699, %v7507, 0.0
      %7586 = vadd.xlane.f32.xlu0 %v7585
      %v7587 = vpop.xlane.xlu0 %7586
      %v7588 = vsel %vm699, %v7508, 0.0
      %7589 = vadd.xlane.f32.xlu0 %v7588
      %v7590 = vpop.xlane.xlu0 %7589
      %v7591 = vsel %vm699, %v7509, 0.0
      %7592 = vadd.xlane.f32.xlu0 %v7591
      %v7593 = vpop.xlane.xlu0 %7592
      %v7594 = vsel %vm699, %v7510, 0.0
      %7595 = vadd.xlane.f32.xlu0 %v7594
      %v7596 = vpop.xlane.xlu0 %7595
      %v7597 = vsel %vm699, %v7511, 0.0
      %7598 = vadd.xlane.f32.xlu0 %v7597
      %v7599 = vpop.xlane.xlu0 %7598
      %v7600 = vsel %vm699, %v7512, 0.0
      %7601 = vadd.xlane.f32.xlu0 %v7600
      %v7602 = vpop.xlane.xlu0 %7601
      %v7603 = vsel %vm699, %v7513, 0.0
      %7604 = vadd.xlane.f32.xlu0 %v7603
      %v7605 = vpop.xlane.xlu0 %7604
      %v7606 = vsel %vm699, %v7514, 0.0
      %7607 = vadd.xlane.f32.xlu0 %v7606
      %v7608 = vpop.xlane.xlu0 %7607
      %v7609 = vsel %vm699, %v7515, 0.0
      %7610 = vadd.xlane.f32.xlu0 %v7609
      %v7611 = vpop.xlane.xlu0 %7610
      %v7612 = vsel %vm699, %v7516, 0.0
      %7613 = vadd.xlane.f32.xlu0 %v7612
      %v7614 = vpop.xlane.xlu0 %7613
      %v7615 = vmul.f32 %v7521, %v802
      %v7616 = vmul.f32 %v7524, %v802
      %v7617 = vmul.f32 %v7527, %v802
      %v7618 = vmul.f32 %v7530, %v802
      %v7619 = vmul.f32 %v7533, %v802
      %v7620 = vmul.f32 %v7536, %v802
      %v7621 = vmul.f32 %v7539, %v802
      %v7622 = vmul.f32 %v7542, %v802
      %v7623 = vmul.f32 %v7545, %v802
      %v7624 = vmul.f32 %v7548, %v802
      %v7625 = vmul.f32 %v7551, %v802
      %v7626 = vmul.f32 %v7554, %v802
      %v7627 = vmul.f32 %v7557, %v802
      %v7628 = vmul.f32 %v7560, %v802
      %v7629 = vmul.f32 %v7563, %v802
      %v7630 = vmul.f32 %v7566, %v802
      %v7631 = vmul.f32 %v7569, %v802
      %v7632 = vmul.f32 %v7572, %v802
      %v7633 = vmul.f32 %v7575, %v802
      %v7634 = vmul.f32 %v7578, %v802
      %v7635 = vmul.f32 %v7581, %v802
      %v7636 = vmul.f32 %v7584, %v802
      %v7637 = vmul.f32 %v7587, %v802
      %v7638 = vmul.f32 %v7590, %v802
      %v7639 = vmul.f32 %v7593, %v802
      %v7640 = vmul.f32 %v7596, %v802
      %v7641 = vmul.f32 %v7599, %v802
      %v7642 = vmul.f32 %v7602, %v802
      %v7643 = vmul.f32 %v7605, %v802
      %v7644 = vmul.f32 %v7608, %v802
      %v7645 = vmul.f32 %v7611, %v802
      %v7646 = vmul.f32 %v7614, %v802
      %v7647 = vsub.f32 %v7485, %v7615
      %v7648 = vsub.f32 %v7486, %v7616
      %v7649 = vsub.f32 %v7487, %v7617
      %v7650 = vsub.f32 %v7488, %v7618
      %v7651 = vsub.f32 %v7489, %v7619
      %v7652 = vsub.f32 %v7490, %v7620
      %v7653 = vsub.f32 %v7491, %v7621
      %v7654 = vsub.f32 %v7492, %v7622
      %v7655 = vsub.f32 %v7493, %v7623
      %v7656 = vsub.f32 %v7494, %v7624
      %v7657 = vsub.f32 %v7495, %v7625
      %v7658 = vsub.f32 %v7496, %v7626
      %v7659 = vsub.f32 %v7497, %v7627
      %v7660 = vsub.f32 %v7498, %v7628
      %v7661 = vsub.f32 %v7499, %v7629
      %v7662 = vsub.f32 %v7500, %v7630
      %v7663 = vsub.f32 %v7501, %v7631
      %v7664 = vsub.f32 %v7502, %v7632
      %v7665 = vsub.f32 %v7503, %v7633
      %v7666 = vsub.f32 %v7504, %v7634
      %v7667 = vsub.f32 %v7505, %v7635
      %v7668 = vsub.f32 %v7506, %v7636
      %v7669 = vsub.f32 %v7507, %v7637
      %v7670 = vsub.f32 %v7508, %v7638
      %v7671 = vsub.f32 %v7509, %v7639
      %v7672 = vsub.f32 %v7510, %v7640
      %v7673 = vsub.f32 %v7511, %v7641
      %v7674 = vsub.f32 %v7512, %v7642
      %v7675 = vsub.f32 %v7513, %v7643
      %v7676 = vsub.f32 %v7514, %v7644
      %v7677 = vsub.f32 %v7515, %v7645
      %v7678 = vsub.f32 %v7516, %v7646
      %v7679 = vmul.f32 %v7647, %v7647
      %v7680 = vmul.f32 %v7648, %v7648
      %v7681 = vmul.f32 %v7649, %v7649
      %v7682 = vmul.f32 %v7650, %v7650
      %v7683 = vmul.f32 %v7651, %v7651
      %v7684 = vmul.f32 %v7652, %v7652
      %v7685 = vmul.f32 %v7653, %v7653
      %v7686 = vmul.f32 %v7654, %v7654
      %v7687 = vmul.f32 %v7655, %v7655
      %v7688 = vmul.f32 %v7656, %v7656
      %v7689 = vmul.f32 %v7657, %v7657
      %v7690 = vmul.f32 %v7658, %v7658
      %v7691 = vmul.f32 %v7659, %v7659
      %v7692 = vmul.f32 %v7660, %v7660
      %v7693 = vmul.f32 %v7661, %v7661
      %v7694 = vmul.f32 %v7662, %v7662
      %v7695 = vmul.f32 %v7663, %v7663
      %v7696 = vmul.f32 %v7664, %v7664
      %v7697 = vmul.f32 %v7665, %v7665
      %v7698 = vmul.f32 %v7666, %v7666
      %v7699 = vmul.f32 %v7667, %v7667
      %v7700 = vmul.f32 %v7668, %v7668
      %v7701 = vmul.f32 %v7669, %v7669
      %v7702 = vmul.f32 %v7670, %v7670
      %v7703 = vmul.f32 %v7671, %v7671
      %v7704 = vmul.f32 %v7672, %v7672
      %v7705 = vmul.f32 %v7673, %v7673
      %v7706 = vmul.f32 %v7674, %v7674
      %v7707 = vmul.f32 %v7675, %v7675
      %v7708 = vmul.f32 %v7676, %v7676
      %v7709 = vmul.f32 %v7677, %v7677
      %v7710 = vmul.f32 %v7678, %v7678
      %v7711 = vsel %vm699, %v7679, 0.0
      %7712 = vadd.xlane.f32.xlu0 %v7711
      %v7713 = vpop.xlane.xlu0 %7712
      %v7714 = vsel %vm699, %v7680, 0.0
      %7715 = vadd.xlane.f32.xlu0 %v7714
      %v7716 = vpop.xlane.xlu0 %7715
      %v7717 = vsel %vm699, %v7681, 0.0
      %7718 = vadd.xlane.f32.xlu0 %v7717
      %v7719 = vpop.xlane.xlu0 %7718
      %v7720 = vsel %vm699, %v7682, 0.0
      %7721 = vadd.xlane.f32.xlu0 %v7720
      %v7722 = vpop.xlane.xlu0 %7721
      %v7723 = vsel %vm699, %v7683, 0.0
      %7724 = vadd.xlane.f32.xlu0 %v7723
      %v7725 = vpop.xlane.xlu0 %7724
      %v7726 = vsel %vm699, %v7684, 0.0
      %7727 = vadd.xlane.f32.xlu0 %v7726
      %v7728 = vpop.xlane.xlu0 %7727
      %v7729 = vsel %vm699, %v7685, 0.0
      %7730 = vadd.xlane.f32.xlu0 %v7729
      %v7731 = vpop.xlane.xlu0 %7730
      %v7732 = vsel %vm699, %v7686, 0.0
      %7733 = vadd.xlane.f32.xlu0 %v7732
      %v7734 = vpop.xlane.xlu0 %7733
      %v7735 = vsel %vm699, %v7687, 0.0
      %7736 = vadd.xlane.f32.xlu0 %v7735
      %v7737 = vpop.xlane.xlu0 %7736
      %v7738 = vsel %vm699, %v7688, 0.0
      %7739 = vadd.xlane.f32.xlu0 %v7738
      %v7740 = vpop.xlane.xlu0 %7739
      %v7741 = vsel %vm699, %v7689, 0.0
      %7742 = vadd.xlane.f32.xlu0 %v7741
      %v7743 = vpop.xlane.xlu0 %7742
      %v7744 = vsel %vm699, %v7690, 0.0
      %7745 = vadd.xlane.f32.xlu0 %v7744
      %v7746 = vpop.xlane.xlu0 %7745
      %v7747 = vsel %vm699, %v7691, 0.0
      %7748 = vadd.xlane.f32.xlu0 %v7747
      %v7749 = vpop.xlane.xlu0 %7748
      %v7750 = vsel %vm699, %v7692, 0.0
      %7751 = vadd.xlane.f32.xlu0 %v7750
      %v7752 = vpop.xlane.xlu0 %7751
      %v7753 = vsel %vm699, %v7693, 0.0
      %7754 = vadd.xlane.f32.xlu0 %v7753
      %v7755 = vpop.xlane.xlu0 %7754
      %v7756 = vsel %vm699, %v7694, 0.0
      %7757 = vadd.xlane.f32.xlu0 %v7756
      %v7758 = vpop.xlane.xlu0 %7757
      %v7759 = vsel %vm699, %v7695, 0.0
      %7760 = vadd.xlane.f32.xlu0 %v7759
      %v7761 = vpop.xlane.xlu0 %7760
      %v7762 = vsel %vm699, %v7696, 0.0
      %7763 = vadd.xlane.f32.xlu0 %v7762
      %v7764 = vpop.xlane.xlu0 %7763
      %v7765 = vsel %vm699, %v7697, 0.0
      %7766 = vadd.xlane.f32.xlu0 %v7765
      %v7767 = vpop.xlane.xlu0 %7766
      %v7768 = vsel %vm699, %v7698, 0.0
      %7769 = vadd.xlane.f32.xlu0 %v7768
      %v7770 = vpop.xlane.xlu0 %7769
      %v7771 = vsel %vm699, %v7699, 0.0
      %7772 = vadd.xlane.f32.xlu0 %v7771
      %v7773 = vpop.xlane.xlu0 %7772
      %v7774 = vsel %vm699, %v7700, 0.0
      %7775 = vadd.xlane.f32.xlu0 %v7774
      %v7776 = vpop.xlane.xlu0 %7775
      %v7777 = vsel %vm699, %v7701, 0.0
      %7778 = vadd.xlane.f32.xlu0 %v7777
      %v7779 = vpop.xlane.xlu0 %7778
      %v7780 = vsel %vm699, %v7702, 0.0
      %7781 = vadd.xlane.f32.xlu0 %v7780
      %v7782 = vpop.xlane.xlu0 %7781
      %v7783 = vsel %vm699, %v7703, 0.0
      %7784 = vadd.xlane.f32.xlu0 %v7783
      %v7785 = vpop.xlane.xlu0 %7784
      %v7786 = vsel %vm699, %v7704, 0.0
      %7787 = vadd.xlane.f32.xlu0 %v7786
      %v7788 = vpop.xlane.xlu0 %7787
      %v7789 = vsel %vm699, %v7705, 0.0
      %7790 = vadd.xlane.f32.xlu0 %v7789
      %v7791 = vpop.xlane.xlu0 %7790
      %v7792 = vsel %vm699, %v7706, 0.0
      %7793 = vadd.xlane.f32.xlu0 %v7792
      %v7794 = vpop.xlane.xlu0 %7793
      %v7795 = vsel %vm699, %v7707, 0.0
      %7796 = vadd.xlane.f32.xlu0 %v7795
      %v7797 = vpop.xlane.xlu0 %7796
      %v7798 = vsel %vm699, %v7708, 0.0
      %7799 = vadd.xlane.f32.xlu0 %v7798
      %v7800 = vpop.xlane.xlu0 %7799
      %v7801 = vsel %vm699, %v7709, 0.0
      %7802 = vadd.xlane.f32.xlu0 %v7801
      %v7803 = vpop.xlane.xlu0 %7802
      %v7804 = vsel %vm699, %v7710, 0.0
      %7805 = vadd.xlane.f32.xlu0 %v7804
      %v7806 = vpop.xlane.xlu0 %7805
      %v7807 = vmul.f32 %v7713, %v802
      %v7808 = vmul.f32 %v7716, %v802
      %v7809 = vmul.f32 %v7719, %v802
      %v7810 = vmul.f32 %v7722, %v802
      %v7811 = vmul.f32 %v7725, %v802
      %v7812 = vmul.f32 %v7728, %v802
      %v7813 = vmul.f32 %v7731, %v802
      %v7814 = vmul.f32 %v7734, %v802
      %v7815 = vmul.f32 %v7737, %v802
      %v7816 = vmul.f32 %v7740, %v802
      %v7817 = vmul.f32 %v7743, %v802
      %v7818 = vmul.f32 %v7746, %v802
      %v7819 = vmul.f32 %v7749, %v802
      %v7820 = vmul.f32 %v7752, %v802
      %v7821 = vmul.f32 %v7755, %v802
      %v7822 = vmul.f32 %v7758, %v802
      %v7823 = vmul.f32 %v7761, %v802
      %v7824 = vmul.f32 %v7764, %v802
      %v7825 = vmul.f32 %v7767, %v802
      %v7826 = vmul.f32 %v7770, %v802
      %v7827 = vmul.f32 %v7773, %v802
      %v7828 = vmul.f32 %v7776, %v802
      %v7829 = vmul.f32 %v7779, %v802
      %v7830 = vmul.f32 %v7782, %v802
      %v7831 = vmul.f32 %v7785, %v802
      %v7832 = vmul.f32 %v7788, %v802
      %v7833 = vmul.f32 %v7791, %v802
      %v7834 = vmul.f32 %v7794, %v802
      %v7835 = vmul.f32 %v7797, %v802
      %v7836 = vmul.f32 %v7800, %v802
      %v7837 = vmul.f32 %v7803, %v802
      %v7838 = vmul.f32 %v7806, %v802
      %v7839 = vadd.f32 %v7807, 1e-05
      %v7840 = vadd.f32 %v7808, 1e-05
      %v7841 = vadd.f32 %v7809, 1e-05
      %v7842 = vadd.f32 %v7810, 1e-05
      %v7843 = vadd.f32 %v7811, 1e-05
      %v7844 = vadd.f32 %v7812, 1e-05
      %v7845 = vadd.f32 %v7813, 1e-05
      %v7846 = vadd.f32 %v7814, 1e-05
      %v7847 = vadd.f32 %v7815, 1e-05
      %v7848 = vadd.f32 %v7816, 1e-05
      %v7849 = vadd.f32 %v7817, 1e-05
      %v7850 = vadd.f32 %v7818, 1e-05
      %v7851 = vadd.f32 %v7819, 1e-05
      %v7852 = vadd.f32 %v7820, 1e-05
      %v7853 = vadd.f32 %v7821, 1e-05
      %v7854 = vadd.f32 %v7822, 1e-05
      %v7855 = vadd.f32 %v7823, 1e-05
      %v7856 = vadd.f32 %v7824, 1e-05
      %v7857 = vadd.f32 %v7825, 1e-05
      %v7858 = vadd.f32 %v7826, 1e-05
      %v7859 = vadd.f32 %v7827, 1e-05
      %v7860 = vadd.f32 %v7828, 1e-05
      %v7861 = vadd.f32 %v7829, 1e-05
      %v7862 = vadd.f32 %v7830, 1e-05
      %v7863 = vadd.f32 %v7831, 1e-05
      %v7864 = vadd.f32 %v7832, 1e-05
      %v7865 = vadd.f32 %v7833, 1e-05
      %v7866 = vadd.f32 %v7834, 1e-05
      %v7867 = vadd.f32 %v7835, 1e-05
      %v7868 = vadd.f32 %v7836, 1e-05
      %v7869 = vadd.f32 %v7837, 1e-05
      %v7870 = vadd.f32 %v7838, 1e-05
      %v7871 = vrsqrt.pop %v7839
      %v7872 = vmul.f32 %v7871, %v7839
      %v7873 = vmul.f32 %v7872, %v7871
      %v7874 = vmul.f32 0.5, %v7873
      %v7875 = vsub.f32 1.5, %v7874
      %v7876 = vmul.f32 %v7871, %v7875
      %vm7877 = vweird.f32 %v7839
      %vm7878 = vweird.f32 %v7871
      %vm7879 = vmor %vm7877, %vm7878
      %v7880 = vsel %vm7879, %v7871, %v7876
      %v7881 = vrsqrt.pop %v7840
      %v7882 = vmul.f32 %v7881, %v7840
      %v7883 = vmul.f32 %v7882, %v7881
      %v7884 = vmul.f32 0.5, %v7883
      %v7885 = vsub.f32 1.5, %v7884
      %v7886 = vmul.f32 %v7881, %v7885
      %vm7887 = vweird.f32 %v7840
      %vm7888 = vweird.f32 %v7881
      %vm7889 = vmor %vm7887, %vm7888
      %v7890 = vsel %vm7889, %v7881, %v7886
      %v7891 = vrsqrt.pop %v7841
      %v7892 = vmul.f32 %v7891, %v7841
      %v7893 = vmul.f32 %v7892, %v7891
      %v7894 = vmul.f32 0.5, %v7893
      %v7895 = vsub.f32 1.5, %v7894
      %v7896 = vmul.f32 %v7891, %v7895
      %vm7897 = vweird.f32 %v7841
      %vm7898 = vweird.f32 %v7891
      %vm7899 = vmor %vm7897, %vm7898
      %v7900 = vsel %vm7899, %v7891, %v7896
      %v7901 = vrsqrt.pop %v7842
      %v7902 = vmul.f32 %v7901, %v7842
      %v7903 = vmul.f32 %v7902, %v7901
      %v7904 = vmul.f32 0.5, %v7903
      %v7905 = vsub.f32 1.5, %v7904
      %v7906 = vmul.f32 %v7901, %v7905
      %vm7907 = vweird.f32 %v7842
      %vm7908 = vweird.f32 %v7901
      %vm7909 = vmor %vm7907, %vm7908
      %v7910 = vsel %vm7909, %v7901, %v7906
      %v7911 = vrsqrt.pop %v7843
      %v7912 = vmul.f32 %v7911, %v7843
      %v7913 = vmul.f32 %v7912, %v7911
      %v7914 = vmul.f32 0.5, %v7913
      %v7915 = vsub.f32 1.5, %v7914
      %v7916 = vmul.f32 %v7911, %v7915
      %vm7917 = vweird.f32 %v7843
      %vm7918 = vweird.f32 %v7911
      %vm7919 = vmor %vm7917, %vm7918
      %v7920 = vsel %vm7919, %v7911, %v7916
      %v7921 = vrsqrt.pop %v7844
      %v7922 = vmul.f32 %v7921, %v7844
      %v7923 = vmul.f32 %v7922, %v7921
      %v7924 = vmul.f32 0.5, %v7923
      %v7925 = vsub.f32 1.5, %v7924
      %v7926 = vmul.f32 %v7921, %v7925
      %vm7927 = vweird.f32 %v7844
      %vm7928 = vweird.f32 %v7921
      %vm7929 = vmor %vm7927, %vm7928
      %v7930 = vsel %vm7929, %v7921, %v7926
      %v7931 = vrsqrt.pop %v7845
      %v7932 = vmul.f32 %v7931, %v7845
      %v7933 = vmul.f32 %v7932, %v7931
      %v7934 = vmul.f32 0.5, %v7933
      %v7935 = vsub.f32 1.5, %v7934
      %v7936 = vmul.f32 %v7931, %v7935
      %vm7937 = vweird.f32 %v7845
      %vm7938 = vweird.f32 %v7931
      %vm7939 = vmor %vm7937, %vm7938
      %v7940 = vsel %vm7939, %v7931, %v7936
      %v7941 = vrsqrt.pop %v7846
      %v7942 = vmul.f32 %v7941, %v7846
      %v7943 = vmul.f32 %v7942, %v7941
      %v7944 = vmul.f32 0.5, %v7943
      %v7945 = vsub.f32 1.5, %v7944
      %v7946 = vmul.f32 %v7941, %v7945
      %vm7947 = vweird.f32 %v7846
      %vm7948 = vweird.f32 %v7941
      %vm7949 = vmor %vm7947, %vm7948
      %v7950 = vsel %vm7949, %v7941, %v7946
      %v7951 = vrsqrt.pop %v7847
      %v7952 = vmul.f32 %v7951, %v7847
      %v7953 = vmul.f32 %v7952, %v7951
      %v7954 = vmul.f32 0.5, %v7953
      %v7955 = vsub.f32 1.5, %v7954
      %v7956 = vmul.f32 %v7951, %v7955
      %vm7957 = vweird.f32 %v7847
      %vm7958 = vweird.f32 %v7951
      %vm7959 = vmor %vm7957, %vm7958
      %v7960 = vsel %vm7959, %v7951, %v7956
      %v7961 = vrsqrt.pop %v7848
      %v7962 = vmul.f32 %v7961, %v7848
      %v7963 = vmul.f32 %v7962, %v7961
      %v7964 = vmul.f32 0.5, %v7963
      %v7965 = vsub.f32 1.5, %v7964
      %v7966 = vmul.f32 %v7961, %v7965
      %vm7967 = vweird.f32 %v7848
      %vm7968 = vweird.f32 %v7961
      %vm7969 = vmor %vm7967, %vm7968
      %v7970 = vsel %vm7969, %v7961, %v7966
      %v7971 = vrsqrt.pop %v7849
      %v7972 = vmul.f32 %v7971, %v7849
      %v7973 = vmul.f32 %v7972, %v7971
      %v7974 = vmul.f32 0.5, %v7973
      %v7975 = vsub.f32 1.5, %v7974
      %v7976 = vmul.f32 %v7971, %v7975
      %vm7977 = vweird.f32 %v7849
      %vm7978 = vweird.f32 %v7971
      %vm7979 = vmor %vm7977, %vm7978
      %v7980 = vsel %vm7979, %v7971, %v7976
      %v7981 = vrsqrt.pop %v7850
      %v7982 = vmul.f32 %v7981, %v7850
      %v7983 = vmul.f32 %v7982, %v7981
      %v7984 = vmul.f32 0.5, %v7983
      %v7985 = vsub.f32 1.5, %v7984
      %v7986 = vmul.f32 %v7981, %v7985
      %vm7987 = vweird.f32 %v7850
      %vm7988 = vweird.f32 %v7981
      %vm7989 = vmor %vm7987, %vm7988
      %v7990 = vsel %vm7989, %v7981, %v7986
      %v7991 = vrsqrt.pop %v7851
      %v7992 = vmul.f32 %v7991, %v7851
      %v7993 = vmul.f32 %v7992, %v7991
      %v7994 = vmul.f32 0.5, %v7993
      %v7995 = vsub.f32 1.5, %v7994
      %v7996 = vmul.f32 %v7991, %v7995
      %vm7997 = vweird.f32 %v7851
      %vm7998 = vweird.f32 %v7991
      %vm7999 = vmor %vm7997, %vm7998
      %v8000 = vsel %vm7999, %v7991, %v7996
      %v8001 = vrsqrt.pop %v7852
      %v8002 = vmul.f32 %v8001, %v7852
      %v8003 = vmul.f32 %v8002, %v8001
      %v8004 = vmul.f32 0.5, %v8003
      %v8005 = vsub.f32 1.5, %v8004
      %v8006 = vmul.f32 %v8001, %v8005
      %vm8007 = vweird.f32 %v7852
      %vm8008 = vweird.f32 %v8001
      %vm8009 = vmor %vm8007, %vm8008
      %v8010 = vsel %vm8009, %v8001, %v8006
      %v8011 = vrsqrt.pop %v7853
      %v8012 = vmul.f32 %v8011, %v7853
      %v8013 = vmul.f32 %v8012, %v8011
      %v8014 = vmul.f32 0.5, %v8013
      %v8015 = vsub.f32 1.5, %v8014
      %v8016 = vmul.f32 %v8011, %v8015
      %vm8017 = vweird.f32 %v7853
      %vm8018 = vweird.f32 %v8011
      %vm8019 = vmor %vm8017, %vm8018
      %v8020 = vsel %vm8019, %v8011, %v8016
      %v8021 = vrsqrt.pop %v7854
      %v8022 = vmul.f32 %v8021, %v7854
      %v8023 = vmul.f32 %v8022, %v8021
      %v8024 = vmul.f32 0.5, %v8023
      %v8025 = vsub.f32 1.5, %v8024
      %v8026 = vmul.f32 %v8021, %v8025
      %vm8027 = vweird.f32 %v7854
      %vm8028 = vweird.f32 %v8021
      %vm8029 = vmor %vm8027, %vm8028
      %v8030 = vsel %vm8029, %v8021, %v8026
      %v8031 = vrsqrt.pop %v7855
      %v8032 = vmul.f32 %v8031, %v7855
      %v8033 = vmul.f32 %v8032, %v8031
      %v8034 = vmul.f32 0.5, %v8033
      %v8035 = vsub.f32 1.5, %v8034
      %v8036 = vmul.f32 %v8031, %v8035
      %vm8037 = vweird.f32 %v7855
      %vm8038 = vweird.f32 %v8031
      %vm8039 = vmor %vm8037, %vm8038
      %v8040 = vsel %vm8039, %v8031, %v8036
      %v8041 = vrsqrt.pop %v7856
      %v8042 = vmul.f32 %v8041, %v7856
      %v8043 = vmul.f32 %v8042, %v8041
      %v8044 = vmul.f32 0.5, %v8043
      %v8045 = vsub.f32 1.5, %v8044
      %v8046 = vmul.f32 %v8041, %v8045
      %vm8047 = vweird.f32 %v7856
      %vm8048 = vweird.f32 %v8041
      %vm8049 = vmor %vm8047, %vm8048
      %v8050 = vsel %vm8049, %v8041, %v8046
      %v8051 = vrsqrt.pop %v7857
      %v8052 = vmul.f32 %v8051, %v7857
      %v8053 = vmul.f32 %v8052, %v8051
      %v8054 = vmul.f32 0.5, %v8053
      %v8055 = vsub.f32 1.5, %v8054
      %v8056 = vmul.f32 %v8051, %v8055
      %vm8057 = vweird.f32 %v7857
      %vm8058 = vweird.f32 %v8051
      %vm8059 = vmor %vm8057, %vm8058
      %v8060 = vsel %vm8059, %v8051, %v8056
      %v8061 = vrsqrt.pop %v7858
      %v8062 = vmul.f32 %v8061, %v7858
      %v8063 = vmul.f32 %v8062, %v8061
      %v8064 = vmul.f32 0.5, %v8063
      %v8065 = vsub.f32 1.5, %v8064
      %v8066 = vmul.f32 %v8061, %v8065
      %vm8067 = vweird.f32 %v7858
      %vm8068 = vweird.f32 %v8061
      %vm8069 = vmor %vm8067, %vm8068
      %v8070 = vsel %vm8069, %v8061, %v8066
      %v8071 = vrsqrt.pop %v7859
      %v8072 = vmul.f32 %v8071, %v7859
      %v8073 = vmul.f32 %v8072, %v8071
      %v8074 = vmul.f32 0.5, %v8073
      %v8075 = vsub.f32 1.5, %v8074
      %v8076 = vmul.f32 %v8071, %v8075
      %vm8077 = vweird.f32 %v7859
      %vm8078 = vweird.f32 %v8071
      %vm8079 = vmor %vm8077, %vm8078
      %v8080 = vsel %vm8079, %v8071, %v8076
      %v8081 = vrsqrt.pop %v7860
      %v8082 = vmul.f32 %v8081, %v7860
      %v8083 = vmul.f32 %v8082, %v8081
      %v8084 = vmul.f32 0.5, %v8083
      %v8085 = vsub.f32 1.5, %v8084
      %v8086 = vmul.f32 %v8081, %v8085
      %vm8087 = vweird.f32 %v7860
      %vm8088 = vweird.f32 %v8081
      %vm8089 = vmor %vm8087, %vm8088
      %v8090 = vsel %vm8089, %v8081, %v8086
      %v8091 = vrsqrt.pop %v7861
      %v8092 = vmul.f32 %v8091, %v7861
      %v8093 = vmul.f32 %v8092, %v8091
      %v8094 = vmul.f32 0.5, %v8093
      %v8095 = vsub.f32 1.5, %v8094
      %v8096 = vmul.f32 %v8091, %v8095
      %vm8097 = vweird.f32 %v7861
      %vm8098 = vweird.f32 %v8091
      %vm8099 = vmor %vm8097, %vm8098
      %v8100 = vsel %vm8099, %v8091, %v8096
      %v8101 = vrsqrt.pop %v7862
      %v8102 = vmul.f32 %v8101, %v7862
      %v8103 = vmul.f32 %v8102, %v8101
      %v8104 = vmul.f32 0.5, %v8103
      %v8105 = vsub.f32 1.5, %v8104
      %v8106 = vmul.f32 %v8101, %v8105
      %vm8107 = vweird.f32 %v7862
      %vm8108 = vweird.f32 %v8101
      %vm8109 = vmor %vm8107, %vm8108
      %v8110 = vsel %vm8109, %v8101, %v8106
      %v8111 = vrsqrt.pop %v7863
      %v8112 = vmul.f32 %v8111, %v7863
      %v8113 = vmul.f32 %v8112, %v8111
      %v8114 = vmul.f32 0.5, %v8113
      %v8115 = vsub.f32 1.5, %v8114
      %v8116 = vmul.f32 %v8111, %v8115
      %vm8117 = vweird.f32 %v7863
      %vm8118 = vweird.f32 %v8111
      %vm8119 = vmor %vm8117, %vm8118
      %v8120 = vsel %vm8119, %v8111, %v8116
      %v8121 = vrsqrt.pop %v7864
      %v8122 = vmul.f32 %v8121, %v7864
      %v8123 = vmul.f32 %v8122, %v8121
      %v8124 = vmul.f32 0.5, %v8123
      %v8125 = vsub.f32 1.5, %v8124
      %v8126 = vmul.f32 %v8121, %v8125
      %vm8127 = vweird.f32 %v7864
      %vm8128 = vweird.f32 %v8121
      %vm8129 = vmor %vm8127, %vm8128
      %v8130 = vsel %vm8129, %v8121, %v8126
      %v8131 = vrsqrt.pop %v7865
      %v8132 = vmul.f32 %v8131, %v7865
      %v8133 = vmul.f32 %v8132, %v8131
      %v8134 = vmul.f32 0.5, %v8133
      %v8135 = vsub.f32 1.5, %v8134
      %v8136 = vmul.f32 %v8131, %v8135
      %vm8137 = vweird.f32 %v7865
      %vm8138 = vweird.f32 %v8131
      %vm8139 = vmor %vm8137, %vm8138
      %v8140 = vsel %vm8139, %v8131, %v8136
      %v8141 = vrsqrt.pop %v7866
      %v8142 = vmul.f32 %v8141, %v7866
      %v8143 = vmul.f32 %v8142, %v8141
      %v8144 = vmul.f32 0.5, %v8143
      %v8145 = vsub.f32 1.5, %v8144
      %v8146 = vmul.f32 %v8141, %v8145
      %vm8147 = vweird.f32 %v7866
      %vm8148 = vweird.f32 %v8141
      %vm8149 = vmor %vm8147, %vm8148
      %v8150 = vsel %vm8149, %v8141, %v8146
      %v8151 = vrsqrt.pop %v7867
      %v8152 = vmul.f32 %v8151, %v7867
      %v8153 = vmul.f32 %v8152, %v8151
      %v8154 = vmul.f32 0.5, %v8153
      %v8155 = vsub.f32 1.5, %v8154
      %v8156 = vmul.f32 %v8151, %v8155
      %vm8157 = vweird.f32 %v7867
      %vm8158 = vweird.f32 %v8151
      %vm8159 = vmor %vm8157, %vm8158
      %v8160 = vsel %vm8159, %v8151, %v8156
      %v8161 = vrsqrt.pop %v7868
      %v8162 = vmul.f32 %v8161, %v7868
      %v8163 = vmul.f32 %v8162, %v8161
      %v8164 = vmul.f32 0.5, %v8163
      %v8165 = vsub.f32 1.5, %v8164
      %v8166 = vmul.f32 %v8161, %v8165
      %vm8167 = vweird.f32 %v7868
      %vm8168 = vweird.f32 %v8161
      %vm8169 = vmor %vm8167, %vm8168
      %v8170 = vsel %vm8169, %v8161, %v8166
      %v8171 = vrsqrt.pop %v7869
      %v8172 = vmul.f32 %v8171, %v7869
      %v8173 = vmul.f32 %v8172, %v8171
      %v8174 = vmul.f32 0.5, %v8173
      %v8175 = vsub.f32 1.5, %v8174
      %v8176 = vmul.f32 %v8171, %v8175
      %vm8177 = vweird.f32 %v7869
      %vm8178 = vweird.f32 %v8171
      %vm8179 = vmor %vm8177, %vm8178
      %v8180 = vsel %vm8179, %v8171, %v8176
      %v8181 = vrsqrt.pop %v7870
      %v8182 = vmul.f32 %v8181, %v7870
      %v8183 = vmul.f32 %v8182, %v8181
      %v8184 = vmul.f32 0.5, %v8183
      %v8185 = vsub.f32 1.5, %v8184
      %v8186 = vmul.f32 %v8181, %v8185
      %vm8187 = vweird.f32 %v7870
      %vm8188 = vweird.f32 %v8181
      %vm8189 = vmor %vm8187, %vm8188
      %v8190 = vsel %vm8189, %v8181, %v8186
      %v8191 = vmul.f32 %v7647, %v7880
      %v8192 = vmul.f32 %v7648, %v7890
      %v8193 = vmul.f32 %v7649, %v7900
      %v8194 = vmul.f32 %v7650, %v7910
      %v8195 = vmul.f32 %v7651, %v7920
      %v8196 = vmul.f32 %v7652, %v7930
      %v8197 = vmul.f32 %v7653, %v7940
      %v8198 = vmul.f32 %v7654, %v7950
      %v8199 = vmul.f32 %v7655, %v7960
      %v8200 = vmul.f32 %v7656, %v7970
      %v8201 = vmul.f32 %v7657, %v7980
      %v8202 = vmul.f32 %v7658, %v7990
      %v8203 = vmul.f32 %v7659, %v8000
      %v8204 = vmul.f32 %v7660, %v8010
      %v8205 = vmul.f32 %v7661, %v8020
      %v8206 = vmul.f32 %v7662, %v8030
      %v8207 = vmul.f32 %v7663, %v8040
      %v8208 = vmul.f32 %v7664, %v8050
      %v8209 = vmul.f32 %v7665, %v8060
      %v8210 = vmul.f32 %v7666, %v8070
      %v8211 = vmul.f32 %v7667, %v8080
      %v8212 = vmul.f32 %v7668, %v8090
      %v8213 = vmul.f32 %v7669, %v8100
      %v8214 = vmul.f32 %v7670, %v8110
      %v8215 = vmul.f32 %v7671, %v8120
      %v8216 = vmul.f32 %v7672, %v8130
      %v8217 = vmul.f32 %v7673, %v8140
      %v8218 = vmul.f32 %v7674, %v8150
      %v8219 = vmul.f32 %v7675, %v8160
      %v8220 = vmul.f32 %v7676, %v8170
      %v8221 = vmul.f32 %v7677, %v8180
      %v8222 = vmul.f32 %v7678, %v8190
      %v8224 = vperm.slane %v7517, 0
      %v8226 = vmul.f32 %v8191, %v8224
      %v8227 = vmul.f32 %v8192, %v8224
      %v8228 = vmul.f32 %v8193, %v8224
      %v8229 = vmul.f32 %v8194, %v8224
      %v8230 = vmul.f32 %v8195, %v8224
      %v8231 = vmul.f32 %v8196, %v8224
      %v8232 = vmul.f32 %v8197, %v8224
      %v8233 = vmul.f32 %v8198, %v8224
      %v8234 = vmul.f32 %v8199, %v8224
      %v8235 = vmul.f32 %v8200, %v8224
      %v8236 = vmul.f32 %v8201, %v8224
      %v8237 = vmul.f32 %v8202, %v8224
      %v8238 = vmul.f32 %v8203, %v8224
      %v8239 = vmul.f32 %v8204, %v8224
      %v8240 = vmul.f32 %v8205, %v8224
      %v8241 = vmul.f32 %v8206, %v8224
      %v8242 = vmul.f32 %v8207, %v8224
      %v8243 = vmul.f32 %v8208, %v8224
      %v8244 = vmul.f32 %v8209, %v8224
      %v8245 = vmul.f32 %v8210, %v8224
      %v8246 = vmul.f32 %v8211, %v8224
      %v8247 = vmul.f32 %v8212, %v8224
      %v8248 = vmul.f32 %v8213, %v8224
      %v8249 = vmul.f32 %v8214, %v8224
      %v8250 = vmul.f32 %v8215, %v8224
      %v8251 = vmul.f32 %v8216, %v8224
      %v8252 = vmul.f32 %v8217, %v8224
      %v8253 = vmul.f32 %v8218, %v8224
      %v8254 = vmul.f32 %v8219, %v8224
      %v8255 = vmul.f32 %v8220, %v8224
      %v8256 = vmul.f32 %v8221, %v8224
      %v8257 = vmul.f32 %v8222, %v8224
      %v8259 = vperm.slane %v7518, 0
      %v8261 = vadd.f32 %v8226, %v8259
      %v8262 = vadd.f32 %v8227, %v8259
      %v8263 = vadd.f32 %v8228, %v8259
      %v8264 = vadd.f32 %v8229, %v8259
      %v8265 = vadd.f32 %v8230, %v8259
      %v8266 = vadd.f32 %v8231, %v8259
      %v8267 = vadd.f32 %v8232, %v8259
      %v8268 = vadd.f32 %v8233, %v8259
      %v8269 = vadd.f32 %v8234, %v8259
      %v8270 = vadd.f32 %v8235, %v8259
      %v8271 = vadd.f32 %v8236, %v8259
      %v8272 = vadd.f32 %v8237, %v8259
      %v8273 = vadd.f32 %v8238, %v8259
      %v8274 = vadd.f32 %v8239, %v8259
      %v8275 = vadd.f32 %v8240, %v8259
      %v8276 = vadd.f32 %v8241, %v8259
      %v8277 = vadd.f32 %v8242, %v8259
      %v8278 = vadd.f32 %v8243, %v8259
      %v8279 = vadd.f32 %v8244, %v8259
      %v8280 = vadd.f32 %v8245, %v8259
      %v8281 = vadd.f32 %v8246, %v8259
      %v8282 = vadd.f32 %v8247, %v8259
      %v8283 = vadd.f32 %v8248, %v8259
      %v8284 = vadd.f32 %v8249, %v8259
      %v8285 = vadd.f32 %v8250, %v8259
      %v8286 = vadd.f32 %v8251, %v8259
      %v8287 = vadd.f32 %v8252, %v8259
      %v8288 = vadd.f32 %v8253, %v8259
      %v8289 = vadd.f32 %v8254, %v8259
      %v8290 = vadd.f32 %v8255, %v8259
      %v8291 = vadd.f32 %v8256, %v8259
      %v8292 = vadd.f32 %v8257, %v8259
      %v8293 = vpack.c.bf16 %v8262, %v8261
      %v8294 = vpack.c.bf16 %v8264, %v8263
      %v8295 = vpack.c.bf16 %v8266, %v8265
      %v8296 = vpack.c.bf16 %v8268, %v8267
      %v8297 = vpack.c.bf16 %v8270, %v8269
      %v8298 = vpack.c.bf16 %v8272, %v8271
      %v8299 = vpack.c.bf16 %v8274, %v8273
      %v8300 = vpack.c.bf16 %v8276, %v8275
      %v8301 = vpack.c.bf16 %v8278, %v8277
      %v8302 = vpack.c.bf16 %v8280, %v8279
      %v8303 = vpack.c.bf16 %v8282, %v8281
      %v8304 = vpack.c.bf16 %v8284, %v8283
      %v8305 = vpack.c.bf16 %v8286, %v8285
      %v8306 = vpack.c.bf16 %v8288, %v8287
      %v8307 = vpack.c.bf16 %v8290, %v8289
      %v8308 = vpack.c.bf16 %v8292, %v8291
      %v8309 = vld [vmem:[%s13] sm:$0xf]
      %v8310 = vld [vmem:[%s13 + $0x4] sm:$0xf]
      %v8311 = vld [vmem:[%s13 + $0x8] sm:$0xf]
      %v8312 = vld [vmem:[%s13 + $0xc] sm:$0xf]
      %v8313 = vld [vmem:[%s13 + $0x10] sm:$0xf]
      %v8314 = vld [vmem:[%s13 + $0x14] sm:$0xf]
      %v8315 = vld [vmem:[%s13 + $0x18] sm:$0xf]
      %v8316 = vld [vmem:[%s13 + $0x1c] sm:$0xf]
      %v8317 = vld [vmem:[%s14] sm:$0x1]
      %v8319 = vperm.slane %v8317, 0
      %v8329 = vunpack.c.l.b16 %v8309
      %v8330 = vunpack.c.l.b16 %v8310
      %v8331 = vunpack.c.l.b16 %v8311
      %v8332 = vunpack.c.l.b16 %v8312
      %v8333 = vunpack.c.l.b16 %v8313
      %v8334 = vunpack.c.l.b16 %v8314
      %v8335 = vunpack.c.l.b16 %v8315
      %v8336 = vunpack.c.l.b16 %v8316
      %v8337 = vpack.c.b16 %v8330, %v8329
      %v8338 = vpack.c.b16 %v8332, %v8331
      %v8339 = vpack.c.b16 %v8334, %v8333
      %v8340 = vpack.c.b16 %v8336, %v8335
      %v8346 = vsel %vm699, %v8293, 0
      %v8349 = vsel %vm699, %v8294, 0
      %v8352 = vsel %vm699, %v8295, 0
      %v8355 = vsel %vm699, %v8296, 0
      %v8358 = vsel %vm699, %v8297, 0
      %v8361 = vsel %vm699, %v8298, 0
      %v8364 = vsel %vm699, %v8299, 0
      %v8367 = vsel %vm699, %v8300, 0
      %v8370 = vsel %vm699, %v8301, 0
      %v8373 = vsel %vm699, %v8302, 0
      %v8376 = vsel %vm699, %v8303, 0
      %v8379 = vsel %vm699, %v8304, 0
      %v8382 = vsel %vm699, %v8305, 0
      %v8385 = vsel %vm699, %v8306, 0
      %v8388 = vsel %vm699, %v8307, 0
      %v8391 = vsel %vm699, %v8308, 0
      %8393 = vmatpush.bf16.msra.mxu0 0
      %8394 = vmatpush.bf16.msra.mxu0 0
      %8395 = vmatpush.bf16.msra.mxu0 0
      %8396 = vmatpush.bf16.msra.mxu0 0
      %8397 = vmatpush.bf16.msra.mxu0 %v8340
      %8398 = vmatpush.bf16.msra.mxu0 %v8339
      %8399 = vmatpush.bf16.msra.mxu0 %v8338
      %8400 = vmatpush.bf16.msra.mxu0 %v8337
      %8401 = vmatmul.bf16.gmra.mxu0 %v8346
      %v8402 = vpop.f32.mrf.mxu0
      %v8403 = vadd.f32 %v8319, %v8402
      %v8404 = vpop.f32.mrf.mxu0
      %v8405 = vadd.f32 %v8319, %v8404
      %8406 = vmatmul.bf16.gmra.mxu0 %v8349
      %v8407 = vpop.f32.mrf.mxu0
      %v8408 = vadd.f32 %v8319, %v8407
      %v8409 = vpop.f32.mrf.mxu0
      %v8410 = vadd.f32 %v8319, %v8409
      %8411 = vmatmul.bf16.gmra.mxu0 %v8352
      %v8412 = vpop.f32.mrf.mxu0
      %v8413 = vadd.f32 %v8319, %v8412
      %v8414 = vpop.f32.mrf.mxu0
      %v8415 = vadd.f32 %v8319, %v8414
      %8416 = vmatmul.bf16.gmra.mxu0 %v8355
      %v8417 = vpop.f32.mrf.mxu0
      %v8418 = vadd.f32 %v8319, %v8417
      %v8419 = vpop.f32.mrf.mxu0
      %v8420 = vadd.f32 %v8319, %v8419
      %8421 = vmatmul.bf16.gmra.mxu0 %v8358
      %v8422 = vpop.f32.mrf.mxu0
      %v8423 = vadd.f32 %v8319, %v8422
      %v8424 = vpop.f32.mrf.mxu0
      %v8425 = vadd.f32 %v8319, %v8424
      %8426 = vmatmul.bf16.gmra.mxu0 %v8361
      %v8427 = vpop.f32.mrf.mxu0
      %v8428 = vadd.f32 %v8319, %v8427
      %v8429 = vpop.f32.mrf.mxu0
      %v8430 = vadd.f32 %v8319, %v8429
      %8431 = vmatmul.bf16.gmra.mxu0 %v8364
      %v8432 = vpop.f32.mrf.mxu0
      %v8433 = vadd.f32 %v8319, %v8432
      %v8434 = vpop.f32.mrf.mxu0
      %v8435 = vadd.f32 %v8319, %v8434
      %8436 = vmatmul.bf16.gmra.mxu0 %v8367
      %v8437 = vpop.f32.mrf.mxu0
      %v8438 = vadd.f32 %v8319, %v8437
      %v8439 = vpop.f32.mrf.mxu0
      %v8440 = vadd.f32 %v8319, %v8439
      %8441 = vmatmul.bf16.gmra.mxu0 %v8370
      %v8442 = vpop.f32.mrf.mxu0
      %v8443 = vadd.f32 %v8319, %v8442
      %v8444 = vpop.f32.mrf.mxu0
      %v8445 = vadd.f32 %v8319, %v8444
      %8446 = vmatmul.bf16.gmra.mxu0 %v8373
      %v8447 = vpop.f32.mrf.mxu0
      %v8448 = vadd.f32 %v8319, %v8447
      %v8449 = vpop.f32.mrf.mxu0
      %v8450 = vadd.f32 %v8319, %v8449
      %8451 = vmatmul.bf16.gmra.mxu0 %v8376
      %v8452 = vpop.f32.mrf.mxu0
      %v8453 = vadd.f32 %v8319, %v8452
      %v8454 = vpop.f32.mrf.mxu0
      %v8455 = vadd.f32 %v8319, %v8454
      %8456 = vmatmul.bf16.gmra.mxu0 %v8379
      %v8457 = vpop.f32.mrf.mxu0
      %v8458 = vadd.f32 %v8319, %v8457
      %v8459 = vpop.f32.mrf.mxu0
      %v8460 = vadd.f32 %v8319, %v8459
      %8461 = vmatmul.bf16.gmra.mxu0 %v8382
      %v8462 = vpop.f32.mrf.mxu0
      %v8463 = vadd.f32 %v8319, %v8462
      %v8464 = vpop.f32.mrf.mxu0
      %v8465 = vadd.f32 %v8319, %v8464
      %8466 = vmatmul.bf16.gmra.mxu0 %v8385
      %v8467 = vpop.f32.mrf.mxu0
      %v8468 = vadd.f32 %v8319, %v8467
      %v8469 = vpop.f32.mrf.mxu0
      %v8470 = vadd.f32 %v8319, %v8469
      %8471 = vmatmul.bf16.gmra.mxu0 %v8388
      %v8472 = vpop.f32.mrf.mxu0
      %v8473 = vadd.f32 %v8319, %v8472
      %v8474 = vpop.f32.mrf.mxu0
      %v8475 = vadd.f32 %v8319, %v8474
      %8476 = vmatmul.bf16.gmra.mxu0 %v8391
      %v8477 = vpop.f32.mrf.mxu0
      %v8478 = vadd.f32 %v8319, %v8477
      %v8479 = vpop.f32.mrf.mxu0
      %v8480 = vadd.f32 %v8319, %v8479
      %8481 = vdwg.mxu0
      %8482 = vst [vmem:[%s496] sm:$0xff] %v8403
      %8483 = vst [vmem:[%s496 + $0x8] sm:$0xff] %v8405
      %8484 = vst [vmem:[%s496 + $0x10] sm:$0xff] %v8408
      %8485 = vst [vmem:[%s496 + $0x18] sm:$0xff] %v8410
      %8486 = vst [vmem:[%s496 + $0x20] sm:$0xff] %v8413
      %8487 = vst [vmem:[%s496 + $0x28] sm:$0xff] %v8415
      %8488 = vst [vmem:[%s496 + $0x30] sm:$0xff] %v8418
      %8489 = vst [vmem:[%s496 + $0x38] sm:$0xff] %v8420
      %8490 = vst [vmem:[%s496 + $0x40] sm:$0xff] %v8423
      %8491 = vst [vmem:[%s496 + $0x48] sm:$0xff] %v8425
      %8492 = vst [vmem:[%s496 + $0x50] sm:$0xff] %v8428
      %8493 = vst [vmem:[%s496 + $0x58] sm:$0xff] %v8430
      %8494 = vst [vmem:[%s496 + $0x60] sm:$0xff] %v8433
      %8495 = vst [vmem:[%s496 + $0x68] sm:$0xff] %v8435
      %8496 = vst [vmem:[%s496 + $0x70] sm:$0xff] %v8438
      %8497 = vst [vmem:[%s496 + $0x78] sm:$0xff] %v8440
      %8498 = vst [vmem:[%s496 + $0x80] sm:$0xff] %v8443
      %8499 = vst [vmem:[%s496 + $0x88] sm:$0xff] %v8445
      %8500 = vst [vmem:[%s496 + $0x90] sm:$0xff] %v8448
      %8501 = vst [vmem:[%s496 + $0x98] sm:$0xff] %v8450
      %8502 = vst [vmem:[%s496 + $0xa0] sm:$0xff] %v8453
      %8503 = vst [vmem:[%s496 + $0xa8] sm:$0xff] %v8455
      %8504 = vst [vmem:[%s496 + $0xb0] sm:$0xff] %v8458
      %8505 = vst [vmem:[%s496 + $0xb8] sm:$0xff] %v8460
      %8506 = vst [vmem:[%s496 + $0xc0] sm:$0xff] %v8463
      %8507 = vst [vmem:[%s496 + $0xc8] sm:$0xff] %v8465
      %8508 = vst [vmem:[%s496 + $0xd0] sm:$0xff] %v8468
      %8509 = vst [vmem:[%s496 + $0xd8] sm:$0xff] %v8470
      %8510 = vst [vmem:[%s496 + $0xe0] sm:$0xff] %v8473
      %8511 = vst [vmem:[%s496 + $0xe8] sm:$0xff] %v8475
      %8512 = vst [vmem:[%s496 + $0xf0] sm:$0xff] %v8478
      %8513 = vst [vmem:[%s496 + $0xf8] sm:$0xff] %v8480
      %s8514 = smul.u32 32, %s26
      %p8515 = scmp.lt.s32.totalorder %s8514, 63
      %s8516 = scalar_select %p8515, %s8514, 63
      %s8517 = smul.addr %s8516, 8
      %s8518 = scalar_lea.vmem %s15, %s8517
      // Predicated region
      $region81: #{fast_transformer_forward.1} parent=79 // pred_check
        %p8519 = pneg %p364
      $region82: #{fast_transformer_forward.1} parent=79 // pred_check_branch
        %8521 = sbr.rel (%p8519) target = $region84
      $region83: #{fast_transformer_forward.1} parent=79 // pred_region
        %s8522 = smul.u32 32, %s26
      $region84: #{fast_transformer_forward.1} parent=79 // pred_fallthru
        _
    $region80: #{fast_transformer_forward.1} parent=5 // pred_fallthru
      _
    %p8523 = scmp.le.s32.totalorder 2, %s21
    // Predicated region
    $region85: #{fast_transformer_forward.1} parent=5 // pred_check
      %p8524 = pneg %p8523
    $region86: #{fast_transformer_forward.1} parent=5 // pred_check_branch
      %8526 = sbr.rel (%p8524) target = $region88
    $region87: #{fast_transformer_forward.1} parent=5 // pred_region
      %s8527 = ssub.s32 %s21, 2
      // Predicated region
      $region89: #{fast_transformer_forward.1} parent=87 // pred_check
        %p8528 = pneg %p370
      $region90: #{fast_transformer_forward.1} parent=87 // pred_check_branch
        %8530 = sbr.rel (%p8528) target = $region92
      $region91: #{fast_transformer_forward.1} parent=87 // pred_region
        %s8531 = smul.u32 32, %s27
        %p8532 = scmp.lt.s32.totalorder %s8531, 63
        %s8533 = scalar_select %p8532, %s8531, 63
        %s8534 = smul.addr %s8533, 8
        %s8535 = scalar_lea.vmem %s15, %s8534
      $region92: #{fast_transformer_forward.1} parent=87 // pred_fallthru
        _
    $region88: #{fast_transformer_forward.1} parent=5 // pred_fallthru
      _
  $region6: #{fast_transformer_forward.1} parent=0 // loop_footer
    %s25 = sadd.s32 1, %s21
  $region7: #{fast_transformer_forward.1} parent=0 // loop_footer_branch
    %20 = sbr.rel target = $region3
  $region8: #{fast_transformer_forward.1} parent=0 // loop_exit
    _

</llo_original>
